<compile_context>
chip_gen: v7x
topology: tpu7x:2x2x1
jax: 0.10.0
libtpu: 0.0.40
codegen_flags: <defaults>
</compile_context>

<pallas_src>
import jax
import jax.numpy as jnp
from jax.experimental import pallas as pl
from jax.experimental.pallas import tpu as pltpu


def vanilla_cnn_forward(x, conv_w, conv_b, lin_w, lin_b):
    B, C, H, W = x.shape                      # (2, 3, 32, 32)
    OC, _, KH, KW = conv_w.shape              # (32, 3, 7, 7)
    OH, OW = H - KH + 1, W - KW + 1           # 26, 26
    PH, PW = OH // 2, OW // 2                 # 13, 13
    F = OC * PH * PW                          # 5408
    NOUT = lin_w.shape[0]                     # 10

    HW = H * W                                # 1024 lanes per batch element
    K = C * KH * KW                           # 147
    # zero halo so every in-kernel shift (up to (KH-1)*W + (KW-1) = 198 lanes) stays in the slab;
    # rounded so the per-batch slab stays a multiple of 128 lanes.
    SLAB = HW + ((((KH - 1) * W + (KW - 1)) + 127) // 128) * 128      # 1280
    # last lane that is a pool-window top-left: 2*(PH-1)*W + 2*(PW-1) = 792 -> round up to 128.
    Z_W = (((2 * (PH - 1) * W + 2 * (PW - 1)) + 1 + 127) // 128) * 128  # 896
    T_W = Z_W + W                                                        # 928 (<= HW-1)

    # ---- tiny layout prep (~25 KB moved; the heavy im2col happens inside kernel 1) -------------
    x_t = x.transpose(1, 0, 2, 3).reshape(C, B, HW)          # lanes = h*W + w, channel-major rows
    x_t = jnp.pad(x_t, ((0, 0), (0, 0), (0, SLAB - HW)))
    x_t = x_t.reshape(C, B * SLAB)                           # (3, B*1280)

    w_mat = conv_w.transpose(0, 2, 3, 1).reshape(OC, K)      # (32, 147), col = (i*KW + j)*C + c
    cb = conv_b.reshape(OC, 1)

    # ---- kernel 1: fused im2col + conv matmul + bias + ReLU + 2x2 max-pool ---------------------
    def conv_relu_pool_kernel(x_ref, w_ref, b_ref, o_ref, xcol_ref):
        # Assemble the im2col patch matrix for this batch element entirely in VMEM:
        # row (i*KW + j)*C + c of xcol is input channel c shifted by i*W + j lanes.
        for i in range(KH):
            for j in range(KW):
                k = i * KW + j
                xcol_ref[pl.ds(k * C, C), :] = x_ref[:, pl.ds(i * W + j, HW)]
        # One MXU matmul -> channel-major, lane-dense conv output (OC, HW).
        conv = jnp.dot(w_ref[...], xcol_ref[...], preferred_element_type=jnp.float32)
        conv = conv + b_ref[...]                              # (OC, HW) + (OC, 1)
        # Fused 2x2 stride-2 max-pool: the window with top-left lane L covers L, L+1, L+W, L+W+1.
        t = jnp.maximum(conv[:, 0:T_W], conv[:, 1:T_W + 1])   # horizontal pair max
        z = jnp.maximum(t[:, 0:Z_W], t[:, W:W + Z_W])         # vertical pair max
        z = jnp.maximum(z, 0.0)                               # ReLU (commutes with max)
        o_ref[:, 0:Z_W] = z
        o_ref[:, Z_W:] = jnp.zeros((OC, HW - Z_W), jnp.float32)

    conv_pool = pl.pallas_call(
        conv_relu_pool_kernel,
        out_shape=jax.ShapeDtypeStruct((OC, B * HW), jnp.float32),
        grid=(B,),
        in_specs=[pl.BlockSpec((C, SLAB), lambda b: (0, b)),
                  pl.BlockSpec((OC, K), lambda b: (0, 0)),
                  pl.BlockSpec((OC, 1), lambda b: (0, 0))],
        out_specs=pl.BlockSpec((OC, HW), lambda b: (0, b)),
        scratch_shapes=[pltpu.VMEM((K, HW), jnp.float32)],
        compiler_params=pltpu.CompilerParams(dimension_semantics=("parallel",)),
        cost_estimate=pl.CostEstimate(
            flops=2 * B * OC * K * HW, transcendentals=0,
            bytes_accessed=4 * (C * B * SLAB + OC * K + OC + OC * B * HW)),
    )(x_t, w_mat, cb)

    # ---- small relayout (~0.3 MB): pick the pooled lanes (2*ph*W + 2*pw) and lay them out in
    #      torch's NCHW .view order.  Only remaining XLA glue on the activation path.
    p = conv_pool.reshape(OC, B, H, W)[:, :, 0:2 * PH:2, 0:2 * PW:2]    # (OC, B, PH, PW)
    pooled = p.transpose(1, 0, 2, 3).reshape(B, F)                       # (B, 5408)

    # ---- kernel 2: Linear.  lin_w stays (10, 5408) (lane-dense); contract the feature axes. ----
    def linear_kernel(p_ref, w_ref, b_ref, o_ref):
        o_ref[...] = jax.lax.dot_general(
            p_ref[...], w_ref[...],
            dimension_numbers=(((1,), (1,)), ((), ())),
            preferred_element_type=jnp.float32) + b_ref[...]

    out = pl.pallas_call(
        linear_kernel,
        out_shape=jax.ShapeDtypeStruct((B, NOUT), jnp.float32),
        grid=(1,),
        in_specs=[pl.BlockSpec((B, F), lambda i: (0, 0)),
                  pl.BlockSpec((NOUT, F), lambda i: (0, 0)),
                  pl.BlockSpec((1, NOUT), lambda i: (0, 0))],
        out_specs=pl.BlockSpec((B, NOUT), lambda i: (0, 0)),
        compiler_params=pltpu.CompilerParams(dimension_semantics=("arbitrary",)),
        cost_estimate=pl.CostEstimate(
            flops=2 * B * F * NOUT, transcendentals=0,
            bytes_accessed=4 * (B * F + NOUT * F + NOUT + B * NOUT)),
    )(pooled, lin_w, lin_b.reshape(1, NOUT))
    return out


def reference_forward(x, conv_w, conv_b, lin_w, lin_b):
    # Pure-JAX reference matching PyTorch semantics (NCHW conv, valid padding, pool 2/2).
    out = jax.lax.conv_general_dilated(
        x, conv_w, window_strides=(1, 1), padding="VALID",
        dimension_numbers=("NCHW", "OIHW", "NCHW"))
    out = out + conv_b.reshape(1, -1, 1, 1)
    out = jnp.maximum(out, 0.0)
    out = jax.lax.reduce_window(out, -jnp.inf, jax.lax.max,
                                (1, 1, 2, 2), (1, 1, 2, 2), "VALID")
    out = out.reshape(out.shape[0], -1)       # NCHW flatten order == torch .view
    return out @ lin_w.T + lin_b


if __name__ == "__main__":
    key = jax.random.PRNGKey(0)
    k1, k2, k3, k4, k5 = jax.random.split(key, 5)

    B = 2
    # Input must be 3x32x32 so the flattened pooled features are 32*13*13 = 5408.
    x = jax.random.normal(k1, (B, 3, 32, 32), dtype=jnp.float32)

    # Deterministic synthetic parameters (shapes from VanillaCNN.__init__).
    conv_w = jax.random.normal(k2, (32, 3, 7, 7), dtype=jnp.float32) * 0.05
    conv_b = jax.random.normal(k3, (32,), dtype=jnp.float32) * 0.05
    lin_w = jax.random.normal(k4, (10, 5408), dtype=jnp.float32) * 0.01
    lin_b = jax.random.normal(k5, (10,), dtype=jnp.float32) * 0.01

    out = jax.jit(vanilla_cnn_forward)(x, conv_w, conv_b, lin_w, lin_b)
    out = jax.block_until_ready(out)

    ref = reference_forward(x, conv_w, conv_b, lin_w, lin_b)
    assert out.shape == (B, 10), out.shape
    assert jnp.allclose(out, ref, atol=2e-2, rtol=2e-2), "Pallas output mismatch vs reference"
    print("KERNEL_OK")
</pallas_src>

<mosaic_0001>
module attributes {stable_mosaic.version = 11 : i64} {
  func.func @conv_relu_pool_kernel(%arg0: i32, %arg1: memref<3x1280xf32, #tpu.memory_space<vmem>>, %arg2: memref<32x147xf32, #tpu.memory_space<vmem>>, %arg3: memref<32x1xf32, #tpu.memory_space<vmem>>, %arg4: memref<32x1024xf32, #tpu.memory_space<vmem>>, %arg5: memref<147x1024xf32, #tpu.memory_space<vmem>>) attributes {dimension_semantics = [#tpu.dimension_semantics<parallel>], iteration_bounds = array<i64: 2>, scalar_prefetch = 0 : i64, scratch_operands = 1 : i64, tpu.core_type = #tpu.core_type<tc>, window_params = [{transform_indices = @transform_0, window_bounds = array<i64: 3, 1280>}, {pipeline_mode = #tpu.pipeline_mode<synchronous>, transform_indices = @transform_1, window_bounds = array<i64: 32, 147>}, {pipeline_mode = #tpu.pipeline_mode<synchronous>, transform_indices = @transform_2, window_bounds = array<i64: 32, 1>}, {transform_indices = @transform_3, window_bounds = array<i64: 32, 1024>}]} {
    %c0 = arith.constant 0 : index
    %c0_0 = arith.constant 0 : index
    %0 = vector.load %arg1[%c0, %c0_0] : memref<3x1280xf32, #tpu.memory_space<vmem>>, vector<3x1024xf32>
    %c0_1 = arith.constant 0 : index
    %c0_2 = arith.constant 0 : index
    %1 = vector.load %arg5[%c0_1, %c0_2] : memref<147x1024xf32, #tpu.memory_space<vmem>>, vector<3x1024xf32>
    tpu.vector_store %arg5[%c0_1, %c0_2], %0 {strides = array<i32>} : memref<147x1024xf32, #tpu.memory_space<vmem>>, vector<3x1024xf32>,
    %c0_3 = arith.constant 0 : index
    %c1 = arith.constant 1 : index
    %2 = vector.load %arg1[%c0_3, %c1] : memref<3x1280xf32, #tpu.memory_space<vmem>>, vector<3x1024xf32>
    %c3 = arith.constant 3 : index
    %c0_4 = arith.constant 0 : index
    %3 = vector.load %arg5[%c3, %c0_4] : memref<147x1024xf32, #tpu.memory_space<vmem>>, vector<3x1024xf32>
    tpu.vector_store %arg5[%c3, %c0_4], %2 {strides = array<i32>} : memref<147x1024xf32, #tpu.memory_space<vmem>>, vector<3x1024xf32>,
    %c0_5 = arith.constant 0 : index
    %c2 = arith.constant 2 : index
    %4 = vector.load %arg1[%c0_5, %c2] : memref<3x1280xf32, #tpu.memory_space<vmem>>, vector<3x1024xf32>
    %c6 = arith.constant 6 : index
    %c0_6 = arith.constant 0 : index
    %5 = vector.load %arg5[%c6, %c0_6] : memref<147x1024xf32, #tpu.memory_space<vmem>>, vector<3x1024xf32>
    tpu.vector_store %arg5[%c6, %c0_6], %4 {strides = array<i32>} : memref<147x1024xf32, #tpu.memory_space<vmem>>, vector<3x1024xf32>,
    %c0_7 = arith.constant 0 : index
    %c3_8 = arith.constant 3 : index
    %6 = vector.load %arg1[%c0_7, %c3_8] : memref<3x1280xf32, #tpu.memory_space<vmem>>, vector<3x1024xf32>
    %c9 = arith.constant 9 : index
    %c0_9 = arith.constant 0 : index
    %7 = vector.load %arg5[%c9, %c0_9] : memref<147x1024xf32, #tpu.memory_space<vmem>>, vector<3x1024xf32>
    tpu.vector_store %arg5[%c9, %c0_9], %6 {strides = array<i32>} : memref<147x1024xf32, #tpu.memory_space<vmem>>, vector<3x1024xf32>,
    %c0_10 = arith.constant 0 : index
    %c4 = arith.constant 4 : index
    %8 = vector.load %arg1[%c0_10, %c4] : memref<3x1280xf32, #tpu.memory_space<vmem>>, vector<3x1024xf32>
    %c12 = arith.constant 12 : index
    %c0_11 = arith.constant 0 : index
    %9 = vector.load %arg5[%c12, %c0_11] : memref<147x1024xf32, #tpu.memory_space<vmem>>, vector<3x1024xf32>
    tpu.vector_store %arg5[%c12, %c0_11], %8 {strides = array<i32>} : memref<147x1024xf32, #tpu.memory_space<vmem>>, vector<3x1024xf32>,
    %c0_12 = arith.constant 0 : index
    %c5 = arith.constant 5 : index
    %10 = vector.load %arg1[%c0_12, %c5] : memref<3x1280xf32, #tpu.memory_space<vmem>>, vector<3x1024xf32>
    %c15 = arith.constant 15 : index
    %c0_13 = arith.constant 0 : index
    %11 = vector.load %arg5[%c15, %c0_13] : memref<147x1024xf32, #tpu.memory_space<vmem>>, vector<3x1024xf32>
    tpu.vector_store %arg5[%c15, %c0_13], %10 {strides = array<i32>} : memref<147x1024xf32, #tpu.memory_space<vmem>>, vector<3x1024xf32>,
    %c0_14 = arith.constant 0 : index
    %c6_15 = arith.constant 6 : index
    %12 = vector.load %arg1[%c0_14, %c6_15] : memref<3x1280xf32, #tpu.memory_space<vmem>>, vector<3x1024xf32>
    %c18 = arith.constant 18 : index
    %c0_16 = arith.constant 0 : index
    %13 = vector.load %arg5[%c18, %c0_16] : memref<147x1024xf32, #tpu.memory_space<vmem>>, vector<3x1024xf32>
    tpu.vector_store %arg5[%c18, %c0_16], %12 {strides = array<i32>} : memref<147x1024xf32, #tpu.memory_space<vmem>>, vector<3x1024xf32>,
    %c0_17 = arith.constant 0 : index
    %c32 = arith.constant 32 : index
    %14 = vector.load %arg1[%c0_17, %c32] : memref<3x1280xf32, #tpu.memory_space<vmem>>, vector<3x1024xf32>
    %c21 = arith.constant 21 : index
    %c0_18 = arith.constant 0 : index
    %15 = vector.load %arg5[%c21, %c0_18] : memref<147x1024xf32, #tpu.memory_space<vmem>>, vector<3x1024xf32>
    tpu.vector_store %arg5[%c21, %c0_18], %14 {strides = array<i32>} : memref<147x1024xf32, #tpu.memory_space<vmem>>, vector<3x1024xf32>,
    %c0_19 = arith.constant 0 : index
    %c33 = arith.constant 33 : index
    %16 = vector.load %arg1[%c0_19, %c33] : memref<3x1280xf32, #tpu.memory_space<vmem>>, vector<3x1024xf32>
    %c24 = arith.constant 24 : index
    %c0_20 = arith.constant 0 : index
    %17 = vector.load %arg5[%c24, %c0_20] : memref<147x1024xf32, #tpu.memory_space<vmem>>, vector<3x1024xf32>
    tpu.vector_store %arg5[%c24, %c0_20], %16 {strides = array<i32>} : memref<147x1024xf32, #tpu.memory_space<vmem>>, vector<3x1024xf32>,
    %c0_21 = arith.constant 0 : index
    %c34 = arith.constant 34 : index
    %18 = vector.load %arg1[%c0_21, %c34] : memref<3x1280xf32, #tpu.memory_space<vmem>>, vector<3x1024xf32>
    %c27 = arith.constant 27 : index
    %c0_22 = arith.constant 0 : index
    %19 = vector.load %arg5[%c27, %c0_22] : memref<147x1024xf32, #tpu.memory_space<vmem>>, vector<3x1024xf32>
    tpu.vector_store %arg5[%c27, %c0_22], %18 {strides = array<i32>} : memref<147x1024xf32, #tpu.memory_space<vmem>>, vector<3x1024xf32>,
    %c0_23 = arith.constant 0 : index
    %c35 = arith.constant 35 : index
    %20 = vector.load %arg1[%c0_23, %c35] : memref<3x1280xf32, #tpu.memory_space<vmem>>, vector<3x1024xf32>
    %c30 = arith.constant 30 : index
    %c0_24 = arith.constant 0 : index
    %21 = vector.load %arg5[%c30, %c0_24] : memref<147x1024xf32, #tpu.memory_space<vmem>>, vector<3x1024xf32>
    tpu.vector_store %arg5[%c30, %c0_24], %20 {strides = array<i32>} : memref<147x1024xf32, #tpu.memory_space<vmem>>, vector<3x1024xf32>,
    %c0_25 = arith.constant 0 : index
    %c36 = arith.constant 36 : index
    %22 = vector.load %arg1[%c0_25, %c36] : memref<3x1280xf32, #tpu.memory_space<vmem>>, vector<3x1024xf32>
    %c33_26 = arith.constant 33 : index
    %c0_27 = arith.constant 0 : index
    %23 = vector.load %arg5[%c33_26, %c0_27] : memref<147x1024xf32, #tpu.memory_space<vmem>>, vector<3x1024xf32>
    tpu.vector_store %arg5[%c33_26, %c0_27], %22 {strides = array<i32>} : memref<147x1024xf32, #tpu.memory_space<vmem>>, vector<3x1024xf32>,
    %c0_28 = arith.constant 0 : index
    %c37 = arith.constant 37 : index
    %24 = vector.load %arg1[%c0_28, %c37] : memref<3x1280xf32, #tpu.memory_space<vmem>>, vector<3x1024xf32>
    %c36_29 = arith.constant 36 : index
    %c0_30 = arith.constant 0 : index
    %25 = vector.load %arg5[%c36_29, %c0_30] : memref<147x1024xf32, #tpu.memory_space<vmem>>, vector<3x1024xf32>
    tpu.vector_store %arg5[%c36_29, %c0_30], %24 {strides = array<i32>} : memref<147x1024xf32, #tpu.memory_space<vmem>>, vector<3x1024xf32>,
    %c0_31 = arith.constant 0 : index
    %c38 = arith.constant 38 : index
    %26 = vector.load %arg1[%c0_31, %c38] : memref<3x1280xf32, #tpu.memory_space<vmem>>, vector<3x1024xf32>
    %c39 = arith.constant 39 : index
    %c0_32 = arith.constant 0 : index
    %27 = vector.load %arg5[%c39, %c0_32] : memref<147x1024xf32, #tpu.memory_space<vmem>>, vector<3x1024xf32>
    tpu.vector_store %arg5[%c39, %c0_32], %26 {strides = array<i32>} : memref<147x1024xf32, #tpu.memory_space<vmem>>, vector<3x1024xf32>,
    %c0_33 = arith.constant 0 : index
    %c64 = arith.constant 64 : index
    %28 = vector.load %arg1[%c0_33, %c64] : memref<3x1280xf32, #tpu.memory_space<vmem>>, vector<3x1024xf32>
    %c42 = arith.constant 42 : index
    %c0_34 = arith.constant 0 : index
    %29 = vector.load %arg5[%c42, %c0_34] : memref<147x1024xf32, #tpu.memory_space<vmem>>, vector<3x1024xf32>
    tpu.vector_store %arg5[%c42, %c0_34], %28 {strides = array<i32>} : memref<147x1024xf32, #tpu.memory_space<vmem>>, vector<3x1024xf32>,
    %c0_35 = arith.constant 0 : index
    %c65 = arith.constant 65 : index
    %30 = vector.load %arg1[%c0_35, %c65] : memref<3x1280xf32, #tpu.memory_space<vmem>>, vector<3x1024xf32>
    %c45 = arith.constant 45 : index
    %c0_36 = arith.constant 0 : index
    %31 = vector.load %arg5[%c45, %c0_36] : memref<147x1024xf32, #tpu.memory_space<vmem>>, vector<3x1024xf32>
    tpu.vector_store %arg5[%c45, %c0_36], %30 {strides = array<i32>} : memref<147x1024xf32, #tpu.memory_space<vmem>>, vector<3x1024xf32>,
    %c0_37 = arith.constant 0 : index
    %c66 = arith.constant 66 : index
    %32 = vector.load %arg1[%c0_37, %c66] : memref<3x1280xf32, #tpu.memory_space<vmem>>, vector<3x1024xf32>
    %c48 = arith.constant 48 : index
    %c0_38 = arith.constant 0 : index
    %33 = vector.load %arg5[%c48, %c0_38] : memref<147x1024xf32, #tpu.memory_space<vmem>>, vector<3x1024xf32>
    tpu.vector_store %arg5[%c48, %c0_38], %32 {strides = array<i32>} : memref<147x1024xf32, #tpu.memory_space<vmem>>, vector<3x1024xf32>,
    %c0_39 = arith.constant 0 : index
    %c67 = arith.constant 67 : index
    %34 = vector.load %arg1[%c0_39, %c67] : memref<3x1280xf32, #tpu.memory_space<vmem>>, vector<3x1024xf32>
    %c51 = arith.constant 51 : index
    %c0_40 = arith.constant 0 : index
    %35 = vector.load %arg5[%c51, %c0_40] : memref<147x1024xf32, #tpu.memory_space<vmem>>, vector<3x1024xf32>
    tpu.vector_store %arg5[%c51, %c0_40], %34 {strides = array<i32>} : memref<147x1024xf32, #tpu.memory_space<vmem>>, vector<3x1024xf32>,
    %c0_41 = arith.constant 0 : index
    %c68 = arith.constant 68 : index
    %36 = vector.load %arg1[%c0_41, %c68] : memref<3x1280xf32, #tpu.memory_space<vmem>>, vector<3x1024xf32>
    %c54 = arith.constant 54 : index
    %c0_42 = arith.constant 0 : index
    %37 = vector.load %arg5[%c54, %c0_42] : memref<147x1024xf32, #tpu.memory_space<vmem>>, vector<3x1024xf32>
    tpu.vector_store %arg5[%c54, %c0_42], %36 {strides = array<i32>} : memref<147x1024xf32, #tpu.memory_space<vmem>>, vector<3x1024xf32>,
    %c0_43 = arith.constant 0 : index
    %c69 = arith.constant 69 : index
    %38 = vector.load %arg1[%c0_43, %c69] : memref<3x1280xf32, #tpu.memory_space<vmem>>, vector<3x1024xf32>
    %c57 = arith.constant 57 : index
    %c0_44 = arith.constant 0 : index
    %39 = vector.load %arg5[%c57, %c0_44] : memref<147x1024xf32, #tpu.memory_space<vmem>>, vector<3x1024xf32>
    tpu.vector_store %arg5[%c57, %c0_44], %38 {strides = array<i32>} : memref<147x1024xf32, #tpu.memory_space<vmem>>, vector<3x1024xf32>,
    %c0_45 = arith.constant 0 : index
    %c70 = arith.constant 70 : index
    %40 = vector.load %arg1[%c0_45, %c70] : memref<3x1280xf32, #tpu.memory_space<vmem>>, vector<3x1024xf32>
    %c60 = arith.constant 60 : index
    %c0_46 = arith.constant 0 : index
    %41 = vector.load %arg5[%c60, %c0_46] : memref<147x1024xf32, #tpu.memory_space<vmem>>, vector<3x1024xf32>
    tpu.vector_store %arg5[%c60, %c0_46], %40 {strides = array<i32>} : memref<147x1024xf32, #tpu.memory_space<vmem>>, vector<3x1024xf32>,
    %c0_47 = arith.constant 0 : index
    %c96 = arith.constant 96 : index
    %42 = vector.load %arg1[%c0_47, %c96] : memref<3x1280xf32, #tpu.memory_space<vmem>>, vector<3x1024xf32>
    %c63 = arith.constant 63 : index
    %c0_48 = arith.constant 0 : index
    %43 = vector.load %arg5[%c63, %c0_48] : memref<147x1024xf32, #tpu.memory_space<vmem>>, vector<3x1024xf32>
    tpu.vector_store %arg5[%c63, %c0_48], %42 {strides = array<i32>} : memref<147x1024xf32, #tpu.memory_space<vmem>>, vector<3x1024xf32>,
    %c0_49 = arith.constant 0 : index
    %c97 = arith.constant 97 : index
    %44 = vector.load %arg1[%c0_49, %c97] : memref<3x1280xf32, #tpu.memory_space<vmem>>, vector<3x1024xf32>
    %c66_50 = arith.constant 66 : index
    %c0_51 = arith.constant 0 : index
    %45 = vector.load %arg5[%c66_50, %c0_51] : memref<147x1024xf32, #tpu.memory_space<vmem>>, vector<3x1024xf32>
    tpu.vector_store %arg5[%c66_50, %c0_51], %44 {strides = array<i32>} : memref<147x1024xf32, #tpu.memory_space<vmem>>, vector<3x1024xf32>,
    %c0_52 = arith.constant 0 : index
    %c98 = arith.constant 98 : index
    %46 = vector.load %arg1[%c0_52, %c98] : memref<3x1280xf32, #tpu.memory_space<vmem>>, vector<3x1024xf32>
    %c69_53 = arith.constant 69 : index
    %c0_54 = arith.constant 0 : index
    %47 = vector.load %arg5[%c69_53, %c0_54] : memref<147x1024xf32, #tpu.memory_space<vmem>>, vector<3x1024xf32>
    tpu.vector_store %arg5[%c69_53, %c0_54], %46 {strides = array<i32>} : memref<147x1024xf32, #tpu.memory_space<vmem>>, vector<3x1024xf32>,
    %c0_55 = arith.constant 0 : index
    %c99 = arith.constant 99 : index
    %48 = vector.load %arg1[%c0_55, %c99] : memref<3x1280xf32, #tpu.memory_space<vmem>>, vector<3x1024xf32>
    %c72 = arith.constant 72 : index
    %c0_56 = arith.constant 0 : index
    %49 = vector.load %arg5[%c72, %c0_56] : memref<147x1024xf32, #tpu.memory_space<vmem>>, vector<3x1024xf32>
    tpu.vector_store %arg5[%c72, %c0_56], %48 {strides = array<i32>} : memref<147x1024xf32, #tpu.memory_space<vmem>>, vector<3x1024xf32>,
    %c0_57 = arith.constant 0 : index
    %c100 = arith.constant 100 : index
    %50 = vector.load %arg1[%c0_57, %c100] : memref<3x1280xf32, #tpu.memory_space<vmem>>, vector<3x1024xf32>
    %c75 = arith.constant 75 : index
    %c0_58 = arith.constant 0 : index
    %51 = vector.load %arg5[%c75, %c0_58] : memref<147x1024xf32, #tpu.memory_space<vmem>>, vector<3x1024xf32>
    tpu.vector_store %arg5[%c75, %c0_58], %50 {strides = array<i32>} : memref<147x1024xf32, #tpu.memory_space<vmem>>, vector<3x1024xf32>,
    %c0_59 = arith.constant 0 : index
    %c101 = arith.constant 101 : index
    %52 = vector.load %arg1[%c0_59, %c101] : memref<3x1280xf32, #tpu.memory_space<vmem>>, vector<3x1024xf32>
    %c78 = arith.constant 78 : index
    %c0_60 = arith.constant 0 : index
    %53 = vector.load %arg5[%c78, %c0_60] : memref<147x1024xf32, #tpu.memory_space<vmem>>, vector<3x1024xf32>
    tpu.vector_store %arg5[%c78, %c0_60], %52 {strides = array<i32>} : memref<147x1024xf32, #tpu.memory_space<vmem>>, vector<3x1024xf32>,
    %c0_61 = arith.constant 0 : index
    %c102 = arith.constant 102 : index
    %54 = vector.load %arg1[%c0_61, %c102] : memref<3x1280xf32, #tpu.memory_space<vmem>>, vector<3x1024xf32>
    %c81 = arith.constant 81 : index
    %c0_62 = arith.constant 0 : index
    %55 = vector.load %arg5[%c81, %c0_62] : memref<147x1024xf32, #tpu.memory_space<vmem>>, vector<3x1024xf32>
    tpu.vector_store %arg5[%c81, %c0_62], %54 {strides = array<i32>} : memref<147x1024xf32, #tpu.memory_space<vmem>>, vector<3x1024xf32>,
    %c0_63 = arith.constant 0 : index
    %c128 = arith.constant 128 : index
    %56 = vector.load %arg1[%c0_63, %c128] : memref<3x1280xf32, #tpu.memory_space<vmem>>, vector<3x1024xf32>
    %c84 = arith.constant 84 : index
    %c0_64 = arith.constant 0 : index
    %57 = vector.load %arg5[%c84, %c0_64] : memref<147x1024xf32, #tpu.memory_space<vmem>>, vector<3x1024xf32>
    tpu.vector_store %arg5[%c84, %c0_64], %56 {strides = array<i32>} : memref<147x1024xf32, #tpu.memory_space<vmem>>, vector<3x1024xf32>,
    %c0_65 = arith.constant 0 : index
    %c129 = arith.constant 129 : index
    %58 = vector.load %arg1[%c0_65, %c129] : memref<3x1280xf32, #tpu.memory_space<vmem>>, vector<3x1024xf32>
    %c87 = arith.constant 87 : index
    %c0_66 = arith.constant 0 : index
    %59 = vector.load %arg5[%c87, %c0_66] : memref<147x1024xf32, #tpu.memory_space<vmem>>, vector<3x1024xf32>
    tpu.vector_store %arg5[%c87, %c0_66], %58 {strides = array<i32>} : memref<147x1024xf32, #tpu.memory_space<vmem>>, vector<3x1024xf32>,
    %c0_67 = arith.constant 0 : index
    %c130 = arith.constant 130 : index
    %60 = vector.load %arg1[%c0_67, %c130] : memref<3x1280xf32, #tpu.memory_space<vmem>>, vector<3x1024xf32>
    %c90 = arith.constant 90 : index
    %c0_68 = arith.constant 0 : index
    %61 = vector.load %arg5[%c90, %c0_68] : memref<147x1024xf32, #tpu.memory_space<vmem>>, vector<3x1024xf32>
    tpu.vector_store %arg5[%c90, %c0_68], %60 {strides = array<i32>} : memref<147x1024xf32, #tpu.memory_space<vmem>>, vector<3x1024xf32>,
    %c0_69 = arith.constant 0 : index
    %c131 = arith.constant 131 : index
    %62 = vector.load %arg1[%c0_69, %c131] : memref<3x1280xf32, #tpu.memory_space<vmem>>, vector<3x1024xf32>
    %c93 = arith.constant 93 : index
    %c0_70 = arith.constant 0 : index
    %63 = vector.load %arg5[%c93, %c0_70] : memref<147x1024xf32, #tpu.memory_space<vmem>>, vector<3x1024xf32>
    tpu.vector_store %arg5[%c93, %c0_70], %62 {strides = array<i32>} : memref<147x1024xf32, #tpu.memory_space<vmem>>, vector<3x1024xf32>,
    %c0_71 = arith.constant 0 : index
    %c132 = arith.constant 132 : index
    %64 = vector.load %arg1[%c0_71, %c132] : memref<3x1280xf32, #tpu.memory_space<vmem>>, vector<3x1024xf32>
    %c96_72 = arith.constant 96 : index
    %c0_73 = arith.constant 0 : index
    %65 = vector.load %arg5[%c96_72, %c0_73] : memref<147x1024xf32, #tpu.memory_space<vmem>>, vector<3x1024xf32>
    tpu.vector_store %arg5[%c96_72, %c0_73], %64 {strides = array<i32>} : memref<147x1024xf32, #tpu.memory_space<vmem>>, vector<3x1024xf32>,
    %c0_74 = arith.constant 0 : index
    %c133 = arith.constant 133 : index
    %66 = vector.load %arg1[%c0_74, %c133] : memref<3x1280xf32, #tpu.memory_space<vmem>>, vector<3x1024xf32>
    %c99_75 = arith.constant 99 : index
    %c0_76 = arith.constant 0 : index
    %67 = vector.load %arg5[%c99_75, %c0_76] : memref<147x1024xf32, #tpu.memory_space<vmem>>, vector<3x1024xf32>
    tpu.vector_store %arg5[%c99_75, %c0_76], %66 {strides = array<i32>} : memref<147x1024xf32, #tpu.memory_space<vmem>>, vector<3x1024xf32>,
    %c0_77 = arith.constant 0 : index
    %c134 = arith.constant 134 : index
    %68 = vector.load %arg1[%c0_77, %c134] : memref<3x1280xf32, #tpu.memory_space<vmem>>, vector<3x1024xf32>
    %c102_78 = arith.constant 102 : index
    %c0_79 = arith.constant 0 : index
    %69 = vector.load %arg5[%c102_78, %c0_79] : memref<147x1024xf32, #tpu.memory_space<vmem>>, vector<3x1024xf32>
    tpu.vector_store %arg5[%c102_78, %c0_79], %68 {strides = array<i32>} : memref<147x1024xf32, #tpu.memory_space<vmem>>, vector<3x1024xf32>,
    %c0_80 = arith.constant 0 : index
    %c160 = arith.constant 160 : index
    %70 = vector.load %arg1[%c0_80, %c160] : memref<3x1280xf32, #tpu.memory_space<vmem>>, vector<3x1024xf32>
    %c105 = arith.constant 105 : index
    %c0_81 = arith.constant 0 : index
    %71 = vector.load %arg5[%c105, %c0_81] : memref<147x1024xf32, #tpu.memory_space<vmem>>, vector<3x1024xf32>
    tpu.vector_store %arg5[%c105, %c0_81], %70 {strides = array<i32>} : memref<147x1024xf32, #tpu.memory_space<vmem>>, vector<3x1024xf32>,
    %c0_82 = arith.constant 0 : index
    %c161 = arith.constant 161 : index
    %72 = vector.load %arg1[%c0_82, %c161] : memref<3x1280xf32, #tpu.memory_space<vmem>>, vector<3x1024xf32>
    %c108 = arith.constant 108 : index
    %c0_83 = arith.constant 0 : index
    %73 = vector.load %arg5[%c108, %c0_83] : memref<147x1024xf32, #tpu.memory_space<vmem>>, vector<3x1024xf32>
    tpu.vector_store %arg5[%c108, %c0_83], %72 {strides = array<i32>} : memref<147x1024xf32, #tpu.memory_space<vmem>>, vector<3x1024xf32>,
    %c0_84 = arith.constant 0 : index
    %c162 = arith.constant 162 : index
    %74 = vector.load %arg1[%c0_84, %c162] : memref<3x1280xf32, #tpu.memory_space<vmem>>, vector<3x1024xf32>
    %c111 = arith.constant 111 : index
    %c0_85 = arith.constant 0 : index
    %75 = vector.load %arg5[%c111, %c0_85] : memref<147x1024xf32, #tpu.memory_space<vmem>>, vector<3x1024xf32>
    tpu.vector_store %arg5[%c111, %c0_85], %74 {strides = array<i32>} : memref<147x1024xf32, #tpu.memory_space<vmem>>, vector<3x1024xf32>,
    %c0_86 = arith.constant 0 : index
    %c163 = arith.constant 163 : index
    %76 = vector.load %arg1[%c0_86, %c163] : memref<3x1280xf32, #tpu.memory_space<vmem>>, vector<3x1024xf32>
    %c114 = arith.constant 114 : index
    %c0_87 = arith.constant 0 : index
    %77 = vector.load %arg5[%c114, %c0_87] : memref<147x1024xf32, #tpu.memory_space<vmem>>, vector<3x1024xf32>
    tpu.vector_store %arg5[%c114, %c0_87], %76 {strides = array<i32>} : memref<147x1024xf32, #tpu.memory_space<vmem>>, vector<3x1024xf32>,
    %c0_88 = arith.constant 0 : index
    %c164 = arith.constant 164 : index
    %78 = vector.load %arg1[%c0_88, %c164] : memref<3x1280xf32, #tpu.memory_space<vmem>>, vector<3x1024xf32>
    %c117 = arith.constant 117 : index
    %c0_89 = arith.constant 0 : index
    %79 = vector.load %arg5[%c117, %c0_89] : memref<147x1024xf32, #tpu.memory_space<vmem>>, vector<3x1024xf32>
    tpu.vector_store %arg5[%c117, %c0_89], %78 {strides = array<i32>} : memref<147x1024xf32, #tpu.memory_space<vmem>>, vector<3x1024xf32>,
    %c0_90 = arith.constant 0 : index
    %c165 = arith.constant 165 : index
    %80 = vector.load %arg1[%c0_90, %c165] : memref<3x1280xf32, #tpu.memory_space<vmem>>, vector<3x1024xf32>
    %c120 = arith.constant 120 : index
    %c0_91 = arith.constant 0 : index
    %81 = vector.load %arg5[%c120, %c0_91] : memref<147x1024xf32, #tpu.memory_space<vmem>>, vector<3x1024xf32>
    tpu.vector_store %arg5[%c120, %c0_91], %80 {strides = array<i32>} : memref<147x1024xf32, #tpu.memory_space<vmem>>, vector<3x1024xf32>,
    %c0_92 = arith.constant 0 : index
    %c166 = arith.constant 166 : index
    %82 = vector.load %arg1[%c0_92, %c166] : memref<3x1280xf32, #tpu.memory_space<vmem>>, vector<3x1024xf32>
    %c123 = arith.constant 123 : index
    %c0_93 = arith.constant 0 : index
    %83 = vector.load %arg5[%c123, %c0_93] : memref<147x1024xf32, #tpu.memory_space<vmem>>, vector<3x1024xf32>
    tpu.vector_store %arg5[%c123, %c0_93], %82 {strides = array<i32>} : memref<147x1024xf32, #tpu.memory_space<vmem>>, vector<3x1024xf32>,
    %c0_94 = arith.constant 0 : index
    %c192 = arith.constant 192 : index
    %84 = vector.load %arg1[%c0_94, %c192] : memref<3x1280xf32, #tpu.memory_space<vmem>>, vector<3x1024xf32>
    %c126 = arith.constant 126 : index
    %c0_95 = arith.constant 0 : index
    %85 = vector.load %arg5[%c126, %c0_95] : memref<147x1024xf32, #tpu.memory_space<vmem>>, vector<3x1024xf32>
    tpu.vector_store %arg5[%c126, %c0_95], %84 {strides = array<i32>} : memref<147x1024xf32, #tpu.memory_space<vmem>>, vector<3x1024xf32>,
    %c0_96 = arith.constant 0 : index
    %c193 = arith.constant 193 : index
    %86 = vector.load %arg1[%c0_96, %c193] : memref<3x1280xf32, #tpu.memory_space<vmem>>, vector<3x1024xf32>
    %c129_97 = arith.constant 129 : index
    %c0_98 = arith.constant 0 : index
    %87 = vector.load %arg5[%c129_97, %c0_98] : memref<147x1024xf32, #tpu.memory_space<vmem>>, vector<3x1024xf32>
    tpu.vector_store %arg5[%c129_97, %c0_98], %86 {strides = array<i32>} : memref<147x1024xf32, #tpu.memory_space<vmem>>, vector<3x1024xf32>,
    %c0_99 = arith.constant 0 : index
    %c194 = arith.constant 194 : index
    %88 = vector.load %arg1[%c0_99, %c194] : memref<3x1280xf32, #tpu.memory_space<vmem>>, vector<3x1024xf32>
    %c132_100 = arith.constant 132 : index
    %c0_101 = arith.constant 0 : index
    %89 = vector.load %arg5[%c132_100, %c0_101] : memref<147x1024xf32, #tpu.memory_space<vmem>>, vector<3x1024xf32>
    tpu.vector_store %arg5[%c132_100, %c0_101], %88 {strides = array<i32>} : memref<147x1024xf32, #tpu.memory_space<vmem>>, vector<3x1024xf32>,
    %c0_102 = arith.constant 0 : index
    %c195 = arith.constant 195 : index
    %90 = vector.load %arg1[%c0_102, %c195] : memref<3x1280xf32, #tpu.memory_space<vmem>>, vector<3x1024xf32>
    %c135 = arith.constant 135 : index
    %c0_103 = arith.constant 0 : index
    %91 = vector.load %arg5[%c135, %c0_103] : memref<147x1024xf32, #tpu.memory_space<vmem>>, vector<3x1024xf32>
    tpu.vector_store %arg5[%c135, %c0_103], %90 {strides = array<i32>} : memref<147x1024xf32, #tpu.memory_space<vmem>>, vector<3x1024xf32>,
    %c0_104 = arith.constant 0 : index
    %c196 = arith.constant 196 : index
    %92 = vector.load %arg1[%c0_104, %c196] : memref<3x1280xf32, #tpu.memory_space<vmem>>, vector<3x1024xf32>
    %c138 = arith.constant 138 : index
    %c0_105 = arith.constant 0 : index
    %93 = vector.load %arg5[%c138, %c0_105] : memref<147x1024xf32, #tpu.memory_space<vmem>>, vector<3x1024xf32>
    tpu.vector_store %arg5[%c138, %c0_105], %92 {strides = array<i32>} : memref<147x1024xf32, #tpu.memory_space<vmem>>, vector<3x1024xf32>,
    %c0_106 = arith.constant 0 : index
    %c197 = arith.constant 197 : index
    %94 = vector.load %arg1[%c0_106, %c197] : memref<3x1280xf32, #tpu.memory_space<vmem>>, vector<3x1024xf32>
    %c141 = arith.constant 141 : index
    %c0_107 = arith.constant 0 : index
    %95 = vector.load %arg5[%c141, %c0_107] : memref<147x1024xf32, #tpu.memory_space<vmem>>, vector<3x1024xf32>
    tpu.vector_store %arg5[%c141, %c0_107], %94 {strides = array<i32>} : memref<147x1024xf32, #tpu.memory_space<vmem>>, vector<3x1024xf32>,
    %c0_108 = arith.constant 0 : index
    %c198 = arith.constant 198 : index
    %96 = vector.load %arg1[%c0_108, %c198] : memref<3x1280xf32, #tpu.memory_space<vmem>>, vector<3x1024xf32>
    %c144 = arith.constant 144 : index
    %c0_109 = arith.constant 0 : index
    %97 = vector.load %arg5[%c144, %c0_109] : memref<147x1024xf32, #tpu.memory_space<vmem>>, vector<3x1024xf32>
    tpu.vector_store %arg5[%c144, %c0_109], %96 {strides = array<i32>} : memref<147x1024xf32, #tpu.memory_space<vmem>>, vector<3x1024xf32>,
    %c0_110 = arith.constant 0 : index
    %c0_111 = arith.constant 0 : index
    %98 = vector.load %arg2[%c0_110, %c0_111] : memref<32x147xf32, #tpu.memory_space<vmem>>, vector<32x147xf32>
    %c0_112 = arith.constant 0 : index
    %c0_113 = arith.constant 0 : index
    %99 = vector.load %arg5[%c0_112, %c0_113] : memref<147x1024xf32, #tpu.memory_space<vmem>>, vector<147x1024xf32>
    %cst = arith.constant dense<0.000000e+00> : vector<32x1024xf32>
    %100 = tpu.matmul %98, %99, %cst {dimension_numbers = #tpu.dot_dimension_numbers<[1], [0], [0], [1], [0, 0, 1, 1], [], []>} : vector<32x147xf32>, vector<147x1024xf32>, vector<32x1024xf32> -> vector<32x1024xf32>
    %c0_114 = arith.constant 0 : index
    %c0_115 = arith.constant 0 : index
    %101 = vector.load %arg3[%c0_114, %c0_115] : memref<32x1xf32, #tpu.memory_space<vmem>>, vector<32x1xf32>
    %102 = vector.broadcast %101 : vector<32x1xf32> to vector<32x1024xf32>
    %103 = arith.addf %100, %102 : vector<32x1024xf32>
    %104 = vector.extract_strided_slice %103 {offsets = [0, 0], sizes = [32, 928], strides = [1, 1]} : vector<32x1024xf32> to vector<32x928xf32>
    %105 = vector.extract_strided_slice %103 {offsets = [0, 1], sizes = [32, 928], strides = [1, 1]} : vector<32x1024xf32> to vector<32x928xf32>
    %106 = arith.maximumf %104, %105 : vector<32x928xf32>
    %107 = vector.extract_strided_slice %106 {offsets = [0, 0], sizes = [32, 896], strides = [1, 1]} : vector<32x928xf32> to vector<32x896xf32>
    %108 = vector.extract_strided_slice %106 {offsets = [0, 32], sizes = [32, 896], strides = [1, 1]} : vector<32x928xf32> to vector<32x896xf32>
    %109 = arith.maximumf %107, %108 : vector<32x896xf32>
    %cst_116 = arith.constant 0.000000e+00 : f32
    %110 = vector.broadcast %cst_116 : f32 to vector<32x896xf32>
    %111 = arith.maximumf %109, %110 : vector<32x896xf32>
    %c0_117 = arith.constant 0 : index
    %c0_118 = arith.constant 0 : index
    %112 = vector.load %arg4[%c0_117, %c0_118] : memref<32x1024xf32, #tpu.memory_space<vmem>>, vector<32x896xf32>
    tpu.vector_store %arg4[%c0_117, %c0_118], %111 {strides = array<i32>} : memref<32x1024xf32, #tpu.memory_space<vmem>>, vector<32x896xf32>,
    %cst_119 = arith.constant 0.000000e+00 : f32
    %113 = vector.broadcast %cst_119 : f32 to vector<32x128xf32>
    %c0_120 = arith.constant 0 : index
    %c896 = arith.constant 896 : index
    %114 = vector.load %arg4[%c0_120, %c896] : memref<32x1024xf32, #tpu.memory_space<vmem>>, vector<32x128xf32>
    tpu.vector_store %arg4[%c0_120, %c896], %113 {strides = array<i32>} : memref<32x1024xf32, #tpu.memory_space<vmem>>, vector<32x128xf32>,
    return
  }
  func.func @transform_0(%arg0: i32) -> (i32, i32) {
    %c0_i32 = arith.constant 0 : i32
    %c0_i32_0 = arith.constant 0 : i32
    return %c0_i32, %arg0 : i32, i32
  }
  func.func @transform_1(%arg0: i32) -> (i32, i32) {
    %c0_i32 = arith.constant 0 : i32
    %c0_i32_0 = arith.constant 0 : i32
    %c0_i32_1 = arith.constant 0 : i32
    return %c0_i32, %c0_i32_0 : i32, i32
  }
  func.func @transform_2(%arg0: i32) -> (i32, i32) {
    %c0_i32 = arith.constant 0 : i32
    %c0_i32_0 = arith.constant 0 : i32
    %c0_i32_1 = arith.constant 0 : i32
    return %c0_i32, %c0_i32_0 : i32, i32
  }
  func.func @transform_3(%arg0: i32) -> (i32, i32) {
    %c0_i32 = arith.constant 0 : i32
    %c0_i32_0 = arith.constant 0 : i32
    return %c0_i32, %arg0 : i32, i32
  }
}

module attributes {stable_mosaic.version = 11 : i64} {
  func.func @linear_kernel(%arg0: i32, %arg1: memref<2x5408xf32, #tpu.memory_space<vmem>>, %arg2: memref<10x5408xf32, #tpu.memory_space<vmem>>, %arg3: memref<1x10xf32, #tpu.memory_space<vmem>>, %arg4: memref<2x10xf32, #tpu.memory_space<vmem>>) attributes {dimension_semantics = [#tpu.dimension_semantics<arbitrary>], iteration_bounds = array<i64: 1>, scalar_prefetch = 0 : i64, scratch_operands = 0 : i64, tpu.core_type = #tpu.core_type<tc>, window_params = [{pipeline_mode = #tpu.pipeline_mode<synchronous>, transform_indices = @transform_0, window_bounds = array<i64: 2, 5408>}, {pipeline_mode = #tpu.pipeline_mode<synchronous>, transform_indices = @transform_1, window_bounds = array<i64: 10, 5408>}, {pipeline_mode = #tpu.pipeline_mode<synchronous>, transform_indices = @transform_2, window_bounds = array<i64: 1, 10>}, {pipeline_mode = #tpu.pipeline_mode<synchronous>, transform_indices = @transform_3, window_bounds = array<i64: 2, 10>}]} {
    %c0 = arith.constant 0 : index
    %c0_0 = arith.constant 0 : index
    %0 = vector.load %arg1[%c0, %c0_0] : memref<2x5408xf32, #tpu.memory_space<vmem>>, vector<2x5408xf32>
    %c0_1 = arith.constant 0 : index
    %c0_2 = arith.constant 0 : index
    %1 = vector.load %arg2[%c0_1, %c0_2] : memref<10x5408xf32, #tpu.memory_space<vmem>>, vector<10x5408xf32>
    %cst = arith.constant dense<0.000000e+00> : vector<2x10xf32>
    %2 = tpu.matmul %0, %1, %cst {dimension_numbers = #tpu.dot_dimension_numbers<[1], [1], [0], [0], [0, 0, 1, 0], [], []>} : vector<2x5408xf32>, vector<10x5408xf32>, vector<2x10xf32> -> vector<2x10xf32>
    %c0_3 = arith.constant 0 : index
    %c0_4 = arith.constant 0 : index
    %3 = vector.load %arg3[%c0_3, %c0_4] : memref<1x10xf32, #tpu.memory_space<vmem>>, vector<1x10xf32>
    %4 = vector.broadcast %3 : vector<1x10xf32> to vector<2x10xf32>
    %5 = arith.addf %2, %4 : vector<2x10xf32>
    %c0_5 = arith.constant 0 : index
    %c0_6 = arith.constant 0 : index
    %6 = vector.load %arg4[%c0_5, %c0_6] : memref<2x10xf32, #tpu.memory_space<vmem>>, vector<2x10xf32>
    tpu.vector_store %arg4[%c0_5, %c0_6], %5 {strides = array<i32>} : memref<2x10xf32, #tpu.memory_space<vmem>>, vector<2x10xf32>,
    return
  }
  func.func @transform_0(%arg0: i32) -> (i32, i32) {
    %c0_i32 = arith.constant 0 : i32
    %c0_i32_0 = arith.constant 0 : i32
    %c0_i32_1 = arith.constant 0 : i32
    return %c0_i32, %c0_i32_0 : i32, i32
  }
  func.func @transform_1(%arg0: i32) -> (i32, i32) {
    %c0_i32 = arith.constant 0 : i32
    %c0_i32_0 = arith.constant 0 : i32
    %c0_i32_1 = arith.constant 0 : i32
    return %c0_i32, %c0_i32_0 : i32, i32
  }
  func.func @transform_2(%arg0: i32) -> (i32, i32) {
    %c0_i32 = arith.constant 0 : i32
    %c0_i32_0 = arith.constant 0 : i32
    %c0_i32_1 = arith.constant 0 : i32
    return %c0_i32, %c0_i32_0 : i32, i32
  }
  func.func @transform_3(%arg0: i32) -> (i32, i32) {
    %c0_i32 = arith.constant 0 : i32
    %c0_i32_0 = arith.constant 0 : i32
    %c0_i32_1 = arith.constant 0 : i32
    return %c0_i32, %c0_i32_0 : i32, i32
  }
}

</mosaic_0001>

<llo_original>
// kernel: vanilla_cnn_forward.3
$region0: #{vanilla_cnn_forward.3}
  #allocation0 [shape = 'u32[]', space=smem, size = 0x4, offset = 0x4, fixed_abs, tag = 'smem constant byte address 0x4 - core index']
  #allocation1 [shape = 'u32[144,128]{1,0:T(1,128)}', space=vmem, size = 0x12000, scoped, tag = 'internal scratch']
  %s0 = inlined_call_operand.vmem [shape: f32[2,5408], index: 0, kind: input, shape index: {}]
  %s1 = inlined_call_operand.vmem [shape: f32[10,5408], index: 1, kind: input, shape index: {}]
  %s2 = inlined_call_operand.vmem [shape: f32[1,10], index: 2, kind: input, shape index: {}]
  %s3 = inlined_call_operand.hbm [shape: f32[2,10], index: 3, kind: output, shape index: {}]
  %s4 = sld [smem:[#allocation0]]
  $region22: #{vanilla_cnn_forward.3} parent=0
    _
  %s6 = ssub.s32 1, %s4
  %s7 = scalar_select 0, %s6, %s4
  $region1: #{vanilla_cnn_forward.3} parent=0
    #allocation2 [shape = 'u8[1024]{0}', space=vmem, size = 0x400, scoped, tag = 'output window, operand 0, single buffered']
    #allocation3 [shape = 's32[1]{0}', space=sflag, size = 0x4, scoped, tag = 'scoped memory for vanilla_cnn_forward.3']
    %8 = vsyncpa [#allocation3], 0
    // Predicated region
    $region2: #{vanilla_cnn_forward.3} parent=1 // pred_check
      _
    $region3: #{vanilla_cnn_forward.3} parent=1 // pred_check_branch
      %10 = sbr.rel (0) target = $region5
    $region4: #{vanilla_cnn_forward.3} parent=1 // pred_region
      _
    $region5: #{vanilla_cnn_forward.3} parent=1 // pred_fallthru
      _
    // Predicated region
    $region6: #{vanilla_cnn_forward.3} parent=1 // pred_check
      _
    $region7: #{vanilla_cnn_forward.3} parent=1 // pred_check_branch
      %12 = sbr.rel (0) target = $region9
    $region8: #{vanilla_cnn_forward.3} parent=1 // pred_region
      _
    $region9: #{vanilla_cnn_forward.3} parent=1 // pred_fallthru
      _
    // Predicated region
    $region10: #{vanilla_cnn_forward.3} parent=1 // pred_check
      _
    $region11: #{vanilla_cnn_forward.3} parent=1 // pred_check_branch
      %14 = sbr.rel (0) target = $region13
    $region12: #{vanilla_cnn_forward.3} parent=1 // pred_region
      _
    $region13: #{vanilla_cnn_forward.3} parent=1 // pred_fallthru
      _
    %v15 = vld [vmem:[%s0] sm:$0xff]
    %v16 = vld [vmem:[%s0 + $0x8] sm:$0xff]
    %v17 = vld [vmem:[%s0 + $0x10] sm:$0xff]
    %v18 = vld [vmem:[%s0 + $0x18] sm:$0xff]
    %v19 = vld [vmem:[%s0 + $0x20] sm:$0xff]
    %v20 = vld [vmem:[%s0 + $0x28] sm:$0xff]
    %v21 = vld [vmem:[%s0 + $0x30] sm:$0xff]
    %v22 = vld [vmem:[%s0 + $0x38] sm:$0xff]
    %v23 = vld [vmem:[%s0 + $0x40] sm:$0xff]
    %v24 = vld [vmem:[%s0 + $0x48] sm:$0xff]
    %v25 = vld [vmem:[%s0 + $0x50] sm:$0x3f]
    %v26 = vld [vmem:[%s1] sm:$0xff]
    %v27 = vld [vmem:[%s1 + $0x8] sm:$0xff]
    %v28 = vld [vmem:[%s1 + $0x10] sm:$0xff]
    %v29 = vld [vmem:[%s1 + $0x18] sm:$0xff]
    %v30 = vld [vmem:[%s1 + $0x20] sm:$0xff]
    %v31 = vld [vmem:[%s1 + $0x28] sm:$0xff]
    %v32 = vld [vmem:[%s1 + $0x30] sm:$0xff]
    %v33 = vld [vmem:[%s1 + $0x38] sm:$0xff]
    %v34 = vld [vmem:[%s1 + $0x40] sm:$0xff]
    %v35 = vld [vmem:[%s1 + $0x48] sm:$0xff]
    %v36 = vld [vmem:[%s1 + $0x50] sm:$0xff]
    %v37 = vld [vmem:[%s1 + $0x58] sm:$0xff]
    %v38 = vld [vmem:[%s1 + $0x60] sm:$0xff]
    %v39 = vld [vmem:[%s1 + $0x68] sm:$0xff]
    %v40 = vld [vmem:[%s1 + $0x70] sm:$0xff]
    %v41 = vld [vmem:[%s1 + $0x78] sm:$0xff]
    %v42 = vld [vmem:[%s1 + $0x80] sm:$0xff]
    %v43 = vld [vmem:[%s1 + $0x88] sm:$0xff]
    %v44 = vld [vmem:[%s1 + $0x90] sm:$0xff]
    %v45 = vld [vmem:[%s1 + $0x98] sm:$0xff]
    %v46 = vld [vmem:[%s1 + $0xa0] sm:$0xff]
    %v47 = vld [vmem:[%s1 + $0xa8] sm:$0xff]
    %v48 = vld [vmem:[%s1 + $0xb0] sm:$0xff]
    %v49 = vld [vmem:[%s1 + $0xb8] sm:$0xff]
    %v50 = vld [vmem:[%s1 + $0xc0] sm:$0xff]
    %v51 = vld [vmem:[%s1 + $0xc8] sm:$0xff]
    %v52 = vld [vmem:[%s1 + $0xd0] sm:$0xff]
    %v53 = vld [vmem:[%s1 + $0xd8] sm:$0xff]
    %v54 = vld [vmem:[%s1 + $0xe0] sm:$0xff]
    %v55 = vld [vmem:[%s1 + $0xe8] sm:$0xff]
    %v56 = vld [vmem:[%s1 + $0xf0] sm:$0xff]
    %v57 = vld [vmem:[%s1 + $0xf8] sm:$0xff]
    %v58 = vld [vmem:[%s1 + $0x100] sm:$0xff]
    %v59 = vld [vmem:[%s1 + $0x108] sm:$0xff]
    %v60 = vld [vmem:[%s1 + $0x110] sm:$0xff]
    %v61 = vld [vmem:[%s1 + $0x118] sm:$0xff]
    %v62 = vld [vmem:[%s1 + $0x120] sm:$0xff]
    %v63 = vld [vmem:[%s1 + $0x128] sm:$0xff]
    %v64 = vld [vmem:[%s1 + $0x130] sm:$0xff]
    %v65 = vld [vmem:[%s1 + $0x138] sm:$0xff]
    %v66 = vld [vmem:[%s1 + $0x140] sm:$0xff]
    %v67 = vld [vmem:[%s1 + $0x148] sm:$0xff]
    %v68 = vld [vmem:[%s1 + $0x150] sm:$0xff]
    %v69 = vld [vmem:[%s1 + $0x158] sm:$0x3]
    %v70 = vld [vmem:[%s1 + $0x160] sm:$0x3]
    %v71 = vld [vmem:[%s1 + $0x168] sm:$0x3]
    %v72 = vld [vmem:[%s1 + $0x170] sm:$0x3]
    %v73 = vld [vmem:[%s1 + $0x178] sm:$0x3]
    %v74 = vld [vmem:[%s1 + $0x180] sm:$0x3]
    %v75 = vld [vmem:[%s1 + $0x188] sm:$0x3]
    %v76 = vld [vmem:[%s1 + $0x190] sm:$0x3]
    %v77 = vld [vmem:[%s1 + $0x198] sm:$0x3]
    %v78 = vld [vmem:[%s1 + $0x1a0] sm:$0x3]
    %v79 = vld [vmem:[%s1 + $0x1a8] sm:$0x3]
    %v80 = vld [vmem:[%s1 + $0x1b0] sm:$0x3]
    %v81 = vld [vmem:[%s1 + $0x1b8] sm:$0x3]
    %v82 = vld [vmem:[%s1 + $0x1c0] sm:$0x3]
    %v83 = vld [vmem:[%s1 + $0x1c8] sm:$0x3]
    %v84 = vld [vmem:[%s1 + $0x1d0] sm:$0x3]
    %v85 = vld [vmem:[%s1 + $0x1d8] sm:$0x3]
    %v86 = vld [vmem:[%s1 + $0x1e0] sm:$0x3]
    %v87 = vld [vmem:[%s1 + $0x1e8] sm:$0x3]
    %v88 = vld [vmem:[%s1 + $0x1f0] sm:$0x3]
    %v89 = vld [vmem:[%s1 + $0x1f8] sm:$0x3]
    %v90 = vld [vmem:[%s1 + $0x200] sm:$0x3]
    %v91 = vld [vmem:[%s1 + $0x208] sm:$0x3]
    %v92 = vld [vmem:[%s1 + $0x210] sm:$0x3]
    %v93 = vld [vmem:[%s1 + $0x218] sm:$0x3]
    %v94 = vld [vmem:[%s1 + $0x220] sm:$0x3]
    %v95 = vld [vmem:[%s1 + $0x228] sm:$0x3]
    %v96 = vld [vmem:[%s1 + $0x230] sm:$0x3]
    %v97 = vld [vmem:[%s1 + $0x238] sm:$0x3]
    %v98 = vld [vmem:[%s1 + $0x240] sm:$0x3]
    %v99 = vld [vmem:[%s1 + $0x248] sm:$0x3]
    %v100 = vld [vmem:[%s1 + $0x250] sm:$0x3]
    %v101 = vld [vmem:[%s1 + $0x258] sm:$0x3]
    %v102 = vld [vmem:[%s1 + $0x260] sm:$0x3]
    %v103 = vld [vmem:[%s1 + $0x268] sm:$0x3]
    %v104 = vld [vmem:[%s1 + $0x270] sm:$0x3]
    %v105 = vld [vmem:[%s1 + $0x278] sm:$0x3]
    %v106 = vld [vmem:[%s1 + $0x280] sm:$0x3]
    %v107 = vld [vmem:[%s1 + $0x288] sm:$0x3]
    %v108 = vld [vmem:[%s1 + $0x290] sm:$0x3]
    %v109 = vld [vmem:[%s1 + $0x298] sm:$0x3]
    %v110 = vld [vmem:[%s1 + $0x2a0] sm:$0x3]
    %v111 = vld [vmem:[%s1 + $0x2a8] sm:$0x3]
    %v112 = vld [vmem:[%s2] sm:$0x1]
    %v114 = vlaneseq
    %v115 = vshrl.u32 %v114, 7
    %v116 = vsub.s32 0, %v115
    %v117 = vrot.slane %v112, %v116
    %v130 = vcombine.high %v15, %v15
    %v132 = vunpack.c.l.s4 1983009808
    %v133 = vunpack.c.0.s8 %v132
    %v134 = vlaneseq
    %v135 = vshrl.u32 %v134, 7
    %v136 = vsub.s32 %v133, %v135
    %v137 = vrot.slane %v15, %v136
    %v139 = vunpack.c.l.s4 1983009808
    %v140 = vunpack.c.0.s8 %v139
    %v141 = vlaneseq
    %v142 = vshrl.u32 %v141, 7
    %v143 = vsub.s32 %v140, %v142
    %v144 = vrot.slane %v130, %v143
    %v145 = vcombine.high %v137, %v137
    %v146 = vcombine.high %v144, %v144
    %v147 = vcombine.high %v16, %v16
    %v149 = vunpack.c.l.s4 1983009808
    %v150 = vunpack.c.0.s8 %v149
    %v151 = vlaneseq
    %v152 = vshrl.u32 %v151, 7
    %v153 = vsub.s32 %v150, %v152
    %v154 = vrot.slane %v16, %v153
    %v156 = vunpack.c.l.s4 1983009808
    %v157 = vunpack.c.0.s8 %v156
    %v158 = vlaneseq
    %v159 = vshrl.u32 %v158, 7
    %v160 = vsub.s32 %v157, %v159
    %v161 = vrot.slane %v147, %v160
    %v162 = vcombine.high %v154, %v154
    %v163 = vcombine.high %v161, %v161
    %v164 = vcombine.high %v17, %v17
    %v166 = vunpack.c.l.s4 1983009808
    %v167 = vunpack.c.0.s8 %v166
    %v168 = vlaneseq
    %v169 = vshrl.u32 %v168, 7
    %v170 = vsub.s32 %v167, %v169
    %v171 = vrot.slane %v17, %v170
    %v173 = vunpack.c.l.s4 1983009808
    %v174 = vunpack.c.0.s8 %v173
    %v175 = vlaneseq
    %v176 = vshrl.u32 %v175, 7
    %v177 = vsub.s32 %v174, %v176
    %v178 = vrot.slane %v164, %v177
    %v179 = vcombine.high %v171, %v171
    %v180 = vcombine.high %v178, %v178
    %v181 = vcombine.high %v18, %v18
    %v183 = vunpack.c.l.s4 1983009808
    %v184 = vunpack.c.0.s8 %v183
    %v185 = vlaneseq
    %v186 = vshrl.u32 %v185, 7
    %v187 = vsub.s32 %v184, %v186
    %v188 = vrot.slane %v18, %v187
    %v190 = vunpack.c.l.s4 1983009808
    %v191 = vunpack.c.0.s8 %v190
    %v192 = vlaneseq
    %v193 = vshrl.u32 %v192, 7
    %v194 = vsub.s32 %v191, %v193
    %v195 = vrot.slane %v181, %v194
    %v196 = vcombine.high %v188, %v188
    %v197 = vcombine.high %v195, %v195
    %v198 = vcombine.high %v19, %v19
    %v200 = vunpack.c.l.s4 1983009808
    %v201 = vunpack.c.0.s8 %v200
    %v202 = vlaneseq
    %v203 = vshrl.u32 %v202, 7
    %v204 = vsub.s32 %v201, %v203
    %v205 = vrot.slane %v19, %v204
    %v207 = vunpack.c.l.s4 1983009808
    %v208 = vunpack.c.0.s8 %v207
    %v209 = vlaneseq
    %v210 = vshrl.u32 %v209, 7
    %v211 = vsub.s32 %v208, %v210
    %v212 = vrot.slane %v198, %v211
    %v213 = vcombine.high %v205, %v205
    %v214 = vcombine.high %v212, %v212
    %v215 = vcombine.high %v20, %v20
    %v217 = vunpack.c.l.s4 1983009808
    %v218 = vunpack.c.0.s8 %v217
    %v219 = vlaneseq
    %v220 = vshrl.u32 %v219, 7
    %v221 = vsub.s32 %v218, %v220
    %v222 = vrot.slane %v20, %v221
    %v224 = vunpack.c.l.s4 1983009808
    %v225 = vunpack.c.0.s8 %v224
    %v226 = vlaneseq
    %v227 = vshrl.u32 %v226, 7
    %v228 = vsub.s32 %v225, %v227
    %v229 = vrot.slane %v215, %v228
    %v230 = vcombine.high %v222, %v222
    %v231 = vcombine.high %v229, %v229
    %v232 = vcombine.high %v21, %v21
    %v234 = vunpack.c.l.s4 1983009808
    %v235 = vunpack.c.0.s8 %v234
    %v236 = vlaneseq
    %v237 = vshrl.u32 %v236, 7
    %v238 = vsub.s32 %v235, %v237
    %v239 = vrot.slane %v21, %v238
    %v241 = vunpack.c.l.s4 1983009808
    %v242 = vunpack.c.0.s8 %v241
    %v243 = vlaneseq
    %v244 = vshrl.u32 %v243, 7
    %v245 = vsub.s32 %v242, %v244
    %v246 = vrot.slane %v232, %v245
    %v247 = vcombine.high %v239, %v239
    %v248 = vcombine.high %v246, %v246
    %v249 = vcombine.high %v22, %v22
    %v251 = vunpack.c.l.s4 1983009808
    %v252 = vunpack.c.0.s8 %v251
    %v253 = vlaneseq
    %v254 = vshrl.u32 %v253, 7
    %v255 = vsub.s32 %v252, %v254
    %v256 = vrot.slane %v22, %v255
    %v258 = vunpack.c.l.s4 1983009808
    %v259 = vunpack.c.0.s8 %v258
    %v260 = vlaneseq
    %v261 = vshrl.u32 %v260, 7
    %v262 = vsub.s32 %v259, %v261
    %v263 = vrot.slane %v249, %v262
    %v264 = vcombine.high %v256, %v256
    %v265 = vcombine.high %v263, %v263
    %v266 = vcombine.high %v23, %v23
    %v268 = vunpack.c.l.s4 1983009808
    %v269 = vunpack.c.0.s8 %v268
    %v270 = vlaneseq
    %v271 = vshrl.u32 %v270, 7
    %v272 = vsub.s32 %v269, %v271
    %v273 = vrot.slane %v23, %v272
    %v275 = vunpack.c.l.s4 1983009808
    %v276 = vunpack.c.0.s8 %v275
    %v277 = vlaneseq
    %v278 = vshrl.u32 %v277, 7
    %v279 = vsub.s32 %v276, %v278
    %v280 = vrot.slane %v266, %v279
    %v281 = vcombine.high %v273, %v273
    %v282 = vcombine.high %v280, %v280
    %v283 = vcombine.high %v24, %v24
    %v285 = vunpack.c.l.s4 1983009808
    %v286 = vunpack.c.0.s8 %v285
    %v287 = vlaneseq
    %v288 = vshrl.u32 %v287, 7
    %v289 = vsub.s32 %v286, %v288
    %v290 = vrot.slane %v24, %v289
    %v292 = vunpack.c.l.s4 1983009808
    %v293 = vunpack.c.0.s8 %v292
    %v294 = vlaneseq
    %v295 = vshrl.u32 %v294, 7
    %v296 = vsub.s32 %v293, %v295
    %v297 = vrot.slane %v283, %v296
    %v298 = vcombine.high %v290, %v290
    %v299 = vcombine.high %v297, %v297
    %v300 = vcombine.high %v25, %v25
    %v302 = vunpack.c.l.s4 1983009808
    %v303 = vunpack.c.0.s8 %v302
    %v304 = vlaneseq
    %v305 = vshrl.u32 %v304, 7
    %v306 = vsub.s32 %v303, %v305
    %v307 = vrot.slane %v25, %v306
    %v309 = vunpack.c.l.s4 1983009808
    %v310 = vunpack.c.0.s8 %v309
    %v311 = vlaneseq
    %v312 = vshrl.u32 %v311, 7
    %v313 = vsub.s32 %v310, %v312
    %v314 = vrot.slane %v300, %v313
    %v315 = vcombine.high %v307, %v307
    %vm358 = vcmask 261120
    %v359 = vsel %vm358, %v314, 0
    %v362 = vsel %vm358, %v68, 0
    %v365 = vsel %vm358, %v111, 0
    %367 = vmatprep.subr.mxu0 %v27
    %368 = vmatpush1.xpose.msra.mxu0 %v26
    %369 = vmatprep.subr.mxu0 %v70
    %370 = vmatpush1.xpose.msra.mxu0 %v69
    %371 = vmatprep.subr.mxu0 0.0
    %372 = vmatpush1.xpose.msra.mxu0 0.0
    %373 = vmatprep.subr.mxu0 0.0
    %374 = vmatpush1.xpose.msra.mxu0 0.0
    %375 = vmatprep.subr.mxu0 0.0
    %376 = vmatpush1.xpose.msra.mxu0 0.0
    %377 = vmatprep.subr.mxu0 0.0
    %378 = vmatpush1.xpose.msra.mxu0 0.0
    %379 = vmatprep.subr.mxu0 0.0
    %380 = vmatpush1.xpose.msra.mxu0 0.0
    %381 = vmatprep.subr.mxu0 0.0
    %382 = vmatpush1.xpose.msra.mxu0 0.0
    %383 = vmatprep.subr.mxu0 0.0
    %384 = vmatpush1.xpose.msra.mxu0 0.0
    %385 = vmatprep.subr.mxu0 0.0
    %386 = vmatpush1.xpose.msra.mxu0 0.0
    %387 = vmatprep.subr.mxu0 0.0
    %388 = vmatpush1.xpose.msra.mxu0 0.0
    %389 = vmatprep.subr.mxu0 0.0
    %390 = vmatpush1.xpose.msra.mxu0 0.0
    %391 = vmatprep.subr.mxu0 0.0
    %392 = vmatpush1.xpose.msra.mxu0 0.0
    %393 = vmatprep.subr.mxu0 0.0
    %394 = vmatpush1.xpose.msra.mxu0 0.0
    %395 = vmatprep.subr.mxu0 0.0
    %396 = vmatpush1.xpose.msra.mxu0 0.0
    %397 = vmatprep.subr.mxu0 0.0
    %398 = vmatpush1.xpose.msra.mxu0 0.0
    %399 = vmatprep.subr.mxu0 0.0
    %400 = vmatpush1.xpose.msra.mxu0 0.0
    %401 = vmatprep.subr.mxu0 0.0
    %402 = vmatpush1.xpose.msra.mxu0 0.0
    %403 = vmatprep.subr.mxu0 0.0
    %404 = vmatpush1.xpose.msra.mxu0 0.0
    %405 = vmatprep.subr.mxu0 0.0
    %406 = vmatpush1.xpose.msra.mxu0 0.0
    %407 = vmatprep.subr.mxu0 0.0
    %408 = vmatpush1.xpose.msra.mxu0 0.0
    %409 = vmatprep.subr.mxu0 0.0
    %410 = vmatpush1.xpose.msra.mxu0 0.0
    %411 = vmatprep.subr.mxu0 0.0
    %412 = vmatpush1.xpose.msra.mxu0 0.0
    %413 = vmatprep.subr.mxu0 0.0
    %414 = vmatpush1.xpose.msra.mxu0 0.0
    %415 = vmatprep.subr.mxu0 0.0
    %416 = vmatpush1.xpose.msra.mxu0 0.0
    %417 = vmatprep.subr.mxu0 0.0
    %418 = vmatpush1.xpose.msra.mxu0 0.0
    %419 = vmatprep.subr.mxu0 0.0
    %420 = vmatpush1.xpose.msra.mxu0 0.0
    %421 = vmatprep.subr.mxu0 0.0
    %422 = vmatpush1.xpose.msra.mxu0 0.0
    %423 = vmatprep.subr.mxu0 0.0
    %424 = vmatpush1.xpose.msra.mxu0 0.0
    %425 = vmatprep.subr.mxu0 0.0
    %426 = vmatpush1.xpose.msra.mxu0 0.0
    %427 = vmatprep.subr.mxu0 0.0
    %428 = vmatpush1.xpose.msra.mxu0 0.0
    %429 = vmatprep.subr.mxu0 0.0
    %430 = vmatpush1.xpose.msra.mxu0 0.0
    %431 = vmatprep.mubr.f32.mxu0 %v145
    %432 = vmatmul.mubr.f32.gmra.mrb[0].mxu0 %v137
    %v433 = vpop.f32.mrb[0].mxu0
    %v434 = vadd.f32 %v117, %v433
    %v435 = vpop.f32.mrb[0].mxu0
    %436 = vdwg.mxu0
    %437 = vmatprep.subr.mxu0 %v29
    %438 = vmatpush1.xpose.msra.mxu0 %v28
    %439 = vmatprep.subr.mxu0 %v72
    %440 = vmatpush1.xpose.msra.mxu0 %v71
    %441 = vmatprep.subr.mxu0 0.0
    %442 = vmatpush1.xpose.msra.mxu0 0.0
    %443 = vmatprep.subr.mxu0 0.0
    %444 = vmatpush1.xpose.msra.mxu0 0.0
    %445 = vmatprep.subr.mxu0 0.0
    %446 = vmatpush1.xpose.msra.mxu0 0.0
    %447 = vmatprep.subr.mxu0 0.0
    %448 = vmatpush1.xpose.msra.mxu0 0.0
    %449 = vmatprep.subr.mxu0 0.0
    %450 = vmatpush1.xpose.msra.mxu0 0.0
    %451 = vmatprep.subr.mxu0 0.0
    %452 = vmatpush1.xpose.msra.mxu0 0.0
    %453 = vmatprep.subr.mxu0 0.0
    %454 = vmatpush1.xpose.msra.mxu0 0.0
    %455 = vmatprep.subr.mxu0 0.0
    %456 = vmatpush1.xpose.msra.mxu0 0.0
    %457 = vmatprep.subr.mxu0 0.0
    %458 = vmatpush1.xpose.msra.mxu0 0.0
    %459 = vmatprep.subr.mxu0 0.0
    %460 = vmatpush1.xpose.msra.mxu0 0.0
    %461 = vmatprep.subr.mxu0 0.0
    %462 = vmatpush1.xpose.msra.mxu0 0.0
    %463 = vmatprep.subr.mxu0 0.0
    %464 = vmatpush1.xpose.msra.mxu0 0.0
    %465 = vmatprep.subr.mxu0 0.0
    %466 = vmatpush1.xpose.msra.mxu0 0.0
    %467 = vmatprep.subr.mxu0 0.0
    %468 = vmatpush1.xpose.msra.mxu0 0.0
    %469 = vmatprep.subr.mxu0 0.0
    %470 = vmatpush1.xpose.msra.mxu0 0.0
    %471 = vmatprep.subr.mxu0 0.0
    %472 = vmatpush1.xpose.msra.mxu0 0.0
    %473 = vmatprep.subr.mxu0 0.0
    %474 = vmatpush1.xpose.msra.mxu0 0.0
    %475 = vmatprep.subr.mxu0 0.0
    %476 = vmatpush1.xpose.msra.mxu0 0.0
    %477 = vmatprep.subr.mxu0 0.0
    %478 = vmatpush1.xpose.msra.mxu0 0.0
    %479 = vmatprep.subr.mxu0 0.0
    %480 = vmatpush1.xpose.msra.mxu0 0.0
    %481 = vmatprep.subr.mxu0 0.0
    %482 = vmatpush1.xpose.msra.mxu0 0.0
    %483 = vmatprep.subr.mxu0 0.0
    %484 = vmatpush1.xpose.msra.mxu0 0.0
    %485 = vmatprep.subr.mxu0 0.0
    %486 = vmatpush1.xpose.msra.mxu0 0.0
    %487 = vmatprep.subr.mxu0 0.0
    %488 = vmatpush1.xpose.msra.mxu0 0.0
    %489 = vmatprep.subr.mxu0 0.0
    %490 = vmatpush1.xpose.msra.mxu0 0.0
    %491 = vmatprep.subr.mxu0 0.0
    %492 = vmatpush1.xpose.msra.mxu0 0.0
    %493 = vmatprep.subr.mxu0 0.0
    %494 = vmatpush1.xpose.msra.mxu0 0.0
    %495 = vmatprep.subr.mxu0 0.0
    %496 = vmatpush1.xpose.msra.mxu0 0.0
    %497 = vmatprep.subr.mxu0 0.0
    %498 = vmatpush1.xpose.msra.mxu0 0.0
    %499 = vmatprep.subr.mxu0 0.0
    %500 = vmatpush1.xpose.msra.mxu0 0.0
    %501 = vmatprep.mubr.f32.mxu0 %v146
    %502 = vmatmul.mubr.f32.gmra.mrb[0].mxu0 %v144
    %v503 = vpop.f32.mrb[0].mxu0
    %v504 = vadd.f32 %v434, %v503
    %v505 = vpop.f32.mrb[0].mxu0
    %506 = vdwg.mxu0
    %507 = vmatprep.subr.mxu0 %v31
    %508 = vmatpush1.xpose.msra.mxu0 %v30
    %509 = vmatprep.subr.mxu0 %v74
    %510 = vmatpush1.xpose.msra.mxu0 %v73
    %511 = vmatprep.subr.mxu0 0.0
    %512 = vmatpush1.xpose.msra.mxu0 0.0
    %513 = vmatprep.subr.mxu0 0.0
    %514 = vmatpush1.xpose.msra.mxu0 0.0
    %515 = vmatprep.subr.mxu0 0.0
    %516 = vmatpush1.xpose.msra.mxu0 0.0
    %517 = vmatprep.subr.mxu0 0.0
    %518 = vmatpush1.xpose.msra.mxu0 0.0
    %519 = vmatprep.subr.mxu0 0.0
    %520 = vmatpush1.xpose.msra.mxu0 0.0
    %521 = vmatprep.subr.mxu0 0.0
    %522 = vmatpush1.xpose.msra.mxu0 0.0
    %523 = vmatprep.subr.mxu0 0.0
    %524 = vmatpush1.xpose.msra.mxu0 0.0
    %525 = vmatprep.subr.mxu0 0.0
    %526 = vmatpush1.xpose.msra.mxu0 0.0
    %527 = vmatprep.subr.mxu0 0.0
    %528 = vmatpush1.xpose.msra.mxu0 0.0
    %529 = vmatprep.subr.mxu0 0.0
    %530 = vmatpush1.xpose.msra.mxu0 0.0
    %531 = vmatprep.subr.mxu0 0.0
    %532 = vmatpush1.xpose.msra.mxu0 0.0
    %533 = vmatprep.subr.mxu0 0.0
    %534 = vmatpush1.xpose.msra.mxu0 0.0
    %535 = vmatprep.subr.mxu0 0.0
    %536 = vmatpush1.xpose.msra.mxu0 0.0
    %537 = vmatprep.subr.mxu0 0.0
    %538 = vmatpush1.xpose.msra.mxu0 0.0
    %539 = vmatprep.subr.mxu0 0.0
    %540 = vmatpush1.xpose.msra.mxu0 0.0
    %541 = vmatprep.subr.mxu0 0.0
    %542 = vmatpush1.xpose.msra.mxu0 0.0
    %543 = vmatprep.subr.mxu0 0.0
    %544 = vmatpush1.xpose.msra.mxu0 0.0
    %545 = vmatprep.subr.mxu0 0.0
    %546 = vmatpush1.xpose.msra.mxu0 0.0
    %547 = vmatprep.subr.mxu0 0.0
    %548 = vmatpush1.xpose.msra.mxu0 0.0
    %549 = vmatprep.subr.mxu0 0.0
    %550 = vmatpush1.xpose.msra.mxu0 0.0
    %551 = vmatprep.subr.mxu0 0.0
    %552 = vmatpush1.xpose.msra.mxu0 0.0
    %553 = vmatprep.subr.mxu0 0.0
    %554 = vmatpush1.xpose.msra.mxu0 0.0
    %555 = vmatprep.subr.mxu0 0.0
    %556 = vmatpush1.xpose.msra.mxu0 0.0
    %557 = vmatprep.subr.mxu0 0.0
    %558 = vmatpush1.xpose.msra.mxu0 0.0
    %559 = vmatprep.subr.mxu0 0.0
    %560 = vmatpush1.xpose.msra.mxu0 0.0
    %561 = vmatprep.subr.mxu0 0.0
    %562 = vmatpush1.xpose.msra.mxu0 0.0
    %563 = vmatprep.subr.mxu0 0.0
    %564 = vmatpush1.xpose.msra.mxu0 0.0
    %565 = vmatprep.subr.mxu0 0.0
    %566 = vmatpush1.xpose.msra.mxu0 0.0
    %567 = vmatprep.subr.mxu0 0.0
    %568 = vmatpush1.xpose.msra.mxu0 0.0
    %569 = vmatprep.subr.mxu0 0.0
    %570 = vmatpush1.xpose.msra.mxu0 0.0
    %571 = vmatprep.mubr.f32.mxu0 %v162
    %572 = vmatmul.mubr.f32.gmra.mrb[0].mxu0 %v154
    %v573 = vpop.f32.mrb[0].mxu0
    %v574 = vadd.f32 %v504, %v573
    %v575 = vpop.f32.mrb[0].mxu0
    %576 = vdwg.mxu0
    %577 = vmatprep.subr.mxu0 %v33
    %578 = vmatpush1.xpose.msra.mxu0 %v32
    %579 = vmatprep.subr.mxu0 %v76
    %580 = vmatpush1.xpose.msra.mxu0 %v75
    %581 = vmatprep.subr.mxu0 0.0
    %582 = vmatpush1.xpose.msra.mxu0 0.0
    %583 = vmatprep.subr.mxu0 0.0
    %584 = vmatpush1.xpose.msra.mxu0 0.0
    %585 = vmatprep.subr.mxu0 0.0
    %586 = vmatpush1.xpose.msra.mxu0 0.0
    %587 = vmatprep.subr.mxu0 0.0
    %588 = vmatpush1.xpose.msra.mxu0 0.0
    %589 = vmatprep.subr.mxu0 0.0
    %590 = vmatpush1.xpose.msra.mxu0 0.0
    %591 = vmatprep.subr.mxu0 0.0
    %592 = vmatpush1.xpose.msra.mxu0 0.0
    %593 = vmatprep.subr.mxu0 0.0
    %594 = vmatpush1.xpose.msra.mxu0 0.0
    %595 = vmatprep.subr.mxu0 0.0
    %596 = vmatpush1.xpose.msra.mxu0 0.0
    %597 = vmatprep.subr.mxu0 0.0
    %598 = vmatpush1.xpose.msra.mxu0 0.0
    %599 = vmatprep.subr.mxu0 0.0
    %600 = vmatpush1.xpose.msra.mxu0 0.0
    %601 = vmatprep.subr.mxu0 0.0
    %602 = vmatpush1.xpose.msra.mxu0 0.0
    %603 = vmatprep.subr.mxu0 0.0
    %604 = vmatpush1.xpose.msra.mxu0 0.0
    %605 = vmatprep.subr.mxu0 0.0
    %606 = vmatpush1.xpose.msra.mxu0 0.0
    %607 = vmatprep.subr.mxu0 0.0
    %608 = vmatpush1.xpose.msra.mxu0 0.0
    %609 = vmatprep.subr.mxu0 0.0
    %610 = vmatpush1.xpose.msra.mxu0 0.0
    %611 = vmatprep.subr.mxu0 0.0
    %612 = vmatpush1.xpose.msra.mxu0 0.0
    %613 = vmatprep.subr.mxu0 0.0
    %614 = vmatpush1.xpose.msra.mxu0 0.0
    %615 = vmatprep.subr.mxu0 0.0
    %616 = vmatpush1.xpose.msra.mxu0 0.0
    %617 = vmatprep.subr.mxu0 0.0
    %618 = vmatpush1.xpose.msra.mxu0 0.0
    %619 = vmatprep.subr.mxu0 0.0
    %620 = vmatpush1.xpose.msra.mxu0 0.0
    %621 = vmatprep.subr.mxu0 0.0
    %622 = vmatpush1.xpose.msra.mxu0 0.0
    %623 = vmatprep.subr.mxu0 0.0
    %624 = vmatpush1.xpose.msra.mxu0 0.0
    %625 = vmatprep.subr.mxu0 0.0
    %626 = vmatpush1.xpose.msra.mxu0 0.0
    %627 = vmatprep.subr.mxu0 0.0
    %628 = vmatpush1.xpose.msra.mxu0 0.0
    %629 = vmatprep.subr.mxu0 0.0
    %630 = vmatpush1.xpose.msra.mxu0 0.0
    %631 = vmatprep.subr.mxu0 0.0
    %632 = vmatpush1.xpose.msra.mxu0 0.0
    %633 = vmatprep.subr.mxu0 0.0
    %634 = vmatpush1.xpose.msra.mxu0 0.0
    %635 = vmatprep.subr.mxu0 0.0
    %636 = vmatpush1.xpose.msra.mxu0 0.0
    %637 = vmatprep.subr.mxu0 0.0
    %638 = vmatpush1.xpose.msra.mxu0 0.0
    %639 = vmatprep.subr.mxu0 0.0
    %640 = vmatpush1.xpose.msra.mxu0 0.0
    %641 = vmatprep.mubr.f32.mxu0 %v163
    %642 = vmatmul.mubr.f32.gmra.mrb[0].mxu0 %v161
    %v643 = vpop.f32.mrb[0].mxu0
    %v644 = vadd.f32 %v574, %v643
    %v645 = vpop.f32.mrb[0].mxu0
    %646 = vdwg.mxu0
    %647 = vmatprep.subr.mxu0 %v35
    %648 = vmatpush1.xpose.msra.mxu0 %v34
    %649 = vmatprep.subr.mxu0 %v78
    %650 = vmatpush1.xpose.msra.mxu0 %v77
    %651 = vmatprep.subr.mxu0 0.0
    %652 = vmatpush1.xpose.msra.mxu0 0.0
    %653 = vmatprep.subr.mxu0 0.0
    %654 = vmatpush1.xpose.msra.mxu0 0.0
    %655 = vmatprep.subr.mxu0 0.0
    %656 = vmatpush1.xpose.msra.mxu0 0.0
    %657 = vmatprep.subr.mxu0 0.0
    %658 = vmatpush1.xpose.msra.mxu0 0.0
    %659 = vmatprep.subr.mxu0 0.0
    %660 = vmatpush1.xpose.msra.mxu0 0.0
    %661 = vmatprep.subr.mxu0 0.0
    %662 = vmatpush1.xpose.msra.mxu0 0.0
    %663 = vmatprep.subr.mxu0 0.0
    %664 = vmatpush1.xpose.msra.mxu0 0.0
    %665 = vmatprep.subr.mxu0 0.0
    %666 = vmatpush1.xpose.msra.mxu0 0.0
    %667 = vmatprep.subr.mxu0 0.0
    %668 = vmatpush1.xpose.msra.mxu0 0.0
    %669 = vmatprep.subr.mxu0 0.0
    %670 = vmatpush1.xpose.msra.mxu0 0.0
    %671 = vmatprep.subr.mxu0 0.0
    %672 = vmatpush1.xpose.msra.mxu0 0.0
    %673 = vmatprep.subr.mxu0 0.0
    %674 = vmatpush1.xpose.msra.mxu0 0.0
    %675 = vmatprep.subr.mxu0 0.0
    %676 = vmatpush1.xpose.msra.mxu0 0.0
    %677 = vmatprep.subr.mxu0 0.0
    %678 = vmatpush1.xpose.msra.mxu0 0.0
    %679 = vmatprep.subr.mxu0 0.0
    %680 = vmatpush1.xpose.msra.mxu0 0.0
    %681 = vmatprep.subr.mxu0 0.0
    %682 = vmatpush1.xpose.msra.mxu0 0.0
    %683 = vmatprep.subr.mxu0 0.0
    %684 = vmatpush1.xpose.msra.mxu0 0.0
    %685 = vmatprep.subr.mxu0 0.0
    %686 = vmatpush1.xpose.msra.mxu0 0.0
    %687 = vmatprep.subr.mxu0 0.0
    %688 = vmatpush1.xpose.msra.mxu0 0.0
    %689 = vmatprep.subr.mxu0 0.0
    %690 = vmatpush1.xpose.msra.mxu0 0.0
    %691 = vmatprep.subr.mxu0 0.0
    %692 = vmatpush1.xpose.msra.mxu0 0.0
    %693 = vmatprep.subr.mxu0 0.0
    %694 = vmatpush1.xpose.msra.mxu0 0.0
    %695 = vmatprep.subr.mxu0 0.0
    %696 = vmatpush1.xpose.msra.mxu0 0.0
    %697 = vmatprep.subr.mxu0 0.0
    %698 = vmatpush1.xpose.msra.mxu0 0.0
    %699 = vmatprep.subr.mxu0 0.0
    %700 = vmatpush1.xpose.msra.mxu0 0.0
    %701 = vmatprep.subr.mxu0 0.0
    %702 = vmatpush1.xpose.msra.mxu0 0.0
    %703 = vmatprep.subr.mxu0 0.0
    %704 = vmatpush1.xpose.msra.mxu0 0.0
    %705 = vmatprep.subr.mxu0 0.0
    %706 = vmatpush1.xpose.msra.mxu0 0.0
    %707 = vmatprep.subr.mxu0 0.0
    %708 = vmatpush1.xpose.msra.mxu0 0.0
    %709 = vmatprep.subr.mxu0 0.0
    %710 = vmatpush1.xpose.msra.mxu0 0.0
    %711 = vmatprep.mubr.f32.mxu0 %v179
    %712 = vmatmul.mubr.f32.gmra.mrb[0].mxu0 %v171
    %v713 = vpop.f32.mrb[0].mxu0
    %v714 = vadd.f32 %v644, %v713
    %v715 = vpop.f32.mrb[0].mxu0
    %716 = vdwg.mxu0
    %717 = vmatprep.subr.mxu0 %v37
    %718 = vmatpush1.xpose.msra.mxu0 %v36
    %719 = vmatprep.subr.mxu0 %v80
    %720 = vmatpush1.xpose.msra.mxu0 %v79
    %721 = vmatprep.subr.mxu0 0.0
    %722 = vmatpush1.xpose.msra.mxu0 0.0
    %723 = vmatprep.subr.mxu0 0.0
    %724 = vmatpush1.xpose.msra.mxu0 0.0
    %725 = vmatprep.subr.mxu0 0.0
    %726 = vmatpush1.xpose.msra.mxu0 0.0
    %727 = vmatprep.subr.mxu0 0.0
    %728 = vmatpush1.xpose.msra.mxu0 0.0
    %729 = vmatprep.subr.mxu0 0.0
    %730 = vmatpush1.xpose.msra.mxu0 0.0
    %731 = vmatprep.subr.mxu0 0.0
    %732 = vmatpush1.xpose.msra.mxu0 0.0
    %733 = vmatprep.subr.mxu0 0.0
    %734 = vmatpush1.xpose.msra.mxu0 0.0
    %735 = vmatprep.subr.mxu0 0.0
    %736 = vmatpush1.xpose.msra.mxu0 0.0
    %737 = vmatprep.subr.mxu0 0.0
    %738 = vmatpush1.xpose.msra.mxu0 0.0
    %739 = vmatprep.subr.mxu0 0.0
    %740 = vmatpush1.xpose.msra.mxu0 0.0
    %741 = vmatprep.subr.mxu0 0.0
    %742 = vmatpush1.xpose.msra.mxu0 0.0
    %743 = vmatprep.subr.mxu0 0.0
    %744 = vmatpush1.xpose.msra.mxu0 0.0
    %745 = vmatprep.subr.mxu0 0.0
    %746 = vmatpush1.xpose.msra.mxu0 0.0
    %747 = vmatprep.subr.mxu0 0.0
    %748 = vmatpush1.xpose.msra.mxu0 0.0
    %749 = vmatprep.subr.mxu0 0.0
    %750 = vmatpush1.xpose.msra.mxu0 0.0
    %751 = vmatprep.subr.mxu0 0.0
    %752 = vmatpush1.xpose.msra.mxu0 0.0
    %753 = vmatprep.subr.mxu0 0.0
    %754 = vmatpush1.xpose.msra.mxu0 0.0
    %755 = vmatprep.subr.mxu0 0.0
    %756 = vmatpush1.xpose.msra.mxu0 0.0
    %757 = vmatprep.subr.mxu0 0.0
    %758 = vmatpush1.xpose.msra.mxu0 0.0
    %759 = vmatprep.subr.mxu0 0.0
    %760 = vmatpush1.xpose.msra.mxu0 0.0
    %761 = vmatprep.subr.mxu0 0.0
    %762 = vmatpush1.xpose.msra.mxu0 0.0
    %763 = vmatprep.subr.mxu0 0.0
    %764 = vmatpush1.xpose.msra.mxu0 0.0
    %765 = vmatprep.subr.mxu0 0.0
    %766 = vmatpush1.xpose.msra.mxu0 0.0
    %767 = vmatprep.subr.mxu0 0.0
    %768 = vmatpush1.xpose.msra.mxu0 0.0
    %769 = vmatprep.subr.mxu0 0.0
    %770 = vmatpush1.xpose.msra.mxu0 0.0
    %771 = vmatprep.subr.mxu0 0.0
    %772 = vmatpush1.xpose.msra.mxu0 0.0
    %773 = vmatprep.subr.mxu0 0.0
    %774 = vmatpush1.xpose.msra.mxu0 0.0
    %775 = vmatprep.subr.mxu0 0.0
    %776 = vmatpush1.xpose.msra.mxu0 0.0
    %777 = vmatprep.subr.mxu0 0.0
    %778 = vmatpush1.xpose.msra.mxu0 0.0
    %779 = vmatprep.subr.mxu0 0.0
    %780 = vmatpush1.xpose.msra.mxu0 0.0
    %781 = vmatprep.mubr.f32.mxu0 %v180
    %782 = vmatmul.mubr.f32.gmra.mrb[0].mxu0 %v178
    %v783 = vpop.f32.mrb[0].mxu0
    %v784 = vadd.f32 %v714, %v783
    %v785 = vpop.f32.mrb[0].mxu0
    %786 = vdwg.mxu0
    %787 = vmatprep.subr.mxu0 %v39
    %788 = vmatpush1.xpose.msra.mxu0 %v38
    %789 = vmatprep.subr.mxu0 %v82
    %790 = vmatpush1.xpose.msra.mxu0 %v81
    %791 = vmatprep.subr.mxu0 0.0
    %792 = vmatpush1.xpose.msra.mxu0 0.0
    %793 = vmatprep.subr.mxu0 0.0
    %794 = vmatpush1.xpose.msra.mxu0 0.0
    %795 = vmatprep.subr.mxu0 0.0
    %796 = vmatpush1.xpose.msra.mxu0 0.0
    %797 = vmatprep.subr.mxu0 0.0
    %798 = vmatpush1.xpose.msra.mxu0 0.0
    %799 = vmatprep.subr.mxu0 0.0
    %800 = vmatpush1.xpose.msra.mxu0 0.0
    %801 = vmatprep.subr.mxu0 0.0
    %802 = vmatpush1.xpose.msra.mxu0 0.0
    %803 = vmatprep.subr.mxu0 0.0
    %804 = vmatpush1.xpose.msra.mxu0 0.0
    %805 = vmatprep.subr.mxu0 0.0
    %806 = vmatpush1.xpose.msra.mxu0 0.0
    %807 = vmatprep.subr.mxu0 0.0
    %808 = vmatpush1.xpose.msra.mxu0 0.0
    %809 = vmatprep.subr.mxu0 0.0
    %810 = vmatpush1.xpose.msra.mxu0 0.0
    %811 = vmatprep.subr.mxu0 0.0
    %812 = vmatpush1.xpose.msra.mxu0 0.0
    %813 = vmatprep.subr.mxu0 0.0
    %814 = vmatpush1.xpose.msra.mxu0 0.0
    %815 = vmatprep.subr.mxu0 0.0
    %816 = vmatpush1.xpose.msra.mxu0 0.0
    %817 = vmatprep.subr.mxu0 0.0
    %818 = vmatpush1.xpose.msra.mxu0 0.0
    %819 = vmatprep.subr.mxu0 0.0
    %820 = vmatpush1.xpose.msra.mxu0 0.0
    %821 = vmatprep.subr.mxu0 0.0
    %822 = vmatpush1.xpose.msra.mxu0 0.0
    %823 = vmatprep.subr.mxu0 0.0
    %824 = vmatpush1.xpose.msra.mxu0 0.0
    %825 = vmatprep.subr.mxu0 0.0
    %826 = vmatpush1.xpose.msra.mxu0 0.0
    %827 = vmatprep.subr.mxu0 0.0
    %828 = vmatpush1.xpose.msra.mxu0 0.0
    %829 = vmatprep.subr.mxu0 0.0
    %830 = vmatpush1.xpose.msra.mxu0 0.0
    %831 = vmatprep.subr.mxu0 0.0
    %832 = vmatpush1.xpose.msra.mxu0 0.0
    %833 = vmatprep.subr.mxu0 0.0
    %834 = vmatpush1.xpose.msra.mxu0 0.0
    %835 = vmatprep.subr.mxu0 0.0
    %836 = vmatpush1.xpose.msra.mxu0 0.0
    %837 = vmatprep.subr.mxu0 0.0
    %838 = vmatpush1.xpose.msra.mxu0 0.0
    %839 = vmatprep.subr.mxu0 0.0
    %840 = vmatpush1.xpose.msra.mxu0 0.0
    %841 = vmatprep.subr.mxu0 0.0
    %842 = vmatpush1.xpose.msra.mxu0 0.0
    %843 = vmatprep.subr.mxu0 0.0
    %844 = vmatpush1.xpose.msra.mxu0 0.0
    %845 = vmatprep.subr.mxu0 0.0
    %846 = vmatpush1.xpose.msra.mxu0 0.0
    %847 = vmatprep.subr.mxu0 0.0
    %848 = vmatpush1.xpose.msra.mxu0 0.0
    %849 = vmatprep.subr.mxu0 0.0
    %850 = vmatpush1.xpose.msra.mxu0 0.0
    %851 = vmatprep.mubr.f32.mxu0 %v196
    %852 = vmatmul.mubr.f32.gmra.mrb[0].mxu0 %v188
    %v853 = vpop.f32.mrb[0].mxu0
    %v854 = vadd.f32 %v784, %v853
    %v855 = vpop.f32.mrb[0].mxu0
    %856 = vdwg.mxu0
    %857 = vmatprep.subr.mxu0 %v41
    %858 = vmatpush1.xpose.msra.mxu0 %v40
    %859 = vmatprep.subr.mxu0 %v84
    %860 = vmatpush1.xpose.msra.mxu0 %v83
    %861 = vmatprep.subr.mxu0 0.0
    %862 = vmatpush1.xpose.msra.mxu0 0.0
    %863 = vmatprep.subr.mxu0 0.0
    %864 = vmatpush1.xpose.msra.mxu0 0.0
    %865 = vmatprep.subr.mxu0 0.0
    %866 = vmatpush1.xpose.msra.mxu0 0.0
    %867 = vmatprep.subr.mxu0 0.0
    %868 = vmatpush1.xpose.msra.mxu0 0.0
    %869 = vmatprep.subr.mxu0 0.0
    %870 = vmatpush1.xpose.msra.mxu0 0.0
    %871 = vmatprep.subr.mxu0 0.0
    %872 = vmatpush1.xpose.msra.mxu0 0.0
    %873 = vmatprep.subr.mxu0 0.0
    %874 = vmatpush1.xpose.msra.mxu0 0.0
    %875 = vmatprep.subr.mxu0 0.0
    %876 = vmatpush1.xpose.msra.mxu0 0.0
    %877 = vmatprep.subr.mxu0 0.0
    %878 = vmatpush1.xpose.msra.mxu0 0.0
    %879 = vmatprep.subr.mxu0 0.0
    %880 = vmatpush1.xpose.msra.mxu0 0.0
    %881 = vmatprep.subr.mxu0 0.0
    %882 = vmatpush1.xpose.msra.mxu0 0.0
    %883 = vmatprep.subr.mxu0 0.0
    %884 = vmatpush1.xpose.msra.mxu0 0.0
    %885 = vmatprep.subr.mxu0 0.0
    %886 = vmatpush1.xpose.msra.mxu0 0.0
    %887 = vmatprep.subr.mxu0 0.0
    %888 = vmatpush1.xpose.msra.mxu0 0.0
    %889 = vmatprep.subr.mxu0 0.0
    %890 = vmatpush1.xpose.msra.mxu0 0.0
    %891 = vmatprep.subr.mxu0 0.0
    %892 = vmatpush1.xpose.msra.mxu0 0.0
    %893 = vmatprep.subr.mxu0 0.0
    %894 = vmatpush1.xpose.msra.mxu0 0.0
    %895 = vmatprep.subr.mxu0 0.0
    %896 = vmatpush1.xpose.msra.mxu0 0.0
    %897 = vmatprep.subr.mxu0 0.0
    %898 = vmatpush1.xpose.msra.mxu0 0.0
    %899 = vmatprep.subr.mxu0 0.0
    %900 = vmatpush1.xpose.msra.mxu0 0.0
    %901 = vmatprep.subr.mxu0 0.0
    %902 = vmatpush1.xpose.msra.mxu0 0.0
    %903 = vmatprep.subr.mxu0 0.0
    %904 = vmatpush1.xpose.msra.mxu0 0.0
    %905 = vmatprep.subr.mxu0 0.0
    %906 = vmatpush1.xpose.msra.mxu0 0.0
    %907 = vmatprep.subr.mxu0 0.0
    %908 = vmatpush1.xpose.msra.mxu0 0.0
    %909 = vmatprep.subr.mxu0 0.0
    %910 = vmatpush1.xpose.msra.mxu0 0.0
    %911 = vmatprep.subr.mxu0 0.0
    %912 = vmatpush1.xpose.msra.mxu0 0.0
    %913 = vmatprep.subr.mxu0 0.0
    %914 = vmatpush1.xpose.msra.mxu0 0.0
    %915 = vmatprep.subr.mxu0 0.0
    %916 = vmatpush1.xpose.msra.mxu0 0.0
    %917 = vmatprep.subr.mxu0 0.0
    %918 = vmatpush1.xpose.msra.mxu0 0.0
    %919 = vmatprep.subr.mxu0 0.0
    %920 = vmatpush1.xpose.msra.mxu0 0.0
    %921 = vmatprep.mubr.f32.mxu0 %v197
    %922 = vmatmul.mubr.f32.gmra.mrb[0].mxu0 %v195
    %v923 = vpop.f32.mrb[0].mxu0
    %v924 = vadd.f32 %v854, %v923
    %v925 = vpop.f32.mrb[0].mxu0
    %926 = vdwg.mxu0
    %927 = vmatprep.subr.mxu0 %v43
    %928 = vmatpush1.xpose.msra.mxu0 %v42
    %929 = vmatprep.subr.mxu0 %v86
    %930 = vmatpush1.xpose.msra.mxu0 %v85
    %931 = vmatprep.subr.mxu0 0.0
    %932 = vmatpush1.xpose.msra.mxu0 0.0
    %933 = vmatprep.subr.mxu0 0.0
    %934 = vmatpush1.xpose.msra.mxu0 0.0
    %935 = vmatprep.subr.mxu0 0.0
    %936 = vmatpush1.xpose.msra.mxu0 0.0
    %937 = vmatprep.subr.mxu0 0.0
    %938 = vmatpush1.xpose.msra.mxu0 0.0
    %939 = vmatprep.subr.mxu0 0.0
    %940 = vmatpush1.xpose.msra.mxu0 0.0
    %941 = vmatprep.subr.mxu0 0.0
    %942 = vmatpush1.xpose.msra.mxu0 0.0
    %943 = vmatprep.subr.mxu0 0.0
    %944 = vmatpush1.xpose.msra.mxu0 0.0
    %945 = vmatprep.subr.mxu0 0.0
    %946 = vmatpush1.xpose.msra.mxu0 0.0
    %947 = vmatprep.subr.mxu0 0.0
    %948 = vmatpush1.xpose.msra.mxu0 0.0
    %949 = vmatprep.subr.mxu0 0.0
    %950 = vmatpush1.xpose.msra.mxu0 0.0
    %951 = vmatprep.subr.mxu0 0.0
    %952 = vmatpush1.xpose.msra.mxu0 0.0
    %953 = vmatprep.subr.mxu0 0.0
    %954 = vmatpush1.xpose.msra.mxu0 0.0
    %955 = vmatprep.subr.mxu0 0.0
    %956 = vmatpush1.xpose.msra.mxu0 0.0
    %957 = vmatprep.subr.mxu0 0.0
    %958 = vmatpush1.xpose.msra.mxu0 0.0
    %959 = vmatprep.subr.mxu0 0.0
    %960 = vmatpush1.xpose.msra.mxu0 0.0
    %961 = vmatprep.subr.mxu0 0.0
    %962 = vmatpush1.xpose.msra.mxu0 0.0
    %963 = vmatprep.subr.mxu0 0.0
    %964 = vmatpush1.xpose.msra.mxu0 0.0
    %965 = vmatprep.subr.mxu0 0.0
    %966 = vmatpush1.xpose.msra.mxu0 0.0
    %967 = vmatprep.subr.mxu0 0.0
    %968 = vmatpush1.xpose.msra.mxu0 0.0
    %969 = vmatprep.subr.mxu0 0.0
    %970 = vmatpush1.xpose.msra.mxu0 0.0
    %971 = vmatprep.subr.mxu0 0.0
    %972 = vmatpush1.xpose.msra.mxu0 0.0
    %973 = vmatprep.subr.mxu0 0.0
    %974 = vmatpush1.xpose.msra.mxu0 0.0
    %975 = vmatprep.subr.mxu0 0.0
    %976 = vmatpush1.xpose.msra.mxu0 0.0
    %977 = vmatprep.subr.mxu0 0.0
    %978 = vmatpush1.xpose.msra.mxu0 0.0
    %979 = vmatprep.subr.mxu0 0.0
    %980 = vmatpush1.xpose.msra.mxu0 0.0
    %981 = vmatprep.subr.mxu0 0.0
    %982 = vmatpush1.xpose.msra.mxu0 0.0
    %983 = vmatprep.subr.mxu0 0.0
    %984 = vmatpush1.xpose.msra.mxu0 0.0
    %985 = vmatprep.subr.mxu0 0.0
    %986 = vmatpush1.xpose.msra.mxu0 0.0
    %987 = vmatprep.subr.mxu0 0.0
    %988 = vmatpush1.xpose.msra.mxu0 0.0
    %989 = vmatprep.subr.mxu0 0.0
    %990 = vmatpush1.xpose.msra.mxu0 0.0
    %991 = vmatprep.mubr.f32.mxu0 %v213
    %992 = vmatmul.mubr.f32.gmra.mrb[0].mxu0 %v205
    %v993 = vpop.f32.mrb[0].mxu0
    %v994 = vadd.f32 %v924, %v993
    %v995 = vpop.f32.mrb[0].mxu0
    %996 = vdwg.mxu0
    %997 = vmatprep.subr.mxu0 %v45
    %998 = vmatpush1.xpose.msra.mxu0 %v44
    %999 = vmatprep.subr.mxu0 %v88
    %1000 = vmatpush1.xpose.msra.mxu0 %v87
    %1001 = vmatprep.subr.mxu0 0.0
    %1002 = vmatpush1.xpose.msra.mxu0 0.0
    %1003 = vmatprep.subr.mxu0 0.0
    %1004 = vmatpush1.xpose.msra.mxu0 0.0
    %1005 = vmatprep.subr.mxu0 0.0
    %1006 = vmatpush1.xpose.msra.mxu0 0.0
    %1007 = vmatprep.subr.mxu0 0.0
    %1008 = vmatpush1.xpose.msra.mxu0 0.0
    %1009 = vmatprep.subr.mxu0 0.0
    %1010 = vmatpush1.xpose.msra.mxu0 0.0
    %1011 = vmatprep.subr.mxu0 0.0
    %1012 = vmatpush1.xpose.msra.mxu0 0.0
    %1013 = vmatprep.subr.mxu0 0.0
    %1014 = vmatpush1.xpose.msra.mxu0 0.0
    %1015 = vmatprep.subr.mxu0 0.0
    %1016 = vmatpush1.xpose.msra.mxu0 0.0
    %1017 = vmatprep.subr.mxu0 0.0
    %1018 = vmatpush1.xpose.msra.mxu0 0.0
    %1019 = vmatprep.subr.mxu0 0.0
    %1020 = vmatpush1.xpose.msra.mxu0 0.0
    %1021 = vmatprep.subr.mxu0 0.0
    %1022 = vmatpush1.xpose.msra.mxu0 0.0
    %1023 = vmatprep.subr.mxu0 0.0
    %1024 = vmatpush1.xpose.msra.mxu0 0.0
    %1025 = vmatprep.subr.mxu0 0.0
    %1026 = vmatpush1.xpose.msra.mxu0 0.0
    %1027 = vmatprep.subr.mxu0 0.0
    %1028 = vmatpush1.xpose.msra.mxu0 0.0
    %1029 = vmatprep.subr.mxu0 0.0
    %1030 = vmatpush1.xpose.msra.mxu0 0.0
    %1031 = vmatprep.subr.mxu0 0.0
    %1032 = vmatpush1.xpose.msra.mxu0 0.0
    %1033 = vmatprep.subr.mxu0 0.0
    %1034 = vmatpush1.xpose.msra.mxu0 0.0
    %1035 = vmatprep.subr.mxu0 0.0
    %1036 = vmatpush1.xpose.msra.mxu0 0.0
    %1037 = vmatprep.subr.mxu0 0.0
    %1038 = vmatpush1.xpose.msra.mxu0 0.0
    %1039 = vmatprep.subr.mxu0 0.0
    %1040 = vmatpush1.xpose.msra.mxu0 0.0
    %1041 = vmatprep.subr.mxu0 0.0
    %1042 = vmatpush1.xpose.msra.mxu0 0.0
    %1043 = vmatprep.subr.mxu0 0.0
    %1044 = vmatpush1.xpose.msra.mxu0 0.0
    %1045 = vmatprep.subr.mxu0 0.0
    %1046 = vmatpush1.xpose.msra.mxu0 0.0
    %1047 = vmatprep.subr.mxu0 0.0
    %1048 = vmatpush1.xpose.msra.mxu0 0.0
    %1049 = vmatprep.subr.mxu0 0.0
    %1050 = vmatpush1.xpose.msra.mxu0 0.0
    %1051 = vmatprep.subr.mxu0 0.0
    %1052 = vmatpush1.xpose.msra.mxu0 0.0
    %1053 = vmatprep.subr.mxu0 0.0
    %1054 = vmatpush1.xpose.msra.mxu0 0.0
    %1055 = vmatprep.subr.mxu0 0.0
    %1056 = vmatpush1.xpose.msra.mxu0 0.0
    %1057 = vmatprep.subr.mxu0 0.0
    %1058 = vmatpush1.xpose.msra.mxu0 0.0
    %1059 = vmatprep.subr.mxu0 0.0
    %1060 = vmatpush1.xpose.msra.mxu0 0.0
    %1061 = vmatprep.mubr.f32.mxu0 %v214
    %1062 = vmatmul.mubr.f32.gmra.mrb[0].mxu0 %v212
    %v1063 = vpop.f32.mrb[0].mxu0
    %v1064 = vadd.f32 %v994, %v1063
    %v1065 = vpop.f32.mrb[0].mxu0
    %1066 = vdwg.mxu0
    %1067 = vmatprep.subr.mxu0 %v47
    %1068 = vmatpush1.xpose.msra.mxu0 %v46
    %1069 = vmatprep.subr.mxu0 %v90
    %1070 = vmatpush1.xpose.msra.mxu0 %v89
    %1071 = vmatprep.subr.mxu0 0.0
    %1072 = vmatpush1.xpose.msra.mxu0 0.0
    %1073 = vmatprep.subr.mxu0 0.0
    %1074 = vmatpush1.xpose.msra.mxu0 0.0
    %1075 = vmatprep.subr.mxu0 0.0
    %1076 = vmatpush1.xpose.msra.mxu0 0.0
    %1077 = vmatprep.subr.mxu0 0.0
    %1078 = vmatpush1.xpose.msra.mxu0 0.0
    %1079 = vmatprep.subr.mxu0 0.0
    %1080 = vmatpush1.xpose.msra.mxu0 0.0
    %1081 = vmatprep.subr.mxu0 0.0
    %1082 = vmatpush1.xpose.msra.mxu0 0.0
    %1083 = vmatprep.subr.mxu0 0.0
    %1084 = vmatpush1.xpose.msra.mxu0 0.0
    %1085 = vmatprep.subr.mxu0 0.0
    %1086 = vmatpush1.xpose.msra.mxu0 0.0
    %1087 = vmatprep.subr.mxu0 0.0
    %1088 = vmatpush1.xpose.msra.mxu0 0.0
    %1089 = vmatprep.subr.mxu0 0.0
    %1090 = vmatpush1.xpose.msra.mxu0 0.0
    %1091 = vmatprep.subr.mxu0 0.0
    %1092 = vmatpush1.xpose.msra.mxu0 0.0
    %1093 = vmatprep.subr.mxu0 0.0
    %1094 = vmatpush1.xpose.msra.mxu0 0.0
    %1095 = vmatprep.subr.mxu0 0.0
    %1096 = vmatpush1.xpose.msra.mxu0 0.0
    %1097 = vmatprep.subr.mxu0 0.0
    %1098 = vmatpush1.xpose.msra.mxu0 0.0
    %1099 = vmatprep.subr.mxu0 0.0
    %1100 = vmatpush1.xpose.msra.mxu0 0.0
    %1101 = vmatprep.subr.mxu0 0.0
    %1102 = vmatpush1.xpose.msra.mxu0 0.0
    %1103 = vmatprep.subr.mxu0 0.0
    %1104 = vmatpush1.xpose.msra.mxu0 0.0
    %1105 = vmatprep.subr.mxu0 0.0
    %1106 = vmatpush1.xpose.msra.mxu0 0.0
    %1107 = vmatprep.subr.mxu0 0.0
    %1108 = vmatpush1.xpose.msra.mxu0 0.0
    %1109 = vmatprep.subr.mxu0 0.0
    %1110 = vmatpush1.xpose.msra.mxu0 0.0
    %1111 = vmatprep.subr.mxu0 0.0
    %1112 = vmatpush1.xpose.msra.mxu0 0.0
    %1113 = vmatprep.subr.mxu0 0.0
    %1114 = vmatpush1.xpose.msra.mxu0 0.0
    %1115 = vmatprep.subr.mxu0 0.0
    %1116 = vmatpush1.xpose.msra.mxu0 0.0
    %1117 = vmatprep.subr.mxu0 0.0
    %1118 = vmatpush1.xpose.msra.mxu0 0.0
    %1119 = vmatprep.subr.mxu0 0.0
    %1120 = vmatpush1.xpose.msra.mxu0 0.0
    %1121 = vmatprep.subr.mxu0 0.0
    %1122 = vmatpush1.xpose.msra.mxu0 0.0
    %1123 = vmatprep.subr.mxu0 0.0
    %1124 = vmatpush1.xpose.msra.mxu0 0.0
    %1125 = vmatprep.subr.mxu0 0.0
    %1126 = vmatpush1.xpose.msra.mxu0 0.0
    %1127 = vmatprep.subr.mxu0 0.0
    %1128 = vmatpush1.xpose.msra.mxu0 0.0
    %1129 = vmatprep.subr.mxu0 0.0
    %1130 = vmatpush1.xpose.msra.mxu0 0.0
    %1131 = vmatprep.mubr.f32.mxu0 %v230
    %1132 = vmatmul.mubr.f32.gmra.mrb[0].mxu0 %v222
    %v1133 = vpop.f32.mrb[0].mxu0
    %v1134 = vadd.f32 %v1064, %v1133
    %v1135 = vpop.f32.mrb[0].mxu0
    %1136 = vdwg.mxu0
    %1137 = vmatprep.subr.mxu0 %v49
    %1138 = vmatpush1.xpose.msra.mxu0 %v48
    %1139 = vmatprep.subr.mxu0 %v92
    %1140 = vmatpush1.xpose.msra.mxu0 %v91
    %1141 = vmatprep.subr.mxu0 0.0
    %1142 = vmatpush1.xpose.msra.mxu0 0.0
    %1143 = vmatprep.subr.mxu0 0.0
    %1144 = vmatpush1.xpose.msra.mxu0 0.0
    %1145 = vmatprep.subr.mxu0 0.0
    %1146 = vmatpush1.xpose.msra.mxu0 0.0
    %1147 = vmatprep.subr.mxu0 0.0
    %1148 = vmatpush1.xpose.msra.mxu0 0.0
    %1149 = vmatprep.subr.mxu0 0.0
    %1150 = vmatpush1.xpose.msra.mxu0 0.0
    %1151 = vmatprep.subr.mxu0 0.0
    %1152 = vmatpush1.xpose.msra.mxu0 0.0
    %1153 = vmatprep.subr.mxu0 0.0
    %1154 = vmatpush1.xpose.msra.mxu0 0.0
    %1155 = vmatprep.subr.mxu0 0.0
    %1156 = vmatpush1.xpose.msra.mxu0 0.0
    %1157 = vmatprep.subr.mxu0 0.0
    %1158 = vmatpush1.xpose.msra.mxu0 0.0
    %1159 = vmatprep.subr.mxu0 0.0
    %1160 = vmatpush1.xpose.msra.mxu0 0.0
    %1161 = vmatprep.subr.mxu0 0.0
    %1162 = vmatpush1.xpose.msra.mxu0 0.0
    %1163 = vmatprep.subr.mxu0 0.0
    %1164 = vmatpush1.xpose.msra.mxu0 0.0
    %1165 = vmatprep.subr.mxu0 0.0
    %1166 = vmatpush1.xpose.msra.mxu0 0.0
    %1167 = vmatprep.subr.mxu0 0.0
    %1168 = vmatpush1.xpose.msra.mxu0 0.0
    %1169 = vmatprep.subr.mxu0 0.0
    %1170 = vmatpush1.xpose.msra.mxu0 0.0
    %1171 = vmatprep.subr.mxu0 0.0
    %1172 = vmatpush1.xpose.msra.mxu0 0.0
    %1173 = vmatprep.subr.mxu0 0.0
    %1174 = vmatpush1.xpose.msra.mxu0 0.0
    %1175 = vmatprep.subr.mxu0 0.0
    %1176 = vmatpush1.xpose.msra.mxu0 0.0
    %1177 = vmatprep.subr.mxu0 0.0
    %1178 = vmatpush1.xpose.msra.mxu0 0.0
    %1179 = vmatprep.subr.mxu0 0.0
    %1180 = vmatpush1.xpose.msra.mxu0 0.0
    %1181 = vmatprep.subr.mxu0 0.0
    %1182 = vmatpush1.xpose.msra.mxu0 0.0
    %1183 = vmatprep.subr.mxu0 0.0
    %1184 = vmatpush1.xpose.msra.mxu0 0.0
    %1185 = vmatprep.subr.mxu0 0.0
    %1186 = vmatpush1.xpose.msra.mxu0 0.0
    %1187 = vmatprep.subr.mxu0 0.0
    %1188 = vmatpush1.xpose.msra.mxu0 0.0
    %1189 = vmatprep.subr.mxu0 0.0
    %1190 = vmatpush1.xpose.msra.mxu0 0.0
    %1191 = vmatprep.subr.mxu0 0.0
    %1192 = vmatpush1.xpose.msra.mxu0 0.0
    %1193 = vmatprep.subr.mxu0 0.0
    %1194 = vmatpush1.xpose.msra.mxu0 0.0
    %1195 = vmatprep.subr.mxu0 0.0
    %1196 = vmatpush1.xpose.msra.mxu0 0.0
    %1197 = vmatprep.subr.mxu0 0.0
    %1198 = vmatpush1.xpose.msra.mxu0 0.0
    %1199 = vmatprep.subr.mxu0 0.0
    %1200 = vmatpush1.xpose.msra.mxu0 0.0
    %1201 = vmatprep.mubr.f32.mxu0 %v231
    %1202 = vmatmul.mubr.f32.gmra.mrb[0].mxu0 %v229
    %v1203 = vpop.f32.mrb[0].mxu0
    %v1204 = vadd.f32 %v1134, %v1203
    %v1205 = vpop.f32.mrb[0].mxu0
    %1206 = vdwg.mxu0
    %1207 = vmatprep.subr.mxu0 %v51
    %1208 = vmatpush1.xpose.msra.mxu0 %v50
    %1209 = vmatprep.subr.mxu0 %v94
    %1210 = vmatpush1.xpose.msra.mxu0 %v93
    %1211 = vmatprep.subr.mxu0 0.0
    %1212 = vmatpush1.xpose.msra.mxu0 0.0
    %1213 = vmatprep.subr.mxu0 0.0
    %1214 = vmatpush1.xpose.msra.mxu0 0.0
    %1215 = vmatprep.subr.mxu0 0.0
    %1216 = vmatpush1.xpose.msra.mxu0 0.0
    %1217 = vmatprep.subr.mxu0 0.0
    %1218 = vmatpush1.xpose.msra.mxu0 0.0
    %1219 = vmatprep.subr.mxu0 0.0
    %1220 = vmatpush1.xpose.msra.mxu0 0.0
    %1221 = vmatprep.subr.mxu0 0.0
    %1222 = vmatpush1.xpose.msra.mxu0 0.0
    %1223 = vmatprep.subr.mxu0 0.0
    %1224 = vmatpush1.xpose.msra.mxu0 0.0
    %1225 = vmatprep.subr.mxu0 0.0
    %1226 = vmatpush1.xpose.msra.mxu0 0.0
    %1227 = vmatprep.subr.mxu0 0.0
    %1228 = vmatpush1.xpose.msra.mxu0 0.0
    %1229 = vmatprep.subr.mxu0 0.0
    %1230 = vmatpush1.xpose.msra.mxu0 0.0
    %1231 = vmatprep.subr.mxu0 0.0
    %1232 = vmatpush1.xpose.msra.mxu0 0.0
    %1233 = vmatprep.subr.mxu0 0.0
    %1234 = vmatpush1.xpose.msra.mxu0 0.0
    %1235 = vmatprep.subr.mxu0 0.0
    %1236 = vmatpush1.xpose.msra.mxu0 0.0
    %1237 = vmatprep.subr.mxu0 0.0
    %1238 = vmatpush1.xpose.msra.mxu0 0.0
    %1239 = vmatprep.subr.mxu0 0.0
    %1240 = vmatpush1.xpose.msra.mxu0 0.0
    %1241 = vmatprep.subr.mxu0 0.0
    %1242 = vmatpush1.xpose.msra.mxu0 0.0
    %1243 = vmatprep.subr.mxu0 0.0
    %1244 = vmatpush1.xpose.msra.mxu0 0.0
    %1245 = vmatprep.subr.mxu0 0.0
    %1246 = vmatpush1.xpose.msra.mxu0 0.0
    %1247 = vmatprep.subr.mxu0 0.0
    %1248 = vmatpush1.xpose.msra.mxu0 0.0
    %1249 = vmatprep.subr.mxu0 0.0
    %1250 = vmatpush1.xpose.msra.mxu0 0.0
    %1251 = vmatprep.subr.mxu0 0.0
    %1252 = vmatpush1.xpose.msra.mxu0 0.0
    %1253 = vmatprep.subr.mxu0 0.0
    %1254 = vmatpush1.xpose.msra.mxu0 0.0
    %1255 = vmatprep.subr.mxu0 0.0
    %1256 = vmatpush1.xpose.msra.mxu0 0.0
    %1257 = vmatprep.subr.mxu0 0.0
    %1258 = vmatpush1.xpose.msra.mxu0 0.0
    %1259 = vmatprep.subr.mxu0 0.0
    %1260 = vmatpush1.xpose.msra.mxu0 0.0
    %1261 = vmatprep.subr.mxu0 0.0
    %1262 = vmatpush1.xpose.msra.mxu0 0.0
    %1263 = vmatprep.subr.mxu0 0.0
    %1264 = vmatpush1.xpose.msra.mxu0 0.0
    %1265 = vmatprep.subr.mxu0 0.0
    %1266 = vmatpush1.xpose.msra.mxu0 0.0
    %1267 = vmatprep.subr.mxu0 0.0
    %1268 = vmatpush1.xpose.msra.mxu0 0.0
    %1269 = vmatprep.subr.mxu0 0.0
    %1270 = vmatpush1.xpose.msra.mxu0 0.0
    %1271 = vmatprep.mubr.f32.mxu0 %v247
    %1272 = vmatmul.mubr.f32.gmra.mrb[0].mxu0 %v239
    %v1273 = vpop.f32.mrb[0].mxu0
    %v1274 = vadd.f32 %v1204, %v1273
    %v1275 = vpop.f32.mrb[0].mxu0
    %1276 = vdwg.mxu0
    %1277 = vmatprep.subr.mxu0 %v53
    %1278 = vmatpush1.xpose.msra.mxu0 %v52
    %1279 = vmatprep.subr.mxu0 %v96
    %1280 = vmatpush1.xpose.msra.mxu0 %v95
    %1281 = vmatprep.subr.mxu0 0.0
    %1282 = vmatpush1.xpose.msra.mxu0 0.0
    %1283 = vmatprep.subr.mxu0 0.0
    %1284 = vmatpush1.xpose.msra.mxu0 0.0
    %1285 = vmatprep.subr.mxu0 0.0
    %1286 = vmatpush1.xpose.msra.mxu0 0.0
    %1287 = vmatprep.subr.mxu0 0.0
    %1288 = vmatpush1.xpose.msra.mxu0 0.0
    %1289 = vmatprep.subr.mxu0 0.0
    %1290 = vmatpush1.xpose.msra.mxu0 0.0
    %1291 = vmatprep.subr.mxu0 0.0
    %1292 = vmatpush1.xpose.msra.mxu0 0.0
    %1293 = vmatprep.subr.mxu0 0.0
    %1294 = vmatpush1.xpose.msra.mxu0 0.0
    %1295 = vmatprep.subr.mxu0 0.0
    %1296 = vmatpush1.xpose.msra.mxu0 0.0
    %1297 = vmatprep.subr.mxu0 0.0
    %1298 = vmatpush1.xpose.msra.mxu0 0.0
    %1299 = vmatprep.subr.mxu0 0.0
    %1300 = vmatpush1.xpose.msra.mxu0 0.0
    %1301 = vmatprep.subr.mxu0 0.0
    %1302 = vmatpush1.xpose.msra.mxu0 0.0
    %1303 = vmatprep.subr.mxu0 0.0
    %1304 = vmatpush1.xpose.msra.mxu0 0.0
    %1305 = vmatprep.subr.mxu0 0.0
    %1306 = vmatpush1.xpose.msra.mxu0 0.0
    %1307 = vmatprep.subr.mxu0 0.0
    %1308 = vmatpush1.xpose.msra.mxu0 0.0
    %1309 = vmatprep.subr.mxu0 0.0
    %1310 = vmatpush1.xpose.msra.mxu0 0.0
    %1311 = vmatprep.subr.mxu0 0.0
    %1312 = vmatpush1.xpose.msra.mxu0 0.0
    %1313 = vmatprep.subr.mxu0 0.0
    %1314 = vmatpush1.xpose.msra.mxu0 0.0
    %1315 = vmatprep.subr.mxu0 0.0
    %1316 = vmatpush1.xpose.msra.mxu0 0.0
    %1317 = vmatprep.subr.mxu0 0.0
    %1318 = vmatpush1.xpose.msra.mxu0 0.0
    %1319 = vmatprep.subr.mxu0 0.0
    %1320 = vmatpush1.xpose.msra.mxu0 0.0
    %1321 = vmatprep.subr.mxu0 0.0
    %1322 = vmatpush1.xpose.msra.mxu0 0.0
    %1323 = vmatprep.subr.mxu0 0.0
    %1324 = vmatpush1.xpose.msra.mxu0 0.0
    %1325 = vmatprep.subr.mxu0 0.0
    %1326 = vmatpush1.xpose.msra.mxu0 0.0
    %1327 = vmatprep.subr.mxu0 0.0
    %1328 = vmatpush1.xpose.msra.mxu0 0.0
    %1329 = vmatprep.subr.mxu0 0.0
    %1330 = vmatpush1.xpose.msra.mxu0 0.0
    %1331 = vmatprep.subr.mxu0 0.0
    %1332 = vmatpush1.xpose.msra.mxu0 0.0
    %1333 = vmatprep.subr.mxu0 0.0
    %1334 = vmatpush1.xpose.msra.mxu0 0.0
    %1335 = vmatprep.subr.mxu0 0.0
    %1336 = vmatpush1.xpose.msra.mxu0 0.0
    %1337 = vmatprep.subr.mxu0 0.0
    %1338 = vmatpush1.xpose.msra.mxu0 0.0
    %1339 = vmatprep.subr.mxu0 0.0
    %1340 = vmatpush1.xpose.msra.mxu0 0.0
    %1341 = vmatprep.mubr.f32.mxu0 %v248
    %1342 = vmatmul.mubr.f32.gmra.mrb[0].mxu0 %v246
    %v1343 = vpop.f32.mrb[0].mxu0
    %v1344 = vadd.f32 %v1274, %v1343
    %v1345 = vpop.f32.mrb[0].mxu0
    %1346 = vdwg.mxu0
    %1347 = vmatprep.subr.mxu0 %v55
    %1348 = vmatpush1.xpose.msra.mxu0 %v54
    %1349 = vmatprep.subr.mxu0 %v98
    %1350 = vmatpush1.xpose.msra.mxu0 %v97
    %1351 = vmatprep.subr.mxu0 0.0
    %1352 = vmatpush1.xpose.msra.mxu0 0.0
    %1353 = vmatprep.subr.mxu0 0.0
    %1354 = vmatpush1.xpose.msra.mxu0 0.0
    %1355 = vmatprep.subr.mxu0 0.0
    %1356 = vmatpush1.xpose.msra.mxu0 0.0
    %1357 = vmatprep.subr.mxu0 0.0
    %1358 = vmatpush1.xpose.msra.mxu0 0.0
    %1359 = vmatprep.subr.mxu0 0.0
    %1360 = vmatpush1.xpose.msra.mxu0 0.0
    %1361 = vmatprep.subr.mxu0 0.0
    %1362 = vmatpush1.xpose.msra.mxu0 0.0
    %1363 = vmatprep.subr.mxu0 0.0
    %1364 = vmatpush1.xpose.msra.mxu0 0.0
    %1365 = vmatprep.subr.mxu0 0.0
    %1366 = vmatpush1.xpose.msra.mxu0 0.0
    %1367 = vmatprep.subr.mxu0 0.0
    %1368 = vmatpush1.xpose.msra.mxu0 0.0
    %1369 = vmatprep.subr.mxu0 0.0
    %1370 = vmatpush1.xpose.msra.mxu0 0.0
    %1371 = vmatprep.subr.mxu0 0.0
    %1372 = vmatpush1.xpose.msra.mxu0 0.0
    %1373 = vmatprep.subr.mxu0 0.0
    %1374 = vmatpush1.xpose.msra.mxu0 0.0
    %1375 = vmatprep.subr.mxu0 0.0
    %1376 = vmatpush1.xpose.msra.mxu0 0.0
    %1377 = vmatprep.subr.mxu0 0.0
    %1378 = vmatpush1.xpose.msra.mxu0 0.0
    %1379 = vmatprep.subr.mxu0 0.0
    %1380 = vmatpush1.xpose.msra.mxu0 0.0
    %1381 = vmatprep.subr.mxu0 0.0
    %1382 = vmatpush1.xpose.msra.mxu0 0.0
    %1383 = vmatprep.subr.mxu0 0.0
    %1384 = vmatpush1.xpose.msra.mxu0 0.0
    %1385 = vmatprep.subr.mxu0 0.0
    %1386 = vmatpush1.xpose.msra.mxu0 0.0
    %1387 = vmatprep.subr.mxu0 0.0
    %1388 = vmatpush1.xpose.msra.mxu0 0.0
    %1389 = vmatprep.subr.mxu0 0.0
    %1390 = vmatpush1.xpose.msra.mxu0 0.0
    %1391 = vmatprep.subr.mxu0 0.0
    %1392 = vmatpush1.xpose.msra.mxu0 0.0
    %1393 = vmatprep.subr.mxu0 0.0
    %1394 = vmatpush1.xpose.msra.mxu0 0.0
    %1395 = vmatprep.subr.mxu0 0.0
    %1396 = vmatpush1.xpose.msra.mxu0 0.0
    %1397 = vmatprep.subr.mxu0 0.0
    %1398 = vmatpush1.xpose.msra.mxu0 0.0
    %1399 = vmatprep.subr.mxu0 0.0
    %1400 = vmatpush1.xpose.msra.mxu0 0.0
    %1401 = vmatprep.subr.mxu0 0.0
    %1402 = vmatpush1.xpose.msra.mxu0 0.0
    %1403 = vmatprep.subr.mxu0 0.0
    %1404 = vmatpush1.xpose.msra.mxu0 0.0
    %1405 = vmatprep.subr.mxu0 0.0
    %1406 = vmatpush1.xpose.msra.mxu0 0.0
    %1407 = vmatprep.subr.mxu0 0.0
    %1408 = vmatpush1.xpose.msra.mxu0 0.0
    %1409 = vmatprep.subr.mxu0 0.0
    %1410 = vmatpush1.xpose.msra.mxu0 0.0
    %1411 = vmatprep.mubr.f32.mxu0 %v264
    %1412 = vmatmul.mubr.f32.gmra.mrb[0].mxu0 %v256
    %v1413 = vpop.f32.mrb[0].mxu0
    %v1414 = vadd.f32 %v1344, %v1413
    %v1415 = vpop.f32.mrb[0].mxu0
    %1416 = vdwg.mxu0
    %1417 = vmatprep.subr.mxu0 %v57
    %1418 = vmatpush1.xpose.msra.mxu0 %v56
    %1419 = vmatprep.subr.mxu0 %v100
    %1420 = vmatpush1.xpose.msra.mxu0 %v99
    %1421 = vmatprep.subr.mxu0 0.0
    %1422 = vmatpush1.xpose.msra.mxu0 0.0
    %1423 = vmatprep.subr.mxu0 0.0
    %1424 = vmatpush1.xpose.msra.mxu0 0.0
    %1425 = vmatprep.subr.mxu0 0.0
    %1426 = vmatpush1.xpose.msra.mxu0 0.0
    %1427 = vmatprep.subr.mxu0 0.0
    %1428 = vmatpush1.xpose.msra.mxu0 0.0
    %1429 = vmatprep.subr.mxu0 0.0
    %1430 = vmatpush1.xpose.msra.mxu0 0.0
    %1431 = vmatprep.subr.mxu0 0.0
    %1432 = vmatpush1.xpose.msra.mxu0 0.0
    %1433 = vmatprep.subr.mxu0 0.0
    %1434 = vmatpush1.xpose.msra.mxu0 0.0
    %1435 = vmatprep.subr.mxu0 0.0
    %1436 = vmatpush1.xpose.msra.mxu0 0.0
    %1437 = vmatprep.subr.mxu0 0.0
    %1438 = vmatpush1.xpose.msra.mxu0 0.0
    %1439 = vmatprep.subr.mxu0 0.0
    %1440 = vmatpush1.xpose.msra.mxu0 0.0
    %1441 = vmatprep.subr.mxu0 0.0
    %1442 = vmatpush1.xpose.msra.mxu0 0.0
    %1443 = vmatprep.subr.mxu0 0.0
    %1444 = vmatpush1.xpose.msra.mxu0 0.0
    %1445 = vmatprep.subr.mxu0 0.0
    %1446 = vmatpush1.xpose.msra.mxu0 0.0
    %1447 = vmatprep.subr.mxu0 0.0
    %1448 = vmatpush1.xpose.msra.mxu0 0.0
    %1449 = vmatprep.subr.mxu0 0.0
    %1450 = vmatpush1.xpose.msra.mxu0 0.0
    %1451 = vmatprep.subr.mxu0 0.0
    %1452 = vmatpush1.xpose.msra.mxu0 0.0
    %1453 = vmatprep.subr.mxu0 0.0
    %1454 = vmatpush1.xpose.msra.mxu0 0.0
    %1455 = vmatprep.subr.mxu0 0.0
    %1456 = vmatpush1.xpose.msra.mxu0 0.0
    %1457 = vmatprep.subr.mxu0 0.0
    %1458 = vmatpush1.xpose.msra.mxu0 0.0
    %1459 = vmatprep.subr.mxu0 0.0
    %1460 = vmatpush1.xpose.msra.mxu0 0.0
    %1461 = vmatprep.subr.mxu0 0.0
    %1462 = vmatpush1.xpose.msra.mxu0 0.0
    %1463 = vmatprep.subr.mxu0 0.0
    %1464 = vmatpush1.xpose.msra.mxu0 0.0
    %1465 = vmatprep.subr.mxu0 0.0
    %1466 = vmatpush1.xpose.msra.mxu0 0.0
    %1467 = vmatprep.subr.mxu0 0.0
    %1468 = vmatpush1.xpose.msra.mxu0 0.0
    %1469 = vmatprep.subr.mxu0 0.0
    %1470 = vmatpush1.xpose.msra.mxu0 0.0
    %1471 = vmatprep.subr.mxu0 0.0
    %1472 = vmatpush1.xpose.msra.mxu0 0.0
    %1473 = vmatprep.subr.mxu0 0.0
    %1474 = vmatpush1.xpose.msra.mxu0 0.0
    %1475 = vmatprep.subr.mxu0 0.0
    %1476 = vmatpush1.xpose.msra.mxu0 0.0
    %1477 = vmatprep.subr.mxu0 0.0
    %1478 = vmatpush1.xpose.msra.mxu0 0.0
    %1479 = vmatprep.subr.mxu0 0.0
    %1480 = vmatpush1.xpose.msra.mxu0 0.0
    %1481 = vmatprep.mubr.f32.mxu0 %v265
    %1482 = vmatmul.mubr.f32.gmra.mrb[0].mxu0 %v263
    %v1483 = vpop.f32.mrb[0].mxu0
    %v1484 = vadd.f32 %v1414, %v1483
    %v1485 = vpop.f32.mrb[0].mxu0
    %1486 = vdwg.mxu0
    %1487 = vmatprep.subr.mxu0 %v59
    %1488 = vmatpush1.xpose.msra.mxu0 %v58
    %1489 = vmatprep.subr.mxu0 %v102
    %1490 = vmatpush1.xpose.msra.mxu0 %v101
    %1491 = vmatprep.subr.mxu0 0.0
    %1492 = vmatpush1.xpose.msra.mxu0 0.0
    %1493 = vmatprep.subr.mxu0 0.0
    %1494 = vmatpush1.xpose.msra.mxu0 0.0
    %1495 = vmatprep.subr.mxu0 0.0
    %1496 = vmatpush1.xpose.msra.mxu0 0.0
    %1497 = vmatprep.subr.mxu0 0.0
    %1498 = vmatpush1.xpose.msra.mxu0 0.0
    %1499 = vmatprep.subr.mxu0 0.0
    %1500 = vmatpush1.xpose.msra.mxu0 0.0
    %1501 = vmatprep.subr.mxu0 0.0
    %1502 = vmatpush1.xpose.msra.mxu0 0.0
    %1503 = vmatprep.subr.mxu0 0.0
    %1504 = vmatpush1.xpose.msra.mxu0 0.0
    %1505 = vmatprep.subr.mxu0 0.0
    %1506 = vmatpush1.xpose.msra.mxu0 0.0
    %1507 = vmatprep.subr.mxu0 0.0
    %1508 = vmatpush1.xpose.msra.mxu0 0.0
    %1509 = vmatprep.subr.mxu0 0.0
    %1510 = vmatpush1.xpose.msra.mxu0 0.0
    %1511 = vmatprep.subr.mxu0 0.0
    %1512 = vmatpush1.xpose.msra.mxu0 0.0
    %1513 = vmatprep.subr.mxu0 0.0
    %1514 = vmatpush1.xpose.msra.mxu0 0.0
    %1515 = vmatprep.subr.mxu0 0.0
    %1516 = vmatpush1.xpose.msra.mxu0 0.0
    %1517 = vmatprep.subr.mxu0 0.0
    %1518 = vmatpush1.xpose.msra.mxu0 0.0
    %1519 = vmatprep.subr.mxu0 0.0
    %1520 = vmatpush1.xpose.msra.mxu0 0.0
    %1521 = vmatprep.subr.mxu0 0.0
    %1522 = vmatpush1.xpose.msra.mxu0 0.0
    %1523 = vmatprep.subr.mxu0 0.0
    %1524 = vmatpush1.xpose.msra.mxu0 0.0
    %1525 = vmatprep.subr.mxu0 0.0
    %1526 = vmatpush1.xpose.msra.mxu0 0.0
    %1527 = vmatprep.subr.mxu0 0.0
    %1528 = vmatpush1.xpose.msra.mxu0 0.0
    %1529 = vmatprep.subr.mxu0 0.0
    %1530 = vmatpush1.xpose.msra.mxu0 0.0
    %1531 = vmatprep.subr.mxu0 0.0
    %1532 = vmatpush1.xpose.msra.mxu0 0.0
    %1533 = vmatprep.subr.mxu0 0.0
    %1534 = vmatpush1.xpose.msra.mxu0 0.0
    %1535 = vmatprep.subr.mxu0 0.0
    %1536 = vmatpush1.xpose.msra.mxu0 0.0
    %1537 = vmatprep.subr.mxu0 0.0
    %1538 = vmatpush1.xpose.msra.mxu0 0.0
    %1539 = vmatprep.subr.mxu0 0.0
    %1540 = vmatpush1.xpose.msra.mxu0 0.0
    %1541 = vmatprep.subr.mxu0 0.0
    %1542 = vmatpush1.xpose.msra.mxu0 0.0
    %1543 = vmatprep.subr.mxu0 0.0
    %1544 = vmatpush1.xpose.msra.mxu0 0.0
    %1545 = vmatprep.subr.mxu0 0.0
    %1546 = vmatpush1.xpose.msra.mxu0 0.0
    %1547 = vmatprep.subr.mxu0 0.0
    %1548 = vmatpush1.xpose.msra.mxu0 0.0
    %1549 = vmatprep.subr.mxu0 0.0
    %1550 = vmatpush1.xpose.msra.mxu0 0.0
    %1551 = vmatprep.mubr.f32.mxu0 %v281
    %1552 = vmatmul.mubr.f32.gmra.mrb[0].mxu0 %v273
    %v1553 = vpop.f32.mrb[0].mxu0
    %v1554 = vadd.f32 %v1484, %v1553
    %v1555 = vpop.f32.mrb[0].mxu0
    %1556 = vdwg.mxu0
    %1557 = vmatprep.subr.mxu0 %v61
    %1558 = vmatpush1.xpose.msra.mxu0 %v60
    %1559 = vmatprep.subr.mxu0 %v104
    %1560 = vmatpush1.xpose.msra.mxu0 %v103
    %1561 = vmatprep.subr.mxu0 0.0
    %1562 = vmatpush1.xpose.msra.mxu0 0.0
    %1563 = vmatprep.subr.mxu0 0.0
    %1564 = vmatpush1.xpose.msra.mxu0 0.0
    %1565 = vmatprep.subr.mxu0 0.0
    %1566 = vmatpush1.xpose.msra.mxu0 0.0
    %1567 = vmatprep.subr.mxu0 0.0
    %1568 = vmatpush1.xpose.msra.mxu0 0.0
    %1569 = vmatprep.subr.mxu0 0.0
    %1570 = vmatpush1.xpose.msra.mxu0 0.0
    %1571 = vmatprep.subr.mxu0 0.0
    %1572 = vmatpush1.xpose.msra.mxu0 0.0
    %1573 = vmatprep.subr.mxu0 0.0
    %1574 = vmatpush1.xpose.msra.mxu0 0.0
    %1575 = vmatprep.subr.mxu0 0.0
    %1576 = vmatpush1.xpose.msra.mxu0 0.0
    %1577 = vmatprep.subr.mxu0 0.0
    %1578 = vmatpush1.xpose.msra.mxu0 0.0
    %1579 = vmatprep.subr.mxu0 0.0
    %1580 = vmatpush1.xpose.msra.mxu0 0.0
    %1581 = vmatprep.subr.mxu0 0.0
    %1582 = vmatpush1.xpose.msra.mxu0 0.0
    %1583 = vmatprep.subr.mxu0 0.0
    %1584 = vmatpush1.xpose.msra.mxu0 0.0
    %1585 = vmatprep.subr.mxu0 0.0
    %1586 = vmatpush1.xpose.msra.mxu0 0.0
    %1587 = vmatprep.subr.mxu0 0.0
    %1588 = vmatpush1.xpose.msra.mxu0 0.0
    %1589 = vmatprep.subr.mxu0 0.0
    %1590 = vmatpush1.xpose.msra.mxu0 0.0
    %1591 = vmatprep.subr.mxu0 0.0
    %1592 = vmatpush1.xpose.msra.mxu0 0.0
    %1593 = vmatprep.subr.mxu0 0.0
    %1594 = vmatpush1.xpose.msra.mxu0 0.0
    %1595 = vmatprep.subr.mxu0 0.0
    %1596 = vmatpush1.xpose.msra.mxu0 0.0
    %1597 = vmatprep.subr.mxu0 0.0
    %1598 = vmatpush1.xpose.msra.mxu0 0.0
    %1599 = vmatprep.subr.mxu0 0.0
    %1600 = vmatpush1.xpose.msra.mxu0 0.0
    %1601 = vmatprep.subr.mxu0 0.0
    %1602 = vmatpush1.xpose.msra.mxu0 0.0
    %1603 = vmatprep.subr.mxu0 0.0
    %1604 = vmatpush1.xpose.msra.mxu0 0.0
    %1605 = vmatprep.subr.mxu0 0.0
    %1606 = vmatpush1.xpose.msra.mxu0 0.0
    %1607 = vmatprep.subr.mxu0 0.0
    %1608 = vmatpush1.xpose.msra.mxu0 0.0
    %1609 = vmatprep.subr.mxu0 0.0
    %1610 = vmatpush1.xpose.msra.mxu0 0.0
    %1611 = vmatprep.subr.mxu0 0.0
    %1612 = vmatpush1.xpose.msra.mxu0 0.0
    %1613 = vmatprep.subr.mxu0 0.0
    %1614 = vmatpush1.xpose.msra.mxu0 0.0
    %1615 = vmatprep.subr.mxu0 0.0
    %1616 = vmatpush1.xpose.msra.mxu0 0.0
    %1617 = vmatprep.subr.mxu0 0.0
    %1618 = vmatpush1.xpose.msra.mxu0 0.0
    %1619 = vmatprep.subr.mxu0 0.0
    %1620 = vmatpush1.xpose.msra.mxu0 0.0
    %1621 = vmatprep.mubr.f32.mxu0 %v282
    %1622 = vmatmul.mubr.f32.gmra.mrb[0].mxu0 %v280
    %v1623 = vpop.f32.mrb[0].mxu0
    %v1624 = vadd.f32 %v1554, %v1623
    %v1625 = vpop.f32.mrb[0].mxu0
    %1626 = vdwg.mxu0
    %1627 = vmatprep.subr.mxu0 %v63
    %1628 = vmatpush1.xpose.msra.mxu0 %v62
    %1629 = vmatprep.subr.mxu0 %v106
    %1630 = vmatpush1.xpose.msra.mxu0 %v105
    %1631 = vmatprep.subr.mxu0 0.0
    %1632 = vmatpush1.xpose.msra.mxu0 0.0
    %1633 = vmatprep.subr.mxu0 0.0
    %1634 = vmatpush1.xpose.msra.mxu0 0.0
    %1635 = vmatprep.subr.mxu0 0.0
    %1636 = vmatpush1.xpose.msra.mxu0 0.0
    %1637 = vmatprep.subr.mxu0 0.0
    %1638 = vmatpush1.xpose.msra.mxu0 0.0
    %1639 = vmatprep.subr.mxu0 0.0
    %1640 = vmatpush1.xpose.msra.mxu0 0.0
    %1641 = vmatprep.subr.mxu0 0.0
    %1642 = vmatpush1.xpose.msra.mxu0 0.0
    %1643 = vmatprep.subr.mxu0 0.0
    %1644 = vmatpush1.xpose.msra.mxu0 0.0
    %1645 = vmatprep.subr.mxu0 0.0
    %1646 = vmatpush1.xpose.msra.mxu0 0.0
    %1647 = vmatprep.subr.mxu0 0.0
    %1648 = vmatpush1.xpose.msra.mxu0 0.0
    %1649 = vmatprep.subr.mxu0 0.0
    %1650 = vmatpush1.xpose.msra.mxu0 0.0
    %1651 = vmatprep.subr.mxu0 0.0
    %1652 = vmatpush1.xpose.msra.mxu0 0.0
    %1653 = vmatprep.subr.mxu0 0.0
    %1654 = vmatpush1.xpose.msra.mxu0 0.0
    %1655 = vmatprep.subr.mxu0 0.0
    %1656 = vmatpush1.xpose.msra.mxu0 0.0
    %1657 = vmatprep.subr.mxu0 0.0
    %1658 = vmatpush1.xpose.msra.mxu0 0.0
    %1659 = vmatprep.subr.mxu0 0.0
    %1660 = vmatpush1.xpose.msra.mxu0 0.0
    %1661 = vmatprep.subr.mxu0 0.0
    %1662 = vmatpush1.xpose.msra.mxu0 0.0
    %1663 = vmatprep.subr.mxu0 0.0
    %1664 = vmatpush1.xpose.msra.mxu0 0.0
    %1665 = vmatprep.subr.mxu0 0.0
    %1666 = vmatpush1.xpose.msra.mxu0 0.0
    %1667 = vmatprep.subr.mxu0 0.0
    %1668 = vmatpush1.xpose.msra.mxu0 0.0
    %1669 = vmatprep.subr.mxu0 0.0
    %1670 = vmatpush1.xpose.msra.mxu0 0.0
    %1671 = vmatprep.subr.mxu0 0.0
    %1672 = vmatpush1.xpose.msra.mxu0 0.0
    %1673 = vmatprep.subr.mxu0 0.0
    %1674 = vmatpush1.xpose.msra.mxu0 0.0
    %1675 = vmatprep.subr.mxu0 0.0
    %1676 = vmatpush1.xpose.msra.mxu0 0.0
    %1677 = vmatprep.subr.mxu0 0.0
    %1678 = vmatpush1.xpose.msra.mxu0 0.0
    %1679 = vmatprep.subr.mxu0 0.0
    %1680 = vmatpush1.xpose.msra.mxu0 0.0
    %1681 = vmatprep.subr.mxu0 0.0
    %1682 = vmatpush1.xpose.msra.mxu0 0.0
    %1683 = vmatprep.subr.mxu0 0.0
    %1684 = vmatpush1.xpose.msra.mxu0 0.0
    %1685 = vmatprep.subr.mxu0 0.0
    %1686 = vmatpush1.xpose.msra.mxu0 0.0
    %1687 = vmatprep.subr.mxu0 0.0
    %1688 = vmatpush1.xpose.msra.mxu0 0.0
    %1689 = vmatprep.subr.mxu0 0.0
    %1690 = vmatpush1.xpose.msra.mxu0 0.0
    %1691 = vmatprep.mubr.f32.mxu0 %v298
    %1692 = vmatmul.mubr.f32.gmra.mrb[0].mxu0 %v290
    %v1693 = vpop.f32.mrb[0].mxu0
    %v1694 = vadd.f32 %v1624, %v1693
    %v1695 = vpop.f32.mrb[0].mxu0
    %1696 = vdwg.mxu0
    %1697 = vmatprep.subr.mxu0 %v65
    %1698 = vmatpush1.xpose.msra.mxu0 %v64
    %1699 = vmatprep.subr.mxu0 %v108
    %1700 = vmatpush1.xpose.msra.mxu0 %v107
    %1701 = vmatprep.subr.mxu0 0.0
    %1702 = vmatpush1.xpose.msra.mxu0 0.0
    %1703 = vmatprep.subr.mxu0 0.0
    %1704 = vmatpush1.xpose.msra.mxu0 0.0
    %1705 = vmatprep.subr.mxu0 0.0
    %1706 = vmatpush1.xpose.msra.mxu0 0.0
    %1707 = vmatprep.subr.mxu0 0.0
    %1708 = vmatpush1.xpose.msra.mxu0 0.0
    %1709 = vmatprep.subr.mxu0 0.0
    %1710 = vmatpush1.xpose.msra.mxu0 0.0
    %1711 = vmatprep.subr.mxu0 0.0
    %1712 = vmatpush1.xpose.msra.mxu0 0.0
    %1713 = vmatprep.subr.mxu0 0.0
    %1714 = vmatpush1.xpose.msra.mxu0 0.0
    %1715 = vmatprep.subr.mxu0 0.0
    %1716 = vmatpush1.xpose.msra.mxu0 0.0
    %1717 = vmatprep.subr.mxu0 0.0
    %1718 = vmatpush1.xpose.msra.mxu0 0.0
    %1719 = vmatprep.subr.mxu0 0.0
    %1720 = vmatpush1.xpose.msra.mxu0 0.0
    %1721 = vmatprep.subr.mxu0 0.0
    %1722 = vmatpush1.xpose.msra.mxu0 0.0
    %1723 = vmatprep.subr.mxu0 0.0
    %1724 = vmatpush1.xpose.msra.mxu0 0.0
    %1725 = vmatprep.subr.mxu0 0.0
    %1726 = vmatpush1.xpose.msra.mxu0 0.0
    %1727 = vmatprep.subr.mxu0 0.0
    %1728 = vmatpush1.xpose.msra.mxu0 0.0
    %1729 = vmatprep.subr.mxu0 0.0
    %1730 = vmatpush1.xpose.msra.mxu0 0.0
    %1731 = vmatprep.subr.mxu0 0.0
    %1732 = vmatpush1.xpose.msra.mxu0 0.0
    %1733 = vmatprep.subr.mxu0 0.0
    %1734 = vmatpush1.xpose.msra.mxu0 0.0
    %1735 = vmatprep.subr.mxu0 0.0
    %1736 = vmatpush1.xpose.msra.mxu0 0.0
    %1737 = vmatprep.subr.mxu0 0.0
    %1738 = vmatpush1.xpose.msra.mxu0 0.0
    %1739 = vmatprep.subr.mxu0 0.0
    %1740 = vmatpush1.xpose.msra.mxu0 0.0
    %1741 = vmatprep.subr.mxu0 0.0
    %1742 = vmatpush1.xpose.msra.mxu0 0.0
    %1743 = vmatprep.subr.mxu0 0.0
    %1744 = vmatpush1.xpose.msra.mxu0 0.0
    %1745 = vmatprep.subr.mxu0 0.0
    %1746 = vmatpush1.xpose.msra.mxu0 0.0
    %1747 = vmatprep.subr.mxu0 0.0
    %1748 = vmatpush1.xpose.msra.mxu0 0.0
    %1749 = vmatprep.subr.mxu0 0.0
    %1750 = vmatpush1.xpose.msra.mxu0 0.0
    %1751 = vmatprep.subr.mxu0 0.0
    %1752 = vmatpush1.xpose.msra.mxu0 0.0
    %1753 = vmatprep.subr.mxu0 0.0
    %1754 = vmatpush1.xpose.msra.mxu0 0.0
    %1755 = vmatprep.subr.mxu0 0.0
    %1756 = vmatpush1.xpose.msra.mxu0 0.0
    %1757 = vmatprep.subr.mxu0 0.0
    %1758 = vmatpush1.xpose.msra.mxu0 0.0
    %1759 = vmatprep.subr.mxu0 0.0
    %1760 = vmatpush1.xpose.msra.mxu0 0.0
    %1761 = vmatprep.mubr.f32.mxu0 %v299
    %1762 = vmatmul.mubr.f32.gmra.mrb[0].mxu0 %v297
    %v1763 = vpop.f32.mrb[0].mxu0
    %v1764 = vadd.f32 %v1694, %v1763
    %v1765 = vpop.f32.mrb[0].mxu0
    %1766 = vdwg.mxu0
    %1767 = vmatprep.subr.mxu0 %v67
    %1768 = vmatpush1.xpose.msra.mxu0 %v66
    %1769 = vmatprep.subr.mxu0 %v110
    %1770 = vmatpush1.xpose.msra.mxu0 %v109
    %1771 = vmatprep.subr.mxu0 0.0
    %1772 = vmatpush1.xpose.msra.mxu0 0.0
    %1773 = vmatprep.subr.mxu0 0.0
    %1774 = vmatpush1.xpose.msra.mxu0 0.0
    %1775 = vmatprep.subr.mxu0 0.0
    %1776 = vmatpush1.xpose.msra.mxu0 0.0
    %1777 = vmatprep.subr.mxu0 0.0
    %1778 = vmatpush1.xpose.msra.mxu0 0.0
    %1779 = vmatprep.subr.mxu0 0.0
    %1780 = vmatpush1.xpose.msra.mxu0 0.0
    %1781 = vmatprep.subr.mxu0 0.0
    %1782 = vmatpush1.xpose.msra.mxu0 0.0
    %1783 = vmatprep.subr.mxu0 0.0
    %1784 = vmatpush1.xpose.msra.mxu0 0.0
    %1785 = vmatprep.subr.mxu0 0.0
    %1786 = vmatpush1.xpose.msra.mxu0 0.0
    %1787 = vmatprep.subr.mxu0 0.0
    %1788 = vmatpush1.xpose.msra.mxu0 0.0
    %1789 = vmatprep.subr.mxu0 0.0
    %1790 = vmatpush1.xpose.msra.mxu0 0.0
    %1791 = vmatprep.subr.mxu0 0.0
    %1792 = vmatpush1.xpose.msra.mxu0 0.0
    %1793 = vmatprep.subr.mxu0 0.0
    %1794 = vmatpush1.xpose.msra.mxu0 0.0
    %1795 = vmatprep.subr.mxu0 0.0
    %1796 = vmatpush1.xpose.msra.mxu0 0.0
    %1797 = vmatprep.subr.mxu0 0.0
    %1798 = vmatpush1.xpose.msra.mxu0 0.0
    %1799 = vmatprep.subr.mxu0 0.0
    %1800 = vmatpush1.xpose.msra.mxu0 0.0
    %1801 = vmatprep.subr.mxu0 0.0
    %1802 = vmatpush1.xpose.msra.mxu0 0.0
    %1803 = vmatprep.subr.mxu0 0.0
    %1804 = vmatpush1.xpose.msra.mxu0 0.0
    %1805 = vmatprep.subr.mxu0 0.0
    %1806 = vmatpush1.xpose.msra.mxu0 0.0
    %1807 = vmatprep.subr.mxu0 0.0
    %1808 = vmatpush1.xpose.msra.mxu0 0.0
    %1809 = vmatprep.subr.mxu0 0.0
    %1810 = vmatpush1.xpose.msra.mxu0 0.0
    %1811 = vmatprep.subr.mxu0 0.0
    %1812 = vmatpush1.xpose.msra.mxu0 0.0
    %1813 = vmatprep.subr.mxu0 0.0
    %1814 = vmatpush1.xpose.msra.mxu0 0.0
    %1815 = vmatprep.subr.mxu0 0.0
    %1816 = vmatpush1.xpose.msra.mxu0 0.0
    %1817 = vmatprep.subr.mxu0 0.0
    %1818 = vmatpush1.xpose.msra.mxu0 0.0
    %1819 = vmatprep.subr.mxu0 0.0
    %1820 = vmatpush1.xpose.msra.mxu0 0.0
    %1821 = vmatprep.subr.mxu0 0.0
    %1822 = vmatpush1.xpose.msra.mxu0 0.0
    %1823 = vmatprep.subr.mxu0 0.0
    %1824 = vmatpush1.xpose.msra.mxu0 0.0
    %1825 = vmatprep.subr.mxu0 0.0
    %1826 = vmatpush1.xpose.msra.mxu0 0.0
    %1827 = vmatprep.subr.mxu0 0.0
    %1828 = vmatpush1.xpose.msra.mxu0 0.0
    %1829 = vmatprep.subr.mxu0 0.0
    %1830 = vmatpush1.xpose.msra.mxu0 0.0
    %1831 = vmatprep.mubr.f32.mxu0 %v315
    %1832 = vmatmul.mubr.f32.gmra.mrb[0].mxu0 %v307
    %v1833 = vpop.f32.mrb[0].mxu0
    %v1834 = vadd.f32 %v1764, %v1833
    %v1835 = vpop.f32.mrb[0].mxu0
    %1836 = vdwg.mxu0
    %1837 = vmatprep.subr.mxu0 0.0
    %1838 = vmatpush1.xpose.msra.mxu0 %v362
    %1839 = vmatprep.subr.mxu0 0.0
    %1840 = vmatpush1.xpose.msra.mxu0 %v365
    %1841 = vmatprep.subr.mxu0 0.0
    %1842 = vmatpush1.xpose.msra.mxu0 0.0
    %1843 = vmatprep.subr.mxu0 0.0
    %1844 = vmatpush1.xpose.msra.mxu0 0.0
    %1845 = vmatprep.subr.mxu0 0.0
    %1846 = vmatpush1.xpose.msra.mxu0 0.0
    %1847 = vmatprep.subr.mxu0 0.0
    %1848 = vmatpush1.xpose.msra.mxu0 0.0
    %1849 = vmatprep.subr.mxu0 0.0
    %1850 = vmatpush1.xpose.msra.mxu0 0.0
    %1851 = vmatprep.subr.mxu0 0.0
    %1852 = vmatpush1.xpose.msra.mxu0 0.0
    %1853 = vmatprep.subr.mxu0 0.0
    %1854 = vmatpush1.xpose.msra.mxu0 0.0
    %1855 = vmatprep.subr.mxu0 0.0
    %1856 = vmatpush1.xpose.msra.mxu0 0.0
    %1857 = vmatprep.subr.mxu0 0.0
    %1858 = vmatpush1.xpose.msra.mxu0 0.0
    %1859 = vmatprep.subr.mxu0 0.0
    %1860 = vmatpush1.xpose.msra.mxu0 0.0
    %1861 = vmatprep.subr.mxu0 0.0
    %1862 = vmatpush1.xpose.msra.mxu0 0.0
    %1863 = vmatprep.subr.mxu0 0.0
    %1864 = vmatpush1.xpose.msra.mxu0 0.0
    %1865 = vmatprep.subr.mxu0 0.0
    %1866 = vmatpush1.xpose.msra.mxu0 0.0
    %1867 = vmatprep.subr.mxu0 0.0
    %1868 = vmatpush1.xpose.msra.mxu0 0.0
    %1869 = vmatprep.subr.mxu0 0.0
    %1870 = vmatpush1.xpose.msra.mxu0 0.0
    %1871 = vmatprep.subr.mxu0 0.0
    %1872 = vmatpush1.xpose.msra.mxu0 0.0
    %1873 = vmatprep.subr.mxu0 0.0
    %1874 = vmatpush1.xpose.msra.mxu0 0.0
    %1875 = vmatprep.subr.mxu0 0.0
    %1876 = vmatpush1.xpose.msra.mxu0 0.0
    %1877 = vmatprep.subr.mxu0 0.0
    %1878 = vmatpush1.xpose.msra.mxu0 0.0
    %1879 = vmatprep.subr.mxu0 0.0
    %1880 = vmatpush1.xpose.msra.mxu0 0.0
    %1881 = vmatprep.subr.mxu0 0.0
    %1882 = vmatpush1.xpose.msra.mxu0 0.0
    %1883 = vmatprep.subr.mxu0 0.0
    %1884 = vmatpush1.xpose.msra.mxu0 0.0
    %1885 = vmatprep.subr.mxu0 0.0
    %1886 = vmatpush1.xpose.msra.mxu0 0.0
    %1887 = vmatprep.subr.mxu0 0.0
    %1888 = vmatpush1.xpose.msra.mxu0 0.0
    %1889 = vmatprep.subr.mxu0 0.0
    %1890 = vmatpush1.xpose.msra.mxu0 0.0
    %1891 = vmatprep.subr.mxu0 0.0
    %1892 = vmatpush1.xpose.msra.mxu0 0.0
    %1893 = vmatprep.subr.mxu0 0.0
    %1894 = vmatpush1.xpose.msra.mxu0 0.0
    %1895 = vmatprep.subr.mxu0 0.0
    %1896 = vmatpush1.xpose.msra.mxu0 0.0
    %1897 = vmatprep.subr.mxu0 0.0
    %1898 = vmatpush1.xpose.msra.mxu0 0.0
    %1899 = vmatprep.subr.mxu0 0.0
    %1900 = vmatpush1.xpose.msra.mxu0 0.0
    %1901 = vmatprep.mubr.f32.mxu0 0.0
    %1902 = vmatmul.mubr.f32.gmra.mrb[0].mxu0 %v359
    %v1903 = vpop.f32.mrb[0].mxu0
    %v1904 = vadd.f32 %v1834, %v1903
    %v1905 = vpop.f32.mrb[0].mxu0
    %1906 = vdwg.mxu0
    %vm1907 = vcmask 74752
    %1908 = vst.msk [vmem:[#allocation2] sm:$0x3] %vm1907, %v1904
    // Predicated region
    $region14: #{vanilla_cnn_forward.3} parent=1 // pred_check
      _
    $region15: #{vanilla_cnn_forward.3} parent=1 // pred_check_branch
      %1910 = sbr.rel (0) target = $region17
    $region16: #{vanilla_cnn_forward.3} parent=1 // pred_region
      %s1912 = ssub.s32 32, 32
      %1913 = vsyncadd [#allocation3], %s1912
      %s1915 = sshll.u32 [#allocation2], 4
      %s1916 = int_to_ptr.vmem [resolvable:$true] %s1915
      %1918 = dma.vmem_to_hbm [thread:$0]  %s1916, 32, %s3, [#allocation3]
    $region17: #{vanilla_cnn_forward.3} parent=1 // pred_fallthru
      _
    // Predicated region
    $region18: #{vanilla_cnn_forward.3} parent=1 // pred_check
      _
    $region19: #{vanilla_cnn_forward.3} parent=1 // pred_check_branch
      %1920 = sbr.rel (0) target = $region21
    $region20: #{vanilla_cnn_forward.3} parent=1 // pred_region
      %1921 = dma.done [#allocation3], 32
    $region21: #{vanilla_cnn_forward.3} parent=1 // pred_fallthru
      _
    %1922 = vsyncpa [#allocation3], 1

// kernel: vanilla_cnn_forward.2
$region0: #{vanilla_cnn_forward.2}
  #allocation0 [shape = 'u32[]', space=smem, size = 0x4, offset = 0x4, fixed_abs, tag = 'smem constant byte address 0x4 - core index']
  #allocation1 [shape = 'u32[144,128]{1,0:T(1,128)}', space=vmem, size = 0x12000, scoped, tag = 'internal scratch']
  #allocation2 [shape = 'f32[147,1024]{1,0:T(8,128)}', space=vmem, size = 0x98000, scoped, tag = 'scratch operand']
  %s0 = inlined_call_operand.vmem [shape: f32[3,2560], index: 0, kind: input, shape index: {}]
  %s1 = inlined_call_operand.vmem [shape: f32[32,147], index: 1, kind: input, shape index: {}]
  %s2 = inlined_call_operand.vmem [shape: f32[32,1], index: 2, kind: input, shape index: {}]
  %s3 = inlined_call_operand.vmem [shape: f32[32,2048], index: 3, kind: output, shape index: {}]
  %s4 = sld [smem:[#allocation0]]
  $region64: #{vanilla_cnn_forward.2} parent=0
    _
  %s6 = ssub.s32 1, %s4
  %s7 = scalar_select 0, %s6, %s4
  $region1: #{vanilla_cnn_forward.2} parent=0
    #allocation3 [shape = 'u8[262144]{0}', space=vmem, size = 0x40000, scoped, tag = 'output window, operand 0']
    loop: start=0, step=1, limit=4
    $region2: #{vanilla_cnn_forward.2} parent=1 // loop_pre_header
      _
    $region3: #{vanilla_cnn_forward.2} parent=1 // loop_header
      %s9 = sphi 0, %s13
      %p10 = scmp.ge.s32.totalorder %s9, 4
      %s19 = sphi 0, %s21
      %s22 = sphi 0, %s19
      %s23 = sphi 0, %s22
      %s39 = sphi 0, %s23
      %s43 = sphi 0, %s43
      %s45 = sphi 0, %s43
      %s46 = sphi 0, %s45
      %s60 = sphi 0, %s46
      %s64 = sphi 0, %s64
      %s66 = sphi 0, %s64
      %s67 = sphi 0, %s66
      %s81 = sphi 0, %s67
      %s87 = sphi 0, %s89
      %s90 = sphi 0, %s87
      %s91 = sphi 0, %s90
      %s107 = sphi 0, %s91
    $region4: #{vanilla_cnn_forward.2} parent=1 // loop_header_branch
      %12 = sbr.rel (%p10) target = $region8
    $region5: #{vanilla_cnn_forward.2} parent=1 // loop_body
      %s14 = ssub.s32 %s9, 1
      %s15 = ssub.s32 %s9, 2
      %s16 = sadd.s32 %s9, 1
      %s17 = ssub.s32 %s9, %s16
      %p18 = scmp.eq.s32.totalorder %s17, 0
      %s20 = sadd.s32 %s19, 1
      %s21 = scalar_select %p18, %s19, %s20
      %p24 = pneg %p18
      %p25 = scmp.eq.s32.totalorder %s9, 1
      %p26 = por %p24, %p25
      %p27 = scmp.ne.s32.totalorder %s19, %s22
      %p28 = scmp.eq.s32.totalorder %s9, 0
      %p29 = por %p27, %p28
      %p30 = scmp.ne.s32.totalorder %s19, %s22
      %p31 = scmp.eq.s32.totalorder %s14, 1
      %p32 = por %p30, %p31
      %p33 = scmp.ne.s32.totalorder %s22, %s23
      %p34 = scmp.eq.s32.totalorder %s14, 0
      %p35 = por %p33, %p34
      %p36 = scmp.ne.s32.totalorder %s22, %s23
      %p37 = scmp.eq.s32.totalorder %s15, 1
      %p38 = por %p36, %p37
      %p40 = scmp.ne.s32.totalorder %s23, %s39
      %p41 = scmp.eq.s32.totalorder %s15, 0
      %p42 = por %p40, %p41
      %s44 = sadd.s32 %s43, 1
      %p47 = scmp.eq.s32.totalorder %s9, 1
      %p48 = scmp.ne.s32.totalorder %s43, %s45
      %p49 = scmp.eq.s32.totalorder %s9, 0
      %p50 = por %p48, %p49
      %p51 = scmp.ne.s32.totalorder %s43, %s45
      %p52 = scmp.eq.s32.totalorder %s14, 1
      %p53 = por %p51, %p52
      %p54 = scmp.ne.s32.totalorder %s45, %s46
      %p55 = scmp.eq.s32.totalorder %s14, 0
      %p56 = por %p54, %p55
      %p57 = scmp.ne.s32.totalorder %s45, %s46
      %p58 = scmp.eq.s32.totalorder %s15, 1
      %p59 = por %p57, %p58
      %p61 = scmp.ne.s32.totalorder %s46, %s60
      %p62 = scmp.eq.s32.totalorder %s15, 0
      %p63 = por %p61, %p62
      %s65 = sadd.s32 %s64, 1
      %p68 = scmp.eq.s32.totalorder %s9, 1
      %p69 = scmp.ne.s32.totalorder %s64, %s66
      %p70 = scmp.eq.s32.totalorder %s9, 0
      %p71 = por %p69, %p70
      %p72 = scmp.ne.s32.totalorder %s64, %s66
      %p73 = scmp.eq.s32.totalorder %s14, 1
      %p74 = por %p72, %p73
      %p75 = scmp.ne.s32.totalorder %s66, %s67
      %p76 = scmp.eq.s32.totalorder %s14, 0
      %p77 = por %p75, %p76
      %p78 = scmp.ne.s32.totalorder %s66, %s67
      %p79 = scmp.eq.s32.totalorder %s15, 1
      %p80 = por %p78, %p79
      %p82 = scmp.ne.s32.totalorder %s67, %s81
      %p83 = scmp.eq.s32.totalorder %s15, 0
      %p84 = por %p82, %p83
      %s85 = ssub.s32 %s9, %s16
      %p86 = scmp.eq.s32.totalorder %s85, 0
      %s88 = sadd.s32 %s87, 1
      %s89 = scalar_select %p86, %s87, %s88
      %p92 = pneg %p86
      %p93 = scmp.eq.s32.totalorder %s9, 1
      %p94 = por %p92, %p93
      %p95 = scmp.ne.s32.totalorder %s87, %s90
      %p96 = scmp.eq.s32.totalorder %s9, 0
      %p97 = por %p95, %p96
      %p98 = scmp.ne.s32.totalorder %s87, %s90
      %p99 = scmp.eq.s32.totalorder %s14, 1
      %p100 = por %p98, %p99
      %p101 = scmp.ne.s32.totalorder %s90, %s91
      %p102 = scmp.eq.s32.totalorder %s14, 0
      %p103 = por %p101, %p102
      %p104 = scmp.ne.s32.totalorder %s90, %s91
      %p105 = scmp.eq.s32.totalorder %s15, 1
      %p106 = por %p104, %p105
      %p108 = scmp.ne.s32.totalorder %s91, %s107
      %p109 = scmp.eq.s32.totalorder %s15, 0
      %p110 = por %p108, %p109
      %p111 = scmp.le.s32.totalorder 1, %s9
      %p112 = scmp.lt.s32.totalorder %s9, 3
      %p113 = pnand %p111, %p112
      %p114 = pneg %p113
      // Predicated region
      $region9: #{vanilla_cnn_forward.2} parent=5 // pred_check
        _
      $region10: #{vanilla_cnn_forward.2} parent=5 // pred_check_branch
        %116 = sbr.rel (%p113) target = $region12
      $region11: #{vanilla_cnn_forward.2} parent=5 // pred_region
        %s117 = ssub.s32 %s9, 1
        // Predicated region
        $region13: #{vanilla_cnn_forward.2} parent=11 // pred_check
          %p118 = pneg %p56
        $region14: #{vanilla_cnn_forward.2} parent=11 // pred_check_branch
          %120 = sbr.rel (%p118) target = $region16
        $region15: #{vanilla_cnn_forward.2} parent=11 // pred_region
          _
        $region16: #{vanilla_cnn_forward.2} parent=11 // pred_fallthru
          _
        // Predicated region
        $region17: #{vanilla_cnn_forward.2} parent=11 // pred_check
          %p121 = pneg %p77
        $region18: #{vanilla_cnn_forward.2} parent=11 // pred_check_branch
          %123 = sbr.rel (%p121) target = $region20
        $region19: #{vanilla_cnn_forward.2} parent=11 // pred_region
          _
        $region20: #{vanilla_cnn_forward.2} parent=11 // pred_fallthru
          _
      $region12: #{vanilla_cnn_forward.2} parent=5 // pred_fallthru
        _
      %p124 = scmp.lt.s32.totalorder %s9, 2
      // Predicated region
      $region21: #{vanilla_cnn_forward.2} parent=5 // pred_check
        %p125 = pneg %p124
      $region22: #{vanilla_cnn_forward.2} parent=5 // pred_check_branch
        %127 = sbr.rel (%p125) target = $region24
      $region23: #{vanilla_cnn_forward.2} parent=5 // pred_region
        // Predicated region
        $region25: #{vanilla_cnn_forward.2} parent=23 // pred_check
          %p128 = pneg %p29
        $region26: #{vanilla_cnn_forward.2} parent=23 // pred_check_branch
          %130 = sbr.rel (%p128) target = $region28
        $region27: #{vanilla_cnn_forward.2} parent=23 // pred_region
          %s131 = smul.u32 10, %s9
          %p132 = scmp.lt.s32.totalorder %s131, 19
          %s133 = scalar_select %p132, %s131, 19
          %s134 = smul.addr %s133, 4
          %s135 = scalar_lea.vmem %s0, %s134
          %s136 = smul.u32 10, %s9
        $region28: #{vanilla_cnn_forward.2} parent=23 // pred_fallthru
          _
      $region24: #{vanilla_cnn_forward.2} parent=5 // pred_fallthru
        _
      %p137 = scmp.le.s32.totalorder 1, %s9
      %p138 = scmp.lt.s32.totalorder %s9, 3
      %p139 = pnand %p137, %p138
      %p140 = pneg %p139
      // Predicated region
      $region29: #{vanilla_cnn_forward.2} parent=5 // pred_check
        _
      $region30: #{vanilla_cnn_forward.2} parent=5 // pred_check_branch
        %142 = sbr.rel (%p139) target = $region32
      $region31: #{vanilla_cnn_forward.2} parent=5 // pred_region
        %s143 = ssub.s32 %s9, 1
        %s144 = smul.u32 10, %s14
        %p145 = scmp.lt.s32.totalorder %s144, 19
        %s146 = scalar_select %p145, %s144, 19
        %s147 = smul.addr %s146, 4
        %s148 = scalar_lea.vmem %s0, %s147
        %p149 = pneg %p35
        %p150 = pneg %p32
        %p151 = pneg %p56
        %p152 = pneg %p53
        %p153 = pneg %p77
        %p154 = pneg %p74
        %p155 = pneg %p103
        %p156 = pneg %p100
        %s157 = sand.u32 %s90, 1
        %s158 = sand.u32 %s90, 1
        %s159 = smul.addr %s158, 256
        %s160 = scalar_lea.vmem [#allocation3], %s159
        %s161 = smul.u32 10, %s14
        %p162 = scmp.lt.s32.totalorder %s161, 19
        %s163 = scalar_select %p162, %s161, 19
        %s164 = smul.addr %s163, 4
        %s165 = scalar_lea.vmem %s0, %s164
        %s166 = smul.u32 10, %s14
        %s167 = smul.u32 8, %s14
        %v168 = vld [vmem:[%s165] sm:$0x77]
        %v169 = vld [vmem:[%s165 + $0x8] sm:$0x77]
        %v170 = vld [vmem:[%s165 + $0x10] sm:$0x77]
        %v171 = vld [vmem:[%s165 + $0x18] sm:$0x77]
        %v176 = vcombine.high %v168, %v168
        %v177 = vcombine.high %v169, %v169
        %v178 = vcombine.high %v170, %v170
        %v179 = vcombine.high %v171, %v171
        %184 = vst [vmem:[#allocation2] sm:$0x7] %v168
        %185 = vst [vmem:[#allocation2 + $0x8] sm:$0x7] %v176
        %186 = vst [vmem:[#allocation2 + $0x10] sm:$0x7] %v169
        %187 = vst [vmem:[#allocation2 + $0x18] sm:$0x7] %v177
        %188 = vst [vmem:[#allocation2 + $0x20] sm:$0x7] %v170
        %189 = vst [vmem:[#allocation2 + $0x28] sm:$0x7] %v178
        %190 = vst [vmem:[#allocation2 + $0x30] sm:$0x7] %v171
        %191 = vst [vmem:[#allocation2 + $0x38] sm:$0x7] %v179
        %v192 = vld [vmem:[%s165] sm:$0x77]
        %v193 = vld [vmem:[%s165 + $0x8] sm:$0x77]
        %v194 = vld [vmem:[%s165 + $0x10] sm:$0x77]
        %v195 = vld [vmem:[%s165 + $0x18] sm:$0x77]
        %v196 = vld [vmem:[%s165 + $0x20] sm:$0x7]
        %v202 = vcombine.high %v192, %v192
        %v203 = vcombine.high %v193, %v193
        %v204 = vcombine.high %v194, %v194
        %v205 = vcombine.high %v195, %v195
        %v206 = vrot.slane %v192, 5
        %v207 = vrot.slane %v202, 5
        %v208 = vrot.slane %v193, 5
        %v209 = vrot.slane %v203, 5
        %v210 = vrot.slane %v194, 5
        %v211 = vrot.slane %v204, 5
        %v212 = vrot.slane %v195, 5
        %v213 = vrot.slane %v205, 5
        %v214 = vrot.slane %v196, 5
        %215 = vrot.lane.b32.xlu0 %v206, 127
        %v216 = vpop.permute.xlu0 %215
        %217 = vrot.lane.b32.xlu0 %v207, 127
        %v218 = vpop.permute.xlu0 %217
        %219 = vrot.lane.b32.xlu0 %v208, 127
        %v220 = vpop.permute.xlu0 %219
        %221 = vrot.lane.b32.xlu0 %v209, 127
        %v222 = vpop.permute.xlu0 %221
        %223 = vrot.lane.b32.xlu0 %v210, 127
        %v224 = vpop.permute.xlu0 %223
        %225 = vrot.lane.b32.xlu0 %v211, 127
        %v226 = vpop.permute.xlu0 %225
        %227 = vrot.lane.b32.xlu0 %v212, 127
        %v228 = vpop.permute.xlu0 %227
        %229 = vrot.lane.b32.xlu0 %v213, 127
        %v230 = vpop.permute.xlu0 %229
        %231 = vrot.lane.b32.xlu0 %v214, 127
        %v232 = vpop.permute.xlu0 %231
        %vm233 = vcmask 1039360
        %v234 = vsel %vm233, %v216, %v218
        %v235 = vsel %vm233, %v218, %v220
        %v236 = vsel %vm233, %v220, %v222
        %v237 = vsel %vm233, %v222, %v224
        %v238 = vsel %vm233, %v224, %v226
        %v239 = vsel %vm233, %v226, %v228
        %v240 = vsel %vm233, %v228, %v230
        %v241 = vsel %vm233, %v230, %v232
        %250 = vst [vmem:[#allocation2] sm:$0x38] %v234
        %251 = vst [vmem:[#allocation2 + $0x8] sm:$0x38] %v235
        %252 = vst [vmem:[#allocation2 + $0x10] sm:$0x38] %v236
        %253 = vst [vmem:[#allocation2 + $0x18] sm:$0x38] %v237
        %254 = vst [vmem:[#allocation2 + $0x20] sm:$0x38] %v238
        %255 = vst [vmem:[#allocation2 + $0x28] sm:$0x38] %v239
        %256 = vst [vmem:[#allocation2 + $0x30] sm:$0x38] %v240
        %257 = vst [vmem:[#allocation2 + $0x38] sm:$0x38] %v241
        %v258 = vld [vmem:[%s165] sm:$0x77]
        %v259 = vld [vmem:[%s165 + $0x8] sm:$0x77]
        %v260 = vld [vmem:[%s165 + $0x10] sm:$0x77]
        %v261 = vld [vmem:[%s165 + $0x18] sm:$0x77]
        %v262 = vld [vmem:[%s165 + $0x20] sm:$0x7]
        %v268 = vcombine.high %v258, %v258
        %v269 = vcombine.high %v259, %v259
        %v270 = vcombine.high %v260, %v260
        %v271 = vcombine.high %v261, %v261
        %v272 = vrot.slane %v258, 2
        %v273 = vrot.slane %v268, 2
        %v274 = vrot.slane %v259, 2
        %v275 = vrot.slane %v269, 2
        %v276 = vrot.slane %v260, 2
        %v277 = vrot.slane %v270, 2
        %v278 = vrot.slane %v261, 2
        %v279 = vrot.slane %v271, 2
        %v280 = vrot.slane %v262, 2
        %281 = vrot.lane.b32.xlu0 %v272, 126
        %v282 = vpop.permute.xlu0 %281
        %283 = vrot.lane.b32.xlu0 %v273, 126
        %v284 = vpop.permute.xlu0 %283
        %285 = vrot.lane.b32.xlu0 %v274, 126
        %v286 = vpop.permute.xlu0 %285
        %287 = vrot.lane.b32.xlu0 %v275, 126
        %v288 = vpop.permute.xlu0 %287
        %289 = vrot.lane.b32.xlu0 %v276, 126
        %v290 = vpop.permute.xlu0 %289
        %291 = vrot.lane.b32.xlu0 %v277, 126
        %v292 = vpop.permute.xlu0 %291
        %293 = vrot.lane.b32.xlu0 %v278, 126
        %v294 = vpop.permute.xlu0 %293
        %295 = vrot.lane.b32.xlu0 %v279, 126
        %v296 = vpop.permute.xlu0 %295
        %297 = vrot.lane.b32.xlu0 %v280, 126
        %v298 = vpop.permute.xlu0 %297
        %vm299 = vcmask 1031168
        %v300 = vsel %vm299, %v282, %v284
        %v301 = vsel %vm299, %v284, %v286
        %v302 = vsel %vm299, %v286, %v288
        %v303 = vsel %vm299, %v288, %v290
        %v304 = vsel %vm299, %v290, %v292
        %v305 = vsel %vm299, %v292, %v294
        %v306 = vsel %vm299, %v294, %v296
        %v307 = vsel %vm299, %v296, %v298
        %316 = vst [vmem:[#allocation2] sm:$0xc0] %v300
        %317 = vst [vmem:[#allocation2 + $0x8] sm:$0xc0] %v301
        %318 = vst [vmem:[#allocation2 + $0x10] sm:$0xc0] %v302
        %319 = vst [vmem:[#allocation2 + $0x18] sm:$0xc0] %v303
        %320 = vst [vmem:[#allocation2 + $0x20] sm:$0xc0] %v304
        %321 = vst [vmem:[#allocation2 + $0x28] sm:$0xc0] %v305
        %322 = vst [vmem:[#allocation2 + $0x30] sm:$0xc0] %v306
        %323 = vst [vmem:[#allocation2 + $0x38] sm:$0xc0] %v307
        %324 = vst [vmem:[#allocation2 + $0x40] sm:$0x1] %v300
        %325 = vst [vmem:[#allocation2 + $0x48] sm:$0x1] %v301
        %326 = vst [vmem:[#allocation2 + $0x50] sm:$0x1] %v302
        %327 = vst [vmem:[#allocation2 + $0x58] sm:$0x1] %v303
        %328 = vst [vmem:[#allocation2 + $0x60] sm:$0x1] %v304
        %329 = vst [vmem:[#allocation2 + $0x68] sm:$0x1] %v305
        %330 = vst [vmem:[#allocation2 + $0x70] sm:$0x1] %v306
        %331 = vst [vmem:[#allocation2 + $0x78] sm:$0x1] %v307
        %v332 = vld [vmem:[%s165] sm:$0x77]
        %v333 = vld [vmem:[%s165 + $0x8] sm:$0x77]
        %v334 = vld [vmem:[%s165 + $0x10] sm:$0x77]
        %v335 = vld [vmem:[%s165 + $0x18] sm:$0x77]
        %v336 = vld [vmem:[%s165 + $0x20] sm:$0x7]
        %v342 = vcombine.high %v332, %v332
        %v343 = vcombine.high %v333, %v333
        %v344 = vcombine.high %v334, %v334
        %v345 = vcombine.high %v335, %v335
        %v346 = vrot.slane %v332, 7
        %v347 = vrot.slane %v342, 7
        %v348 = vrot.slane %v333, 7
        %v349 = vrot.slane %v343, 7
        %v350 = vrot.slane %v334, 7
        %v351 = vrot.slane %v344, 7
        %v352 = vrot.slane %v335, 7
        %v353 = vrot.slane %v345, 7
        %v354 = vrot.slane %v336, 7
        %355 = vrot.lane.b32.xlu0 %v346, 125
        %v356 = vpop.permute.xlu0 %355
        %357 = vrot.lane.b32.xlu0 %v347, 125
        %v358 = vpop.permute.xlu0 %357
        %359 = vrot.lane.b32.xlu0 %v348, 125
        %v360 = vpop.permute.xlu0 %359
        %361 = vrot.lane.b32.xlu0 %v349, 125
        %v362 = vpop.permute.xlu0 %361
        %363 = vrot.lane.b32.xlu0 %v350, 125
        %v364 = vpop.permute.xlu0 %363
        %365 = vrot.lane.b32.xlu0 %v351, 125
        %v366 = vpop.permute.xlu0 %365
        %367 = vrot.lane.b32.xlu0 %v352, 125
        %v368 = vpop.permute.xlu0 %367
        %369 = vrot.lane.b32.xlu0 %v353, 125
        %v370 = vpop.permute.xlu0 %369
        %371 = vrot.lane.b32.xlu0 %v354, 125
        %v372 = vpop.permute.xlu0 %371
        %vm373 = vcmask 1022976
        %v374 = vsel %vm373, %v356, %v358
        %v375 = vsel %vm373, %v358, %v360
        %v376 = vsel %vm373, %v360, %v362
        %v377 = vsel %vm373, %v362, %v364
        %v378 = vsel %vm373, %v364, %v366
        %v379 = vsel %vm373, %v366, %v368
        %v380 = vsel %vm373, %v368, %v370
        %v381 = vsel %vm373, %v370, %v372
        %390 = vst [vmem:[#allocation2 + $0x40] sm:$0xe] %v374
        %391 = vst [vmem:[#allocation2 + $0x48] sm:$0xe] %v375
        %392 = vst [vmem:[#allocation2 + $0x50] sm:$0xe] %v376
        %393 = vst [vmem:[#allocation2 + $0x58] sm:$0xe] %v377
        %394 = vst [vmem:[#allocation2 + $0x60] sm:$0xe] %v378
        %395 = vst [vmem:[#allocation2 + $0x68] sm:$0xe] %v379
        %396 = vst [vmem:[#allocation2 + $0x70] sm:$0xe] %v380
        %397 = vst [vmem:[#allocation2 + $0x78] sm:$0xe] %v381
        %v398 = vld [vmem:[%s165] sm:$0x77]
        %v399 = vld [vmem:[%s165 + $0x8] sm:$0x77]
        %v400 = vld [vmem:[%s165 + $0x10] sm:$0x77]
        %v401 = vld [vmem:[%s165 + $0x18] sm:$0x77]
        %v402 = vld [vmem:[%s165 + $0x20] sm:$0x7]
        %v408 = vcombine.low %v398, %v398
        %v409 = vcombine.low %v399, %v399
        %v410 = vcombine.low %v400, %v400
        %v411 = vcombine.low %v401, %v401
        %v412 = vcombine.low %v402, %v402
        %413 = vrot.lane.b32.xlu0 %v408, 124
        %v414 = vpop.permute.xlu0 %413
        %415 = vrot.lane.b32.xlu0 %v398, 124
        %v416 = vpop.permute.xlu0 %415
        %417 = vrot.lane.b32.xlu0 %v409, 124
        %v418 = vpop.permute.xlu0 %417
        %419 = vrot.lane.b32.xlu0 %v399, 124
        %v420 = vpop.permute.xlu0 %419
        %421 = vrot.lane.b32.xlu0 %v410, 124
        %v422 = vpop.permute.xlu0 %421
        %423 = vrot.lane.b32.xlu0 %v400, 124
        %v424 = vpop.permute.xlu0 %423
        %425 = vrot.lane.b32.xlu0 %v411, 124
        %v426 = vpop.permute.xlu0 %425
        %427 = vrot.lane.b32.xlu0 %v401, 124
        %v428 = vpop.permute.xlu0 %427
        %429 = vrot.lane.b32.xlu0 %v412, 124
        %v430 = vpop.permute.xlu0 %429
        %vm431 = vcmask 1014784
        %v432 = vsel %vm431, %v414, %v416
        %v433 = vsel %vm431, %v416, %v418
        %v434 = vsel %vm431, %v418, %v420
        %v435 = vsel %vm431, %v420, %v422
        %v436 = vsel %vm431, %v422, %v424
        %v437 = vsel %vm431, %v424, %v426
        %v438 = vsel %vm431, %v426, %v428
        %v439 = vsel %vm431, %v428, %v430
        %448 = vst [vmem:[#allocation2 + $0x40] sm:$0x70] %v432
        %449 = vst [vmem:[#allocation2 + $0x48] sm:$0x70] %v433
        %450 = vst [vmem:[#allocation2 + $0x50] sm:$0x70] %v434
        %451 = vst [vmem:[#allocation2 + $0x58] sm:$0x70] %v435
        %452 = vst [vmem:[#allocation2 + $0x60] sm:$0x70] %v436
        %453 = vst [vmem:[#allocation2 + $0x68] sm:$0x70] %v437
        %454 = vst [vmem:[#allocation2 + $0x70] sm:$0x70] %v438
        %455 = vst [vmem:[#allocation2 + $0x78] sm:$0x70] %v439
        %v456 = vld [vmem:[%s165] sm:$0x77]
        %v457 = vld [vmem:[%s165 + $0x8] sm:$0x77]
        %v458 = vld [vmem:[%s165 + $0x10] sm:$0x77]
        %v459 = vld [vmem:[%s165 + $0x18] sm:$0x77]
        %v460 = vld [vmem:[%s165 + $0x20] sm:$0x7]
        %v466 = vcombine.high %v456, %v456
        %v467 = vcombine.high %v457, %v457
        %v468 = vcombine.high %v458, %v458
        %v469 = vcombine.high %v459, %v459
        %v470 = vrot.slane %v456, 1
        %v471 = vrot.slane %v466, 1
        %v472 = vrot.slane %v457, 1
        %v473 = vrot.slane %v467, 1
        %v474 = vrot.slane %v458, 1
        %v475 = vrot.slane %v468, 1
        %v476 = vrot.slane %v459, 1
        %v477 = vrot.slane %v469, 1
        %v478 = vrot.slane %v460, 1
        %479 = vrot.lane.b32.xlu0 %v470, 123
        %v480 = vpop.permute.xlu0 %479
        %481 = vrot.lane.b32.xlu0 %v471, 123
        %v482 = vpop.permute.xlu0 %481
        %483 = vrot.lane.b32.xlu0 %v472, 123
        %v484 = vpop.permute.xlu0 %483
        %485 = vrot.lane.b32.xlu0 %v473, 123
        %v486 = vpop.permute.xlu0 %485
        %487 = vrot.lane.b32.xlu0 %v474, 123
        %v488 = vpop.permute.xlu0 %487
        %489 = vrot.lane.b32.xlu0 %v475, 123
        %v490 = vpop.permute.xlu0 %489
        %491 = vrot.lane.b32.xlu0 %v476, 123
        %v492 = vpop.permute.xlu0 %491
        %493 = vrot.lane.b32.xlu0 %v477, 123
        %v494 = vpop.permute.xlu0 %493
        %495 = vrot.lane.b32.xlu0 %v478, 123
        %v496 = vpop.permute.xlu0 %495
        %vm497 = vcmask 1006592
        %v498 = vsel %vm497, %v480, %v482
        %v499 = vsel %vm497, %v482, %v484
        %v500 = vsel %vm497, %v484, %v486
        %v501 = vsel %vm497, %v486, %v488
        %v502 = vsel %vm497, %v488, %v490
        %v503 = vsel %vm497, %v490, %v492
        %v504 = vsel %vm497, %v492, %v494
        %v505 = vsel %vm497, %v494, %v496
        %514 = vst [vmem:[#allocation2 + $0x40] sm:$0x80] %v498
        %515 = vst [vmem:[#allocation2 + $0x48] sm:$0x80] %v499
        %516 = vst [vmem:[#allocation2 + $0x50] sm:$0x80] %v500
        %517 = vst [vmem:[#allocation2 + $0x58] sm:$0x80] %v501
        %518 = vst [vmem:[#allocation2 + $0x60] sm:$0x80] %v502
        %519 = vst [vmem:[#allocation2 + $0x68] sm:$0x80] %v503
        %520 = vst [vmem:[#allocation2 + $0x70] sm:$0x80] %v504
        %521 = vst [vmem:[#allocation2 + $0x78] sm:$0x80] %v505
        %522 = vst [vmem:[#allocation2 + $0x80] sm:$0x3] %v498
        %523 = vst [vmem:[#allocation2 + $0x88] sm:$0x3] %v499
        %524 = vst [vmem:[#allocation2 + $0x90] sm:$0x3] %v500
        %525 = vst [vmem:[#allocation2 + $0x98] sm:$0x3] %v501
        %526 = vst [vmem:[#allocation2 + $0xa0] sm:$0x3] %v502
        %527 = vst [vmem:[#allocation2 + $0xa8] sm:$0x3] %v503
        %528 = vst [vmem:[#allocation2 + $0xb0] sm:$0x3] %v504
        %529 = vst [vmem:[#allocation2 + $0xb8] sm:$0x3] %v505
        %v530 = vld [vmem:[%s165] sm:$0x77]
        %v531 = vld [vmem:[%s165 + $0x8] sm:$0x77]
        %v532 = vld [vmem:[%s165 + $0x10] sm:$0x77]
        %v533 = vld [vmem:[%s165 + $0x18] sm:$0x77]
        %v534 = vld [vmem:[%s165 + $0x20] sm:$0x7]
        %v540 = vcombine.high %v530, %v530
        %v541 = vcombine.high %v531, %v531
        %v542 = vcombine.high %v532, %v532
        %v543 = vcombine.high %v533, %v533
        %v544 = vrot.slane %v530, 6
        %v545 = vrot.slane %v540, 6
        %v546 = vrot.slane %v531, 6
        %v547 = vrot.slane %v541, 6
        %v548 = vrot.slane %v532, 6
        %v549 = vrot.slane %v542, 6
        %v550 = vrot.slane %v533, 6
        %v551 = vrot.slane %v543, 6
        %v552 = vrot.slane %v534, 6
        %553 = vrot.lane.b32.xlu0 %v544, 122
        %v554 = vpop.permute.xlu0 %553
        %555 = vrot.lane.b32.xlu0 %v545, 122
        %v556 = vpop.permute.xlu0 %555
        %557 = vrot.lane.b32.xlu0 %v546, 122
        %v558 = vpop.permute.xlu0 %557
        %559 = vrot.lane.b32.xlu0 %v547, 122
        %v560 = vpop.permute.xlu0 %559
        %561 = vrot.lane.b32.xlu0 %v548, 122
        %v562 = vpop.permute.xlu0 %561
        %563 = vrot.lane.b32.xlu0 %v549, 122
        %v564 = vpop.permute.xlu0 %563
        %565 = vrot.lane.b32.xlu0 %v550, 122
        %v566 = vpop.permute.xlu0 %565
        %567 = vrot.lane.b32.xlu0 %v551, 122
        %v568 = vpop.permute.xlu0 %567
        %569 = vrot.lane.b32.xlu0 %v552, 122
        %v570 = vpop.permute.xlu0 %569
        %vm571 = vcmask 998400
        %v572 = vsel %vm571, %v554, %v556
        %v573 = vsel %vm571, %v556, %v558
        %v574 = vsel %vm571, %v558, %v560
        %v575 = vsel %vm571, %v560, %v562
        %v576 = vsel %vm571, %v562, %v564
        %v577 = vsel %vm571, %v564, %v566
        %v578 = vsel %vm571, %v566, %v568
        %v579 = vsel %vm571, %v568, %v570
        %588 = vst [vmem:[#allocation2 + $0x80] sm:$0x1c] %v572
        %589 = vst [vmem:[#allocation2 + $0x88] sm:$0x1c] %v573
        %590 = vst [vmem:[#allocation2 + $0x90] sm:$0x1c] %v574
        %591 = vst [vmem:[#allocation2 + $0x98] sm:$0x1c] %v575
        %592 = vst [vmem:[#allocation2 + $0xa0] sm:$0x1c] %v576
        %593 = vst [vmem:[#allocation2 + $0xa8] sm:$0x1c] %v577
        %594 = vst [vmem:[#allocation2 + $0xb0] sm:$0x1c] %v578
        %595 = vst [vmem:[#allocation2 + $0xb8] sm:$0x1c] %v579
        %v596 = vld [vmem:[%s165] sm:$0x77]
        %v597 = vld [vmem:[%s165 + $0x8] sm:$0x77]
        %v598 = vld [vmem:[%s165 + $0x10] sm:$0x77]
        %v599 = vld [vmem:[%s165 + $0x18] sm:$0x77]
        %v600 = vld [vmem:[%s165 + $0x20] sm:$0x7]
        %v606 = vcombine.high %v596, %v596
        %v607 = vcombine.high %v597, %v597
        %v608 = vcombine.high %v598, %v598
        %v609 = vcombine.high %v599, %v599
        %v610 = vrot.slane %v596, 3
        %v611 = vrot.slane %v606, 3
        %v612 = vrot.slane %v597, 3
        %v613 = vrot.slane %v607, 3
        %v614 = vrot.slane %v598, 3
        %v615 = vrot.slane %v608, 3
        %v616 = vrot.slane %v599, 3
        %v617 = vrot.slane %v609, 3
        %v618 = vrot.slane %v600, 3
        %619 = vrot.lane.b32.xlu0 %v610, 96
        %v620 = vpop.permute.xlu0 %619
        %621 = vrot.lane.b32.xlu0 %v611, 96
        %v622 = vpop.permute.xlu0 %621
        %623 = vrot.lane.b32.xlu0 %v612, 96
        %v624 = vpop.permute.xlu0 %623
        %625 = vrot.lane.b32.xlu0 %v613, 96
        %v626 = vpop.permute.xlu0 %625
        %627 = vrot.lane.b32.xlu0 %v614, 96
        %v628 = vpop.permute.xlu0 %627
        %629 = vrot.lane.b32.xlu0 %v615, 96
        %v630 = vpop.permute.xlu0 %629
        %631 = vrot.lane.b32.xlu0 %v616, 96
        %v632 = vpop.permute.xlu0 %631
        %633 = vrot.lane.b32.xlu0 %v617, 96
        %v634 = vpop.permute.xlu0 %633
        %635 = vrot.lane.b32.xlu0 %v618, 96
        %v636 = vpop.permute.xlu0 %635
        %vm637 = vcmask 785408
        %v638 = vsel %vm637, %v620, %v622
        %v639 = vsel %vm637, %v622, %v624
        %v640 = vsel %vm637, %v624, %v626
        %v641 = vsel %vm637, %v626, %v628
        %v642 = vsel %vm637, %v628, %v630
        %v643 = vsel %vm637, %v630, %v632
        %v644 = vsel %vm637, %v632, %v634
        %v645 = vsel %vm637, %v634, %v636
        %654 = vst [vmem:[#allocation2 + $0x80] sm:$0xe0] %v638
        %655 = vst [vmem:[#allocation2 + $0x88] sm:$0xe0] %v639
        %656 = vst [vmem:[#allocation2 + $0x90] sm:$0xe0] %v640
        %657 = vst [vmem:[#allocation2 + $0x98] sm:$0xe0] %v641
        %658 = vst [vmem:[#allocation2 + $0xa0] sm:$0xe0] %v642
        %659 = vst [vmem:[#allocation2 + $0xa8] sm:$0xe0] %v643
        %660 = vst [vmem:[#allocation2 + $0xb0] sm:$0xe0] %v644
        %661 = vst [vmem:[#allocation2 + $0xb8] sm:$0xe0] %v645
        %v662 = vld [vmem:[%s165] sm:$0x77]
        %v663 = vld [vmem:[%s165 + $0x8] sm:$0x77]
        %v664 = vld [vmem:[%s165 + $0x10] sm:$0x77]
        %v665 = vld [vmem:[%s165 + $0x18] sm:$0x77]
        %v666 = vld [vmem:[%s165 + $0x20] sm:$0x7]
        %v672 = vcombine.high %v662, %v662
        %v673 = vcombine.high %v663, %v663
        %v674 = vcombine.high %v664, %v664
        %v675 = vcombine.high %v665, %v665
        %676 = vrot.lane.b32.xlu0 %v662, 95
        %v677 = vpop.permute.xlu0 %676
        %678 = vrot.lane.b32.xlu0 %v672, 95
        %v679 = vpop.permute.xlu0 %678
        %680 = vrot.lane.b32.xlu0 %v663, 95
        %v681 = vpop.permute.xlu0 %680
        %682 = vrot.lane.b32.xlu0 %v673, 95
        %v683 = vpop.permute.xlu0 %682
        %684 = vrot.lane.b32.xlu0 %v664, 95
        %v685 = vpop.permute.xlu0 %684
        %686 = vrot.lane.b32.xlu0 %v674, 95
        %v687 = vpop.permute.xlu0 %686
        %688 = vrot.lane.b32.xlu0 %v665, 95
        %v689 = vpop.permute.xlu0 %688
        %690 = vrot.lane.b32.xlu0 %v675, 95
        %v691 = vpop.permute.xlu0 %690
        %692 = vrot.lane.b32.xlu0 %v666, 95
        %v693 = vpop.permute.xlu0 %692
        %vm694 = vcmask 777216
        %v695 = vsel %vm694, %v677, %v679
        %v696 = vsel %vm694, %v679, %v681
        %v697 = vsel %vm694, %v681, %v683
        %v698 = vsel %vm694, %v683, %v685
        %v699 = vsel %vm694, %v685, %v687
        %v700 = vsel %vm694, %v687, %v689
        %v701 = vsel %vm694, %v689, %v691
        %v702 = vsel %vm694, %v691, %v693
        %711 = vst [vmem:[#allocation2 + $0xc0] sm:$0x7] %v695
        %712 = vst [vmem:[#allocation2 + $0xc8] sm:$0x7] %v696
        %713 = vst [vmem:[#allocation2 + $0xd0] sm:$0x7] %v697
        %714 = vst [vmem:[#allocation2 + $0xd8] sm:$0x7] %v698
        %715 = vst [vmem:[#allocation2 + $0xe0] sm:$0x7] %v699
        %716 = vst [vmem:[#allocation2 + $0xe8] sm:$0x7] %v700
        %717 = vst [vmem:[#allocation2 + $0xf0] sm:$0x7] %v701
        %718 = vst [vmem:[#allocation2 + $0xf8] sm:$0x7] %v702
        %v719 = vld [vmem:[%s165] sm:$0x77]
        %v720 = vld [vmem:[%s165 + $0x8] sm:$0x77]
        %v721 = vld [vmem:[%s165 + $0x10] sm:$0x77]
        %v722 = vld [vmem:[%s165 + $0x18] sm:$0x77]
        %v723 = vld [vmem:[%s165 + $0x20] sm:$0x7]
        %v729 = vcombine.high %v719, %v719
        %v730 = vcombine.high %v720, %v720
        %v731 = vcombine.high %v721, %v721
        %v732 = vcombine.high %v722, %v722
        %v733 = vrot.slane %v719, 5
        %v734 = vrot.slane %v729, 5
        %v735 = vrot.slane %v720, 5
        %v736 = vrot.slane %v730, 5
        %v737 = vrot.slane %v721, 5
        %v738 = vrot.slane %v731, 5
        %v739 = vrot.slane %v722, 5
        %v740 = vrot.slane %v732, 5
        %v741 = vrot.slane %v723, 5
        %742 = vrot.lane.b32.xlu0 %v733, 94
        %v743 = vpop.permute.xlu0 %742
        %744 = vrot.lane.b32.xlu0 %v734, 94
        %v745 = vpop.permute.xlu0 %744
        %746 = vrot.lane.b32.xlu0 %v735, 94
        %v747 = vpop.permute.xlu0 %746
        %748 = vrot.lane.b32.xlu0 %v736, 94
        %v749 = vpop.permute.xlu0 %748
        %750 = vrot.lane.b32.xlu0 %v737, 94
        %v751 = vpop.permute.xlu0 %750
        %752 = vrot.lane.b32.xlu0 %v738, 94
        %v753 = vpop.permute.xlu0 %752
        %754 = vrot.lane.b32.xlu0 %v739, 94
        %v755 = vpop.permute.xlu0 %754
        %756 = vrot.lane.b32.xlu0 %v740, 94
        %v757 = vpop.permute.xlu0 %756
        %758 = vrot.lane.b32.xlu0 %v741, 94
        %v759 = vpop.permute.xlu0 %758
        %vm760 = vcmask 769024
        %v761 = vsel %vm760, %v743, %v745
        %v762 = vsel %vm760, %v745, %v747
        %v763 = vsel %vm760, %v747, %v749
        %v764 = vsel %vm760, %v749, %v751
        %v765 = vsel %vm760, %v751, %v753
        %v766 = vsel %vm760, %v753, %v755
        %v767 = vsel %vm760, %v755, %v757
        %v768 = vsel %vm760, %v757, %v759
        %777 = vst [vmem:[#allocation2 + $0xc0] sm:$0x38] %v761
        %778 = vst [vmem:[#allocation2 + $0xc8] sm:$0x38] %v762
        %779 = vst [vmem:[#allocation2 + $0xd0] sm:$0x38] %v763
        %780 = vst [vmem:[#allocation2 + $0xd8] sm:$0x38] %v764
        %781 = vst [vmem:[#allocation2 + $0xe0] sm:$0x38] %v765
        %782 = vst [vmem:[#allocation2 + $0xe8] sm:$0x38] %v766
        %783 = vst [vmem:[#allocation2 + $0xf0] sm:$0x38] %v767
        %784 = vst [vmem:[#allocation2 + $0xf8] sm:$0x38] %v768
        %v785 = vld [vmem:[%s165] sm:$0x77]
        %v786 = vld [vmem:[%s165 + $0x8] sm:$0x77]
        %v787 = vld [vmem:[%s165 + $0x10] sm:$0x77]
        %v788 = vld [vmem:[%s165 + $0x18] sm:$0x77]
        %v789 = vld [vmem:[%s165 + $0x20] sm:$0x7]
        %v795 = vcombine.high %v785, %v785
        %v796 = vcombine.high %v786, %v786
        %v797 = vcombine.high %v787, %v787
        %v798 = vcombine.high %v788, %v788
        %v799 = vrot.slane %v785, 2
        %v800 = vrot.slane %v795, 2
        %v801 = vrot.slane %v786, 2
        %v802 = vrot.slane %v796, 2
        %v803 = vrot.slane %v787, 2
        %v804 = vrot.slane %v797, 2
        %v805 = vrot.slane %v788, 2
        %v806 = vrot.slane %v798, 2
        %v807 = vrot.slane %v789, 2
        %808 = vrot.lane.b32.xlu0 %v799, 93
        %v809 = vpop.permute.xlu0 %808
        %810 = vrot.lane.b32.xlu0 %v800, 93
        %v811 = vpop.permute.xlu0 %810
        %812 = vrot.lane.b32.xlu0 %v801, 93
        %v813 = vpop.permute.xlu0 %812
        %814 = vrot.lane.b32.xlu0 %v802, 93
        %v815 = vpop.permute.xlu0 %814
        %816 = vrot.lane.b32.xlu0 %v803, 93
        %v817 = vpop.permute.xlu0 %816
        %818 = vrot.lane.b32.xlu0 %v804, 93
        %v819 = vpop.permute.xlu0 %818
        %820 = vrot.lane.b32.xlu0 %v805, 93
        %v821 = vpop.permute.xlu0 %820
        %822 = vrot.lane.b32.xlu0 %v806, 93
        %v823 = vpop.permute.xlu0 %822
        %824 = vrot.lane.b32.xlu0 %v807, 93
        %v825 = vpop.permute.xlu0 %824
        %vm826 = vcmask 760832
        %v827 = vsel %vm826, %v809, %v811
        %v828 = vsel %vm826, %v811, %v813
        %v829 = vsel %vm826, %v813, %v815
        %v830 = vsel %vm826, %v815, %v817
        %v831 = vsel %vm826, %v817, %v819
        %v832 = vsel %vm826, %v819, %v821
        %v833 = vsel %vm826, %v821, %v823
        %v834 = vsel %vm826, %v823, %v825
        %843 = vst [vmem:[#allocation2 + $0xc0] sm:$0xc0] %v827
        %844 = vst [vmem:[#allocation2 + $0xc8] sm:$0xc0] %v828
        %845 = vst [vmem:[#allocation2 + $0xd0] sm:$0xc0] %v829
        %846 = vst [vmem:[#allocation2 + $0xd8] sm:$0xc0] %v830
        %847 = vst [vmem:[#allocation2 + $0xe0] sm:$0xc0] %v831
        %848 = vst [vmem:[#allocation2 + $0xe8] sm:$0xc0] %v832
        %849 = vst [vmem:[#allocation2 + $0xf0] sm:$0xc0] %v833
        %850 = vst [vmem:[#allocation2 + $0xf8] sm:$0xc0] %v834
        %851 = vst [vmem:[#allocation2 + $0x100] sm:$0x1] %v827
        %852 = vst [vmem:[#allocation2 + $0x108] sm:$0x1] %v828
        %853 = vst [vmem:[#allocation2 + $0x110] sm:$0x1] %v829
        %854 = vst [vmem:[#allocation2 + $0x118] sm:$0x1] %v830
        %855 = vst [vmem:[#allocation2 + $0x120] sm:$0x1] %v831
        %856 = vst [vmem:[#allocation2 + $0x128] sm:$0x1] %v832
        %857 = vst [vmem:[#allocation2 + $0x130] sm:$0x1] %v833
        %858 = vst [vmem:[#allocation2 + $0x138] sm:$0x1] %v834
        %v859 = vld [vmem:[%s165] sm:$0x77]
        %v860 = vld [vmem:[%s165 + $0x8] sm:$0x77]
        %v861 = vld [vmem:[%s165 + $0x10] sm:$0x77]
        %v862 = vld [vmem:[%s165 + $0x18] sm:$0x77]
        %v863 = vld [vmem:[%s165 + $0x20] sm:$0x7]
        %v869 = vcombine.high %v859, %v859
        %v870 = vcombine.high %v860, %v860
        %v871 = vcombine.high %v861, %v861
        %v872 = vcombine.high %v862, %v862
        %v873 = vrot.slane %v859, 7
        %v874 = vrot.slane %v869, 7
        %v875 = vrot.slane %v860, 7
        %v876 = vrot.slane %v870, 7
        %v877 = vrot.slane %v861, 7
        %v878 = vrot.slane %v871, 7
        %v879 = vrot.slane %v862, 7
        %v880 = vrot.slane %v872, 7
        %v881 = vrot.slane %v863, 7
        %882 = vrot.lane.b32.xlu0 %v873, 92
        %v883 = vpop.permute.xlu0 %882
        %884 = vrot.lane.b32.xlu0 %v874, 92
        %v885 = vpop.permute.xlu0 %884
        %886 = vrot.lane.b32.xlu0 %v875, 92
        %v887 = vpop.permute.xlu0 %886
        %888 = vrot.lane.b32.xlu0 %v876, 92
        %v889 = vpop.permute.xlu0 %888
        %890 = vrot.lane.b32.xlu0 %v877, 92
        %v891 = vpop.permute.xlu0 %890
        %892 = vrot.lane.b32.xlu0 %v878, 92
        %v893 = vpop.permute.xlu0 %892
        %894 = vrot.lane.b32.xlu0 %v879, 92
        %v895 = vpop.permute.xlu0 %894
        %896 = vrot.lane.b32.xlu0 %v880, 92
        %v897 = vpop.permute.xlu0 %896
        %898 = vrot.lane.b32.xlu0 %v881, 92
        %v899 = vpop.permute.xlu0 %898
        %vm900 = vcmask 752640
        %v901 = vsel %vm900, %v883, %v885
        %v902 = vsel %vm900, %v885, %v887
        %v903 = vsel %vm900, %v887, %v889
        %v904 = vsel %vm900, %v889, %v891
        %v905 = vsel %vm900, %v891, %v893
        %v906 = vsel %vm900, %v893, %v895
        %v907 = vsel %vm900, %v895, %v897
        %v908 = vsel %vm900, %v897, %v899
        %917 = vst [vmem:[#allocation2 + $0x100] sm:$0xe] %v901
        %918 = vst [vmem:[#allocation2 + $0x108] sm:$0xe] %v902
        %919 = vst [vmem:[#allocation2 + $0x110] sm:$0xe] %v903
        %920 = vst [vmem:[#allocation2 + $0x118] sm:$0xe] %v904
        %921 = vst [vmem:[#allocation2 + $0x120] sm:$0xe] %v905
        %922 = vst [vmem:[#allocation2 + $0x128] sm:$0xe] %v906
        %923 = vst [vmem:[#allocation2 + $0x130] sm:$0xe] %v907
        %924 = vst [vmem:[#allocation2 + $0x138] sm:$0xe] %v908
        %v925 = vld [vmem:[%s165] sm:$0x77]
        %v926 = vld [vmem:[%s165 + $0x8] sm:$0x77]
        %v927 = vld [vmem:[%s165 + $0x10] sm:$0x77]
        %v928 = vld [vmem:[%s165 + $0x18] sm:$0x77]
        %v929 = vld [vmem:[%s165 + $0x20] sm:$0x7]
        %v935 = vcombine.low %v925, %v925
        %v936 = vcombine.low %v926, %v926
        %v937 = vcombine.low %v927, %v927
        %v938 = vcombine.low %v928, %v928
        %v939 = vcombine.low %v929, %v929
        %940 = vrot.lane.b32.xlu0 %v935, 91
        %v941 = vpop.permute.xlu0 %940
        %942 = vrot.lane.b32.xlu0 %v925, 91
        %v943 = vpop.permute.xlu0 %942
        %944 = vrot.lane.b32.xlu0 %v936, 91
        %v945 = vpop.permute.xlu0 %944
        %946 = vrot.lane.b32.xlu0 %v926, 91
        %v947 = vpop.permute.xlu0 %946
        %948 = vrot.lane.b32.xlu0 %v937, 91
        %v949 = vpop.permute.xlu0 %948
        %950 = vrot.lane.b32.xlu0 %v927, 91
        %v951 = vpop.permute.xlu0 %950
        %952 = vrot.lane.b32.xlu0 %v938, 91
        %v953 = vpop.permute.xlu0 %952
        %954 = vrot.lane.b32.xlu0 %v928, 91
        %v955 = vpop.permute.xlu0 %954
        %956 = vrot.lane.b32.xlu0 %v939, 91
        %v957 = vpop.permute.xlu0 %956
        %vm958 = vcmask 744448
        %v959 = vsel %vm958, %v941, %v943
        %v960 = vsel %vm958, %v943, %v945
        %v961 = vsel %vm958, %v945, %v947
        %v962 = vsel %vm958, %v947, %v949
        %v963 = vsel %vm958, %v949, %v951
        %v964 = vsel %vm958, %v951, %v953
        %v965 = vsel %vm958, %v953, %v955
        %v966 = vsel %vm958, %v955, %v957
        %975 = vst [vmem:[#allocation2 + $0x100] sm:$0x70] %v959
        %976 = vst [vmem:[#allocation2 + $0x108] sm:$0x70] %v960
        %977 = vst [vmem:[#allocation2 + $0x110] sm:$0x70] %v961
        %978 = vst [vmem:[#allocation2 + $0x118] sm:$0x70] %v962
        %979 = vst [vmem:[#allocation2 + $0x120] sm:$0x70] %v963
        %980 = vst [vmem:[#allocation2 + $0x128] sm:$0x70] %v964
        %981 = vst [vmem:[#allocation2 + $0x130] sm:$0x70] %v965
        %982 = vst [vmem:[#allocation2 + $0x138] sm:$0x70] %v966
        %v983 = vld [vmem:[%s165] sm:$0x77]
        %v984 = vld [vmem:[%s165 + $0x8] sm:$0x77]
        %v985 = vld [vmem:[%s165 + $0x10] sm:$0x77]
        %v986 = vld [vmem:[%s165 + $0x18] sm:$0x77]
        %v987 = vld [vmem:[%s165 + $0x20] sm:$0x7]
        %v993 = vcombine.high %v983, %v983
        %v994 = vcombine.high %v984, %v984
        %v995 = vcombine.high %v985, %v985
        %v996 = vcombine.high %v986, %v986
        %v997 = vrot.slane %v983, 1
        %v998 = vrot.slane %v993, 1
        %v999 = vrot.slane %v984, 1
        %v1000 = vrot.slane %v994, 1
        %v1001 = vrot.slane %v985, 1
        %v1002 = vrot.slane %v995, 1
        %v1003 = vrot.slane %v986, 1
        %v1004 = vrot.slane %v996, 1
        %v1005 = vrot.slane %v987, 1
        %1006 = vrot.lane.b32.xlu0 %v997, 90
        %v1007 = vpop.permute.xlu0 %1006
        %1008 = vrot.lane.b32.xlu0 %v998, 90
        %v1009 = vpop.permute.xlu0 %1008
        %1010 = vrot.lane.b32.xlu0 %v999, 90
        %v1011 = vpop.permute.xlu0 %1010
        %1012 = vrot.lane.b32.xlu0 %v1000, 90
        %v1013 = vpop.permute.xlu0 %1012
        %1014 = vrot.lane.b32.xlu0 %v1001, 90
        %v1015 = vpop.permute.xlu0 %1014
        %1016 = vrot.lane.b32.xlu0 %v1002, 90
        %v1017 = vpop.permute.xlu0 %1016
        %1018 = vrot.lane.b32.xlu0 %v1003, 90
        %v1019 = vpop.permute.xlu0 %1018
        %1020 = vrot.lane.b32.xlu0 %v1004, 90
        %v1021 = vpop.permute.xlu0 %1020
        %1022 = vrot.lane.b32.xlu0 %v1005, 90
        %v1023 = vpop.permute.xlu0 %1022
        %vm1024 = vcmask 736256
        %v1025 = vsel %vm1024, %v1007, %v1009
        %v1026 = vsel %vm1024, %v1009, %v1011
        %v1027 = vsel %vm1024, %v1011, %v1013
        %v1028 = vsel %vm1024, %v1013, %v1015
        %v1029 = vsel %vm1024, %v1015, %v1017
        %v1030 = vsel %vm1024, %v1017, %v1019
        %v1031 = vsel %vm1024, %v1019, %v1021
        %v1032 = vsel %vm1024, %v1021, %v1023
        %1041 = vst [vmem:[#allocation2 + $0x100] sm:$0x80] %v1025
        %1042 = vst [vmem:[#allocation2 + $0x108] sm:$0x80] %v1026
        %1043 = vst [vmem:[#allocation2 + $0x110] sm:$0x80] %v1027
        %1044 = vst [vmem:[#allocation2 + $0x118] sm:$0x80] %v1028
        %1045 = vst [vmem:[#allocation2 + $0x120] sm:$0x80] %v1029
        %1046 = vst [vmem:[#allocation2 + $0x128] sm:$0x80] %v1030
        %1047 = vst [vmem:[#allocation2 + $0x130] sm:$0x80] %v1031
        %1048 = vst [vmem:[#allocation2 + $0x138] sm:$0x80] %v1032
        %1049 = vst [vmem:[#allocation2 + $0x140] sm:$0x3] %v1025
        %1050 = vst [vmem:[#allocation2 + $0x148] sm:$0x3] %v1026
        %1051 = vst [vmem:[#allocation2 + $0x150] sm:$0x3] %v1027
        %1052 = vst [vmem:[#allocation2 + $0x158] sm:$0x3] %v1028
        %1053 = vst [vmem:[#allocation2 + $0x160] sm:$0x3] %v1029
        %1054 = vst [vmem:[#allocation2 + $0x168] sm:$0x3] %v1030
        %1055 = vst [vmem:[#allocation2 + $0x170] sm:$0x3] %v1031
        %1056 = vst [vmem:[#allocation2 + $0x178] sm:$0x3] %v1032
        %v1057 = vld [vmem:[%s165] sm:$0x77]
        %v1058 = vld [vmem:[%s165 + $0x8] sm:$0x77]
        %v1059 = vld [vmem:[%s165 + $0x10] sm:$0x77]
        %v1060 = vld [vmem:[%s165 + $0x18] sm:$0x77]
        %v1061 = vld [vmem:[%s165 + $0x20] sm:$0x7]
        %v1067 = vcombine.high %v1057, %v1057
        %v1068 = vcombine.high %v1058, %v1058
        %v1069 = vcombine.high %v1059, %v1059
        %v1070 = vcombine.high %v1060, %v1060
        %v1071 = vrot.slane %v1057, 6
        %v1072 = vrot.slane %v1067, 6
        %v1073 = vrot.slane %v1058, 6
        %v1074 = vrot.slane %v1068, 6
        %v1075 = vrot.slane %v1059, 6
        %v1076 = vrot.slane %v1069, 6
        %v1077 = vrot.slane %v1060, 6
        %v1078 = vrot.slane %v1070, 6
        %v1079 = vrot.slane %v1061, 6
        %1080 = vrot.lane.b32.xlu0 %v1071, 64
        %v1081 = vpop.permute.xlu0 %1080
        %1082 = vrot.lane.b32.xlu0 %v1072, 64
        %v1083 = vpop.permute.xlu0 %1082
        %1084 = vrot.lane.b32.xlu0 %v1073, 64
        %v1085 = vpop.permute.xlu0 %1084
        %1086 = vrot.lane.b32.xlu0 %v1074, 64
        %v1087 = vpop.permute.xlu0 %1086
        %1088 = vrot.lane.b32.xlu0 %v1075, 64
        %v1089 = vpop.permute.xlu0 %1088
        %1090 = vrot.lane.b32.xlu0 %v1076, 64
        %v1091 = vpop.permute.xlu0 %1090
        %1092 = vrot.lane.b32.xlu0 %v1077, 64
        %v1093 = vpop.permute.xlu0 %1092
        %1094 = vrot.lane.b32.xlu0 %v1078, 64
        %v1095 = vpop.permute.xlu0 %1094
        %1096 = vrot.lane.b32.xlu0 %v1079, 64
        %v1097 = vpop.permute.xlu0 %1096
        %vm1098 = vcmask 523264
        %v1099 = vsel %vm1098, %v1081, %v1083
        %v1100 = vsel %vm1098, %v1083, %v1085
        %v1101 = vsel %vm1098, %v1085, %v1087
        %v1102 = vsel %vm1098, %v1087, %v1089
        %v1103 = vsel %vm1098, %v1089, %v1091
        %v1104 = vsel %vm1098, %v1091, %v1093
        %v1105 = vsel %vm1098, %v1093, %v1095
        %v1106 = vsel %vm1098, %v1095, %v1097
        %1115 = vst [vmem:[#allocation2 + $0x140] sm:$0x1c] %v1099
        %1116 = vst [vmem:[#allocation2 + $0x148] sm:$0x1c] %v1100
        %1117 = vst [vmem:[#allocation2 + $0x150] sm:$0x1c] %v1101
        %1118 = vst [vmem:[#allocation2 + $0x158] sm:$0x1c] %v1102
        %1119 = vst [vmem:[#allocation2 + $0x160] sm:$0x1c] %v1103
        %1120 = vst [vmem:[#allocation2 + $0x168] sm:$0x1c] %v1104
        %1121 = vst [vmem:[#allocation2 + $0x170] sm:$0x1c] %v1105
        %1122 = vst [vmem:[#allocation2 + $0x178] sm:$0x1c] %v1106
        %v1123 = vld [vmem:[%s165] sm:$0x77]
        %v1124 = vld [vmem:[%s165 + $0x8] sm:$0x77]
        %v1125 = vld [vmem:[%s165 + $0x10] sm:$0x77]
        %v1126 = vld [vmem:[%s165 + $0x18] sm:$0x77]
        %v1127 = vld [vmem:[%s165 + $0x20] sm:$0x7]
        %v1133 = vcombine.high %v1123, %v1123
        %v1134 = vcombine.high %v1124, %v1124
        %v1135 = vcombine.high %v1125, %v1125
        %v1136 = vcombine.high %v1126, %v1126
        %v1137 = vrot.slane %v1123, 3
        %v1138 = vrot.slane %v1133, 3
        %v1139 = vrot.slane %v1124, 3
        %v1140 = vrot.slane %v1134, 3
        %v1141 = vrot.slane %v1125, 3
        %v1142 = vrot.slane %v1135, 3
        %v1143 = vrot.slane %v1126, 3
        %v1144 = vrot.slane %v1136, 3
        %v1145 = vrot.slane %v1127, 3
        %1146 = vrot.lane.b32.xlu0 %v1137, 63
        %v1147 = vpop.permute.xlu0 %1146
        %1148 = vrot.lane.b32.xlu0 %v1138, 63
        %v1149 = vpop.permute.xlu0 %1148
        %1150 = vrot.lane.b32.xlu0 %v1139, 63
        %v1151 = vpop.permute.xlu0 %1150
        %1152 = vrot.lane.b32.xlu0 %v1140, 63
        %v1153 = vpop.permute.xlu0 %1152
        %1154 = vrot.lane.b32.xlu0 %v1141, 63
        %v1155 = vpop.permute.xlu0 %1154
        %1156 = vrot.lane.b32.xlu0 %v1142, 63
        %v1157 = vpop.permute.xlu0 %1156
        %1158 = vrot.lane.b32.xlu0 %v1143, 63
        %v1159 = vpop.permute.xlu0 %1158
        %1160 = vrot.lane.b32.xlu0 %v1144, 63
        %v1161 = vpop.permute.xlu0 %1160
        %1162 = vrot.lane.b32.xlu0 %v1145, 63
        %v1163 = vpop.permute.xlu0 %1162
        %vm1164 = vcmask 515072
        %v1165 = vsel %vm1164, %v1147, %v1149
        %v1166 = vsel %vm1164, %v1149, %v1151
        %v1167 = vsel %vm1164, %v1151, %v1153
        %v1168 = vsel %vm1164, %v1153, %v1155
        %v1169 = vsel %vm1164, %v1155, %v1157
        %v1170 = vsel %vm1164, %v1157, %v1159
        %v1171 = vsel %vm1164, %v1159, %v1161
        %v1172 = vsel %vm1164, %v1161, %v1163
        %1181 = vst [vmem:[#allocation2 + $0x140] sm:$0xe0] %v1165
        %1182 = vst [vmem:[#allocation2 + $0x148] sm:$0xe0] %v1166
        %1183 = vst [vmem:[#allocation2 + $0x150] sm:$0xe0] %v1167
        %1184 = vst [vmem:[#allocation2 + $0x158] sm:$0xe0] %v1168
        %1185 = vst [vmem:[#allocation2 + $0x160] sm:$0xe0] %v1169
        %1186 = vst [vmem:[#allocation2 + $0x168] sm:$0xe0] %v1170
        %1187 = vst [vmem:[#allocation2 + $0x170] sm:$0xe0] %v1171
        %1188 = vst [vmem:[#allocation2 + $0x178] sm:$0xe0] %v1172
        %v1189 = vld [vmem:[%s165] sm:$0x77]
        %v1190 = vld [vmem:[%s165 + $0x8] sm:$0x77]
        %v1191 = vld [vmem:[%s165 + $0x10] sm:$0x77]
        %v1192 = vld [vmem:[%s165 + $0x18] sm:$0x77]
        %v1193 = vld [vmem:[%s165 + $0x20] sm:$0x7]
        %v1199 = vcombine.high %v1189, %v1189
        %v1200 = vcombine.high %v1190, %v1190
        %v1201 = vcombine.high %v1191, %v1191
        %v1202 = vcombine.high %v1192, %v1192
        %1203 = vrot.lane.b32.xlu0 %v1189, 62
        %v1204 = vpop.permute.xlu0 %1203
        %1205 = vrot.lane.b32.xlu0 %v1199, 62
        %v1206 = vpop.permute.xlu0 %1205
        %1207 = vrot.lane.b32.xlu0 %v1190, 62
        %v1208 = vpop.permute.xlu0 %1207
        %1209 = vrot.lane.b32.xlu0 %v1200, 62
        %v1210 = vpop.permute.xlu0 %1209
        %1211 = vrot.lane.b32.xlu0 %v1191, 62
        %v1212 = vpop.permute.xlu0 %1211
        %1213 = vrot.lane.b32.xlu0 %v1201, 62
        %v1214 = vpop.permute.xlu0 %1213
        %1215 = vrot.lane.b32.xlu0 %v1192, 62
        %v1216 = vpop.permute.xlu0 %1215
        %1217 = vrot.lane.b32.xlu0 %v1202, 62
        %v1218 = vpop.permute.xlu0 %1217
        %1219 = vrot.lane.b32.xlu0 %v1193, 62
        %v1220 = vpop.permute.xlu0 %1219
        %vm1221 = vcmask 506880
        %v1222 = vsel %vm1221, %v1204, %v1206
        %v1223 = vsel %vm1221, %v1206, %v1208
        %v1224 = vsel %vm1221, %v1208, %v1210
        %v1225 = vsel %vm1221, %v1210, %v1212
        %v1226 = vsel %vm1221, %v1212, %v1214
        %v1227 = vsel %vm1221, %v1214, %v1216
        %v1228 = vsel %vm1221, %v1216, %v1218
        %v1229 = vsel %vm1221, %v1218, %v1220
        %1238 = vst [vmem:[#allocation2 + $0x180] sm:$0x7] %v1222
        %1239 = vst [vmem:[#allocation2 + $0x188] sm:$0x7] %v1223
        %1240 = vst [vmem:[#allocation2 + $0x190] sm:$0x7] %v1224
        %1241 = vst [vmem:[#allocation2 + $0x198] sm:$0x7] %v1225
        %1242 = vst [vmem:[#allocation2 + $0x1a0] sm:$0x7] %v1226
        %1243 = vst [vmem:[#allocation2 + $0x1a8] sm:$0x7] %v1227
        %1244 = vst [vmem:[#allocation2 + $0x1b0] sm:$0x7] %v1228
        %1245 = vst [vmem:[#allocation2 + $0x1b8] sm:$0x7] %v1229
        %v1246 = vld [vmem:[%s165] sm:$0x77]
        %v1247 = vld [vmem:[%s165 + $0x8] sm:$0x77]
        %v1248 = vld [vmem:[%s165 + $0x10] sm:$0x77]
        %v1249 = vld [vmem:[%s165 + $0x18] sm:$0x77]
        %v1250 = vld [vmem:[%s165 + $0x20] sm:$0x7]
        %v1256 = vcombine.high %v1246, %v1246
        %v1257 = vcombine.high %v1247, %v1247
        %v1258 = vcombine.high %v1248, %v1248
        %v1259 = vcombine.high %v1249, %v1249
        %v1260 = vrot.slane %v1246, 5
        %v1261 = vrot.slane %v1256, 5
        %v1262 = vrot.slane %v1247, 5
        %v1263 = vrot.slane %v1257, 5
        %v1264 = vrot.slane %v1248, 5
        %v1265 = vrot.slane %v1258, 5
        %v1266 = vrot.slane %v1249, 5
        %v1267 = vrot.slane %v1259, 5
        %v1268 = vrot.slane %v1250, 5
        %1269 = vrot.lane.b32.xlu0 %v1260, 61
        %v1270 = vpop.permute.xlu0 %1269
        %1271 = vrot.lane.b32.xlu0 %v1261, 61
        %v1272 = vpop.permute.xlu0 %1271
        %1273 = vrot.lane.b32.xlu0 %v1262, 61
        %v1274 = vpop.permute.xlu0 %1273
        %1275 = vrot.lane.b32.xlu0 %v1263, 61
        %v1276 = vpop.permute.xlu0 %1275
        %1277 = vrot.lane.b32.xlu0 %v1264, 61
        %v1278 = vpop.permute.xlu0 %1277
        %1279 = vrot.lane.b32.xlu0 %v1265, 61
        %v1280 = vpop.permute.xlu0 %1279
        %1281 = vrot.lane.b32.xlu0 %v1266, 61
        %v1282 = vpop.permute.xlu0 %1281
        %1283 = vrot.lane.b32.xlu0 %v1267, 61
        %v1284 = vpop.permute.xlu0 %1283
        %1285 = vrot.lane.b32.xlu0 %v1268, 61
        %v1286 = vpop.permute.xlu0 %1285
        %vm1287 = vcmask 498688
        %v1288 = vsel %vm1287, %v1270, %v1272
        %v1289 = vsel %vm1287, %v1272, %v1274
        %v1290 = vsel %vm1287, %v1274, %v1276
        %v1291 = vsel %vm1287, %v1276, %v1278
        %v1292 = vsel %vm1287, %v1278, %v1280
        %v1293 = vsel %vm1287, %v1280, %v1282
        %v1294 = vsel %vm1287, %v1282, %v1284
        %v1295 = vsel %vm1287, %v1284, %v1286
        %1304 = vst [vmem:[#allocation2 + $0x180] sm:$0x38] %v1288
        %1305 = vst [vmem:[#allocation2 + $0x188] sm:$0x38] %v1289
        %1306 = vst [vmem:[#allocation2 + $0x190] sm:$0x38] %v1290
        %1307 = vst [vmem:[#allocation2 + $0x198] sm:$0x38] %v1291
        %1308 = vst [vmem:[#allocation2 + $0x1a0] sm:$0x38] %v1292
        %1309 = vst [vmem:[#allocation2 + $0x1a8] sm:$0x38] %v1293
        %1310 = vst [vmem:[#allocation2 + $0x1b0] sm:$0x38] %v1294
        %1311 = vst [vmem:[#allocation2 + $0x1b8] sm:$0x38] %v1295
        %v1312 = vld [vmem:[%s165] sm:$0x77]
        %v1313 = vld [vmem:[%s165 + $0x8] sm:$0x77]
        %v1314 = vld [vmem:[%s165 + $0x10] sm:$0x77]
        %v1315 = vld [vmem:[%s165 + $0x18] sm:$0x77]
        %v1316 = vld [vmem:[%s165 + $0x20] sm:$0x7]
        %v1322 = vcombine.high %v1312, %v1312
        %v1323 = vcombine.high %v1313, %v1313
        %v1324 = vcombine.high %v1314, %v1314
        %v1325 = vcombine.high %v1315, %v1315
        %v1326 = vrot.slane %v1312, 2
        %v1327 = vrot.slane %v1322, 2
        %v1328 = vrot.slane %v1313, 2
        %v1329 = vrot.slane %v1323, 2
        %v1330 = vrot.slane %v1314, 2
        %v1331 = vrot.slane %v1324, 2
        %v1332 = vrot.slane %v1315, 2
        %v1333 = vrot.slane %v1325, 2
        %v1334 = vrot.slane %v1316, 2
        %1335 = vrot.lane.b32.xlu0 %v1326, 60
        %v1336 = vpop.permute.xlu0 %1335
        %1337 = vrot.lane.b32.xlu0 %v1327, 60
        %v1338 = vpop.permute.xlu0 %1337
        %1339 = vrot.lane.b32.xlu0 %v1328, 60
        %v1340 = vpop.permute.xlu0 %1339
        %1341 = vrot.lane.b32.xlu0 %v1329, 60
        %v1342 = vpop.permute.xlu0 %1341
        %1343 = vrot.lane.b32.xlu0 %v1330, 60
        %v1344 = vpop.permute.xlu0 %1343
        %1345 = vrot.lane.b32.xlu0 %v1331, 60
        %v1346 = vpop.permute.xlu0 %1345
        %1347 = vrot.lane.b32.xlu0 %v1332, 60
        %v1348 = vpop.permute.xlu0 %1347
        %1349 = vrot.lane.b32.xlu0 %v1333, 60
        %v1350 = vpop.permute.xlu0 %1349
        %1351 = vrot.lane.b32.xlu0 %v1334, 60
        %v1352 = vpop.permute.xlu0 %1351
        %vm1353 = vcmask 490496
        %v1354 = vsel %vm1353, %v1336, %v1338
        %v1355 = vsel %vm1353, %v1338, %v1340
        %v1356 = vsel %vm1353, %v1340, %v1342
        %v1357 = vsel %vm1353, %v1342, %v1344
        %v1358 = vsel %vm1353, %v1344, %v1346
        %v1359 = vsel %vm1353, %v1346, %v1348
        %v1360 = vsel %vm1353, %v1348, %v1350
        %v1361 = vsel %vm1353, %v1350, %v1352
        %1370 = vst [vmem:[#allocation2 + $0x180] sm:$0xc0] %v1354
        %1371 = vst [vmem:[#allocation2 + $0x188] sm:$0xc0] %v1355
        %1372 = vst [vmem:[#allocation2 + $0x190] sm:$0xc0] %v1356
        %1373 = vst [vmem:[#allocation2 + $0x198] sm:$0xc0] %v1357
        %1374 = vst [vmem:[#allocation2 + $0x1a0] sm:$0xc0] %v1358
        %1375 = vst [vmem:[#allocation2 + $0x1a8] sm:$0xc0] %v1359
        %1376 = vst [vmem:[#allocation2 + $0x1b0] sm:$0xc0] %v1360
        %1377 = vst [vmem:[#allocation2 + $0x1b8] sm:$0xc0] %v1361
        %1378 = vst [vmem:[#allocation2 + $0x1c0] sm:$0x1] %v1354
        %1379 = vst [vmem:[#allocation2 + $0x1c8] sm:$0x1] %v1355
        %1380 = vst [vmem:[#allocation2 + $0x1d0] sm:$0x1] %v1356
        %1381 = vst [vmem:[#allocation2 + $0x1d8] sm:$0x1] %v1357
        %1382 = vst [vmem:[#allocation2 + $0x1e0] sm:$0x1] %v1358
        %1383 = vst [vmem:[#allocation2 + $0x1e8] sm:$0x1] %v1359
        %1384 = vst [vmem:[#allocation2 + $0x1f0] sm:$0x1] %v1360
        %1385 = vst [vmem:[#allocation2 + $0x1f8] sm:$0x1] %v1361
        %v1386 = vld [vmem:[%s165] sm:$0x77]
        %v1387 = vld [vmem:[%s165 + $0x8] sm:$0x77]
        %v1388 = vld [vmem:[%s165 + $0x10] sm:$0x77]
        %v1389 = vld [vmem:[%s165 + $0x18] sm:$0x77]
        %v1390 = vld [vmem:[%s165 + $0x20] sm:$0x7]
        %v1396 = vcombine.high %v1386, %v1386
        %v1397 = vcombine.high %v1387, %v1387
        %v1398 = vcombine.high %v1388, %v1388
        %v1399 = vcombine.high %v1389, %v1389
        %v1400 = vrot.slane %v1386, 7
        %v1401 = vrot.slane %v1396, 7
        %v1402 = vrot.slane %v1387, 7
        %v1403 = vrot.slane %v1397, 7
        %v1404 = vrot.slane %v1388, 7
        %v1405 = vrot.slane %v1398, 7
        %v1406 = vrot.slane %v1389, 7
        %v1407 = vrot.slane %v1399, 7
        %v1408 = vrot.slane %v1390, 7
        %1409 = vrot.lane.b32.xlu0 %v1400, 59
        %v1410 = vpop.permute.xlu0 %1409
        %1411 = vrot.lane.b32.xlu0 %v1401, 59
        %v1412 = vpop.permute.xlu0 %1411
        %1413 = vrot.lane.b32.xlu0 %v1402, 59
        %v1414 = vpop.permute.xlu0 %1413
        %1415 = vrot.lane.b32.xlu0 %v1403, 59
        %v1416 = vpop.permute.xlu0 %1415
        %1417 = vrot.lane.b32.xlu0 %v1404, 59
        %v1418 = vpop.permute.xlu0 %1417
        %1419 = vrot.lane.b32.xlu0 %v1405, 59
        %v1420 = vpop.permute.xlu0 %1419
        %1421 = vrot.lane.b32.xlu0 %v1406, 59
        %v1422 = vpop.permute.xlu0 %1421
        %1423 = vrot.lane.b32.xlu0 %v1407, 59
        %v1424 = vpop.permute.xlu0 %1423
        %1425 = vrot.lane.b32.xlu0 %v1408, 59
        %v1426 = vpop.permute.xlu0 %1425
        %vm1427 = vcmask 482304
        %v1428 = vsel %vm1427, %v1410, %v1412
        %v1429 = vsel %vm1427, %v1412, %v1414
        %v1430 = vsel %vm1427, %v1414, %v1416
        %v1431 = vsel %vm1427, %v1416, %v1418
        %v1432 = vsel %vm1427, %v1418, %v1420
        %v1433 = vsel %vm1427, %v1420, %v1422
        %v1434 = vsel %vm1427, %v1422, %v1424
        %v1435 = vsel %vm1427, %v1424, %v1426
        %1444 = vst [vmem:[#allocation2 + $0x1c0] sm:$0xe] %v1428
        %1445 = vst [vmem:[#allocation2 + $0x1c8] sm:$0xe] %v1429
        %1446 = vst [vmem:[#allocation2 + $0x1d0] sm:$0xe] %v1430
        %1447 = vst [vmem:[#allocation2 + $0x1d8] sm:$0xe] %v1431
        %1448 = vst [vmem:[#allocation2 + $0x1e0] sm:$0xe] %v1432
        %1449 = vst [vmem:[#allocation2 + $0x1e8] sm:$0xe] %v1433
        %1450 = vst [vmem:[#allocation2 + $0x1f0] sm:$0xe] %v1434
        %1451 = vst [vmem:[#allocation2 + $0x1f8] sm:$0xe] %v1435
        %v1452 = vld [vmem:[%s165] sm:$0x77]
        %v1453 = vld [vmem:[%s165 + $0x8] sm:$0x77]
        %v1454 = vld [vmem:[%s165 + $0x10] sm:$0x77]
        %v1455 = vld [vmem:[%s165 + $0x18] sm:$0x77]
        %v1456 = vld [vmem:[%s165 + $0x20] sm:$0x7]
        %v1462 = vcombine.low %v1452, %v1452
        %v1463 = vcombine.low %v1453, %v1453
        %v1464 = vcombine.low %v1454, %v1454
        %v1465 = vcombine.low %v1455, %v1455
        %v1466 = vcombine.low %v1456, %v1456
        %1467 = vrot.lane.b32.xlu0 %v1462, 58
        %v1468 = vpop.permute.xlu0 %1467
        %1469 = vrot.lane.b32.xlu0 %v1452, 58
        %v1470 = vpop.permute.xlu0 %1469
        %1471 = vrot.lane.b32.xlu0 %v1463, 58
        %v1472 = vpop.permute.xlu0 %1471
        %1473 = vrot.lane.b32.xlu0 %v1453, 58
        %v1474 = vpop.permute.xlu0 %1473
        %1475 = vrot.lane.b32.xlu0 %v1464, 58
        %v1476 = vpop.permute.xlu0 %1475
        %1477 = vrot.lane.b32.xlu0 %v1454, 58
        %v1478 = vpop.permute.xlu0 %1477
        %1479 = vrot.lane.b32.xlu0 %v1465, 58
        %v1480 = vpop.permute.xlu0 %1479
        %1481 = vrot.lane.b32.xlu0 %v1455, 58
        %v1482 = vpop.permute.xlu0 %1481
        %1483 = vrot.lane.b32.xlu0 %v1466, 58
        %v1484 = vpop.permute.xlu0 %1483
        %vm1485 = vcmask 474112
        %v1486 = vsel %vm1485, %v1468, %v1470
        %v1487 = vsel %vm1485, %v1470, %v1472
        %v1488 = vsel %vm1485, %v1472, %v1474
        %v1489 = vsel %vm1485, %v1474, %v1476
        %v1490 = vsel %vm1485, %v1476, %v1478
        %v1491 = vsel %vm1485, %v1478, %v1480
        %v1492 = vsel %vm1485, %v1480, %v1482
        %v1493 = vsel %vm1485, %v1482, %v1484
        %1502 = vst [vmem:[#allocation2 + $0x1c0] sm:$0x70] %v1486
        %1503 = vst [vmem:[#allocation2 + $0x1c8] sm:$0x70] %v1487
        %1504 = vst [vmem:[#allocation2 + $0x1d0] sm:$0x70] %v1488
        %1505 = vst [vmem:[#allocation2 + $0x1d8] sm:$0x70] %v1489
        %1506 = vst [vmem:[#allocation2 + $0x1e0] sm:$0x70] %v1490
        %1507 = vst [vmem:[#allocation2 + $0x1e8] sm:$0x70] %v1491
        %1508 = vst [vmem:[#allocation2 + $0x1f0] sm:$0x70] %v1492
        %1509 = vst [vmem:[#allocation2 + $0x1f8] sm:$0x70] %v1493
        %v1510 = vld [vmem:[%s165] sm:$0x77]
        %v1511 = vld [vmem:[%s165 + $0x8] sm:$0x77]
        %v1512 = vld [vmem:[%s165 + $0x10] sm:$0x77]
        %v1513 = vld [vmem:[%s165 + $0x18] sm:$0x77]
        %v1514 = vld [vmem:[%s165 + $0x20] sm:$0x7]
        %v1520 = vcombine.high %v1510, %v1510
        %v1521 = vcombine.high %v1511, %v1511
        %v1522 = vcombine.high %v1512, %v1512
        %v1523 = vcombine.high %v1513, %v1513
        %v1524 = vrot.slane %v1510, 1
        %v1525 = vrot.slane %v1520, 1
        %v1526 = vrot.slane %v1511, 1
        %v1527 = vrot.slane %v1521, 1
        %v1528 = vrot.slane %v1512, 1
        %v1529 = vrot.slane %v1522, 1
        %v1530 = vrot.slane %v1513, 1
        %v1531 = vrot.slane %v1523, 1
        %v1532 = vrot.slane %v1514, 1
        %1533 = vrot.lane.b32.xlu0 %v1524, 32
        %v1534 = vpop.permute.xlu0 %1533
        %1535 = vrot.lane.b32.xlu0 %v1525, 32
        %v1536 = vpop.permute.xlu0 %1535
        %1537 = vrot.lane.b32.xlu0 %v1526, 32
        %v1538 = vpop.permute.xlu0 %1537
        %1539 = vrot.lane.b32.xlu0 %v1527, 32
        %v1540 = vpop.permute.xlu0 %1539
        %1541 = vrot.lane.b32.xlu0 %v1528, 32
        %v1542 = vpop.permute.xlu0 %1541
        %1543 = vrot.lane.b32.xlu0 %v1529, 32
        %v1544 = vpop.permute.xlu0 %1543
        %1545 = vrot.lane.b32.xlu0 %v1530, 32
        %v1546 = vpop.permute.xlu0 %1545
        %1547 = vrot.lane.b32.xlu0 %v1531, 32
        %v1548 = vpop.permute.xlu0 %1547
        %1549 = vrot.lane.b32.xlu0 %v1532, 32
        %v1550 = vpop.permute.xlu0 %1549
        %vm1551 = vcmask 261120
        %v1552 = vsel %vm1551, %v1534, %v1536
        %v1553 = vsel %vm1551, %v1536, %v1538
        %v1554 = vsel %vm1551, %v1538, %v1540
        %v1555 = vsel %vm1551, %v1540, %v1542
        %v1556 = vsel %vm1551, %v1542, %v1544
        %v1557 = vsel %vm1551, %v1544, %v1546
        %v1558 = vsel %vm1551, %v1546, %v1548
        %v1559 = vsel %vm1551, %v1548, %v1550
        %1568 = vst [vmem:[#allocation2 + $0x1c0] sm:$0x80] %v1552
        %1569 = vst [vmem:[#allocation2 + $0x1c8] sm:$0x80] %v1553
        %1570 = vst [vmem:[#allocation2 + $0x1d0] sm:$0x80] %v1554
        %1571 = vst [vmem:[#allocation2 + $0x1d8] sm:$0x80] %v1555
        %1572 = vst [vmem:[#allocation2 + $0x1e0] sm:$0x80] %v1556
        %1573 = vst [vmem:[#allocation2 + $0x1e8] sm:$0x80] %v1557
        %1574 = vst [vmem:[#allocation2 + $0x1f0] sm:$0x80] %v1558
        %1575 = vst [vmem:[#allocation2 + $0x1f8] sm:$0x80] %v1559
        %1576 = vst [vmem:[#allocation2 + $0x200] sm:$0x3] %v1552
        %1577 = vst [vmem:[#allocation2 + $0x208] sm:$0x3] %v1553
        %1578 = vst [vmem:[#allocation2 + $0x210] sm:$0x3] %v1554
        %1579 = vst [vmem:[#allocation2 + $0x218] sm:$0x3] %v1555
        %1580 = vst [vmem:[#allocation2 + $0x220] sm:$0x3] %v1556
        %1581 = vst [vmem:[#allocation2 + $0x228] sm:$0x3] %v1557
        %1582 = vst [vmem:[#allocation2 + $0x230] sm:$0x3] %v1558
        %1583 = vst [vmem:[#allocation2 + $0x238] sm:$0x3] %v1559
        %v1584 = vld [vmem:[%s165] sm:$0x77]
        %v1585 = vld [vmem:[%s165 + $0x8] sm:$0x77]
        %v1586 = vld [vmem:[%s165 + $0x10] sm:$0x77]
        %v1587 = vld [vmem:[%s165 + $0x18] sm:$0x77]
        %v1588 = vld [vmem:[%s165 + $0x20] sm:$0x7]
        %v1594 = vcombine.high %v1584, %v1584
        %v1595 = vcombine.high %v1585, %v1585
        %v1596 = vcombine.high %v1586, %v1586
        %v1597 = vcombine.high %v1587, %v1587
        %v1598 = vrot.slane %v1584, 6
        %v1599 = vrot.slane %v1594, 6
        %v1600 = vrot.slane %v1585, 6
        %v1601 = vrot.slane %v1595, 6
        %v1602 = vrot.slane %v1586, 6
        %v1603 = vrot.slane %v1596, 6
        %v1604 = vrot.slane %v1587, 6
        %v1605 = vrot.slane %v1597, 6
        %v1606 = vrot.slane %v1588, 6
        %1607 = vrot.lane.b32.xlu0 %v1598, 31
        %v1608 = vpop.permute.xlu0 %1607
        %1609 = vrot.lane.b32.xlu0 %v1599, 31
        %v1610 = vpop.permute.xlu0 %1609
        %1611 = vrot.lane.b32.xlu0 %v1600, 31
        %v1612 = vpop.permute.xlu0 %1611
        %1613 = vrot.lane.b32.xlu0 %v1601, 31
        %v1614 = vpop.permute.xlu0 %1613
        %1615 = vrot.lane.b32.xlu0 %v1602, 31
        %v1616 = vpop.permute.xlu0 %1615
        %1617 = vrot.lane.b32.xlu0 %v1603, 31
        %v1618 = vpop.permute.xlu0 %1617
        %1619 = vrot.lane.b32.xlu0 %v1604, 31
        %v1620 = vpop.permute.xlu0 %1619
        %1621 = vrot.lane.b32.xlu0 %v1605, 31
        %v1622 = vpop.permute.xlu0 %1621
        %1623 = vrot.lane.b32.xlu0 %v1606, 31
        %v1624 = vpop.permute.xlu0 %1623
        %vm1625 = vcmask 252928
        %v1626 = vsel %vm1625, %v1608, %v1610
        %v1627 = vsel %vm1625, %v1610, %v1612
        %v1628 = vsel %vm1625, %v1612, %v1614
        %v1629 = vsel %vm1625, %v1614, %v1616
        %v1630 = vsel %vm1625, %v1616, %v1618
        %v1631 = vsel %vm1625, %v1618, %v1620
        %v1632 = vsel %vm1625, %v1620, %v1622
        %v1633 = vsel %vm1625, %v1622, %v1624
        %1642 = vst [vmem:[#allocation2 + $0x200] sm:$0x1c] %v1626
        %1643 = vst [vmem:[#allocation2 + $0x208] sm:$0x1c] %v1627
        %1644 = vst [vmem:[#allocation2 + $0x210] sm:$0x1c] %v1628
        %1645 = vst [vmem:[#allocation2 + $0x218] sm:$0x1c] %v1629
        %1646 = vst [vmem:[#allocation2 + $0x220] sm:$0x1c] %v1630
        %1647 = vst [vmem:[#allocation2 + $0x228] sm:$0x1c] %v1631
        %1648 = vst [vmem:[#allocation2 + $0x230] sm:$0x1c] %v1632
        %1649 = vst [vmem:[#allocation2 + $0x238] sm:$0x1c] %v1633
        %v1650 = vld [vmem:[%s165] sm:$0x77]
        %v1651 = vld [vmem:[%s165 + $0x8] sm:$0x77]
        %v1652 = vld [vmem:[%s165 + $0x10] sm:$0x77]
        %v1653 = vld [vmem:[%s165 + $0x18] sm:$0x77]
        %v1654 = vld [vmem:[%s165 + $0x20] sm:$0x7]
        %v1660 = vcombine.high %v1650, %v1650
        %v1661 = vcombine.high %v1651, %v1651
        %v1662 = vcombine.high %v1652, %v1652
        %v1663 = vcombine.high %v1653, %v1653
        %v1664 = vrot.slane %v1650, 3
        %v1665 = vrot.slane %v1660, 3
        %v1666 = vrot.slane %v1651, 3
        %v1667 = vrot.slane %v1661, 3
        %v1668 = vrot.slane %v1652, 3
        %v1669 = vrot.slane %v1662, 3
        %v1670 = vrot.slane %v1653, 3
        %v1671 = vrot.slane %v1663, 3
        %v1672 = vrot.slane %v1654, 3
        %1673 = vrot.lane.b32.xlu0 %v1664, 30
        %v1674 = vpop.permute.xlu0 %1673
        %1675 = vrot.lane.b32.xlu0 %v1665, 30
        %v1676 = vpop.permute.xlu0 %1675
        %1677 = vrot.lane.b32.xlu0 %v1666, 30
        %v1678 = vpop.permute.xlu0 %1677
        %1679 = vrot.lane.b32.xlu0 %v1667, 30
        %v1680 = vpop.permute.xlu0 %1679
        %1681 = vrot.lane.b32.xlu0 %v1668, 30
        %v1682 = vpop.permute.xlu0 %1681
        %1683 = vrot.lane.b32.xlu0 %v1669, 30
        %v1684 = vpop.permute.xlu0 %1683
        %1685 = vrot.lane.b32.xlu0 %v1670, 30
        %v1686 = vpop.permute.xlu0 %1685
        %1687 = vrot.lane.b32.xlu0 %v1671, 30
        %v1688 = vpop.permute.xlu0 %1687
        %1689 = vrot.lane.b32.xlu0 %v1672, 30
        %v1690 = vpop.permute.xlu0 %1689
        %vm1691 = vcmask 244736
        %v1692 = vsel %vm1691, %v1674, %v1676
        %v1693 = vsel %vm1691, %v1676, %v1678
        %v1694 = vsel %vm1691, %v1678, %v1680
        %v1695 = vsel %vm1691, %v1680, %v1682
        %v1696 = vsel %vm1691, %v1682, %v1684
        %v1697 = vsel %vm1691, %v1684, %v1686
        %v1698 = vsel %vm1691, %v1686, %v1688
        %v1699 = vsel %vm1691, %v1688, %v1690
        %1708 = vst [vmem:[#allocation2 + $0x200] sm:$0xe0] %v1692
        %1709 = vst [vmem:[#allocation2 + $0x208] sm:$0xe0] %v1693
        %1710 = vst [vmem:[#allocation2 + $0x210] sm:$0xe0] %v1694
        %1711 = vst [vmem:[#allocation2 + $0x218] sm:$0xe0] %v1695
        %1712 = vst [vmem:[#allocation2 + $0x220] sm:$0xe0] %v1696
        %1713 = vst [vmem:[#allocation2 + $0x228] sm:$0xe0] %v1697
        %1714 = vst [vmem:[#allocation2 + $0x230] sm:$0xe0] %v1698
        %1715 = vst [vmem:[#allocation2 + $0x238] sm:$0xe0] %v1699
        %v1716 = vld [vmem:[%s165] sm:$0x77]
        %v1717 = vld [vmem:[%s165 + $0x8] sm:$0x77]
        %v1718 = vld [vmem:[%s165 + $0x10] sm:$0x77]
        %v1719 = vld [vmem:[%s165 + $0x18] sm:$0x77]
        %v1720 = vld [vmem:[%s165 + $0x20] sm:$0x7]
        %v1726 = vcombine.high %v1716, %v1716
        %v1727 = vcombine.high %v1717, %v1717
        %v1728 = vcombine.high %v1718, %v1718
        %v1729 = vcombine.high %v1719, %v1719
        %1730 = vrot.lane.b32.xlu0 %v1716, 29
        %v1731 = vpop.permute.xlu0 %1730
        %1732 = vrot.lane.b32.xlu0 %v1726, 29
        %v1733 = vpop.permute.xlu0 %1732
        %1734 = vrot.lane.b32.xlu0 %v1717, 29
        %v1735 = vpop.permute.xlu0 %1734
        %1736 = vrot.lane.b32.xlu0 %v1727, 29
        %v1737 = vpop.permute.xlu0 %1736
        %1738 = vrot.lane.b32.xlu0 %v1718, 29
        %v1739 = vpop.permute.xlu0 %1738
        %1740 = vrot.lane.b32.xlu0 %v1728, 29
        %v1741 = vpop.permute.xlu0 %1740
        %1742 = vrot.lane.b32.xlu0 %v1719, 29
        %v1743 = vpop.permute.xlu0 %1742
        %1744 = vrot.lane.b32.xlu0 %v1729, 29
        %v1745 = vpop.permute.xlu0 %1744
        %1746 = vrot.lane.b32.xlu0 %v1720, 29
        %v1747 = vpop.permute.xlu0 %1746
        %vm1748 = vcmask 236544
        %v1749 = vsel %vm1748, %v1731, %v1733
        %v1750 = vsel %vm1748, %v1733, %v1735
        %v1751 = vsel %vm1748, %v1735, %v1737
        %v1752 = vsel %vm1748, %v1737, %v1739
        %v1753 = vsel %vm1748, %v1739, %v1741
        %v1754 = vsel %vm1748, %v1741, %v1743
        %v1755 = vsel %vm1748, %v1743, %v1745
        %v1756 = vsel %vm1748, %v1745, %v1747
        %1765 = vst [vmem:[#allocation2 + $0x240] sm:$0x7] %v1749
        %1766 = vst [vmem:[#allocation2 + $0x248] sm:$0x7] %v1750
        %1767 = vst [vmem:[#allocation2 + $0x250] sm:$0x7] %v1751
        %1768 = vst [vmem:[#allocation2 + $0x258] sm:$0x7] %v1752
        %1769 = vst [vmem:[#allocation2 + $0x260] sm:$0x7] %v1753
        %1770 = vst [vmem:[#allocation2 + $0x268] sm:$0x7] %v1754
        %1771 = vst [vmem:[#allocation2 + $0x270] sm:$0x7] %v1755
        %1772 = vst [vmem:[#allocation2 + $0x278] sm:$0x7] %v1756
        %v1773 = vld [vmem:[%s165] sm:$0x77]
        %v1774 = vld [vmem:[%s165 + $0x8] sm:$0x77]
        %v1775 = vld [vmem:[%s165 + $0x10] sm:$0x77]
        %v1776 = vld [vmem:[%s165 + $0x18] sm:$0x77]
        %v1777 = vld [vmem:[%s165 + $0x20] sm:$0x7]
        %v1783 = vcombine.high %v1773, %v1773
        %v1784 = vcombine.high %v1774, %v1774
        %v1785 = vcombine.high %v1775, %v1775
        %v1786 = vcombine.high %v1776, %v1776
        %v1787 = vrot.slane %v1773, 5
        %v1788 = vrot.slane %v1783, 5
        %v1789 = vrot.slane %v1774, 5
        %v1790 = vrot.slane %v1784, 5
        %v1791 = vrot.slane %v1775, 5
        %v1792 = vrot.slane %v1785, 5
        %v1793 = vrot.slane %v1776, 5
        %v1794 = vrot.slane %v1786, 5
        %v1795 = vrot.slane %v1777, 5
        %1796 = vrot.lane.b32.xlu0 %v1787, 28
        %v1797 = vpop.permute.xlu0 %1796
        %1798 = vrot.lane.b32.xlu0 %v1788, 28
        %v1799 = vpop.permute.xlu0 %1798
        %1800 = vrot.lane.b32.xlu0 %v1789, 28
        %v1801 = vpop.permute.xlu0 %1800
        %1802 = vrot.lane.b32.xlu0 %v1790, 28
        %v1803 = vpop.permute.xlu0 %1802
        %1804 = vrot.lane.b32.xlu0 %v1791, 28
        %v1805 = vpop.permute.xlu0 %1804
        %1806 = vrot.lane.b32.xlu0 %v1792, 28
        %v1807 = vpop.permute.xlu0 %1806
        %1808 = vrot.lane.b32.xlu0 %v1793, 28
        %v1809 = vpop.permute.xlu0 %1808
        %1810 = vrot.lane.b32.xlu0 %v1794, 28
        %v1811 = vpop.permute.xlu0 %1810
        %1812 = vrot.lane.b32.xlu0 %v1795, 28
        %v1813 = vpop.permute.xlu0 %1812
        %vm1814 = vcmask 228352
        %v1815 = vsel %vm1814, %v1797, %v1799
        %v1816 = vsel %vm1814, %v1799, %v1801
        %v1817 = vsel %vm1814, %v1801, %v1803
        %v1818 = vsel %vm1814, %v1803, %v1805
        %v1819 = vsel %vm1814, %v1805, %v1807
        %v1820 = vsel %vm1814, %v1807, %v1809
        %v1821 = vsel %vm1814, %v1809, %v1811
        %v1822 = vsel %vm1814, %v1811, %v1813
        %1831 = vst [vmem:[#allocation2 + $0x240] sm:$0x38] %v1815
        %1832 = vst [vmem:[#allocation2 + $0x248] sm:$0x38] %v1816
        %1833 = vst [vmem:[#allocation2 + $0x250] sm:$0x38] %v1817
        %1834 = vst [vmem:[#allocation2 + $0x258] sm:$0x38] %v1818
        %1835 = vst [vmem:[#allocation2 + $0x260] sm:$0x38] %v1819
        %1836 = vst [vmem:[#allocation2 + $0x268] sm:$0x38] %v1820
        %1837 = vst [vmem:[#allocation2 + $0x270] sm:$0x38] %v1821
        %1838 = vst [vmem:[#allocation2 + $0x278] sm:$0x38] %v1822
        %v1839 = vld [vmem:[%s165] sm:$0x77]
        %v1840 = vld [vmem:[%s165 + $0x8] sm:$0x77]
        %v1841 = vld [vmem:[%s165 + $0x10] sm:$0x77]
        %v1842 = vld [vmem:[%s165 + $0x18] sm:$0x77]
        %v1843 = vld [vmem:[%s165 + $0x20] sm:$0x7]
        %v1849 = vcombine.high %v1839, %v1839
        %v1850 = vcombine.high %v1840, %v1840
        %v1851 = vcombine.high %v1841, %v1841
        %v1852 = vcombine.high %v1842, %v1842
        %v1853 = vrot.slane %v1839, 2
        %v1854 = vrot.slane %v1849, 2
        %v1855 = vrot.slane %v1840, 2
        %v1856 = vrot.slane %v1850, 2
        %v1857 = vrot.slane %v1841, 2
        %v1858 = vrot.slane %v1851, 2
        %v1859 = vrot.slane %v1842, 2
        %v1860 = vrot.slane %v1852, 2
        %v1861 = vrot.slane %v1843, 2
        %1862 = vrot.lane.b32.xlu0 %v1853, 27
        %v1863 = vpop.permute.xlu0 %1862
        %1864 = vrot.lane.b32.xlu0 %v1854, 27
        %v1865 = vpop.permute.xlu0 %1864
        %1866 = vrot.lane.b32.xlu0 %v1855, 27
        %v1867 = vpop.permute.xlu0 %1866
        %1868 = vrot.lane.b32.xlu0 %v1856, 27
        %v1869 = vpop.permute.xlu0 %1868
        %1870 = vrot.lane.b32.xlu0 %v1857, 27
        %v1871 = vpop.permute.xlu0 %1870
        %1872 = vrot.lane.b32.xlu0 %v1858, 27
        %v1873 = vpop.permute.xlu0 %1872
        %1874 = vrot.lane.b32.xlu0 %v1859, 27
        %v1875 = vpop.permute.xlu0 %1874
        %1876 = vrot.lane.b32.xlu0 %v1860, 27
        %v1877 = vpop.permute.xlu0 %1876
        %1878 = vrot.lane.b32.xlu0 %v1861, 27
        %v1879 = vpop.permute.xlu0 %1878
        %vm1880 = vcmask 220160
        %v1881 = vsel %vm1880, %v1863, %v1865
        %v1882 = vsel %vm1880, %v1865, %v1867
        %v1883 = vsel %vm1880, %v1867, %v1869
        %v1884 = vsel %vm1880, %v1869, %v1871
        %v1885 = vsel %vm1880, %v1871, %v1873
        %v1886 = vsel %vm1880, %v1873, %v1875
        %v1887 = vsel %vm1880, %v1875, %v1877
        %v1888 = vsel %vm1880, %v1877, %v1879
        %1897 = vst [vmem:[#allocation2 + $0x240] sm:$0xc0] %v1881
        %1898 = vst [vmem:[#allocation2 + $0x248] sm:$0xc0] %v1882
        %1899 = vst [vmem:[#allocation2 + $0x250] sm:$0xc0] %v1883
        %1900 = vst [vmem:[#allocation2 + $0x258] sm:$0xc0] %v1884
        %1901 = vst [vmem:[#allocation2 + $0x260] sm:$0xc0] %v1885
        %1902 = vst [vmem:[#allocation2 + $0x268] sm:$0xc0] %v1886
        %1903 = vst [vmem:[#allocation2 + $0x270] sm:$0xc0] %v1887
        %1904 = vst [vmem:[#allocation2 + $0x278] sm:$0xc0] %v1888
        %1905 = vst [vmem:[#allocation2 + $0x280] sm:$0x1] %v1881
        %1906 = vst [vmem:[#allocation2 + $0x288] sm:$0x1] %v1882
        %1907 = vst [vmem:[#allocation2 + $0x290] sm:$0x1] %v1883
        %1908 = vst [vmem:[#allocation2 + $0x298] sm:$0x1] %v1884
        %1909 = vst [vmem:[#allocation2 + $0x2a0] sm:$0x1] %v1885
        %1910 = vst [vmem:[#allocation2 + $0x2a8] sm:$0x1] %v1886
        %1911 = vst [vmem:[#allocation2 + $0x2b0] sm:$0x1] %v1887
        %1912 = vst [vmem:[#allocation2 + $0x2b8] sm:$0x1] %v1888
        %v1913 = vld [vmem:[%s165] sm:$0x77]
        %v1914 = vld [vmem:[%s165 + $0x8] sm:$0x77]
        %v1915 = vld [vmem:[%s165 + $0x10] sm:$0x77]
        %v1916 = vld [vmem:[%s165 + $0x18] sm:$0x77]
        %v1917 = vld [vmem:[%s165 + $0x20] sm:$0x7]
        %v1923 = vcombine.high %v1913, %v1913
        %v1924 = vcombine.high %v1914, %v1914
        %v1925 = vcombine.high %v1915, %v1915
        %v1926 = vcombine.high %v1916, %v1916
        %v1927 = vrot.slane %v1913, 7
        %v1928 = vrot.slane %v1923, 7
        %v1929 = vrot.slane %v1914, 7
        %v1930 = vrot.slane %v1924, 7
        %v1931 = vrot.slane %v1915, 7
        %v1932 = vrot.slane %v1925, 7
        %v1933 = vrot.slane %v1916, 7
        %v1934 = vrot.slane %v1926, 7
        %v1935 = vrot.slane %v1917, 7
        %1936 = vrot.lane.b32.xlu0 %v1927, 26
        %v1937 = vpop.permute.xlu0 %1936
        %1938 = vrot.lane.b32.xlu0 %v1928, 26
        %v1939 = vpop.permute.xlu0 %1938
        %1940 = vrot.lane.b32.xlu0 %v1929, 26
        %v1941 = vpop.permute.xlu0 %1940
        %1942 = vrot.lane.b32.xlu0 %v1930, 26
        %v1943 = vpop.permute.xlu0 %1942
        %1944 = vrot.lane.b32.xlu0 %v1931, 26
        %v1945 = vpop.permute.xlu0 %1944
        %1946 = vrot.lane.b32.xlu0 %v1932, 26
        %v1947 = vpop.permute.xlu0 %1946
        %1948 = vrot.lane.b32.xlu0 %v1933, 26
        %v1949 = vpop.permute.xlu0 %1948
        %1950 = vrot.lane.b32.xlu0 %v1934, 26
        %v1951 = vpop.permute.xlu0 %1950
        %1952 = vrot.lane.b32.xlu0 %v1935, 26
        %v1953 = vpop.permute.xlu0 %1952
        %vm1954 = vcmask 211968
        %v1955 = vsel %vm1954, %v1937, %v1939
        %v1956 = vsel %vm1954, %v1939, %v1941
        %v1957 = vsel %vm1954, %v1941, %v1943
        %v1958 = vsel %vm1954, %v1943, %v1945
        %v1959 = vsel %vm1954, %v1945, %v1947
        %v1960 = vsel %vm1954, %v1947, %v1949
        %v1961 = vsel %vm1954, %v1949, %v1951
        %v1962 = vsel %vm1954, %v1951, %v1953
        %1971 = vst [vmem:[#allocation2 + $0x280] sm:$0xe] %v1955
        %1972 = vst [vmem:[#allocation2 + $0x288] sm:$0xe] %v1956
        %1973 = vst [vmem:[#allocation2 + $0x290] sm:$0xe] %v1957
        %1974 = vst [vmem:[#allocation2 + $0x298] sm:$0xe] %v1958
        %1975 = vst [vmem:[#allocation2 + $0x2a0] sm:$0xe] %v1959
        %1976 = vst [vmem:[#allocation2 + $0x2a8] sm:$0xe] %v1960
        %1977 = vst [vmem:[#allocation2 + $0x2b0] sm:$0xe] %v1961
        %1978 = vst [vmem:[#allocation2 + $0x2b8] sm:$0xe] %v1962
        %v1979 = vld [vmem:[%s165 + $0x4] sm:$0x77]
        %v1980 = vld [vmem:[%s165 + $0xc] sm:$0x77]
        %v1981 = vld [vmem:[%s165 + $0x14] sm:$0x77]
        %v1982 = vld [vmem:[%s165 + $0x1c] sm:$0x77]
        %v1987 = vcombine.low %v1979, %v1979
        %v1988 = vcombine.low %v1980, %v1980
        %v1989 = vcombine.low %v1981, %v1981
        %v1990 = vcombine.low %v1982, %v1982
        %1995 = vst [vmem:[#allocation2 + $0x280] sm:$0x70] %v1987
        %1996 = vst [vmem:[#allocation2 + $0x288] sm:$0x70] %v1979
        %1997 = vst [vmem:[#allocation2 + $0x290] sm:$0x70] %v1988
        %1998 = vst [vmem:[#allocation2 + $0x298] sm:$0x70] %v1980
        %1999 = vst [vmem:[#allocation2 + $0x2a0] sm:$0x70] %v1989
        %2000 = vst [vmem:[#allocation2 + $0x2a8] sm:$0x70] %v1981
        %2001 = vst [vmem:[#allocation2 + $0x2b0] sm:$0x70] %v1990
        %2002 = vst [vmem:[#allocation2 + $0x2b8] sm:$0x70] %v1982
        %v2003 = vld [vmem:[%s165 + $0x4] sm:$0x77]
        %v2004 = vld [vmem:[%s165 + $0xc] sm:$0x77]
        %v2005 = vld [vmem:[%s165 + $0x14] sm:$0x77]
        %v2006 = vld [vmem:[%s165 + $0x1c] sm:$0x77]
        %v2007 = vld [vmem:[%s165 + $0x24] sm:$0x7]
        %v2013 = vcombine.high %v2003, %v2003
        %v2014 = vcombine.high %v2004, %v2004
        %v2015 = vcombine.high %v2005, %v2005
        %v2016 = vcombine.high %v2006, %v2006
        %v2017 = vrot.slane %v2003, 1
        %v2018 = vrot.slane %v2013, 1
        %v2019 = vrot.slane %v2004, 1
        %v2020 = vrot.slane %v2014, 1
        %v2021 = vrot.slane %v2005, 1
        %v2022 = vrot.slane %v2015, 1
        %v2023 = vrot.slane %v2006, 1
        %v2024 = vrot.slane %v2016, 1
        %v2025 = vrot.slane %v2007, 1
        %2026 = vrot.lane.b32.xlu0 %v2017, 127
        %v2027 = vpop.permute.xlu0 %2026
        %2028 = vrot.lane.b32.xlu0 %v2018, 127
        %v2029 = vpop.permute.xlu0 %2028
        %2030 = vrot.lane.b32.xlu0 %v2019, 127
        %v2031 = vpop.permute.xlu0 %2030
        %2032 = vrot.lane.b32.xlu0 %v2020, 127
        %v2033 = vpop.permute.xlu0 %2032
        %2034 = vrot.lane.b32.xlu0 %v2021, 127
        %v2035 = vpop.permute.xlu0 %2034
        %2036 = vrot.lane.b32.xlu0 %v2022, 127
        %v2037 = vpop.permute.xlu0 %2036
        %2038 = vrot.lane.b32.xlu0 %v2023, 127
        %v2039 = vpop.permute.xlu0 %2038
        %2040 = vrot.lane.b32.xlu0 %v2024, 127
        %v2041 = vpop.permute.xlu0 %2040
        %2042 = vrot.lane.b32.xlu0 %v2025, 127
        %v2043 = vpop.permute.xlu0 %2042
        %v2044 = vsel %vm233, %v2027, %v2029
        %v2045 = vsel %vm233, %v2029, %v2031
        %v2046 = vsel %vm233, %v2031, %v2033
        %v2047 = vsel %vm233, %v2033, %v2035
        %v2048 = vsel %vm233, %v2035, %v2037
        %v2049 = vsel %vm233, %v2037, %v2039
        %v2050 = vsel %vm233, %v2039, %v2041
        %v2051 = vsel %vm233, %v2041, %v2043
        %2060 = vst [vmem:[#allocation2 + $0x280] sm:$0x80] %v2044
        %2061 = vst [vmem:[#allocation2 + $0x288] sm:$0x80] %v2045
        %2062 = vst [vmem:[#allocation2 + $0x290] sm:$0x80] %v2046
        %2063 = vst [vmem:[#allocation2 + $0x298] sm:$0x80] %v2047
        %2064 = vst [vmem:[#allocation2 + $0x2a0] sm:$0x80] %v2048
        %2065 = vst [vmem:[#allocation2 + $0x2a8] sm:$0x80] %v2049
        %2066 = vst [vmem:[#allocation2 + $0x2b0] sm:$0x80] %v2050
        %2067 = vst [vmem:[#allocation2 + $0x2b8] sm:$0x80] %v2051
        %2068 = vst [vmem:[#allocation2 + $0x2c0] sm:$0x3] %v2044
        %2069 = vst [vmem:[#allocation2 + $0x2c8] sm:$0x3] %v2045
        %2070 = vst [vmem:[#allocation2 + $0x2d0] sm:$0x3] %v2046
        %2071 = vst [vmem:[#allocation2 + $0x2d8] sm:$0x3] %v2047
        %2072 = vst [vmem:[#allocation2 + $0x2e0] sm:$0x3] %v2048
        %2073 = vst [vmem:[#allocation2 + $0x2e8] sm:$0x3] %v2049
        %2074 = vst [vmem:[#allocation2 + $0x2f0] sm:$0x3] %v2050
        %2075 = vst [vmem:[#allocation2 + $0x2f8] sm:$0x3] %v2051
        %v2076 = vld [vmem:[%s165 + $0x4] sm:$0x77]
        %v2077 = vld [vmem:[%s165 + $0xc] sm:$0x77]
        %v2078 = vld [vmem:[%s165 + $0x14] sm:$0x77]
        %v2079 = vld [vmem:[%s165 + $0x1c] sm:$0x77]
        %v2080 = vld [vmem:[%s165 + $0x24] sm:$0x7]
        %v2086 = vcombine.high %v2076, %v2076
        %v2087 = vcombine.high %v2077, %v2077
        %v2088 = vcombine.high %v2078, %v2078
        %v2089 = vcombine.high %v2079, %v2079
        %v2090 = vrot.slane %v2076, 6
        %v2091 = vrot.slane %v2086, 6
        %v2092 = vrot.slane %v2077, 6
        %v2093 = vrot.slane %v2087, 6
        %v2094 = vrot.slane %v2078, 6
        %v2095 = vrot.slane %v2088, 6
        %v2096 = vrot.slane %v2079, 6
        %v2097 = vrot.slane %v2089, 6
        %v2098 = vrot.slane %v2080, 6
        %2099 = vrot.lane.b32.xlu0 %v2090, 126
        %v2100 = vpop.permute.xlu0 %2099
        %2101 = vrot.lane.b32.xlu0 %v2091, 126
        %v2102 = vpop.permute.xlu0 %2101
        %2103 = vrot.lane.b32.xlu0 %v2092, 126
        %v2104 = vpop.permute.xlu0 %2103
        %2105 = vrot.lane.b32.xlu0 %v2093, 126
        %v2106 = vpop.permute.xlu0 %2105
        %2107 = vrot.lane.b32.xlu0 %v2094, 126
        %v2108 = vpop.permute.xlu0 %2107
        %2109 = vrot.lane.b32.xlu0 %v2095, 126
        %v2110 = vpop.permute.xlu0 %2109
        %2111 = vrot.lane.b32.xlu0 %v2096, 126
        %v2112 = vpop.permute.xlu0 %2111
        %2113 = vrot.lane.b32.xlu0 %v2097, 126
        %v2114 = vpop.permute.xlu0 %2113
        %2115 = vrot.lane.b32.xlu0 %v2098, 126
        %v2116 = vpop.permute.xlu0 %2115
        %v2117 = vsel %vm299, %v2100, %v2102
        %v2118 = vsel %vm299, %v2102, %v2104
        %v2119 = vsel %vm299, %v2104, %v2106
        %v2120 = vsel %vm299, %v2106, %v2108
        %v2121 = vsel %vm299, %v2108, %v2110
        %v2122 = vsel %vm299, %v2110, %v2112
        %v2123 = vsel %vm299, %v2112, %v2114
        %v2124 = vsel %vm299, %v2114, %v2116
        %2133 = vst [vmem:[#allocation2 + $0x2c0] sm:$0x1c] %v2117
        %2134 = vst [vmem:[#allocation2 + $0x2c8] sm:$0x1c] %v2118
        %2135 = vst [vmem:[#allocation2 + $0x2d0] sm:$0x1c] %v2119
        %2136 = vst [vmem:[#allocation2 + $0x2d8] sm:$0x1c] %v2120
        %2137 = vst [vmem:[#allocation2 + $0x2e0] sm:$0x1c] %v2121
        %2138 = vst [vmem:[#allocation2 + $0x2e8] sm:$0x1c] %v2122
        %2139 = vst [vmem:[#allocation2 + $0x2f0] sm:$0x1c] %v2123
        %2140 = vst [vmem:[#allocation2 + $0x2f8] sm:$0x1c] %v2124
        %v2141 = vld [vmem:[%s165 + $0x4] sm:$0x77]
        %v2142 = vld [vmem:[%s165 + $0xc] sm:$0x77]
        %v2143 = vld [vmem:[%s165 + $0x14] sm:$0x77]
        %v2144 = vld [vmem:[%s165 + $0x1c] sm:$0x77]
        %v2145 = vld [vmem:[%s165 + $0x24] sm:$0x7]
        %v2151 = vcombine.high %v2141, %v2141
        %v2152 = vcombine.high %v2142, %v2142
        %v2153 = vcombine.high %v2143, %v2143
        %v2154 = vcombine.high %v2144, %v2144
        %v2155 = vrot.slane %v2141, 3
        %v2156 = vrot.slane %v2151, 3
        %v2157 = vrot.slane %v2142, 3
        %v2158 = vrot.slane %v2152, 3
        %v2159 = vrot.slane %v2143, 3
        %v2160 = vrot.slane %v2153, 3
        %v2161 = vrot.slane %v2144, 3
        %v2162 = vrot.slane %v2154, 3
        %v2163 = vrot.slane %v2145, 3
        %2164 = vrot.lane.b32.xlu0 %v2155, 125
        %v2165 = vpop.permute.xlu0 %2164
        %2166 = vrot.lane.b32.xlu0 %v2156, 125
        %v2167 = vpop.permute.xlu0 %2166
        %2168 = vrot.lane.b32.xlu0 %v2157, 125
        %v2169 = vpop.permute.xlu0 %2168
        %2170 = vrot.lane.b32.xlu0 %v2158, 125
        %v2171 = vpop.permute.xlu0 %2170
        %2172 = vrot.lane.b32.xlu0 %v2159, 125
        %v2173 = vpop.permute.xlu0 %2172
        %2174 = vrot.lane.b32.xlu0 %v2160, 125
        %v2175 = vpop.permute.xlu0 %2174
        %2176 = vrot.lane.b32.xlu0 %v2161, 125
        %v2177 = vpop.permute.xlu0 %2176
        %2178 = vrot.lane.b32.xlu0 %v2162, 125
        %v2179 = vpop.permute.xlu0 %2178
        %2180 = vrot.lane.b32.xlu0 %v2163, 125
        %v2181 = vpop.permute.xlu0 %2180
        %v2182 = vsel %vm373, %v2165, %v2167
        %v2183 = vsel %vm373, %v2167, %v2169
        %v2184 = vsel %vm373, %v2169, %v2171
        %v2185 = vsel %vm373, %v2171, %v2173
        %v2186 = vsel %vm373, %v2173, %v2175
        %v2187 = vsel %vm373, %v2175, %v2177
        %v2188 = vsel %vm373, %v2177, %v2179
        %v2189 = vsel %vm373, %v2179, %v2181
        %2198 = vst [vmem:[#allocation2 + $0x2c0] sm:$0xe0] %v2182
        %2199 = vst [vmem:[#allocation2 + $0x2c8] sm:$0xe0] %v2183
        %2200 = vst [vmem:[#allocation2 + $0x2d0] sm:$0xe0] %v2184
        %2201 = vst [vmem:[#allocation2 + $0x2d8] sm:$0xe0] %v2185
        %2202 = vst [vmem:[#allocation2 + $0x2e0] sm:$0xe0] %v2186
        %2203 = vst [vmem:[#allocation2 + $0x2e8] sm:$0xe0] %v2187
        %2204 = vst [vmem:[#allocation2 + $0x2f0] sm:$0xe0] %v2188
        %2205 = vst [vmem:[#allocation2 + $0x2f8] sm:$0xe0] %v2189
        %v2206 = vld [vmem:[%s165 + $0x4] sm:$0x77]
        %v2207 = vld [vmem:[%s165 + $0xc] sm:$0x77]
        %v2208 = vld [vmem:[%s165 + $0x14] sm:$0x77]
        %v2209 = vld [vmem:[%s165 + $0x1c] sm:$0x77]
        %v2210 = vld [vmem:[%s165 + $0x24] sm:$0x7]
        %v2216 = vcombine.high %v2206, %v2206
        %v2217 = vcombine.high %v2207, %v2207
        %v2218 = vcombine.high %v2208, %v2208
        %v2219 = vcombine.high %v2209, %v2209
        %2220 = vrot.lane.b32.xlu0 %v2206, 124
        %v2221 = vpop.permute.xlu0 %2220
        %2222 = vrot.lane.b32.xlu0 %v2216, 124
        %v2223 = vpop.permute.xlu0 %2222
        %2224 = vrot.lane.b32.xlu0 %v2207, 124
        %v2225 = vpop.permute.xlu0 %2224
        %2226 = vrot.lane.b32.xlu0 %v2217, 124
        %v2227 = vpop.permute.xlu0 %2226
        %2228 = vrot.lane.b32.xlu0 %v2208, 124
        %v2229 = vpop.permute.xlu0 %2228
        %2230 = vrot.lane.b32.xlu0 %v2218, 124
        %v2231 = vpop.permute.xlu0 %2230
        %2232 = vrot.lane.b32.xlu0 %v2209, 124
        %v2233 = vpop.permute.xlu0 %2232
        %2234 = vrot.lane.b32.xlu0 %v2219, 124
        %v2235 = vpop.permute.xlu0 %2234
        %2236 = vrot.lane.b32.xlu0 %v2210, 124
        %v2237 = vpop.permute.xlu0 %2236
        %v2238 = vsel %vm431, %v2221, %v2223
        %v2239 = vsel %vm431, %v2223, %v2225
        %v2240 = vsel %vm431, %v2225, %v2227
        %v2241 = vsel %vm431, %v2227, %v2229
        %v2242 = vsel %vm431, %v2229, %v2231
        %v2243 = vsel %vm431, %v2231, %v2233
        %v2244 = vsel %vm431, %v2233, %v2235
        %v2245 = vsel %vm431, %v2235, %v2237
        %2254 = vst [vmem:[#allocation2 + $0x300] sm:$0x7] %v2238
        %2255 = vst [vmem:[#allocation2 + $0x308] sm:$0x7] %v2239
        %2256 = vst [vmem:[#allocation2 + $0x310] sm:$0x7] %v2240
        %2257 = vst [vmem:[#allocation2 + $0x318] sm:$0x7] %v2241
        %2258 = vst [vmem:[#allocation2 + $0x320] sm:$0x7] %v2242
        %2259 = vst [vmem:[#allocation2 + $0x328] sm:$0x7] %v2243
        %2260 = vst [vmem:[#allocation2 + $0x330] sm:$0x7] %v2244
        %2261 = vst [vmem:[#allocation2 + $0x338] sm:$0x7] %v2245
        %v2262 = vld [vmem:[%s165 + $0x4] sm:$0x77]
        %v2263 = vld [vmem:[%s165 + $0xc] sm:$0x77]
        %v2264 = vld [vmem:[%s165 + $0x14] sm:$0x77]
        %v2265 = vld [vmem:[%s165 + $0x1c] sm:$0x77]
        %v2266 = vld [vmem:[%s165 + $0x24] sm:$0x7]
        %v2272 = vcombine.high %v2262, %v2262
        %v2273 = vcombine.high %v2263, %v2263
        %v2274 = vcombine.high %v2264, %v2264
        %v2275 = vcombine.high %v2265, %v2265
        %v2276 = vrot.slane %v2262, 5
        %v2277 = vrot.slane %v2272, 5
        %v2278 = vrot.slane %v2263, 5
        %v2279 = vrot.slane %v2273, 5
        %v2280 = vrot.slane %v2264, 5
        %v2281 = vrot.slane %v2274, 5
        %v2282 = vrot.slane %v2265, 5
        %v2283 = vrot.slane %v2275, 5
        %v2284 = vrot.slane %v2266, 5
        %2285 = vrot.lane.b32.xlu0 %v2276, 123
        %v2286 = vpop.permute.xlu0 %2285
        %2287 = vrot.lane.b32.xlu0 %v2277, 123
        %v2288 = vpop.permute.xlu0 %2287
        %2289 = vrot.lane.b32.xlu0 %v2278, 123
        %v2290 = vpop.permute.xlu0 %2289
        %2291 = vrot.lane.b32.xlu0 %v2279, 123
        %v2292 = vpop.permute.xlu0 %2291
        %2293 = vrot.lane.b32.xlu0 %v2280, 123
        %v2294 = vpop.permute.xlu0 %2293
        %2295 = vrot.lane.b32.xlu0 %v2281, 123
        %v2296 = vpop.permute.xlu0 %2295
        %2297 = vrot.lane.b32.xlu0 %v2282, 123
        %v2298 = vpop.permute.xlu0 %2297
        %2299 = vrot.lane.b32.xlu0 %v2283, 123
        %v2300 = vpop.permute.xlu0 %2299
        %2301 = vrot.lane.b32.xlu0 %v2284, 123
        %v2302 = vpop.permute.xlu0 %2301
        %v2303 = vsel %vm497, %v2286, %v2288
        %v2304 = vsel %vm497, %v2288, %v2290
        %v2305 = vsel %vm497, %v2290, %v2292
        %v2306 = vsel %vm497, %v2292, %v2294
        %v2307 = vsel %vm497, %v2294, %v2296
        %v2308 = vsel %vm497, %v2296, %v2298
        %v2309 = vsel %vm497, %v2298, %v2300
        %v2310 = vsel %vm497, %v2300, %v2302
        %2319 = vst [vmem:[#allocation2 + $0x300] sm:$0x38] %v2303
        %2320 = vst [vmem:[#allocation2 + $0x308] sm:$0x38] %v2304
        %2321 = vst [vmem:[#allocation2 + $0x310] sm:$0x38] %v2305
        %2322 = vst [vmem:[#allocation2 + $0x318] sm:$0x38] %v2306
        %2323 = vst [vmem:[#allocation2 + $0x320] sm:$0x38] %v2307
        %2324 = vst [vmem:[#allocation2 + $0x328] sm:$0x38] %v2308
        %2325 = vst [vmem:[#allocation2 + $0x330] sm:$0x38] %v2309
        %2326 = vst [vmem:[#allocation2 + $0x338] sm:$0x38] %v2310
        %v2327 = vld [vmem:[%s165 + $0x4] sm:$0x77]
        %v2328 = vld [vmem:[%s165 + $0xc] sm:$0x77]
        %v2329 = vld [vmem:[%s165 + $0x14] sm:$0x77]
        %v2330 = vld [vmem:[%s165 + $0x1c] sm:$0x77]
        %v2331 = vld [vmem:[%s165 + $0x24] sm:$0x7]
        %v2337 = vcombine.high %v2327, %v2327
        %v2338 = vcombine.high %v2328, %v2328
        %v2339 = vcombine.high %v2329, %v2329
        %v2340 = vcombine.high %v2330, %v2330
        %v2341 = vrot.slane %v2327, 2
        %v2342 = vrot.slane %v2337, 2
        %v2343 = vrot.slane %v2328, 2
        %v2344 = vrot.slane %v2338, 2
        %v2345 = vrot.slane %v2329, 2
        %v2346 = vrot.slane %v2339, 2
        %v2347 = vrot.slane %v2330, 2
        %v2348 = vrot.slane %v2340, 2
        %v2349 = vrot.slane %v2331, 2
        %2350 = vrot.lane.b32.xlu0 %v2341, 122
        %v2351 = vpop.permute.xlu0 %2350
        %2352 = vrot.lane.b32.xlu0 %v2342, 122
        %v2353 = vpop.permute.xlu0 %2352
        %2354 = vrot.lane.b32.xlu0 %v2343, 122
        %v2355 = vpop.permute.xlu0 %2354
        %2356 = vrot.lane.b32.xlu0 %v2344, 122
        %v2357 = vpop.permute.xlu0 %2356
        %2358 = vrot.lane.b32.xlu0 %v2345, 122
        %v2359 = vpop.permute.xlu0 %2358
        %2360 = vrot.lane.b32.xlu0 %v2346, 122
        %v2361 = vpop.permute.xlu0 %2360
        %2362 = vrot.lane.b32.xlu0 %v2347, 122
        %v2363 = vpop.permute.xlu0 %2362
        %2364 = vrot.lane.b32.xlu0 %v2348, 122
        %v2365 = vpop.permute.xlu0 %2364
        %2366 = vrot.lane.b32.xlu0 %v2349, 122
        %v2367 = vpop.permute.xlu0 %2366
        %v2368 = vsel %vm571, %v2351, %v2353
        %v2369 = vsel %vm571, %v2353, %v2355
        %v2370 = vsel %vm571, %v2355, %v2357
        %v2371 = vsel %vm571, %v2357, %v2359
        %v2372 = vsel %vm571, %v2359, %v2361
        %v2373 = vsel %vm571, %v2361, %v2363
        %v2374 = vsel %vm571, %v2363, %v2365
        %v2375 = vsel %vm571, %v2365, %v2367
        %2384 = vst [vmem:[#allocation2 + $0x300] sm:$0xc0] %v2368
        %2385 = vst [vmem:[#allocation2 + $0x308] sm:$0xc0] %v2369
        %2386 = vst [vmem:[#allocation2 + $0x310] sm:$0xc0] %v2370
        %2387 = vst [vmem:[#allocation2 + $0x318] sm:$0xc0] %v2371
        %2388 = vst [vmem:[#allocation2 + $0x320] sm:$0xc0] %v2372
        %2389 = vst [vmem:[#allocation2 + $0x328] sm:$0xc0] %v2373
        %2390 = vst [vmem:[#allocation2 + $0x330] sm:$0xc0] %v2374
        %2391 = vst [vmem:[#allocation2 + $0x338] sm:$0xc0] %v2375
        %2392 = vst [vmem:[#allocation2 + $0x340] sm:$0x1] %v2368
        %2393 = vst [vmem:[#allocation2 + $0x348] sm:$0x1] %v2369
        %2394 = vst [vmem:[#allocation2 + $0x350] sm:$0x1] %v2370
        %2395 = vst [vmem:[#allocation2 + $0x358] sm:$0x1] %v2371
        %2396 = vst [vmem:[#allocation2 + $0x360] sm:$0x1] %v2372
        %2397 = vst [vmem:[#allocation2 + $0x368] sm:$0x1] %v2373
        %2398 = vst [vmem:[#allocation2 + $0x370] sm:$0x1] %v2374
        %2399 = vst [vmem:[#allocation2 + $0x378] sm:$0x1] %v2375
        %v2400 = vld [vmem:[%s165 + $0x4] sm:$0x77]
        %v2401 = vld [vmem:[%s165 + $0xc] sm:$0x77]
        %v2402 = vld [vmem:[%s165 + $0x14] sm:$0x77]
        %v2403 = vld [vmem:[%s165 + $0x1c] sm:$0x77]
        %v2404 = vld [vmem:[%s165 + $0x24] sm:$0x7]
        %v2410 = vcombine.high %v2400, %v2400
        %v2411 = vcombine.high %v2401, %v2401
        %v2412 = vcombine.high %v2402, %v2402
        %v2413 = vcombine.high %v2403, %v2403
        %v2414 = vrot.slane %v2400, 7
        %v2415 = vrot.slane %v2410, 7
        %v2416 = vrot.slane %v2401, 7
        %v2417 = vrot.slane %v2411, 7
        %v2418 = vrot.slane %v2402, 7
        %v2419 = vrot.slane %v2412, 7
        %v2420 = vrot.slane %v2403, 7
        %v2421 = vrot.slane %v2413, 7
        %v2422 = vrot.slane %v2404, 7
        %2423 = vrot.lane.b32.xlu0 %v2414, 96
        %v2424 = vpop.permute.xlu0 %2423
        %2425 = vrot.lane.b32.xlu0 %v2415, 96
        %v2426 = vpop.permute.xlu0 %2425
        %2427 = vrot.lane.b32.xlu0 %v2416, 96
        %v2428 = vpop.permute.xlu0 %2427
        %2429 = vrot.lane.b32.xlu0 %v2417, 96
        %v2430 = vpop.permute.xlu0 %2429
        %2431 = vrot.lane.b32.xlu0 %v2418, 96
        %v2432 = vpop.permute.xlu0 %2431
        %2433 = vrot.lane.b32.xlu0 %v2419, 96
        %v2434 = vpop.permute.xlu0 %2433
        %2435 = vrot.lane.b32.xlu0 %v2420, 96
        %v2436 = vpop.permute.xlu0 %2435
        %2437 = vrot.lane.b32.xlu0 %v2421, 96
        %v2438 = vpop.permute.xlu0 %2437
        %2439 = vrot.lane.b32.xlu0 %v2422, 96
        %v2440 = vpop.permute.xlu0 %2439
        %v2441 = vsel %vm637, %v2424, %v2426
        %v2442 = vsel %vm637, %v2426, %v2428
        %v2443 = vsel %vm637, %v2428, %v2430
        %v2444 = vsel %vm637, %v2430, %v2432
        %v2445 = vsel %vm637, %v2432, %v2434
        %v2446 = vsel %vm637, %v2434, %v2436
        %v2447 = vsel %vm637, %v2436, %v2438
        %v2448 = vsel %vm637, %v2438, %v2440
        %2457 = vst [vmem:[#allocation2 + $0x340] sm:$0xe] %v2441
        %2458 = vst [vmem:[#allocation2 + $0x348] sm:$0xe] %v2442
        %2459 = vst [vmem:[#allocation2 + $0x350] sm:$0xe] %v2443
        %2460 = vst [vmem:[#allocation2 + $0x358] sm:$0xe] %v2444
        %2461 = vst [vmem:[#allocation2 + $0x360] sm:$0xe] %v2445
        %2462 = vst [vmem:[#allocation2 + $0x368] sm:$0xe] %v2446
        %2463 = vst [vmem:[#allocation2 + $0x370] sm:$0xe] %v2447
        %2464 = vst [vmem:[#allocation2 + $0x378] sm:$0xe] %v2448
        %v2465 = vld [vmem:[%s165 + $0x4] sm:$0x77]
        %v2466 = vld [vmem:[%s165 + $0xc] sm:$0x77]
        %v2467 = vld [vmem:[%s165 + $0x14] sm:$0x77]
        %v2468 = vld [vmem:[%s165 + $0x1c] sm:$0x77]
        %v2469 = vld [vmem:[%s165 + $0x24] sm:$0x7]
        %v2475 = vcombine.low %v2465, %v2465
        %v2476 = vcombine.low %v2466, %v2466
        %v2477 = vcombine.low %v2467, %v2467
        %v2478 = vcombine.low %v2468, %v2468
        %v2479 = vcombine.low %v2469, %v2469
        %2480 = vrot.lane.b32.xlu0 %v2475, 95
        %v2481 = vpop.permute.xlu0 %2480
        %2482 = vrot.lane.b32.xlu0 %v2465, 95
        %v2483 = vpop.permute.xlu0 %2482
        %2484 = vrot.lane.b32.xlu0 %v2476, 95
        %v2485 = vpop.permute.xlu0 %2484
        %2486 = vrot.lane.b32.xlu0 %v2466, 95
        %v2487 = vpop.permute.xlu0 %2486
        %2488 = vrot.lane.b32.xlu0 %v2477, 95
        %v2489 = vpop.permute.xlu0 %2488
        %2490 = vrot.lane.b32.xlu0 %v2467, 95
        %v2491 = vpop.permute.xlu0 %2490
        %2492 = vrot.lane.b32.xlu0 %v2478, 95
        %v2493 = vpop.permute.xlu0 %2492
        %2494 = vrot.lane.b32.xlu0 %v2468, 95
        %v2495 = vpop.permute.xlu0 %2494
        %2496 = vrot.lane.b32.xlu0 %v2479, 95
        %v2497 = vpop.permute.xlu0 %2496
        %v2498 = vsel %vm694, %v2481, %v2483
        %v2499 = vsel %vm694, %v2483, %v2485
        %v2500 = vsel %vm694, %v2485, %v2487
        %v2501 = vsel %vm694, %v2487, %v2489
        %v2502 = vsel %vm694, %v2489, %v2491
        %v2503 = vsel %vm694, %v2491, %v2493
        %v2504 = vsel %vm694, %v2493, %v2495
        %v2505 = vsel %vm694, %v2495, %v2497
        %2514 = vst [vmem:[#allocation2 + $0x340] sm:$0x70] %v2498
        %2515 = vst [vmem:[#allocation2 + $0x348] sm:$0x70] %v2499
        %2516 = vst [vmem:[#allocation2 + $0x350] sm:$0x70] %v2500
        %2517 = vst [vmem:[#allocation2 + $0x358] sm:$0x70] %v2501
        %2518 = vst [vmem:[#allocation2 + $0x360] sm:$0x70] %v2502
        %2519 = vst [vmem:[#allocation2 + $0x368] sm:$0x70] %v2503
        %2520 = vst [vmem:[#allocation2 + $0x370] sm:$0x70] %v2504
        %2521 = vst [vmem:[#allocation2 + $0x378] sm:$0x70] %v2505
        %v2522 = vld [vmem:[%s165 + $0x4] sm:$0x77]
        %v2523 = vld [vmem:[%s165 + $0xc] sm:$0x77]
        %v2524 = vld [vmem:[%s165 + $0x14] sm:$0x77]
        %v2525 = vld [vmem:[%s165 + $0x1c] sm:$0x77]
        %v2526 = vld [vmem:[%s165 + $0x24] sm:$0x7]
        %v2532 = vcombine.high %v2522, %v2522
        %v2533 = vcombine.high %v2523, %v2523
        %v2534 = vcombine.high %v2524, %v2524
        %v2535 = vcombine.high %v2525, %v2525
        %v2536 = vrot.slane %v2522, 1
        %v2537 = vrot.slane %v2532, 1
        %v2538 = vrot.slane %v2523, 1
        %v2539 = vrot.slane %v2533, 1
        %v2540 = vrot.slane %v2524, 1
        %v2541 = vrot.slane %v2534, 1
        %v2542 = vrot.slane %v2525, 1
        %v2543 = vrot.slane %v2535, 1
        %v2544 = vrot.slane %v2526, 1
        %2545 = vrot.lane.b32.xlu0 %v2536, 94
        %v2546 = vpop.permute.xlu0 %2545
        %2547 = vrot.lane.b32.xlu0 %v2537, 94
        %v2548 = vpop.permute.xlu0 %2547
        %2549 = vrot.lane.b32.xlu0 %v2538, 94
        %v2550 = vpop.permute.xlu0 %2549
        %2551 = vrot.lane.b32.xlu0 %v2539, 94
        %v2552 = vpop.permute.xlu0 %2551
        %2553 = vrot.lane.b32.xlu0 %v2540, 94
        %v2554 = vpop.permute.xlu0 %2553
        %2555 = vrot.lane.b32.xlu0 %v2541, 94
        %v2556 = vpop.permute.xlu0 %2555
        %2557 = vrot.lane.b32.xlu0 %v2542, 94
        %v2558 = vpop.permute.xlu0 %2557
        %2559 = vrot.lane.b32.xlu0 %v2543, 94
        %v2560 = vpop.permute.xlu0 %2559
        %2561 = vrot.lane.b32.xlu0 %v2544, 94
        %v2562 = vpop.permute.xlu0 %2561
        %v2563 = vsel %vm760, %v2546, %v2548
        %v2564 = vsel %vm760, %v2548, %v2550
        %v2565 = vsel %vm760, %v2550, %v2552
        %v2566 = vsel %vm760, %v2552, %v2554
        %v2567 = vsel %vm760, %v2554, %v2556
        %v2568 = vsel %vm760, %v2556, %v2558
        %v2569 = vsel %vm760, %v2558, %v2560
        %v2570 = vsel %vm760, %v2560, %v2562
        %2579 = vst [vmem:[#allocation2 + $0x340] sm:$0x80] %v2563
        %2580 = vst [vmem:[#allocation2 + $0x348] sm:$0x80] %v2564
        %2581 = vst [vmem:[#allocation2 + $0x350] sm:$0x80] %v2565
        %2582 = vst [vmem:[#allocation2 + $0x358] sm:$0x80] %v2566
        %2583 = vst [vmem:[#allocation2 + $0x360] sm:$0x80] %v2567
        %2584 = vst [vmem:[#allocation2 + $0x368] sm:$0x80] %v2568
        %2585 = vst [vmem:[#allocation2 + $0x370] sm:$0x80] %v2569
        %2586 = vst [vmem:[#allocation2 + $0x378] sm:$0x80] %v2570
        %2587 = vst [vmem:[#allocation2 + $0x380] sm:$0x3] %v2563
        %2588 = vst [vmem:[#allocation2 + $0x388] sm:$0x3] %v2564
        %2589 = vst [vmem:[#allocation2 + $0x390] sm:$0x3] %v2565
        %2590 = vst [vmem:[#allocation2 + $0x398] sm:$0x3] %v2566
        %2591 = vst [vmem:[#allocation2 + $0x3a0] sm:$0x3] %v2567
        %2592 = vst [vmem:[#allocation2 + $0x3a8] sm:$0x3] %v2568
        %2593 = vst [vmem:[#allocation2 + $0x3b0] sm:$0x3] %v2569
        %2594 = vst [vmem:[#allocation2 + $0x3b8] sm:$0x3] %v2570
        %v2595 = vld [vmem:[%s165 + $0x4] sm:$0x77]
        %v2596 = vld [vmem:[%s165 + $0xc] sm:$0x77]
        %v2597 = vld [vmem:[%s165 + $0x14] sm:$0x77]
        %v2598 = vld [vmem:[%s165 + $0x1c] sm:$0x77]
        %v2599 = vld [vmem:[%s165 + $0x24] sm:$0x7]
        %v2605 = vcombine.high %v2595, %v2595
        %v2606 = vcombine.high %v2596, %v2596
        %v2607 = vcombine.high %v2597, %v2597
        %v2608 = vcombine.high %v2598, %v2598
        %v2609 = vrot.slane %v2595, 6
        %v2610 = vrot.slane %v2605, 6
        %v2611 = vrot.slane %v2596, 6
        %v2612 = vrot.slane %v2606, 6
        %v2613 = vrot.slane %v2597, 6
        %v2614 = vrot.slane %v2607, 6
        %v2615 = vrot.slane %v2598, 6
        %v2616 = vrot.slane %v2608, 6
        %v2617 = vrot.slane %v2599, 6
        %2618 = vrot.lane.b32.xlu0 %v2609, 93
        %v2619 = vpop.permute.xlu0 %2618
        %2620 = vrot.lane.b32.xlu0 %v2610, 93
        %v2621 = vpop.permute.xlu0 %2620
        %2622 = vrot.lane.b32.xlu0 %v2611, 93
        %v2623 = vpop.permute.xlu0 %2622
        %2624 = vrot.lane.b32.xlu0 %v2612, 93
        %v2625 = vpop.permute.xlu0 %2624
        %2626 = vrot.lane.b32.xlu0 %v2613, 93
        %v2627 = vpop.permute.xlu0 %2626
        %2628 = vrot.lane.b32.xlu0 %v2614, 93
        %v2629 = vpop.permute.xlu0 %2628
        %2630 = vrot.lane.b32.xlu0 %v2615, 93
        %v2631 = vpop.permute.xlu0 %2630
        %2632 = vrot.lane.b32.xlu0 %v2616, 93
        %v2633 = vpop.permute.xlu0 %2632
        %2634 = vrot.lane.b32.xlu0 %v2617, 93
        %v2635 = vpop.permute.xlu0 %2634
        %v2636 = vsel %vm826, %v2619, %v2621
        %v2637 = vsel %vm826, %v2621, %v2623
        %v2638 = vsel %vm826, %v2623, %v2625
        %v2639 = vsel %vm826, %v2625, %v2627
        %v2640 = vsel %vm826, %v2627, %v2629
        %v2641 = vsel %vm826, %v2629, %v2631
        %v2642 = vsel %vm826, %v2631, %v2633
        %v2643 = vsel %vm826, %v2633, %v2635
        %2652 = vst [vmem:[#allocation2 + $0x380] sm:$0x1c] %v2636
        %2653 = vst [vmem:[#allocation2 + $0x388] sm:$0x1c] %v2637
        %2654 = vst [vmem:[#allocation2 + $0x390] sm:$0x1c] %v2638
        %2655 = vst [vmem:[#allocation2 + $0x398] sm:$0x1c] %v2639
        %2656 = vst [vmem:[#allocation2 + $0x3a0] sm:$0x1c] %v2640
        %2657 = vst [vmem:[#allocation2 + $0x3a8] sm:$0x1c] %v2641
        %2658 = vst [vmem:[#allocation2 + $0x3b0] sm:$0x1c] %v2642
        %2659 = vst [vmem:[#allocation2 + $0x3b8] sm:$0x1c] %v2643
        %v2660 = vld [vmem:[%s165 + $0x4] sm:$0x77]
        %v2661 = vld [vmem:[%s165 + $0xc] sm:$0x77]
        %v2662 = vld [vmem:[%s165 + $0x14] sm:$0x77]
        %v2663 = vld [vmem:[%s165 + $0x1c] sm:$0x77]
        %v2664 = vld [vmem:[%s165 + $0x24] sm:$0x7]
        %v2670 = vcombine.high %v2660, %v2660
        %v2671 = vcombine.high %v2661, %v2661
        %v2672 = vcombine.high %v2662, %v2662
        %v2673 = vcombine.high %v2663, %v2663
        %v2674 = vrot.slane %v2660, 3
        %v2675 = vrot.slane %v2670, 3
        %v2676 = vrot.slane %v2661, 3
        %v2677 = vrot.slane %v2671, 3
        %v2678 = vrot.slane %v2662, 3
        %v2679 = vrot.slane %v2672, 3
        %v2680 = vrot.slane %v2663, 3
        %v2681 = vrot.slane %v2673, 3
        %v2682 = vrot.slane %v2664, 3
        %2683 = vrot.lane.b32.xlu0 %v2674, 92
        %v2684 = vpop.permute.xlu0 %2683
        %2685 = vrot.lane.b32.xlu0 %v2675, 92
        %v2686 = vpop.permute.xlu0 %2685
        %2687 = vrot.lane.b32.xlu0 %v2676, 92
        %v2688 = vpop.permute.xlu0 %2687
        %2689 = vrot.lane.b32.xlu0 %v2677, 92
        %v2690 = vpop.permute.xlu0 %2689
        %2691 = vrot.lane.b32.xlu0 %v2678, 92
        %v2692 = vpop.permute.xlu0 %2691
        %2693 = vrot.lane.b32.xlu0 %v2679, 92
        %v2694 = vpop.permute.xlu0 %2693
        %2695 = vrot.lane.b32.xlu0 %v2680, 92
        %v2696 = vpop.permute.xlu0 %2695
        %2697 = vrot.lane.b32.xlu0 %v2681, 92
        %v2698 = vpop.permute.xlu0 %2697
        %2699 = vrot.lane.b32.xlu0 %v2682, 92
        %v2700 = vpop.permute.xlu0 %2699
        %v2701 = vsel %vm900, %v2684, %v2686
        %v2702 = vsel %vm900, %v2686, %v2688
        %v2703 = vsel %vm900, %v2688, %v2690
        %v2704 = vsel %vm900, %v2690, %v2692
        %v2705 = vsel %vm900, %v2692, %v2694
        %v2706 = vsel %vm900, %v2694, %v2696
        %v2707 = vsel %vm900, %v2696, %v2698
        %v2708 = vsel %vm900, %v2698, %v2700
        %2717 = vst [vmem:[#allocation2 + $0x380] sm:$0xe0] %v2701
        %2718 = vst [vmem:[#allocation2 + $0x388] sm:$0xe0] %v2702
        %2719 = vst [vmem:[#allocation2 + $0x390] sm:$0xe0] %v2703
        %2720 = vst [vmem:[#allocation2 + $0x398] sm:$0xe0] %v2704
        %2721 = vst [vmem:[#allocation2 + $0x3a0] sm:$0xe0] %v2705
        %2722 = vst [vmem:[#allocation2 + $0x3a8] sm:$0xe0] %v2706
        %2723 = vst [vmem:[#allocation2 + $0x3b0] sm:$0xe0] %v2707
        %2724 = vst [vmem:[#allocation2 + $0x3b8] sm:$0xe0] %v2708
        %v2725 = vld [vmem:[%s165 + $0x4] sm:$0x77]
        %v2726 = vld [vmem:[%s165 + $0xc] sm:$0x77]
        %v2727 = vld [vmem:[%s165 + $0x14] sm:$0x77]
        %v2728 = vld [vmem:[%s165 + $0x1c] sm:$0x77]
        %v2729 = vld [vmem:[%s165 + $0x24] sm:$0x7]
        %v2735 = vcombine.high %v2725, %v2725
        %v2736 = vcombine.high %v2726, %v2726
        %v2737 = vcombine.high %v2727, %v2727
        %v2738 = vcombine.high %v2728, %v2728
        %2739 = vrot.lane.b32.xlu0 %v2725, 91
        %v2740 = vpop.permute.xlu0 %2739
        %2741 = vrot.lane.b32.xlu0 %v2735, 91
        %v2742 = vpop.permute.xlu0 %2741
        %2743 = vrot.lane.b32.xlu0 %v2726, 91
        %v2744 = vpop.permute.xlu0 %2743
        %2745 = vrot.lane.b32.xlu0 %v2736, 91
        %v2746 = vpop.permute.xlu0 %2745
        %2747 = vrot.lane.b32.xlu0 %v2727, 91
        %v2748 = vpop.permute.xlu0 %2747
        %2749 = vrot.lane.b32.xlu0 %v2737, 91
        %v2750 = vpop.permute.xlu0 %2749
        %2751 = vrot.lane.b32.xlu0 %v2728, 91
        %v2752 = vpop.permute.xlu0 %2751
        %2753 = vrot.lane.b32.xlu0 %v2738, 91
        %v2754 = vpop.permute.xlu0 %2753
        %2755 = vrot.lane.b32.xlu0 %v2729, 91
        %v2756 = vpop.permute.xlu0 %2755
        %v2757 = vsel %vm958, %v2740, %v2742
        %v2758 = vsel %vm958, %v2742, %v2744
        %v2759 = vsel %vm958, %v2744, %v2746
        %v2760 = vsel %vm958, %v2746, %v2748
        %v2761 = vsel %vm958, %v2748, %v2750
        %v2762 = vsel %vm958, %v2750, %v2752
        %v2763 = vsel %vm958, %v2752, %v2754
        %v2764 = vsel %vm958, %v2754, %v2756
        %2773 = vst [vmem:[#allocation2 + $0x3c0] sm:$0x7] %v2757
        %2774 = vst [vmem:[#allocation2 + $0x3c8] sm:$0x7] %v2758
        %2775 = vst [vmem:[#allocation2 + $0x3d0] sm:$0x7] %v2759
        %2776 = vst [vmem:[#allocation2 + $0x3d8] sm:$0x7] %v2760
        %2777 = vst [vmem:[#allocation2 + $0x3e0] sm:$0x7] %v2761
        %2778 = vst [vmem:[#allocation2 + $0x3e8] sm:$0x7] %v2762
        %2779 = vst [vmem:[#allocation2 + $0x3f0] sm:$0x7] %v2763
        %2780 = vst [vmem:[#allocation2 + $0x3f8] sm:$0x7] %v2764
        %v2781 = vld [vmem:[%s165 + $0x4] sm:$0x77]
        %v2782 = vld [vmem:[%s165 + $0xc] sm:$0x77]
        %v2783 = vld [vmem:[%s165 + $0x14] sm:$0x77]
        %v2784 = vld [vmem:[%s165 + $0x1c] sm:$0x77]
        %v2785 = vld [vmem:[%s165 + $0x24] sm:$0x7]
        %v2791 = vcombine.high %v2781, %v2781
        %v2792 = vcombine.high %v2782, %v2782
        %v2793 = vcombine.high %v2783, %v2783
        %v2794 = vcombine.high %v2784, %v2784
        %v2795 = vrot.slane %v2781, 5
        %v2796 = vrot.slane %v2791, 5
        %v2797 = vrot.slane %v2782, 5
        %v2798 = vrot.slane %v2792, 5
        %v2799 = vrot.slane %v2783, 5
        %v2800 = vrot.slane %v2793, 5
        %v2801 = vrot.slane %v2784, 5
        %v2802 = vrot.slane %v2794, 5
        %v2803 = vrot.slane %v2785, 5
        %2804 = vrot.lane.b32.xlu0 %v2795, 90
        %v2805 = vpop.permute.xlu0 %2804
        %2806 = vrot.lane.b32.xlu0 %v2796, 90
        %v2807 = vpop.permute.xlu0 %2806
        %2808 = vrot.lane.b32.xlu0 %v2797, 90
        %v2809 = vpop.permute.xlu0 %2808
        %2810 = vrot.lane.b32.xlu0 %v2798, 90
        %v2811 = vpop.permute.xlu0 %2810
        %2812 = vrot.lane.b32.xlu0 %v2799, 90
        %v2813 = vpop.permute.xlu0 %2812
        %2814 = vrot.lane.b32.xlu0 %v2800, 90
        %v2815 = vpop.permute.xlu0 %2814
        %2816 = vrot.lane.b32.xlu0 %v2801, 90
        %v2817 = vpop.permute.xlu0 %2816
        %2818 = vrot.lane.b32.xlu0 %v2802, 90
        %v2819 = vpop.permute.xlu0 %2818
        %2820 = vrot.lane.b32.xlu0 %v2803, 90
        %v2821 = vpop.permute.xlu0 %2820
        %v2822 = vsel %vm1024, %v2805, %v2807
        %v2823 = vsel %vm1024, %v2807, %v2809
        %v2824 = vsel %vm1024, %v2809, %v2811
        %v2825 = vsel %vm1024, %v2811, %v2813
        %v2826 = vsel %vm1024, %v2813, %v2815
        %v2827 = vsel %vm1024, %v2815, %v2817
        %v2828 = vsel %vm1024, %v2817, %v2819
        %v2829 = vsel %vm1024, %v2819, %v2821
        %2838 = vst [vmem:[#allocation2 + $0x3c0] sm:$0x38] %v2822
        %2839 = vst [vmem:[#allocation2 + $0x3c8] sm:$0x38] %v2823
        %2840 = vst [vmem:[#allocation2 + $0x3d0] sm:$0x38] %v2824
        %2841 = vst [vmem:[#allocation2 + $0x3d8] sm:$0x38] %v2825
        %2842 = vst [vmem:[#allocation2 + $0x3e0] sm:$0x38] %v2826
        %2843 = vst [vmem:[#allocation2 + $0x3e8] sm:$0x38] %v2827
        %2844 = vst [vmem:[#allocation2 + $0x3f0] sm:$0x38] %v2828
        %2845 = vst [vmem:[#allocation2 + $0x3f8] sm:$0x38] %v2829
        %v2846 = vld [vmem:[%s165 + $0x4] sm:$0x77]
        %v2847 = vld [vmem:[%s165 + $0xc] sm:$0x77]
        %v2848 = vld [vmem:[%s165 + $0x14] sm:$0x77]
        %v2849 = vld [vmem:[%s165 + $0x1c] sm:$0x77]
        %v2850 = vld [vmem:[%s165 + $0x24] sm:$0x7]
        %v2856 = vcombine.high %v2846, %v2846
        %v2857 = vcombine.high %v2847, %v2847
        %v2858 = vcombine.high %v2848, %v2848
        %v2859 = vcombine.high %v2849, %v2849
        %v2860 = vrot.slane %v2846, 2
        %v2861 = vrot.slane %v2856, 2
        %v2862 = vrot.slane %v2847, 2
        %v2863 = vrot.slane %v2857, 2
        %v2864 = vrot.slane %v2848, 2
        %v2865 = vrot.slane %v2858, 2
        %v2866 = vrot.slane %v2849, 2
        %v2867 = vrot.slane %v2859, 2
        %v2868 = vrot.slane %v2850, 2
        %2869 = vrot.lane.b32.xlu0 %v2860, 64
        %v2870 = vpop.permute.xlu0 %2869
        %2871 = vrot.lane.b32.xlu0 %v2861, 64
        %v2872 = vpop.permute.xlu0 %2871
        %2873 = vrot.lane.b32.xlu0 %v2862, 64
        %v2874 = vpop.permute.xlu0 %2873
        %2875 = vrot.lane.b32.xlu0 %v2863, 64
        %v2876 = vpop.permute.xlu0 %2875
        %2877 = vrot.lane.b32.xlu0 %v2864, 64
        %v2878 = vpop.permute.xlu0 %2877
        %2879 = vrot.lane.b32.xlu0 %v2865, 64
        %v2880 = vpop.permute.xlu0 %2879
        %2881 = vrot.lane.b32.xlu0 %v2866, 64
        %v2882 = vpop.permute.xlu0 %2881
        %2883 = vrot.lane.b32.xlu0 %v2867, 64
        %v2884 = vpop.permute.xlu0 %2883
        %2885 = vrot.lane.b32.xlu0 %v2868, 64
        %v2886 = vpop.permute.xlu0 %2885
        %v2887 = vsel %vm1098, %v2870, %v2872
        %v2888 = vsel %vm1098, %v2872, %v2874
        %v2889 = vsel %vm1098, %v2874, %v2876
        %v2890 = vsel %vm1098, %v2876, %v2878
        %v2891 = vsel %vm1098, %v2878, %v2880
        %v2892 = vsel %vm1098, %v2880, %v2882
        %v2893 = vsel %vm1098, %v2882, %v2884
        %v2894 = vsel %vm1098, %v2884, %v2886
        %2903 = vst [vmem:[#allocation2 + $0x3c0] sm:$0xc0] %v2887
        %2904 = vst [vmem:[#allocation2 + $0x3c8] sm:$0xc0] %v2888
        %2905 = vst [vmem:[#allocation2 + $0x3d0] sm:$0xc0] %v2889
        %2906 = vst [vmem:[#allocation2 + $0x3d8] sm:$0xc0] %v2890
        %2907 = vst [vmem:[#allocation2 + $0x3e0] sm:$0xc0] %v2891
        %2908 = vst [vmem:[#allocation2 + $0x3e8] sm:$0xc0] %v2892
        %2909 = vst [vmem:[#allocation2 + $0x3f0] sm:$0xc0] %v2893
        %2910 = vst [vmem:[#allocation2 + $0x3f8] sm:$0xc0] %v2894
        %2911 = vst [vmem:[#allocation2 + $0x400] sm:$0x1] %v2887
        %2912 = vst [vmem:[#allocation2 + $0x408] sm:$0x1] %v2888
        %2913 = vst [vmem:[#allocation2 + $0x410] sm:$0x1] %v2889
        %2914 = vst [vmem:[#allocation2 + $0x418] sm:$0x1] %v2890
        %2915 = vst [vmem:[#allocation2 + $0x420] sm:$0x1] %v2891
        %2916 = vst [vmem:[#allocation2 + $0x428] sm:$0x1] %v2892
        %2917 = vst [vmem:[#allocation2 + $0x430] sm:$0x1] %v2893
        %2918 = vst [vmem:[#allocation2 + $0x438] sm:$0x1] %v2894
        %v2919 = vld [vmem:[%s165 + $0x4] sm:$0x77]
        %v2920 = vld [vmem:[%s165 + $0xc] sm:$0x77]
        %v2921 = vld [vmem:[%s165 + $0x14] sm:$0x77]
        %v2922 = vld [vmem:[%s165 + $0x1c] sm:$0x77]
        %v2923 = vld [vmem:[%s165 + $0x24] sm:$0x7]
        %v2929 = vcombine.high %v2919, %v2919
        %v2930 = vcombine.high %v2920, %v2920
        %v2931 = vcombine.high %v2921, %v2921
        %v2932 = vcombine.high %v2922, %v2922
        %v2933 = vrot.slane %v2919, 7
        %v2934 = vrot.slane %v2929, 7
        %v2935 = vrot.slane %v2920, 7
        %v2936 = vrot.slane %v2930, 7
        %v2937 = vrot.slane %v2921, 7
        %v2938 = vrot.slane %v2931, 7
        %v2939 = vrot.slane %v2922, 7
        %v2940 = vrot.slane %v2932, 7
        %v2941 = vrot.slane %v2923, 7
        %2942 = vrot.lane.b32.xlu0 %v2933, 63
        %v2943 = vpop.permute.xlu0 %2942
        %2944 = vrot.lane.b32.xlu0 %v2934, 63
        %v2945 = vpop.permute.xlu0 %2944
        %2946 = vrot.lane.b32.xlu0 %v2935, 63
        %v2947 = vpop.permute.xlu0 %2946
        %2948 = vrot.lane.b32.xlu0 %v2936, 63
        %v2949 = vpop.permute.xlu0 %2948
        %2950 = vrot.lane.b32.xlu0 %v2937, 63
        %v2951 = vpop.permute.xlu0 %2950
        %2952 = vrot.lane.b32.xlu0 %v2938, 63
        %v2953 = vpop.permute.xlu0 %2952
        %2954 = vrot.lane.b32.xlu0 %v2939, 63
        %v2955 = vpop.permute.xlu0 %2954
        %2956 = vrot.lane.b32.xlu0 %v2940, 63
        %v2957 = vpop.permute.xlu0 %2956
        %2958 = vrot.lane.b32.xlu0 %v2941, 63
        %v2959 = vpop.permute.xlu0 %2958
        %v2960 = vsel %vm1164, %v2943, %v2945
        %v2961 = vsel %vm1164, %v2945, %v2947
        %v2962 = vsel %vm1164, %v2947, %v2949
        %v2963 = vsel %vm1164, %v2949, %v2951
        %v2964 = vsel %vm1164, %v2951, %v2953
        %v2965 = vsel %vm1164, %v2953, %v2955
        %v2966 = vsel %vm1164, %v2955, %v2957
        %v2967 = vsel %vm1164, %v2957, %v2959
        %2976 = vst [vmem:[#allocation2 + $0x400] sm:$0xe] %v2960
        %2977 = vst [vmem:[#allocation2 + $0x408] sm:$0xe] %v2961
        %2978 = vst [vmem:[#allocation2 + $0x410] sm:$0xe] %v2962
        %2979 = vst [vmem:[#allocation2 + $0x418] sm:$0xe] %v2963
        %2980 = vst [vmem:[#allocation2 + $0x420] sm:$0xe] %v2964
        %2981 = vst [vmem:[#allocation2 + $0x428] sm:$0xe] %v2965
        %2982 = vst [vmem:[#allocation2 + $0x430] sm:$0xe] %v2966
        %2983 = vst [vmem:[#allocation2 + $0x438] sm:$0xe] %v2967
        %v2984 = vld [vmem:[%s165 + $0x4] sm:$0x77]
        %v2985 = vld [vmem:[%s165 + $0xc] sm:$0x77]
        %v2986 = vld [vmem:[%s165 + $0x14] sm:$0x77]
        %v2987 = vld [vmem:[%s165 + $0x1c] sm:$0x77]
        %v2988 = vld [vmem:[%s165 + $0x24] sm:$0x7]
        %v2994 = vcombine.low %v2984, %v2984
        %v2995 = vcombine.low %v2985, %v2985
        %v2996 = vcombine.low %v2986, %v2986
        %v2997 = vcombine.low %v2987, %v2987
        %v2998 = vcombine.low %v2988, %v2988
        %2999 = vrot.lane.b32.xlu0 %v2994, 62
        %v3000 = vpop.permute.xlu0 %2999
        %3001 = vrot.lane.b32.xlu0 %v2984, 62
        %v3002 = vpop.permute.xlu0 %3001
        %3003 = vrot.lane.b32.xlu0 %v2995, 62
        %v3004 = vpop.permute.xlu0 %3003
        %3005 = vrot.lane.b32.xlu0 %v2985, 62
        %v3006 = vpop.permute.xlu0 %3005
        %3007 = vrot.lane.b32.xlu0 %v2996, 62
        %v3008 = vpop.permute.xlu0 %3007
        %3009 = vrot.lane.b32.xlu0 %v2986, 62
        %v3010 = vpop.permute.xlu0 %3009
        %3011 = vrot.lane.b32.xlu0 %v2997, 62
        %v3012 = vpop.permute.xlu0 %3011
        %3013 = vrot.lane.b32.xlu0 %v2987, 62
        %v3014 = vpop.permute.xlu0 %3013
        %3015 = vrot.lane.b32.xlu0 %v2998, 62
        %v3016 = vpop.permute.xlu0 %3015
        %v3017 = vsel %vm1221, %v3000, %v3002
        %v3018 = vsel %vm1221, %v3002, %v3004
        %v3019 = vsel %vm1221, %v3004, %v3006
        %v3020 = vsel %vm1221, %v3006, %v3008
        %v3021 = vsel %vm1221, %v3008, %v3010
        %v3022 = vsel %vm1221, %v3010, %v3012
        %v3023 = vsel %vm1221, %v3012, %v3014
        %v3024 = vsel %vm1221, %v3014, %v3016
        %3033 = vst [vmem:[#allocation2 + $0x400] sm:$0x70] %v3017
        %3034 = vst [vmem:[#allocation2 + $0x408] sm:$0x70] %v3018
        %3035 = vst [vmem:[#allocation2 + $0x410] sm:$0x70] %v3019
        %3036 = vst [vmem:[#allocation2 + $0x418] sm:$0x70] %v3020
        %3037 = vst [vmem:[#allocation2 + $0x420] sm:$0x70] %v3021
        %3038 = vst [vmem:[#allocation2 + $0x428] sm:$0x70] %v3022
        %3039 = vst [vmem:[#allocation2 + $0x430] sm:$0x70] %v3023
        %3040 = vst [vmem:[#allocation2 + $0x438] sm:$0x70] %v3024
        %v3041 = vld [vmem:[%s165 + $0x4] sm:$0x77]
        %v3042 = vld [vmem:[%s165 + $0xc] sm:$0x77]
        %v3043 = vld [vmem:[%s165 + $0x14] sm:$0x77]
        %v3044 = vld [vmem:[%s165 + $0x1c] sm:$0x77]
        %v3045 = vld [vmem:[%s165 + $0x24] sm:$0x7]
        %v3051 = vcombine.high %v3041, %v3041
        %v3052 = vcombine.high %v3042, %v3042
        %v3053 = vcombine.high %v3043, %v3043
        %v3054 = vcombine.high %v3044, %v3044
        %v3055 = vrot.slane %v3041, 1
        %v3056 = vrot.slane %v3051, 1
        %v3057 = vrot.slane %v3042, 1
        %v3058 = vrot.slane %v3052, 1
        %v3059 = vrot.slane %v3043, 1
        %v3060 = vrot.slane %v3053, 1
        %v3061 = vrot.slane %v3044, 1
        %v3062 = vrot.slane %v3054, 1
        %v3063 = vrot.slane %v3045, 1
        %3064 = vrot.lane.b32.xlu0 %v3055, 61
        %v3065 = vpop.permute.xlu0 %3064
        %3066 = vrot.lane.b32.xlu0 %v3056, 61
        %v3067 = vpop.permute.xlu0 %3066
        %3068 = vrot.lane.b32.xlu0 %v3057, 61
        %v3069 = vpop.permute.xlu0 %3068
        %3070 = vrot.lane.b32.xlu0 %v3058, 61
        %v3071 = vpop.permute.xlu0 %3070
        %3072 = vrot.lane.b32.xlu0 %v3059, 61
        %v3073 = vpop.permute.xlu0 %3072
        %3074 = vrot.lane.b32.xlu0 %v3060, 61
        %v3075 = vpop.permute.xlu0 %3074
        %3076 = vrot.lane.b32.xlu0 %v3061, 61
        %v3077 = vpop.permute.xlu0 %3076
        %3078 = vrot.lane.b32.xlu0 %v3062, 61
        %v3079 = vpop.permute.xlu0 %3078
        %3080 = vrot.lane.b32.xlu0 %v3063, 61
        %v3081 = vpop.permute.xlu0 %3080
        %v3082 = vsel %vm1287, %v3065, %v3067
        %v3083 = vsel %vm1287, %v3067, %v3069
        %v3084 = vsel %vm1287, %v3069, %v3071
        %v3085 = vsel %vm1287, %v3071, %v3073
        %v3086 = vsel %vm1287, %v3073, %v3075
        %v3087 = vsel %vm1287, %v3075, %v3077
        %v3088 = vsel %vm1287, %v3077, %v3079
        %v3089 = vsel %vm1287, %v3079, %v3081
        %3098 = vst [vmem:[#allocation2 + $0x400] sm:$0x80] %v3082
        %3099 = vst [vmem:[#allocation2 + $0x408] sm:$0x80] %v3083
        %3100 = vst [vmem:[#allocation2 + $0x410] sm:$0x80] %v3084
        %3101 = vst [vmem:[#allocation2 + $0x418] sm:$0x80] %v3085
        %3102 = vst [vmem:[#allocation2 + $0x420] sm:$0x80] %v3086
        %3103 = vst [vmem:[#allocation2 + $0x428] sm:$0x80] %v3087
        %3104 = vst [vmem:[#allocation2 + $0x430] sm:$0x80] %v3088
        %3105 = vst [vmem:[#allocation2 + $0x438] sm:$0x80] %v3089
        %3106 = vst [vmem:[#allocation2 + $0x440] sm:$0x3] %v3082
        %3107 = vst [vmem:[#allocation2 + $0x448] sm:$0x3] %v3083
        %3108 = vst [vmem:[#allocation2 + $0x450] sm:$0x3] %v3084
        %3109 = vst [vmem:[#allocation2 + $0x458] sm:$0x3] %v3085
        %3110 = vst [vmem:[#allocation2 + $0x460] sm:$0x3] %v3086
        %3111 = vst [vmem:[#allocation2 + $0x468] sm:$0x3] %v3087
        %3112 = vst [vmem:[#allocation2 + $0x470] sm:$0x3] %v3088
        %3113 = vst [vmem:[#allocation2 + $0x478] sm:$0x3] %v3089
        %v3114 = vld [vmem:[%s165 + $0x4] sm:$0x77]
        %v3115 = vld [vmem:[%s165 + $0xc] sm:$0x77]
        %v3116 = vld [vmem:[%s165 + $0x14] sm:$0x77]
        %v3117 = vld [vmem:[%s165 + $0x1c] sm:$0x77]
        %v3118 = vld [vmem:[%s165 + $0x24] sm:$0x7]
        %v3124 = vcombine.high %v3114, %v3114
        %v3125 = vcombine.high %v3115, %v3115
        %v3126 = vcombine.high %v3116, %v3116
        %v3127 = vcombine.high %v3117, %v3117
        %v3128 = vrot.slane %v3114, 6
        %v3129 = vrot.slane %v3124, 6
        %v3130 = vrot.slane %v3115, 6
        %v3131 = vrot.slane %v3125, 6
        %v3132 = vrot.slane %v3116, 6
        %v3133 = vrot.slane %v3126, 6
        %v3134 = vrot.slane %v3117, 6
        %v3135 = vrot.slane %v3127, 6
        %v3136 = vrot.slane %v3118, 6
        %3137 = vrot.lane.b32.xlu0 %v3128, 60
        %v3138 = vpop.permute.xlu0 %3137
        %3139 = vrot.lane.b32.xlu0 %v3129, 60
        %v3140 = vpop.permute.xlu0 %3139
        %3141 = vrot.lane.b32.xlu0 %v3130, 60
        %v3142 = vpop.permute.xlu0 %3141
        %3143 = vrot.lane.b32.xlu0 %v3131, 60
        %v3144 = vpop.permute.xlu0 %3143
        %3145 = vrot.lane.b32.xlu0 %v3132, 60
        %v3146 = vpop.permute.xlu0 %3145
        %3147 = vrot.lane.b32.xlu0 %v3133, 60
        %v3148 = vpop.permute.xlu0 %3147
        %3149 = vrot.lane.b32.xlu0 %v3134, 60
        %v3150 = vpop.permute.xlu0 %3149
        %3151 = vrot.lane.b32.xlu0 %v3135, 60
        %v3152 = vpop.permute.xlu0 %3151
        %3153 = vrot.lane.b32.xlu0 %v3136, 60
        %v3154 = vpop.permute.xlu0 %3153
        %v3155 = vsel %vm1353, %v3138, %v3140
        %v3156 = vsel %vm1353, %v3140, %v3142
        %v3157 = vsel %vm1353, %v3142, %v3144
        %v3158 = vsel %vm1353, %v3144, %v3146
        %v3159 = vsel %vm1353, %v3146, %v3148
        %v3160 = vsel %vm1353, %v3148, %v3150
        %v3161 = vsel %vm1353, %v3150, %v3152
        %v3162 = vsel %vm1353, %v3152, %v3154
        %3171 = vst [vmem:[#allocation2 + $0x440] sm:$0x1c] %v3155
        %3172 = vst [vmem:[#allocation2 + $0x448] sm:$0x1c] %v3156
        %3173 = vst [vmem:[#allocation2 + $0x450] sm:$0x1c] %v3157
        %3174 = vst [vmem:[#allocation2 + $0x458] sm:$0x1c] %v3158
        %3175 = vst [vmem:[#allocation2 + $0x460] sm:$0x1c] %v3159
        %3176 = vst [vmem:[#allocation2 + $0x468] sm:$0x1c] %v3160
        %3177 = vst [vmem:[#allocation2 + $0x470] sm:$0x1c] %v3161
        %3178 = vst [vmem:[#allocation2 + $0x478] sm:$0x1c] %v3162
        %v3179 = vld [vmem:[%s165 + $0x4] sm:$0x77]
        %v3180 = vld [vmem:[%s165 + $0xc] sm:$0x77]
        %v3181 = vld [vmem:[%s165 + $0x14] sm:$0x77]
        %v3182 = vld [vmem:[%s165 + $0x1c] sm:$0x77]
        %v3183 = vld [vmem:[%s165 + $0x24] sm:$0x7]
        %v3189 = vcombine.high %v3179, %v3179
        %v3190 = vcombine.high %v3180, %v3180
        %v3191 = vcombine.high %v3181, %v3181
        %v3192 = vcombine.high %v3182, %v3182
        %v3193 = vrot.slane %v3179, 3
        %v3194 = vrot.slane %v3189, 3
        %v3195 = vrot.slane %v3180, 3
        %v3196 = vrot.slane %v3190, 3
        %v3197 = vrot.slane %v3181, 3
        %v3198 = vrot.slane %v3191, 3
        %v3199 = vrot.slane %v3182, 3
        %v3200 = vrot.slane %v3192, 3
        %v3201 = vrot.slane %v3183, 3
        %3202 = vrot.lane.b32.xlu0 %v3193, 59
        %v3203 = vpop.permute.xlu0 %3202
        %3204 = vrot.lane.b32.xlu0 %v3194, 59
        %v3205 = vpop.permute.xlu0 %3204
        %3206 = vrot.lane.b32.xlu0 %v3195, 59
        %v3207 = vpop.permute.xlu0 %3206
        %3208 = vrot.lane.b32.xlu0 %v3196, 59
        %v3209 = vpop.permute.xlu0 %3208
        %3210 = vrot.lane.b32.xlu0 %v3197, 59
        %v3211 = vpop.permute.xlu0 %3210
        %3212 = vrot.lane.b32.xlu0 %v3198, 59
        %v3213 = vpop.permute.xlu0 %3212
        %3214 = vrot.lane.b32.xlu0 %v3199, 59
        %v3215 = vpop.permute.xlu0 %3214
        %3216 = vrot.lane.b32.xlu0 %v3200, 59
        %v3217 = vpop.permute.xlu0 %3216
        %3218 = vrot.lane.b32.xlu0 %v3201, 59
        %v3219 = vpop.permute.xlu0 %3218
        %v3220 = vsel %vm1427, %v3203, %v3205
        %v3221 = vsel %vm1427, %v3205, %v3207
        %v3222 = vsel %vm1427, %v3207, %v3209
        %v3223 = vsel %vm1427, %v3209, %v3211
        %v3224 = vsel %vm1427, %v3211, %v3213
        %v3225 = vsel %vm1427, %v3213, %v3215
        %v3226 = vsel %vm1427, %v3215, %v3217
        %v3227 = vsel %vm1427, %v3217, %v3219
        %3236 = vst [vmem:[#allocation2 + $0x440] sm:$0xe0] %v3220
        %3237 = vst [vmem:[#allocation2 + $0x448] sm:$0xe0] %v3221
        %3238 = vst [vmem:[#allocation2 + $0x450] sm:$0xe0] %v3222
        %3239 = vst [vmem:[#allocation2 + $0x458] sm:$0xe0] %v3223
        %3240 = vst [vmem:[#allocation2 + $0x460] sm:$0xe0] %v3224
        %3241 = vst [vmem:[#allocation2 + $0x468] sm:$0xe0] %v3225
        %3242 = vst [vmem:[#allocation2 + $0x470] sm:$0xe0] %v3226
        %3243 = vst [vmem:[#allocation2 + $0x478] sm:$0xe0] %v3227
        %v3244 = vld [vmem:[%s165 + $0x4] sm:$0x77]
        %v3245 = vld [vmem:[%s165 + $0xc] sm:$0x77]
        %v3246 = vld [vmem:[%s165 + $0x14] sm:$0x77]
        %v3247 = vld [vmem:[%s165 + $0x1c] sm:$0x77]
        %v3248 = vld [vmem:[%s165 + $0x24] sm:$0x7]
        %v3254 = vcombine.high %v3244, %v3244
        %v3255 = vcombine.high %v3245, %v3245
        %v3256 = vcombine.high %v3246, %v3246
        %v3257 = vcombine.high %v3247, %v3247
        %3258 = vrot.lane.b32.xlu0 %v3244, 58
        %v3259 = vpop.permute.xlu0 %3258
        %3260 = vrot.lane.b32.xlu0 %v3254, 58
        %v3261 = vpop.permute.xlu0 %3260
        %3262 = vrot.lane.b32.xlu0 %v3245, 58
        %v3263 = vpop.permute.xlu0 %3262
        %3264 = vrot.lane.b32.xlu0 %v3255, 58
        %v3265 = vpop.permute.xlu0 %3264
        %3266 = vrot.lane.b32.xlu0 %v3246, 58
        %v3267 = vpop.permute.xlu0 %3266
        %3268 = vrot.lane.b32.xlu0 %v3256, 58
        %v3269 = vpop.permute.xlu0 %3268
        %3270 = vrot.lane.b32.xlu0 %v3247, 58
        %v3271 = vpop.permute.xlu0 %3270
        %3272 = vrot.lane.b32.xlu0 %v3257, 58
        %v3273 = vpop.permute.xlu0 %3272
        %3274 = vrot.lane.b32.xlu0 %v3248, 58
        %v3275 = vpop.permute.xlu0 %3274
        %v3276 = vsel %vm1485, %v3259, %v3261
        %v3277 = vsel %vm1485, %v3261, %v3263
        %v3278 = vsel %vm1485, %v3263, %v3265
        %v3279 = vsel %vm1485, %v3265, %v3267
        %v3280 = vsel %vm1485, %v3267, %v3269
        %v3281 = vsel %vm1485, %v3269, %v3271
        %v3282 = vsel %vm1485, %v3271, %v3273
        %v3283 = vsel %vm1485, %v3273, %v3275
        %3292 = vst [vmem:[#allocation2 + $0x480] sm:$0x7] %v3276
        %3293 = vst [vmem:[#allocation2 + $0x488] sm:$0x7] %v3277
        %3294 = vst [vmem:[#allocation2 + $0x490] sm:$0x7] %v3278
        %3295 = vst [vmem:[#allocation2 + $0x498] sm:$0x7] %v3279
        %3296 = vst [vmem:[#allocation2 + $0x4a0] sm:$0x7] %v3280
        %3297 = vst [vmem:[#allocation2 + $0x4a8] sm:$0x7] %v3281
        %3298 = vst [vmem:[#allocation2 + $0x4b0] sm:$0x7] %v3282
        %3299 = vst [vmem:[#allocation2 + $0x4b8] sm:$0x7] %v3283
        %v3300 = vld [vmem:[%s1] sm:$0xff]
        %v3301 = vld [vmem:[%s1 + $0x8] sm:$0xff]
        %v3302 = vld [vmem:[%s1 + $0x10] sm:$0xff]
        %v3303 = vld [vmem:[%s1 + $0x18] sm:$0xff]
        %v3304 = vld [vmem:[%s1 + $0x20] sm:$0xff]
        %v3305 = vld [vmem:[%s1 + $0x28] sm:$0xff]
        %v3306 = vld [vmem:[%s1 + $0x30] sm:$0xff]
        %v3307 = vld [vmem:[%s1 + $0x38] sm:$0xff]
        %v3308 = vld [vmem:[#allocation2] sm:$0xff]
        %v3309 = vld [vmem:[#allocation2 + $0x8] sm:$0xff]
        %v3310 = vld [vmem:[#allocation2 + $0x10] sm:$0xff]
        %v3311 = vld [vmem:[#allocation2 + $0x18] sm:$0xff]
        %v3312 = vld [vmem:[#allocation2 + $0x20] sm:$0xff]
        %v3313 = vld [vmem:[#allocation2 + $0x28] sm:$0xff]
        %v3314 = vld [vmem:[#allocation2 + $0x30] sm:$0xff]
        %v3315 = vld [vmem:[#allocation2 + $0x38] sm:$0xff]
        %v3316 = vld [vmem:[#allocation2 + $0x40] sm:$0xff]
        %v3317 = vld [vmem:[#allocation2 + $0x48] sm:$0xff]
        %v3318 = vld [vmem:[#allocation2 + $0x50] sm:$0xff]
        %v3319 = vld [vmem:[#allocation2 + $0x58] sm:$0xff]
        %v3320 = vld [vmem:[#allocation2 + $0x60] sm:$0xff]
        %v3321 = vld [vmem:[#allocation2 + $0x68] sm:$0xff]
        %v3322 = vld [vmem:[#allocation2 + $0x70] sm:$0xff]
        %v3323 = vld [vmem:[#allocation2 + $0x78] sm:$0xff]
        %v3324 = vld [vmem:[#allocation2 + $0x80] sm:$0xff]
        %v3325 = vld [vmem:[#allocation2 + $0x88] sm:$0xff]
        %v3326 = vld [vmem:[#allocation2 + $0x90] sm:$0xff]
        %v3327 = vld [vmem:[#allocation2 + $0x98] sm:$0xff]
        %v3328 = vld [vmem:[#allocation2 + $0xa0] sm:$0xff]
        %v3329 = vld [vmem:[#allocation2 + $0xa8] sm:$0xff]
        %v3330 = vld [vmem:[#allocation2 + $0xb0] sm:$0xff]
        %v3331 = vld [vmem:[#allocation2 + $0xb8] sm:$0xff]
        %v3332 = vld [vmem:[#allocation2 + $0xc0] sm:$0xff]
        %v3333 = vld [vmem:[#allocation2 + $0xc8] sm:$0xff]
        %v3334 = vld [vmem:[#allocation2 + $0xd0] sm:$0xff]
        %v3335 = vld [vmem:[#allocation2 + $0xd8] sm:$0xff]
        %v3336 = vld [vmem:[#allocation2 + $0xe0] sm:$0xff]
        %v3337 = vld [vmem:[#allocation2 + $0xe8] sm:$0xff]
        %v3338 = vld [vmem:[#allocation2 + $0xf0] sm:$0xff]
        %v3339 = vld [vmem:[#allocation2 + $0xf8] sm:$0xff]
        %v3340 = vld [vmem:[#allocation2 + $0x100] sm:$0xff]
        %v3341 = vld [vmem:[#allocation2 + $0x108] sm:$0xff]
        %v3342 = vld [vmem:[#allocation2 + $0x110] sm:$0xff]
        %v3343 = vld [vmem:[#allocation2 + $0x118] sm:$0xff]
        %v3344 = vld [vmem:[#allocation2 + $0x120] sm:$0xff]
        %v3345 = vld [vmem:[#allocation2 + $0x128] sm:$0xff]
        %v3346 = vld [vmem:[#allocation2 + $0x130] sm:$0xff]
        %v3347 = vld [vmem:[#allocation2 + $0x138] sm:$0xff]
        %v3348 = vld [vmem:[#allocation2 + $0x140] sm:$0xff]
        %v3349 = vld [vmem:[#allocation2 + $0x148] sm:$0xff]
        %v3350 = vld [vmem:[#allocation2 + $0x150] sm:$0xff]
        %v3351 = vld [vmem:[#allocation2 + $0x158] sm:$0xff]
        %v3352 = vld [vmem:[#allocation2 + $0x160] sm:$0xff]
        %v3353 = vld [vmem:[#allocation2 + $0x168] sm:$0xff]
        %v3354 = vld [vmem:[#allocation2 + $0x170] sm:$0xff]
        %v3355 = vld [vmem:[#allocation2 + $0x178] sm:$0xff]
        %v3356 = vld [vmem:[#allocation2 + $0x180] sm:$0xff]
        %v3357 = vld [vmem:[#allocation2 + $0x188] sm:$0xff]
        %v3358 = vld [vmem:[#allocation2 + $0x190] sm:$0xff]
        %v3359 = vld [vmem:[#allocation2 + $0x198] sm:$0xff]
        %v3360 = vld [vmem:[#allocation2 + $0x1a0] sm:$0xff]
        %v3361 = vld [vmem:[#allocation2 + $0x1a8] sm:$0xff]
        %v3362 = vld [vmem:[#allocation2 + $0x1b0] sm:$0xff]
        %v3363 = vld [vmem:[#allocation2 + $0x1b8] sm:$0xff]
        %v3364 = vld [vmem:[#allocation2 + $0x1c0] sm:$0xff]
        %v3365 = vld [vmem:[#allocation2 + $0x1c8] sm:$0xff]
        %v3366 = vld [vmem:[#allocation2 + $0x1d0] sm:$0xff]
        %v3367 = vld [vmem:[#allocation2 + $0x1d8] sm:$0xff]
        %v3368 = vld [vmem:[#allocation2 + $0x1e0] sm:$0xff]
        %v3369 = vld [vmem:[#allocation2 + $0x1e8] sm:$0xff]
        %v3370 = vld [vmem:[#allocation2 + $0x1f0] sm:$0xff]
        %v3371 = vld [vmem:[#allocation2 + $0x1f8] sm:$0xff]
        %v3372 = vld [vmem:[#allocation2 + $0x200] sm:$0xff]
        %v3373 = vld [vmem:[#allocation2 + $0x208] sm:$0xff]
        %v3374 = vld [vmem:[#allocation2 + $0x210] sm:$0xff]
        %v3375 = vld [vmem:[#allocation2 + $0x218] sm:$0xff]
        %v3376 = vld [vmem:[#allocation2 + $0x220] sm:$0xff]
        %v3377 = vld [vmem:[#allocation2 + $0x228] sm:$0xff]
        %v3378 = vld [vmem:[#allocation2 + $0x230] sm:$0xff]
        %v3379 = vld [vmem:[#allocation2 + $0x238] sm:$0xff]
        %v3380 = vld [vmem:[#allocation2 + $0x240] sm:$0xff]
        %v3381 = vld [vmem:[#allocation2 + $0x248] sm:$0xff]
        %v3382 = vld [vmem:[#allocation2 + $0x250] sm:$0xff]
        %v3383 = vld [vmem:[#allocation2 + $0x258] sm:$0xff]
        %v3384 = vld [vmem:[#allocation2 + $0x260] sm:$0xff]
        %v3385 = vld [vmem:[#allocation2 + $0x268] sm:$0xff]
        %v3386 = vld [vmem:[#allocation2 + $0x270] sm:$0xff]
        %v3387 = vld [vmem:[#allocation2 + $0x278] sm:$0xff]
        %v3388 = vld [vmem:[#allocation2 + $0x280] sm:$0xff]
        %v3389 = vld [vmem:[#allocation2 + $0x288] sm:$0xff]
        %v3390 = vld [vmem:[#allocation2 + $0x290] sm:$0xff]
        %v3391 = vld [vmem:[#allocation2 + $0x298] sm:$0xff]
        %v3392 = vld [vmem:[#allocation2 + $0x2a0] sm:$0xff]
        %v3393 = vld [vmem:[#allocation2 + $0x2a8] sm:$0xff]
        %v3394 = vld [vmem:[#allocation2 + $0x2b0] sm:$0xff]
        %v3395 = vld [vmem:[#allocation2 + $0x2b8] sm:$0xff]
        %v3396 = vld [vmem:[#allocation2 + $0x2c0] sm:$0xff]
        %v3397 = vld [vmem:[#allocation2 + $0x2c8] sm:$0xff]
        %v3398 = vld [vmem:[#allocation2 + $0x2d0] sm:$0xff]
        %v3399 = vld [vmem:[#allocation2 + $0x2d8] sm:$0xff]
        %v3400 = vld [vmem:[#allocation2 + $0x2e0] sm:$0xff]
        %v3401 = vld [vmem:[#allocation2 + $0x2e8] sm:$0xff]
        %v3402 = vld [vmem:[#allocation2 + $0x2f0] sm:$0xff]
        %v3403 = vld [vmem:[#allocation2 + $0x2f8] sm:$0xff]
        %v3404 = vld [vmem:[#allocation2 + $0x300] sm:$0xff]
        %v3405 = vld [vmem:[#allocation2 + $0x308] sm:$0xff]
        %v3406 = vld [vmem:[#allocation2 + $0x310] sm:$0xff]
        %v3407 = vld [vmem:[#allocation2 + $0x318] sm:$0xff]
        %v3408 = vld [vmem:[#allocation2 + $0x320] sm:$0xff]
        %v3409 = vld [vmem:[#allocation2 + $0x328] sm:$0xff]
        %v3410 = vld [vmem:[#allocation2 + $0x330] sm:$0xff]
        %v3411 = vld [vmem:[#allocation2 + $0x338] sm:$0xff]
        %v3412 = vld [vmem:[#allocation2 + $0x340] sm:$0xff]
        %v3413 = vld [vmem:[#allocation2 + $0x348] sm:$0xff]
        %v3414 = vld [vmem:[#allocation2 + $0x350] sm:$0xff]
        %v3415 = vld [vmem:[#allocation2 + $0x358] sm:$0xff]
        %v3416 = vld [vmem:[#allocation2 + $0x360] sm:$0xff]
        %v3417 = vld [vmem:[#allocation2 + $0x368] sm:$0xff]
        %v3418 = vld [vmem:[#allocation2 + $0x370] sm:$0xff]
        %v3419 = vld [vmem:[#allocation2 + $0x378] sm:$0xff]
        %v3420 = vld [vmem:[#allocation2 + $0x380] sm:$0xff]
        %v3421 = vld [vmem:[#allocation2 + $0x388] sm:$0xff]
        %v3422 = vld [vmem:[#allocation2 + $0x390] sm:$0xff]
        %v3423 = vld [vmem:[#allocation2 + $0x398] sm:$0xff]
        %v3424 = vld [vmem:[#allocation2 + $0x3a0] sm:$0xff]
        %v3425 = vld [vmem:[#allocation2 + $0x3a8] sm:$0xff]
        %v3426 = vld [vmem:[#allocation2 + $0x3b0] sm:$0xff]
        %v3427 = vld [vmem:[#allocation2 + $0x3b8] sm:$0xff]
        %v3428 = vld [vmem:[#allocation2 + $0x3c0] sm:$0xff]
        %v3429 = vld [vmem:[#allocation2 + $0x3c8] sm:$0xff]
        %v3430 = vld [vmem:[#allocation2 + $0x3d0] sm:$0xff]
        %v3431 = vld [vmem:[#allocation2 + $0x3d8] sm:$0xff]
        %v3432 = vld [vmem:[#allocation2 + $0x3e0] sm:$0xff]
        %v3433 = vld [vmem:[#allocation2 + $0x3e8] sm:$0xff]
        %v3434 = vld [vmem:[#allocation2 + $0x3f0] sm:$0xff]
        %v3435 = vld [vmem:[#allocation2 + $0x3f8] sm:$0xff]
        %v3436 = vld [vmem:[#allocation2 + $0x400] sm:$0xff]
        %v3437 = vld [vmem:[#allocation2 + $0x408] sm:$0xff]
        %v3438 = vld [vmem:[#allocation2 + $0x410] sm:$0xff]
        %v3439 = vld [vmem:[#allocation2 + $0x418] sm:$0xff]
        %v3440 = vld [vmem:[#allocation2 + $0x420] sm:$0xff]
        %v3441 = vld [vmem:[#allocation2 + $0x428] sm:$0xff]
        %v3442 = vld [vmem:[#allocation2 + $0x430] sm:$0xff]
        %v3443 = vld [vmem:[#allocation2 + $0x438] sm:$0xff]
        %v3444 = vld [vmem:[#allocation2 + $0x440] sm:$0xff]
        %v3445 = vld [vmem:[#allocation2 + $0x448] sm:$0xff]
        %v3446 = vld [vmem:[#allocation2 + $0x450] sm:$0xff]
        %v3447 = vld [vmem:[#allocation2 + $0x458] sm:$0xff]
        %v3448 = vld [vmem:[#allocation2 + $0x460] sm:$0xff]
        %v3449 = vld [vmem:[#allocation2 + $0x468] sm:$0xff]
        %v3450 = vld [vmem:[#allocation2 + $0x470] sm:$0xff]
        %v3451 = vld [vmem:[#allocation2 + $0x478] sm:$0xff]
        %v3452 = vld [vmem:[#allocation2 + $0x480] sm:$0x7]
        %v3453 = vld [vmem:[#allocation2 + $0x488] sm:$0x7]
        %v3454 = vld [vmem:[#allocation2 + $0x490] sm:$0x7]
        %v3455 = vld [vmem:[#allocation2 + $0x498] sm:$0x7]
        %v3456 = vld [vmem:[#allocation2 + $0x4a0] sm:$0x7]
        %v3457 = vld [vmem:[#allocation2 + $0x4a8] sm:$0x7]
        %v3458 = vld [vmem:[#allocation2 + $0x4b0] sm:$0x7]
        %v3459 = vld [vmem:[#allocation2 + $0x4b8] sm:$0x7]
        %v3460 = vld [vmem:[%s2] sm:$0xff]
        %v3461 = vld [vmem:[%s2 + $0x8] sm:$0xff]
        %v3462 = vld [vmem:[%s2 + $0x10] sm:$0xff]
        %v3463 = vld [vmem:[%s2 + $0x18] sm:$0xff]
        %3465 = vset.pattern.permute.xlu0 0
        %3466 = vperm.xlu0 %3465, %v3460
        %v3467 = vpop.permute.xlu0 %3466
        %3470 = vset.pattern.permute.xlu0 0
        %3471 = vperm.xlu0 %3470, %v3461
        %v3472 = vpop.permute.xlu0 %3471
        %3475 = vset.pattern.permute.xlu0 0
        %3476 = vperm.xlu0 %3475, %v3462
        %v3477 = vpop.permute.xlu0 %3476
        %3480 = vset.pattern.permute.xlu0 0
        %3481 = vperm.xlu0 %3480, %v3463
        %v3482 = vpop.permute.xlu0 %3481
        %vm3484 = vcmask 154624
        %v3486 = vsel %vm3484, %v3301, 0
        %v3489 = vsel %vm3484, %v3303, 0
        %v3492 = vsel %vm3484, %v3305, 0
        %v3495 = vsel %vm3484, %v3307, 0
        %vm3497 = vcmask 1042432
        %v3499 = vsel %vm3497, %v3452, 0
        %v3502 = vsel %vm3497, %v3453, 0
        %v3505 = vsel %vm3497, %v3454, 0
        %v3508 = vsel %vm3497, %v3455, 0
        %v3511 = vsel %vm3497, %v3456, 0
        %v3514 = vsel %vm3497, %v3457, 0
        %v3517 = vsel %vm3497, %v3458, 0
        %v3520 = vsel %vm3497, %v3459, 0
        %3522 = vmatprep.subr.mxu0 %v3309
        %3523 = vmatpush1.msra.mxu0 %v3308
        %3524 = vmatprep.subr.mxu0 %v3317
        %3525 = vmatpush1.msra.mxu0 %v3316
        %3526 = vmatprep.subr.mxu0 %v3325
        %3527 = vmatpush1.msra.mxu0 %v3324
        %3528 = vmatprep.subr.mxu0 %v3333
        %3529 = vmatpush1.msra.mxu0 %v3332
        %3530 = vmatprep.subr.mxu0 %v3341
        %3531 = vmatpush1.msra.mxu0 %v3340
        %3532 = vmatprep.subr.mxu0 %v3349
        %3533 = vmatpush1.msra.mxu0 %v3348
        %3534 = vmatprep.subr.mxu0 %v3357
        %3535 = vmatpush1.msra.mxu0 %v3356
        %3536 = vmatprep.subr.mxu0 %v3365
        %3537 = vmatpush1.msra.mxu0 %v3364
        %3538 = vmatprep.subr.mxu0 %v3373
        %3539 = vmatpush1.msra.mxu0 %v3372
        %3540 = vmatprep.subr.mxu0 %v3381
        %3541 = vmatpush1.msra.mxu0 %v3380
        %3542 = vmatprep.subr.mxu0 %v3389
        %3543 = vmatpush1.msra.mxu0 %v3388
        %3544 = vmatprep.subr.mxu0 %v3397
        %3545 = vmatpush1.msra.mxu0 %v3396
        %3546 = vmatprep.subr.mxu0 %v3405
        %3547 = vmatpush1.msra.mxu0 %v3404
        %3548 = vmatprep.subr.mxu0 %v3413
        %3549 = vmatpush1.msra.mxu0 %v3412
        %3550 = vmatprep.subr.mxu0 %v3421
        %3551 = vmatpush1.msra.mxu0 %v3420
        %3552 = vmatprep.subr.mxu0 %v3429
        %3553 = vmatpush1.msra.mxu0 %v3428
        %3554 = vmatprep.subr.mxu0 %v3437
        %3555 = vmatpush1.msra.mxu0 %v3436
        %3556 = vmatprep.subr.mxu0 %v3445
        %3557 = vmatpush1.msra.mxu0 %v3444
        %3558 = vmatprep.subr.mxu0 %v3502
        %3559 = vmatpush1.msra.mxu0 %v3499
        %3560 = vmatprep.subr.mxu0 0.0
        %3561 = vmatpush1.msra.mxu0 0.0
        %3562 = vmatprep.subr.mxu0 0.0
        %3563 = vmatpush1.msra.mxu0 0.0
        %3564 = vmatprep.subr.mxu0 0.0
        %3565 = vmatpush1.msra.mxu0 0.0
        %3566 = vmatprep.subr.mxu0 0.0
        %3567 = vmatpush1.msra.mxu0 0.0
        %3568 = vmatprep.subr.mxu0 0.0
        %3569 = vmatpush1.msra.mxu0 0.0
        %3570 = vmatprep.subr.mxu0 0.0
        %3571 = vmatpush1.msra.mxu0 0.0
        %3572 = vmatprep.subr.mxu0 0.0
        %3573 = vmatpush1.msra.mxu0 0.0
        %3574 = vmatprep.subr.mxu0 0.0
        %3575 = vmatpush1.msra.mxu0 0.0
        %3576 = vmatprep.subr.mxu0 0.0
        %3577 = vmatpush1.msra.mxu0 0.0
        %3578 = vmatprep.subr.mxu0 0.0
        %3579 = vmatpush1.msra.mxu0 0.0
        %3580 = vmatprep.subr.mxu0 0.0
        %3581 = vmatpush1.msra.mxu0 0.0
        %3582 = vmatprep.subr.mxu0 0.0
        %3583 = vmatpush1.msra.mxu0 0.0
        %3584 = vmatprep.subr.mxu0 0.0
        %3585 = vmatpush1.msra.mxu0 0.0
        %3586 = vmatprep.mubr.f32.mxu0 %v3486
        %3587 = vmatmul.mubr.f32.gmra.mrb[0].mxu0 %v3300
        %v3588 = vpop.f32.mrb[0].mxu0
        %v3589 = vadd.f32 %v3467, %v3588
        %v3590 = vpop.f32.mrb[0].mxu0
        %v3591 = vadd.f32 %v3467, %v3590
        %3592 = vmatprep.mubr.f32.mxu0 %v3489
        %3593 = vmatmul.mubr.f32.gmra.mrb[0].mxu0 %v3302
        %v3594 = vpop.f32.mrb[0].mxu0
        %v3595 = vadd.f32 %v3472, %v3594
        %v3596 = vpop.f32.mrb[0].mxu0
        %v3597 = vadd.f32 %v3472, %v3596
        %3598 = vmatprep.mubr.f32.mxu0 %v3492
        %3599 = vmatmul.mubr.f32.gmra.mrb[0].mxu0 %v3304
        %v3600 = vpop.f32.mrb[0].mxu0
        %v3601 = vadd.f32 %v3477, %v3600
        %v3602 = vpop.f32.mrb[0].mxu0
        %v3603 = vadd.f32 %v3477, %v3602
        %3604 = vmatprep.mubr.f32.mxu0 %v3495
        %3605 = vmatmul.mubr.f32.gmra.mrb[0].mxu0 %v3306
        %v3606 = vpop.f32.mrb[0].mxu0
        %v3607 = vadd.f32 %v3482, %v3606
        %v3608 = vpop.f32.mrb[0].mxu0
        %v3609 = vadd.f32 %v3482, %v3608
        %3610 = vdwg.mxu0
        %3611 = vmatprep.subr.mxu0 %v3311
        %3612 = vmatpush1.msra.mxu0 %v3310
        %3613 = vmatprep.subr.mxu0 %v3319
        %3614 = vmatpush1.msra.mxu0 %v3318
        %3615 = vmatprep.subr.mxu0 %v3327
        %3616 = vmatpush1.msra.mxu0 %v3326
        %3617 = vmatprep.subr.mxu0 %v3335
        %3618 = vmatpush1.msra.mxu0 %v3334
        %3619 = vmatprep.subr.mxu0 %v3343
        %3620 = vmatpush1.msra.mxu0 %v3342
        %3621 = vmatprep.subr.mxu0 %v3351
        %3622 = vmatpush1.msra.mxu0 %v3350
        %3623 = vmatprep.subr.mxu0 %v3359
        %3624 = vmatpush1.msra.mxu0 %v3358
        %3625 = vmatprep.subr.mxu0 %v3367
        %3626 = vmatpush1.msra.mxu0 %v3366
        %3627 = vmatprep.subr.mxu0 %v3375
        %3628 = vmatpush1.msra.mxu0 %v3374
        %3629 = vmatprep.subr.mxu0 %v3383
        %3630 = vmatpush1.msra.mxu0 %v3382
        %3631 = vmatprep.subr.mxu0 %v3391
        %3632 = vmatpush1.msra.mxu0 %v3390
        %3633 = vmatprep.subr.mxu0 %v3399
        %3634 = vmatpush1.msra.mxu0 %v3398
        %3635 = vmatprep.subr.mxu0 %v3407
        %3636 = vmatpush1.msra.mxu0 %v3406
        %3637 = vmatprep.subr.mxu0 %v3415
        %3638 = vmatpush1.msra.mxu0 %v3414
        %3639 = vmatprep.subr.mxu0 %v3423
        %3640 = vmatpush1.msra.mxu0 %v3422
        %3641 = vmatprep.subr.mxu0 %v3431
        %3642 = vmatpush1.msra.mxu0 %v3430
        %3643 = vmatprep.subr.mxu0 %v3439
        %3644 = vmatpush1.msra.mxu0 %v3438
        %3645 = vmatprep.subr.mxu0 %v3447
        %3646 = vmatpush1.msra.mxu0 %v3446
        %3647 = vmatprep.subr.mxu0 %v3508
        %3648 = vmatpush1.msra.mxu0 %v3505
        %3649 = vmatprep.subr.mxu0 0.0
        %3650 = vmatpush1.msra.mxu0 0.0
        %3651 = vmatprep.subr.mxu0 0.0
        %3652 = vmatpush1.msra.mxu0 0.0
        %3653 = vmatprep.subr.mxu0 0.0
        %3654 = vmatpush1.msra.mxu0 0.0
        %3655 = vmatprep.subr.mxu0 0.0
        %3656 = vmatpush1.msra.mxu0 0.0
        %3657 = vmatprep.subr.mxu0 0.0
        %3658 = vmatpush1.msra.mxu0 0.0
        %3659 = vmatprep.subr.mxu0 0.0
        %3660 = vmatpush1.msra.mxu0 0.0
        %3661 = vmatprep.subr.mxu0 0.0
        %3662 = vmatpush1.msra.mxu0 0.0
        %3663 = vmatprep.subr.mxu0 0.0
        %3664 = vmatpush1.msra.mxu0 0.0
        %3665 = vmatprep.subr.mxu0 0.0
        %3666 = vmatpush1.msra.mxu0 0.0
        %3667 = vmatprep.subr.mxu0 0.0
        %3668 = vmatpush1.msra.mxu0 0.0
        %3669 = vmatprep.subr.mxu0 0.0
        %3670 = vmatpush1.msra.mxu0 0.0
        %3671 = vmatprep.subr.mxu0 0.0
        %3672 = vmatpush1.msra.mxu0 0.0
        %3673 = vmatprep.subr.mxu0 0.0
        %3674 = vmatpush1.msra.mxu0 0.0
        %3675 = vmatprep.mubr.f32.mxu0 %v3486
        %3676 = vmatmul.mubr.f32.gmra.mrb[0].mxu0 %v3300
        %v3677 = vpop.f32.mrb[0].mxu0
        %v3678 = vadd.f32 %v3467, %v3677
        %v3679 = vpop.f32.mrb[0].mxu0
        %v3680 = vadd.f32 %v3467, %v3679
        %3681 = vmatprep.mubr.f32.mxu0 %v3489
        %3682 = vmatmul.mubr.f32.gmra.mrb[0].mxu0 %v3302
        %v3683 = vpop.f32.mrb[0].mxu0
        %v3684 = vadd.f32 %v3472, %v3683
        %v3685 = vpop.f32.mrb[0].mxu0
        %v3686 = vadd.f32 %v3472, %v3685
        %3687 = vmatprep.mubr.f32.mxu0 %v3492
        %3688 = vmatmul.mubr.f32.gmra.mrb[0].mxu0 %v3304
        %v3689 = vpop.f32.mrb[0].mxu0
        %v3690 = vadd.f32 %v3477, %v3689
        %v3691 = vpop.f32.mrb[0].mxu0
        %v3692 = vadd.f32 %v3477, %v3691
        %3693 = vmatprep.mubr.f32.mxu0 %v3495
        %3694 = vmatmul.mubr.f32.gmra.mrb[0].mxu0 %v3306
        %v3695 = vpop.f32.mrb[0].mxu0
        %v3696 = vadd.f32 %v3482, %v3695
        %v3697 = vpop.f32.mrb[0].mxu0
        %v3698 = vadd.f32 %v3482, %v3697
        %3699 = vdwg.mxu0
        %3700 = vmatprep.subr.mxu0 %v3313
        %3701 = vmatpush1.msra.mxu0 %v3312
        %3702 = vmatprep.subr.mxu0 %v3321
        %3703 = vmatpush1.msra.mxu0 %v3320
        %3704 = vmatprep.subr.mxu0 %v3329
        %3705 = vmatpush1.msra.mxu0 %v3328
        %3706 = vmatprep.subr.mxu0 %v3337
        %3707 = vmatpush1.msra.mxu0 %v3336
        %3708 = vmatprep.subr.mxu0 %v3345
        %3709 = vmatpush1.msra.mxu0 %v3344
        %3710 = vmatprep.subr.mxu0 %v3353
        %3711 = vmatpush1.msra.mxu0 %v3352
        %3712 = vmatprep.subr.mxu0 %v3361
        %3713 = vmatpush1.msra.mxu0 %v3360
        %3714 = vmatprep.subr.mxu0 %v3369
        %3715 = vmatpush1.msra.mxu0 %v3368
        %3716 = vmatprep.subr.mxu0 %v3377
        %3717 = vmatpush1.msra.mxu0 %v3376
        %3718 = vmatprep.subr.mxu0 %v3385
        %3719 = vmatpush1.msra.mxu0 %v3384
        %3720 = vmatprep.subr.mxu0 %v3393
        %3721 = vmatpush1.msra.mxu0 %v3392
        %3722 = vmatprep.subr.mxu0 %v3401
        %3723 = vmatpush1.msra.mxu0 %v3400
        %3724 = vmatprep.subr.mxu0 %v3409
        %3725 = vmatpush1.msra.mxu0 %v3408
        %3726 = vmatprep.subr.mxu0 %v3417
        %3727 = vmatpush1.msra.mxu0 %v3416
        %3728 = vmatprep.subr.mxu0 %v3425
        %3729 = vmatpush1.msra.mxu0 %v3424
        %3730 = vmatprep.subr.mxu0 %v3433
        %3731 = vmatpush1.msra.mxu0 %v3432
        %3732 = vmatprep.subr.mxu0 %v3441
        %3733 = vmatpush1.msra.mxu0 %v3440
        %3734 = vmatprep.subr.mxu0 %v3449
        %3735 = vmatpush1.msra.mxu0 %v3448
        %3736 = vmatprep.subr.mxu0 %v3514
        %3737 = vmatpush1.msra.mxu0 %v3511
        %3738 = vmatprep.subr.mxu0 0.0
        %3739 = vmatpush1.msra.mxu0 0.0
        %3740 = vmatprep.subr.mxu0 0.0
        %3741 = vmatpush1.msra.mxu0 0.0
        %3742 = vmatprep.subr.mxu0 0.0
        %3743 = vmatpush1.msra.mxu0 0.0
        %3744 = vmatprep.subr.mxu0 0.0
        %3745 = vmatpush1.msra.mxu0 0.0
        %3746 = vmatprep.subr.mxu0 0.0
        %3747 = vmatpush1.msra.mxu0 0.0
        %3748 = vmatprep.subr.mxu0 0.0
        %3749 = vmatpush1.msra.mxu0 0.0
        %3750 = vmatprep.subr.mxu0 0.0
        %3751 = vmatpush1.msra.mxu0 0.0
        %3752 = vmatprep.subr.mxu0 0.0
        %3753 = vmatpush1.msra.mxu0 0.0
        %3754 = vmatprep.subr.mxu0 0.0
        %3755 = vmatpush1.msra.mxu0 0.0
        %3756 = vmatprep.subr.mxu0 0.0
        %3757 = vmatpush1.msra.mxu0 0.0
        %3758 = vmatprep.subr.mxu0 0.0
        %3759 = vmatpush1.msra.mxu0 0.0
        %3760 = vmatprep.subr.mxu0 0.0
        %3761 = vmatpush1.msra.mxu0 0.0
        %3762 = vmatprep.subr.mxu0 0.0
        %3763 = vmatpush1.msra.mxu0 0.0
        %3764 = vmatprep.mubr.f32.mxu0 %v3486
        %3765 = vmatmul.mubr.f32.gmra.mrb[0].mxu0 %v3300
        %v3766 = vpop.f32.mrb[0].mxu0
        %v3767 = vadd.f32 %v3467, %v3766
        %v3768 = vpop.f32.mrb[0].mxu0
        %v3769 = vadd.f32 %v3467, %v3768
        %3770 = vmatprep.mubr.f32.mxu0 %v3489
        %3771 = vmatmul.mubr.f32.gmra.mrb[0].mxu0 %v3302
        %v3772 = vpop.f32.mrb[0].mxu0
        %v3773 = vadd.f32 %v3472, %v3772
        %v3774 = vpop.f32.mrb[0].mxu0
        %v3775 = vadd.f32 %v3472, %v3774
        %3776 = vmatprep.mubr.f32.mxu0 %v3492
        %3777 = vmatmul.mubr.f32.gmra.mrb[0].mxu0 %v3304
        %v3778 = vpop.f32.mrb[0].mxu0
        %v3779 = vadd.f32 %v3477, %v3778
        %v3780 = vpop.f32.mrb[0].mxu0
        %v3781 = vadd.f32 %v3477, %v3780
        %3782 = vmatprep.mubr.f32.mxu0 %v3495
        %3783 = vmatmul.mubr.f32.gmra.mrb[0].mxu0 %v3306
        %v3784 = vpop.f32.mrb[0].mxu0
        %v3785 = vadd.f32 %v3482, %v3784
        %v3786 = vpop.f32.mrb[0].mxu0
        %v3787 = vadd.f32 %v3482, %v3786
        %3788 = vdwg.mxu0
        %3789 = vmatprep.subr.mxu0 %v3315
        %3790 = vmatpush1.msra.mxu0 %v3314
        %3791 = vmatprep.subr.mxu0 %v3323
        %3792 = vmatpush1.msra.mxu0 %v3322
        %3793 = vmatprep.subr.mxu0 %v3331
        %3794 = vmatpush1.msra.mxu0 %v3330
        %3795 = vmatprep.subr.mxu0 %v3339
        %3796 = vmatpush1.msra.mxu0 %v3338
        %3797 = vmatprep.subr.mxu0 %v3347
        %3798 = vmatpush1.msra.mxu0 %v3346
        %3799 = vmatprep.subr.mxu0 %v3355
        %3800 = vmatpush1.msra.mxu0 %v3354
        %3801 = vmatprep.subr.mxu0 %v3363
        %3802 = vmatpush1.msra.mxu0 %v3362
        %3803 = vmatprep.subr.mxu0 %v3371
        %3804 = vmatpush1.msra.mxu0 %v3370
        %3805 = vmatprep.subr.mxu0 %v3379
        %3806 = vmatpush1.msra.mxu0 %v3378
        %3807 = vmatprep.subr.mxu0 %v3387
        %3808 = vmatpush1.msra.mxu0 %v3386
        %3809 = vmatprep.subr.mxu0 %v3395
        %3810 = vmatpush1.msra.mxu0 %v3394
        %3811 = vmatprep.subr.mxu0 %v3403
        %3812 = vmatpush1.msra.mxu0 %v3402
        %3813 = vmatprep.subr.mxu0 %v3411
        %3814 = vmatpush1.msra.mxu0 %v3410
        %3815 = vmatprep.subr.mxu0 %v3419
        %3816 = vmatpush1.msra.mxu0 %v3418
        %3817 = vmatprep.subr.mxu0 %v3427
        %3818 = vmatpush1.msra.mxu0 %v3426
        %3819 = vmatprep.subr.mxu0 %v3435
        %3820 = vmatpush1.msra.mxu0 %v3434
        %3821 = vmatprep.subr.mxu0 %v3443
        %3822 = vmatpush1.msra.mxu0 %v3442
        %3823 = vmatprep.subr.mxu0 %v3451
        %3824 = vmatpush1.msra.mxu0 %v3450
        %3825 = vmatprep.subr.mxu0 %v3520
        %3826 = vmatpush1.msra.mxu0 %v3517
        %3827 = vmatprep.subr.mxu0 0.0
        %3828 = vmatpush1.msra.mxu0 0.0
        %3829 = vmatprep.subr.mxu0 0.0
        %3830 = vmatpush1.msra.mxu0 0.0
        %3831 = vmatprep.subr.mxu0 0.0
        %3832 = vmatpush1.msra.mxu0 0.0
        %3833 = vmatprep.subr.mxu0 0.0
        %3834 = vmatpush1.msra.mxu0 0.0
        %3835 = vmatprep.subr.mxu0 0.0
        %3836 = vmatpush1.msra.mxu0 0.0
        %3837 = vmatprep.subr.mxu0 0.0
        %3838 = vmatpush1.msra.mxu0 0.0
        %3839 = vmatprep.subr.mxu0 0.0
        %3840 = vmatpush1.msra.mxu0 0.0
        %3841 = vmatprep.subr.mxu0 0.0
        %3842 = vmatpush1.msra.mxu0 0.0
        %3843 = vmatprep.subr.mxu0 0.0
        %3844 = vmatpush1.msra.mxu0 0.0
        %3845 = vmatprep.subr.mxu0 0.0
        %3846 = vmatpush1.msra.mxu0 0.0
        %3847 = vmatprep.subr.mxu0 0.0
        %3848 = vmatpush1.msra.mxu0 0.0
        %3849 = vmatprep.subr.mxu0 0.0
        %3850 = vmatpush1.msra.mxu0 0.0
        %3851 = vmatprep.subr.mxu0 0.0
        %3852 = vmatpush1.msra.mxu0 0.0
        %3853 = vmatprep.mubr.f32.mxu0 %v3486
        %3854 = vmatmul.mubr.f32.gmra.mrb[0].mxu0 %v3300
        %v3855 = vpop.f32.mrb[0].mxu0
        %v3856 = vadd.f32 %v3467, %v3855
        %v3857 = vpop.f32.mrb[0].mxu0
        %v3858 = vadd.f32 %v3467, %v3857
        %3859 = vmatprep.mubr.f32.mxu0 %v3489
        %3860 = vmatmul.mubr.f32.gmra.mrb[0].mxu0 %v3302
        %v3861 = vpop.f32.mrb[0].mxu0
        %v3862 = vadd.f32 %v3472, %v3861
        %v3863 = vpop.f32.mrb[0].mxu0
        %v3864 = vadd.f32 %v3472, %v3863
        %3865 = vmatprep.mubr.f32.mxu0 %v3492
        %3866 = vmatmul.mubr.f32.gmra.mrb[0].mxu0 %v3304
        %v3867 = vpop.f32.mrb[0].mxu0
        %v3868 = vadd.f32 %v3477, %v3867
        %v3869 = vpop.f32.mrb[0].mxu0
        %v3870 = vadd.f32 %v3477, %v3869
        %3871 = vmatprep.mubr.f32.mxu0 %v3495
        %3872 = vmatmul.mubr.f32.gmra.mrb[0].mxu0 %v3306
        %v3873 = vpop.f32.mrb[0].mxu0
        %v3874 = vadd.f32 %v3482, %v3873
        %v3875 = vpop.f32.mrb[0].mxu0
        %v3876 = vadd.f32 %v3482, %v3875
        %3877 = vdwg.mxu0
        %3910 = vrot.lane.b32.xlu0 %v3589, 127
        %v3911 = vpop.permute.xlu0 %3910
        %3912 = vrot.lane.b32.xlu0 %v3591, 127
        %v3913 = vpop.permute.xlu0 %3912
        %3914 = vrot.lane.b32.xlu0 %v3678, 127
        %v3915 = vpop.permute.xlu0 %3914
        %3916 = vrot.lane.b32.xlu0 %v3680, 127
        %v3917 = vpop.permute.xlu0 %3916
        %3918 = vrot.lane.b32.xlu0 %v3767, 127
        %v3919 = vpop.permute.xlu0 %3918
        %3920 = vrot.lane.b32.xlu0 %v3769, 127
        %v3921 = vpop.permute.xlu0 %3920
        %3922 = vrot.lane.b32.xlu0 %v3856, 127
        %v3923 = vpop.permute.xlu0 %3922
        %3924 = vrot.lane.b32.xlu0 %v3858, 127
        %v3925 = vpop.permute.xlu0 %3924
        %3926 = vrot.lane.b32.xlu0 %v3595, 127
        %v3927 = vpop.permute.xlu0 %3926
        %3928 = vrot.lane.b32.xlu0 %v3597, 127
        %v3929 = vpop.permute.xlu0 %3928
        %3930 = vrot.lane.b32.xlu0 %v3684, 127
        %v3931 = vpop.permute.xlu0 %3930
        %3932 = vrot.lane.b32.xlu0 %v3686, 127
        %v3933 = vpop.permute.xlu0 %3932
        %3934 = vrot.lane.b32.xlu0 %v3773, 127
        %v3935 = vpop.permute.xlu0 %3934
        %3936 = vrot.lane.b32.xlu0 %v3775, 127
        %v3937 = vpop.permute.xlu0 %3936
        %3938 = vrot.lane.b32.xlu0 %v3862, 127
        %v3939 = vpop.permute.xlu0 %3938
        %3940 = vrot.lane.b32.xlu0 %v3864, 127
        %v3941 = vpop.permute.xlu0 %3940
        %3942 = vrot.lane.b32.xlu0 %v3601, 127
        %v3943 = vpop.permute.xlu0 %3942
        %3944 = vrot.lane.b32.xlu0 %v3603, 127
        %v3945 = vpop.permute.xlu0 %3944
        %3946 = vrot.lane.b32.xlu0 %v3690, 127
        %v3947 = vpop.permute.xlu0 %3946
        %3948 = vrot.lane.b32.xlu0 %v3692, 127
        %v3949 = vpop.permute.xlu0 %3948
        %3950 = vrot.lane.b32.xlu0 %v3779, 127
        %v3951 = vpop.permute.xlu0 %3950
        %3952 = vrot.lane.b32.xlu0 %v3781, 127
        %v3953 = vpop.permute.xlu0 %3952
        %3954 = vrot.lane.b32.xlu0 %v3868, 127
        %v3955 = vpop.permute.xlu0 %3954
        %3956 = vrot.lane.b32.xlu0 %v3870, 127
        %v3957 = vpop.permute.xlu0 %3956
        %3958 = vrot.lane.b32.xlu0 %v3607, 127
        %v3959 = vpop.permute.xlu0 %3958
        %3960 = vrot.lane.b32.xlu0 %v3609, 127
        %v3961 = vpop.permute.xlu0 %3960
        %3962 = vrot.lane.b32.xlu0 %v3696, 127
        %v3963 = vpop.permute.xlu0 %3962
        %3964 = vrot.lane.b32.xlu0 %v3698, 127
        %v3965 = vpop.permute.xlu0 %3964
        %3966 = vrot.lane.b32.xlu0 %v3785, 127
        %v3967 = vpop.permute.xlu0 %3966
        %3968 = vrot.lane.b32.xlu0 %v3787, 127
        %v3969 = vpop.permute.xlu0 %3968
        %3970 = vrot.lane.b32.xlu0 %v3874, 127
        %v3971 = vpop.permute.xlu0 %3970
        %3972 = vrot.lane.b32.xlu0 %v3876, 127
        %v3973 = vpop.permute.xlu0 %3972
        %v3974 = vsel %vm233, %v3911, %v3913
        %v3975 = vsel %vm233, %v3913, %v3915
        %v3976 = vsel %vm233, %v3915, %v3917
        %v3977 = vsel %vm233, %v3917, %v3919
        %v3978 = vsel %vm233, %v3919, %v3921
        %v3979 = vsel %vm233, %v3921, %v3923
        %v3980 = vsel %vm233, %v3923, %v3925
        %v3981 = vsel %vm233, %v3927, %v3929
        %v3982 = vsel %vm233, %v3929, %v3931
        %v3983 = vsel %vm233, %v3931, %v3933
        %v3984 = vsel %vm233, %v3933, %v3935
        %v3985 = vsel %vm233, %v3935, %v3937
        %v3986 = vsel %vm233, %v3937, %v3939
        %v3987 = vsel %vm233, %v3939, %v3941
        %v3988 = vsel %vm233, %v3943, %v3945
        %v3989 = vsel %vm233, %v3945, %v3947
        %v3990 = vsel %vm233, %v3947, %v3949
        %v3991 = vsel %vm233, %v3949, %v3951
        %v3992 = vsel %vm233, %v3951, %v3953
        %v3993 = vsel %vm233, %v3953, %v3955
        %v3994 = vsel %vm233, %v3955, %v3957
        %v3995 = vsel %vm233, %v3959, %v3961
        %v3996 = vsel %vm233, %v3961, %v3963
        %v3997 = vsel %vm233, %v3963, %v3965
        %v3998 = vsel %vm233, %v3965, %v3967
        %v3999 = vsel %vm233, %v3967, %v3969
        %v4000 = vsel %vm233, %v3969, %v3971
        %v4001 = vsel %vm233, %v3971, %v3973
        %v4034 = vmax.f32 %v3589, %v3974
        %v4035 = vmax.f32 %v3591, %v3975
        %v4036 = vmax.f32 %v3678, %v3976
        %v4037 = vmax.f32 %v3680, %v3977
        %v4038 = vmax.f32 %v3767, %v3978
        %v4039 = vmax.f32 %v3769, %v3979
        %v4040 = vmax.f32 %v3856, %v3980
        %v4041 = vmax.f32 %v3858, %v3925
        %v4042 = vmax.f32 %v3595, %v3981
        %v4043 = vmax.f32 %v3597, %v3982
        %v4044 = vmax.f32 %v3684, %v3983
        %v4045 = vmax.f32 %v3686, %v3984
        %v4046 = vmax.f32 %v3773, %v3985
        %v4047 = vmax.f32 %v3775, %v3986
        %v4048 = vmax.f32 %v3862, %v3987
        %v4049 = vmax.f32 %v3864, %v3941
        %v4050 = vmax.f32 %v3601, %v3988
        %v4051 = vmax.f32 %v3603, %v3989
        %v4052 = vmax.f32 %v3690, %v3990
        %v4053 = vmax.f32 %v3692, %v3991
        %v4054 = vmax.f32 %v3779, %v3992
        %v4055 = vmax.f32 %v3781, %v3993
        %v4056 = vmax.f32 %v3868, %v3994
        %v4057 = vmax.f32 %v3870, %v3957
        %v4058 = vmax.f32 %v3607, %v3995
        %v4059 = vmax.f32 %v3609, %v3996
        %v4060 = vmax.f32 %v3696, %v3997
        %v4061 = vmax.f32 %v3698, %v3998
        %v4062 = vmax.f32 %v3785, %v3999
        %v4063 = vmax.f32 %v3787, %v4000
        %v4064 = vmax.f32 %v3874, %v4001
        %v4065 = vmax.f32 %v3876, %v3973
        %4098 = vrot.lane.b32.xlu0 %v4034, 96
        %v4099 = vpop.permute.xlu0 %4098
        %4100 = vrot.lane.b32.xlu0 %v4035, 96
        %v4101 = vpop.permute.xlu0 %4100
        %4102 = vrot.lane.b32.xlu0 %v4036, 96
        %v4103 = vpop.permute.xlu0 %4102
        %4104 = vrot.lane.b32.xlu0 %v4037, 96
        %v4105 = vpop.permute.xlu0 %4104
        %4106 = vrot.lane.b32.xlu0 %v4038, 96
        %v4107 = vpop.permute.xlu0 %4106
        %4108 = vrot.lane.b32.xlu0 %v4039, 96
        %v4109 = vpop.permute.xlu0 %4108
        %4110 = vrot.lane.b32.xlu0 %v4040, 96
        %v4111 = vpop.permute.xlu0 %4110
        %4112 = vrot.lane.b32.xlu0 %v4041, 96
        %v4113 = vpop.permute.xlu0 %4112
        %4114 = vrot.lane.b32.xlu0 %v4042, 96
        %v4115 = vpop.permute.xlu0 %4114
        %4116 = vrot.lane.b32.xlu0 %v4043, 96
        %v4117 = vpop.permute.xlu0 %4116
        %4118 = vrot.lane.b32.xlu0 %v4044, 96
        %v4119 = vpop.permute.xlu0 %4118
        %4120 = vrot.lane.b32.xlu0 %v4045, 96
        %v4121 = vpop.permute.xlu0 %4120
        %4122 = vrot.lane.b32.xlu0 %v4046, 96
        %v4123 = vpop.permute.xlu0 %4122
        %4124 = vrot.lane.b32.xlu0 %v4047, 96
        %v4125 = vpop.permute.xlu0 %4124
        %4126 = vrot.lane.b32.xlu0 %v4048, 96
        %v4127 = vpop.permute.xlu0 %4126
        %4128 = vrot.lane.b32.xlu0 %v4049, 96
        %v4129 = vpop.permute.xlu0 %4128
        %4130 = vrot.lane.b32.xlu0 %v4050, 96
        %v4131 = vpop.permute.xlu0 %4130
        %4132 = vrot.lane.b32.xlu0 %v4051, 96
        %v4133 = vpop.permute.xlu0 %4132
        %4134 = vrot.lane.b32.xlu0 %v4052, 96
        %v4135 = vpop.permute.xlu0 %4134
        %4136 = vrot.lane.b32.xlu0 %v4053, 96
        %v4137 = vpop.permute.xlu0 %4136
        %4138 = vrot.lane.b32.xlu0 %v4054, 96
        %v4139 = vpop.permute.xlu0 %4138
        %4140 = vrot.lane.b32.xlu0 %v4055, 96
        %v4141 = vpop.permute.xlu0 %4140
        %4142 = vrot.lane.b32.xlu0 %v4056, 96
        %v4143 = vpop.permute.xlu0 %4142
        %4144 = vrot.lane.b32.xlu0 %v4057, 96
        %v4145 = vpop.permute.xlu0 %4144
        %4146 = vrot.lane.b32.xlu0 %v4058, 96
        %v4147 = vpop.permute.xlu0 %4146
        %4148 = vrot.lane.b32.xlu0 %v4059, 96
        %v4149 = vpop.permute.xlu0 %4148
        %4150 = vrot.lane.b32.xlu0 %v4060, 96
        %v4151 = vpop.permute.xlu0 %4150
        %4152 = vrot.lane.b32.xlu0 %v4061, 96
        %v4153 = vpop.permute.xlu0 %4152
        %4154 = vrot.lane.b32.xlu0 %v4062, 96
        %v4155 = vpop.permute.xlu0 %4154
        %4156 = vrot.lane.b32.xlu0 %v4063, 96
        %v4157 = vpop.permute.xlu0 %4156
        %4158 = vrot.lane.b32.xlu0 %v4064, 96
        %v4159 = vpop.permute.xlu0 %4158
        %4160 = vrot.lane.b32.xlu0 %v4065, 96
        %v4161 = vpop.permute.xlu0 %4160
        %v4162 = vsel %vm637, %v4099, %v4101
        %v4163 = vsel %vm637, %v4101, %v4103
        %v4164 = vsel %vm637, %v4103, %v4105
        %v4165 = vsel %vm637, %v4105, %v4107
        %v4166 = vsel %vm637, %v4107, %v4109
        %v4167 = vsel %vm637, %v4109, %v4111
        %v4168 = vsel %vm637, %v4111, %v4113
        %v4169 = vsel %vm637, %v4115, %v4117
        %v4170 = vsel %vm637, %v4117, %v4119
        %v4171 = vsel %vm637, %v4119, %v4121
        %v4172 = vsel %vm637, %v4121, %v4123
        %v4173 = vsel %vm637, %v4123, %v4125
        %v4174 = vsel %vm637, %v4125, %v4127
        %v4175 = vsel %vm637, %v4127, %v4129
        %v4176 = vsel %vm637, %v4131, %v4133
        %v4177 = vsel %vm637, %v4133, %v4135
        %v4178 = vsel %vm637, %v4135, %v4137
        %v4179 = vsel %vm637, %v4137, %v4139
        %v4180 = vsel %vm637, %v4139, %v4141
        %v4181 = vsel %vm637, %v4141, %v4143
        %v4182 = vsel %vm637, %v4143, %v4145
        %v4183 = vsel %vm637, %v4147, %v4149
        %v4184 = vsel %vm637, %v4149, %v4151
        %v4185 = vsel %vm637, %v4151, %v4153
        %v4186 = vsel %vm637, %v4153, %v4155
        %v4187 = vsel %vm637, %v4155, %v4157
        %v4188 = vsel %vm637, %v4157, %v4159
        %v4189 = vsel %vm637, %v4159, %v4161
        %v4218 = vmax.f32 %v4034, %v4162
        %v4219 = vmax.f32 %v4035, %v4163
        %v4220 = vmax.f32 %v4036, %v4164
        %v4221 = vmax.f32 %v4037, %v4165
        %v4222 = vmax.f32 %v4038, %v4166
        %v4223 = vmax.f32 %v4039, %v4167
        %v4224 = vmax.f32 %v4040, %v4168
        %v4225 = vmax.f32 %v4042, %v4169
        %v4226 = vmax.f32 %v4043, %v4170
        %v4227 = vmax.f32 %v4044, %v4171
        %v4228 = vmax.f32 %v4045, %v4172
        %v4229 = vmax.f32 %v4046, %v4173
        %v4230 = vmax.f32 %v4047, %v4174
        %v4231 = vmax.f32 %v4048, %v4175
        %v4232 = vmax.f32 %v4050, %v4176
        %v4233 = vmax.f32 %v4051, %v4177
        %v4234 = vmax.f32 %v4052, %v4178
        %v4235 = vmax.f32 %v4053, %v4179
        %v4236 = vmax.f32 %v4054, %v4180
        %v4237 = vmax.f32 %v4055, %v4181
        %v4238 = vmax.f32 %v4056, %v4182
        %v4239 = vmax.f32 %v4058, %v4183
        %v4240 = vmax.f32 %v4059, %v4184
        %v4241 = vmax.f32 %v4060, %v4185
        %v4242 = vmax.f32 %v4061, %v4186
        %v4243 = vmax.f32 %v4062, %v4187
        %v4244 = vmax.f32 %v4063, %v4188
        %v4245 = vmax.f32 %v4064, %v4189
        %v4246 = vmax.f32 %v4218, 0.0
        %v4247 = vmax.f32 %v4219, 0.0
        %v4248 = vmax.f32 %v4220, 0.0
        %v4249 = vmax.f32 %v4221, 0.0
        %v4250 = vmax.f32 %v4222, 0.0
        %v4251 = vmax.f32 %v4223, 0.0
        %v4252 = vmax.f32 %v4224, 0.0
        %v4253 = vmax.f32 %v4225, 0.0
        %v4254 = vmax.f32 %v4226, 0.0
        %v4255 = vmax.f32 %v4227, 0.0
        %v4256 = vmax.f32 %v4228, 0.0
        %v4257 = vmax.f32 %v4229, 0.0
        %v4258 = vmax.f32 %v4230, 0.0
        %v4259 = vmax.f32 %v4231, 0.0
        %v4260 = vmax.f32 %v4232, 0.0
        %v4261 = vmax.f32 %v4233, 0.0
        %v4262 = vmax.f32 %v4234, 0.0
        %v4263 = vmax.f32 %v4235, 0.0
        %v4264 = vmax.f32 %v4236, 0.0
        %v4265 = vmax.f32 %v4237, 0.0
        %v4266 = vmax.f32 %v4238, 0.0
        %v4267 = vmax.f32 %v4239, 0.0
        %v4268 = vmax.f32 %v4240, 0.0
        %v4269 = vmax.f32 %v4241, 0.0
        %v4270 = vmax.f32 %v4242, 0.0
        %v4271 = vmax.f32 %v4243, 0.0
        %v4272 = vmax.f32 %v4244, 0.0
        %v4273 = vmax.f32 %v4245, 0.0
        %4274 = vst [vmem:[%s160] sm:$0xff] %v4246
        %4275 = vst [vmem:[%s160 + $0x8] sm:$0xff] %v4247
        %4276 = vst [vmem:[%s160 + $0x10] sm:$0xff] %v4248
        %4277 = vst [vmem:[%s160 + $0x18] sm:$0xff] %v4249
        %4278 = vst [vmem:[%s160 + $0x20] sm:$0xff] %v4250
        %4279 = vst [vmem:[%s160 + $0x28] sm:$0xff] %v4251
        %4280 = vst [vmem:[%s160 + $0x30] sm:$0xff] %v4252
        %4281 = vst [vmem:[%s160 + $0x40] sm:$0xff] %v4253
        %4282 = vst [vmem:[%s160 + $0x48] sm:$0xff] %v4254
        %4283 = vst [vmem:[%s160 + $0x50] sm:$0xff] %v4255
        %4284 = vst [vmem:[%s160 + $0x58] sm:$0xff] %v4256
        %4285 = vst [vmem:[%s160 + $0x60] sm:$0xff] %v4257
        %4286 = vst [vmem:[%s160 + $0x68] sm:$0xff] %v4258
        %4287 = vst [vmem:[%s160 + $0x70] sm:$0xff] %v4259
        %4288 = vst [vmem:[%s160 + $0x80] sm:$0xff] %v4260
        %4289 = vst [vmem:[%s160 + $0x88] sm:$0xff] %v4261
        %4290 = vst [vmem:[%s160 + $0x90] sm:$0xff] %v4262
        %4291 = vst [vmem:[%s160 + $0x98] sm:$0xff] %v4263
        %4292 = vst [vmem:[%s160 + $0xa0] sm:$0xff] %v4264
        %4293 = vst [vmem:[%s160 + $0xa8] sm:$0xff] %v4265
        %4294 = vst [vmem:[%s160 + $0xb0] sm:$0xff] %v4266
        %4295 = vst [vmem:[%s160 + $0xc0] sm:$0xff] %v4267
        %4296 = vst [vmem:[%s160 + $0xc8] sm:$0xff] %v4268
        %4297 = vst [vmem:[%s160 + $0xd0] sm:$0xff] %v4269
        %4298 = vst [vmem:[%s160 + $0xd8] sm:$0xff] %v4270
        %4299 = vst [vmem:[%s160 + $0xe0] sm:$0xff] %v4271
        %4300 = vst [vmem:[%s160 + $0xe8] sm:$0xff] %v4272
        %4301 = vst [vmem:[%s160 + $0xf0] sm:$0xff] %v4273
        %4302 = vst [vmem:[%s160 + $0x38] sm:$0xff] 0.0
        %4303 = vst [vmem:[%s160 + $0x78] sm:$0xff] 0.0
        %4304 = vst [vmem:[%s160 + $0xb8] sm:$0xff] 0.0
        %4305 = vst [vmem:[%s160 + $0xf8] sm:$0xff] 0.0
        %s4306 = sand.u32 %s90, 1
        %s4307 = sand.u32 %s90, 1
        %s4308 = smul.addr %s4307, 256
        %s4309 = scalar_lea.vmem [#allocation3], %s4308
        // Predicated region
        $region33: #{vanilla_cnn_forward.2} parent=31 // pred_check
          %p4310 = pneg %p100
        $region34: #{vanilla_cnn_forward.2} parent=31 // pred_check_branch
          %4312 = sbr.rel (%p4310) target = $region36
        $region35: #{vanilla_cnn_forward.2} parent=31 // pred_region
          %s4313 = smul.u32 8, %s14
          %s4314 = smul.addr %s4313, 8
          %s4315 = scalar_lea.vmem %s3, %s4314
          // Predicated region
          $region37: #{vanilla_cnn_forward.2} parent=35 // pred_check
            _
          $region38: #{vanilla_cnn_forward.2} parent=35 // pred_check_branch
            %4317 = sbr.rel (0) target = $region40
          $region39: #{vanilla_cnn_forward.2} parent=35 // pred_region
            // Predicated region
            $region41: #{vanilla_cnn_forward.2} parent=39 // pred_check
              _
            $region42: #{vanilla_cnn_forward.2} parent=39 // pred_check_branch
              %4319 = sbr.rel (0) target = $region44
            $region43: #{vanilla_cnn_forward.2} parent=39 // pred_region
              loop: start=0, step=1, limit=1
              $region45: #{vanilla_cnn_forward.2} parent=43 // loop_pre_header
                _
              $region46: #{vanilla_cnn_forward.2} parent=43 // loop_header
                %s4321 = sphi 0, %s4325
                %p4322 = scmp.ge.s32.totalorder %s4321, 1
                %s4326 = sphi %s4309, %s4309
                %s4327 = sphi %s4315, %s4315
              $region47: #{vanilla_cnn_forward.2} parent=43 // loop_header_branch
                %4324 = sbr.rel (%p4322) target = $region51
              $region48: #{vanilla_cnn_forward.2} parent=43 // loop_body
                %v4328 = vld [vmem:[%s4326] sm:$0xff]
                %4329 = vst [vmem:[%s4327] sm:$0xff] %v4328
                %v4330 = vld [vmem:[%s4326 + $0x8] sm:$0xff]
                %4331 = vst [vmem:[%s4327 + $0x8] sm:$0xff] %v4330
                %v4332 = vld [vmem:[%s4326 + $0x10] sm:$0xff]
                %4333 = vst [vmem:[%s4327 + $0x10] sm:$0xff] %v4332
                %v4334 = vld [vmem:[%s4326 + $0x18] sm:$0xff]
                %4335 = vst [vmem:[%s4327 + $0x18] sm:$0xff] %v4334
                %v4336 = vld [vmem:[%s4326 + $0x20] sm:$0xff]
                %4337 = vst [vmem:[%s4327 + $0x20] sm:$0xff] %v4336
                %v4338 = vld [vmem:[%s4326 + $0x28] sm:$0xff]
                %4339 = vst [vmem:[%s4327 + $0x28] sm:$0xff] %v4338
                %v4340 = vld [vmem:[%s4326 + $0x30] sm:$0xff]
                %4341 = vst [vmem:[%s4327 + $0x30] sm:$0xff] %v4340
                %v4342 = vld [vmem:[%s4326 + $0x38] sm:$0xff]
                %4343 = vst [vmem:[%s4327 + $0x38] sm:$0xff] %v4342
                %v4344 = vld [vmem:[%s4326 + $0x40] sm:$0xff]
                %4345 = vst [vmem:[%s4327 + $0x80] sm:$0xff] %v4344
                %v4346 = vld [vmem:[%s4326 + $0x48] sm:$0xff]
                %4347 = vst [vmem:[%s4327 + $0x88] sm:$0xff] %v4346
                %v4348 = vld [vmem:[%s4326 + $0x50] sm:$0xff]
                %4349 = vst [vmem:[%s4327 + $0x90] sm:$0xff] %v4348
                %v4350 = vld [vmem:[%s4326 + $0x58] sm:$0xff]
                %4351 = vst [vmem:[%s4327 + $0x98] sm:$0xff] %v4350
                %v4352 = vld [vmem:[%s4326 + $0x60] sm:$0xff]
                %4353 = vst [vmem:[%s4327 + $0xa0] sm:$0xff] %v4352
                %v4354 = vld [vmem:[%s4326 + $0x68] sm:$0xff]
                %4355 = vst [vmem:[%s4327 + $0xa8] sm:$0xff] %v4354
                %v4356 = vld [vmem:[%s4326 + $0x70] sm:$0xff]
                %4357 = vst [vmem:[%s4327 + $0xb0] sm:$0xff] %v4356
                %v4358 = vld [vmem:[%s4326 + $0x78] sm:$0xff]
                %4359 = vst [vmem:[%s4327 + $0xb8] sm:$0xff] %v4358
                %v4360 = vld [vmem:[%s4326 + $0x80] sm:$0xff]
                %4361 = vst [vmem:[%s4327 + $0x100] sm:$0xff] %v4360
                %v4362 = vld [vmem:[%s4326 + $0x88] sm:$0xff]
                %4363 = vst [vmem:[%s4327 + $0x108] sm:$0xff] %v4362
                %v4364 = vld [vmem:[%s4326 + $0x90] sm:$0xff]
                %4365 = vst [vmem:[%s4327 + $0x110] sm:$0xff] %v4364
                %v4366 = vld [vmem:[%s4326 + $0x98] sm:$0xff]
                %4367 = vst [vmem:[%s4327 + $0x118] sm:$0xff] %v4366
                %v4368 = vld [vmem:[%s4326 + $0xa0] sm:$0xff]
                %4369 = vst [vmem:[%s4327 + $0x120] sm:$0xff] %v4368
                %v4370 = vld [vmem:[%s4326 + $0xa8] sm:$0xff]
                %4371 = vst [vmem:[%s4327 + $0x128] sm:$0xff] %v4370
                %v4372 = vld [vmem:[%s4326 + $0xb0] sm:$0xff]
                %4373 = vst [vmem:[%s4327 + $0x130] sm:$0xff] %v4372
                %v4374 = vld [vmem:[%s4326 + $0xb8] sm:$0xff]
                %4375 = vst [vmem:[%s4327 + $0x138] sm:$0xff] %v4374
                %v4376 = vld [vmem:[%s4326 + $0xc0] sm:$0xff]
                %4377 = vst [vmem:[%s4327 + $0x180] sm:$0xff] %v4376
                %v4378 = vld [vmem:[%s4326 + $0xc8] sm:$0xff]
                %4379 = vst [vmem:[%s4327 + $0x188] sm:$0xff] %v4378
                %v4380 = vld [vmem:[%s4326 + $0xd0] sm:$0xff]
                %4381 = vst [vmem:[%s4327 + $0x190] sm:$0xff] %v4380
                %v4382 = vld [vmem:[%s4326 + $0xd8] sm:$0xff]
                %4383 = vst [vmem:[%s4327 + $0x198] sm:$0xff] %v4382
                %v4384 = vld [vmem:[%s4326 + $0xe0] sm:$0xff]
                %4385 = vst [vmem:[%s4327 + $0x1a0] sm:$0xff] %v4384
                %v4386 = vld [vmem:[%s4326 + $0xe8] sm:$0xff]
                %4387 = vst [vmem:[%s4327 + $0x1a8] sm:$0xff] %v4386
                %v4388 = vld [vmem:[%s4326 + $0xf0] sm:$0xff]
                %4389 = vst [vmem:[%s4327 + $0x1b0] sm:$0xff] %v4388
                %v4390 = vld [vmem:[%s4326 + $0xf8] sm:$0xff]
                %4391 = vst [vmem:[%s4327 + $0x1b8] sm:$0xff] %v4390
              $region49: #{vanilla_cnn_forward.2} parent=43 // loop_footer
                %s4325 = sadd.s32 1, %s4321
              $region50: #{vanilla_cnn_forward.2} parent=43 // loop_footer_branch
                %4320 = sbr.rel target = $region46
              $region51: #{vanilla_cnn_forward.2} parent=43 // loop_exit
                _
            $region44: #{vanilla_cnn_forward.2} parent=39 // pred_fallthru
              _
            // Predicated region
            $region52: #{vanilla_cnn_forward.2} parent=39 // pred_check
              _
            $region53: #{vanilla_cnn_forward.2} parent=39 // pred_check_branch
              %4393 = sbr.rel target = $region55
            $region54: #{vanilla_cnn_forward.2} parent=39 // pred_region
              _
            $region55: #{vanilla_cnn_forward.2} parent=39 // pred_fallthru
              _
          $region40: #{vanilla_cnn_forward.2} parent=35 // pred_fallthru
            _
          %4394 = vnop
        $region36: #{vanilla_cnn_forward.2} parent=31 // pred_fallthru
          _
      $region32: #{vanilla_cnn_forward.2} parent=5 // pred_fallthru
        _
      %p4395 = scmp.le.s32.totalorder 2, %s9
      // Predicated region
      $region56: #{vanilla_cnn_forward.2} parent=5 // pred_check
        %p4396 = pneg %p4395
      $region57: #{vanilla_cnn_forward.2} parent=5 // pred_check_branch
        %4398 = sbr.rel (%p4396) target = $region59
      $region58: #{vanilla_cnn_forward.2} parent=5 // pred_region
        %s4399 = ssub.s32 %s9, 2
        // Predicated region
        $region60: #{vanilla_cnn_forward.2} parent=58 // pred_check
          %p4400 = pneg %p106
        $region61: #{vanilla_cnn_forward.2} parent=58 // pred_check_branch
          %4402 = sbr.rel (%p4400) target = $region63
        $region62: #{vanilla_cnn_forward.2} parent=58 // pred_region
          %s4403 = sand.u32 %s91, 1
          %s4404 = sand.u32 %s91, 1
          %s4405 = smul.addr %s4404, 256
          %s4406 = scalar_lea.vmem [#allocation3], %s4405
        $region63: #{vanilla_cnn_forward.2} parent=58 // pred_fallthru
          _
      $region59: #{vanilla_cnn_forward.2} parent=5 // pred_fallthru
        _
    $region6: #{vanilla_cnn_forward.2} parent=1 // loop_footer
      %s13 = sadd.s32 1, %s9
    $region7: #{vanilla_cnn_forward.2} parent=1 // loop_footer_branch
      %8 = sbr.rel target = $region3
    $region8: #{vanilla_cnn_forward.2} parent=1 // loop_exit
      _

</llo_original>
